<compile_context>
chip_gen: v5e
topology: v5e:2x2
jax: 0.10.0
libtpu: 0.0.40
codegen_flags: <defaults>
</compile_context>

<pallas_src>
import functools

import jax
import jax.numpy as jnp
from jax import lax
from jax.experimental import pallas as pl
from jax.experimental.pallas import tpu as pltpu

EPS = 1e-5
LANE = 128


def _round_up(n, m):
    return (n + m - 1) // m * m


# ---------------------------------------------------------------------------
# In-kernel helpers
# ---------------------------------------------------------------------------
def _group_norm(x2d, gamma, beta, proj):
    """GroupNorm over an (HW, C) slab.

    `proj` is the (C, C) group-membership matrix with 1/(HW*cpg) folded in
    (precomputed in the wrapper), so no per-step divides are needed."""
    col_sum = jnp.sum(x2d, axis=0, keepdims=True)                    # (1, C)
    mean_c = jnp.dot(col_sum, proj, preferred_element_type=jnp.float32)
    d = x2d - mean_c
    sq_sum = jnp.sum(d * d, axis=0, keepdims=True)
    var_c = jnp.dot(sq_sum, proj, preferred_element_type=jnp.float32)
    return d * lax.rsqrt(var_c + EPS) * gamma + beta


def _conv3x3(h2d, w_ref, bias, y_idx, x_idx, H, W):
    """3x3 conv (padding=1) as 3 ky-row chunked matmuls accumulated in f32.

    Taps are built with pltpu.roll (XLU) + boundary masks (VPU select) on the
    flat (HW, C) slab.  w_ref is the folded (9*C, Nout) bf16 weight with
    row order (ky, kx, cin); chunk ky uses rows [ky*3*C, (ky+1)*3*C)."""
    HW, c = h2d.shape
    acc = None
    for dy in (-1, 0, 1):
        ky = dy + 1
        taps = []
        for dx in (-1, 0, 1):
            delta = dy * W + dx
            t = h2d if delta == 0 else pltpu.roll(h2d, shift=(-delta) % HW, axis=0)
            conds = []
            if dy < 0:
                conds.append(y_idx >= -dy)
            elif dy > 0:
                conds.append(y_idx < H - dy)
            if dx < 0:
                conds.append(x_idx >= -dx)
            elif dx > 0:
                conds.append(x_idx < W - dx)
            if conds:
                m = conds[0]
                for extra in conds[1:]:
                    m = m & extra
                t = jnp.where(m, t, 0.0)
            # TODO(synk): on v6e/v7x cast h2d to bf16 once BEFORE the roll loop
            # (halves XLU/VPU traffic); kept f32 rolls here because packed
            # (sub-32-bit) sublane rotates are not guaranteed to lower on all
            # generations (v5e has no bf16 VALU).
            taps.append(t.astype(jnp.bfloat16))
        chunk = jnp.concatenate(taps, axis=-1)                       # (HW, 3*c) bf16
        w_chunk = w_ref[ky * 3 * c:(ky + 1) * 3 * c, :]              # static slice
        p = jnp.dot(chunk, w_chunk, preferred_element_type=jnp.float32)
        acc = p if acc is None else acc + p
    return acc + bias


# ---------------------------------------------------------------------------
# Pallas kernel: one batch element per grid step
# ---------------------------------------------------------------------------
def resnet_kernel(x_ref, film_ref, yidx_ref, xidx_ref, proj1_ref, proj2_ref,
                  gn1_w_ref, gn1_b_ref, conv1_w_ref, conv1_b_ref,
                  gn2_w_ref, gn2_b_ref, conv2_w_ref, conv2_b_ref,
                  conv3_w_ref, conv3_b_ref, out_ref, *, H, W):
    y_idx = yidx_ref[...]                                            # (HW, 1) i32
    x_idx = xidx_ref[...]

    x = x_ref[0]                                                     # (HW, Cin) f32

    # h = conv1(silu(norm1(x)))
    h = jax.nn.silu(_group_norm(x, gn1_w_ref[...], gn1_b_ref[...], proj1_ref[...]))
    h = _conv3x3(h, conv1_w_ref, conv1_b_ref[...], y_idx, x_idx, H, W)

    # FiLM modulation: ta/tb were projected in the wrapper (time_layer).
    film = film_ref[0]                                               # (2, Cout)
    ta = film[0:1, :]
    tb = film[1:2, :]
    # TODO(synk): einops.repeat branch (h batch > temb batch) not implemented;
    # x and temb are assumed to share the same batch dimension.

    # h = conv2(dropout(silu(norm2(h) * (1 + ta) + tb)));  dropout(p=0) == id
    h = _group_norm(h, gn2_w_ref[...], gn2_b_ref[...], proj2_ref[...])
    h = jax.nn.silu(h * (1.0 + ta) + tb)
    h = _conv3x3(h, conv2_w_ref, conv2_b_ref[...], y_idx, x_idx, H, W)

    # 1x1 skip conv (output_channels != num_channels in this config)
    skip = jnp.dot(x.astype(jnp.bfloat16), conv3_w_ref[...],
                   preferred_element_type=jnp.float32) + conv3_b_ref[...]

    # TODO(synk): emit bf16 here if the downstream consumer tolerates it
    # (halves output writeback); kept f32 to match the module contract.
    out_ref[0] = h + skip


# ---------------------------------------------------------------------------
# One-time parameter packing (outside the per-call hot path)
# ---------------------------------------------------------------------------
def prepare_params(params, *, H, W, num_groups):
    f32 = jnp.float32
    Cin = params["gn1_w"].shape[-1]
    Cout = params["conv1_w"].shape[-1]
    Cp_out = _round_up(Cout, LANE)          # output slab padded -> unmasked vst
    HW = H * W

    def gproj(c):
        cpg = c // num_groups
        idx = jnp.arange(c)
        same = (idx[:, None] // cpg) == (idx[None, :] // cpg)
        return same.astype(f32) / float(HW * cpg)   # 1/denom folded into proj

    flat = jnp.arange(HW, dtype=jnp.int32)[:, None]
    packed = {
        "y_idx": flat // W,
        "x_idx": flat % W,
        "proj1": gproj(Cin),
        "proj2": gproj(Cout),
        "gn1_w": params["gn1_w"].astype(f32).reshape(1, Cin),
        "gn1_b": params["gn1_b"].astype(f32).reshape(1, Cin),
        "gn2_w": params["gn2_w"].astype(f32).reshape(1, Cout),
        "gn2_b": params["gn2_b"].astype(f32).reshape(1, Cout),
        # conv1: real-channel K (9*Cin), real Cout (internal value, no store)
        "conv1_w": params["conv1_w"].astype(jnp.bfloat16).reshape(9 * Cin, Cout),
        "conv1_b": params["conv1_b"].astype(f32).reshape(1, Cout),
        # conv2: real-channel K (9*Cout), N padded to 128 for lane-dense output
        "conv2_w": jnp.pad(params["conv2_w"],
                           ((0, 0), (0, 0), (0, 0), (0, Cp_out - Cout))
                           ).astype(jnp.bfloat16).reshape(9 * Cout, Cp_out),
        "conv2_b": jnp.pad(params["conv2_b"].astype(f32).reshape(1, Cout),
                           ((0, 0), (0, Cp_out - Cout))),
        "conv3_w": jnp.pad(params["conv3_w"],
                           ((0, 0), (0, Cp_out - Cout))).astype(jnp.bfloat16),
        "conv3_b": jnp.pad(params["conv3_b"].astype(f32).reshape(1, Cout),
                           ((0, 0), (0, Cp_out - Cout))),
        "time_w": params["time_w"].astype(f32),
        "time_b": params["time_b"].astype(f32),
    }
    return packed


# ---------------------------------------------------------------------------
# Per-call forward (jit this).  NCHW in/out to honor the module contract.
# ---------------------------------------------------------------------------
def resnet_forward(x_nchw, temb, packed):
    B, Cin, H, W = x_nchw.shape
    HW = H * W
    Cout = packed["conv1_b"].shape[-1]
    Cp_out = packed["conv2_b"].shape[-1]
    f32 = jnp.float32

    # TODO(synk): in an NHWC-native surrounding model this transpose (and the
    # output one) disappears; kept because the PyTorch module is NCHW.
    x = jnp.transpose(x_nchw, (0, 2, 3, 1)).astype(f32).reshape(B, HW, Cin)

    # FiLM projection done once per call in the wrapper (tiny XLA matmul)
    tt = jax.nn.silu(temb.astype(f32)) @ packed["time_w"] + packed["time_b"]
    film = jnp.stack([tt[:, :Cout], tt[:, Cout:]], axis=1)           # (B, 2, Cout)

    kernel = functools.partial(resnet_kernel, H=H, W=W)

    def const_spec(shape):
        n = len(shape)
        return pl.BlockSpec(shape, lambda b, _n=n: (0,) * _n)

    out = pl.pallas_call(
        kernel,
        out_shape=jax.ShapeDtypeStruct((B, HW, Cp_out), f32),
        grid=(B,),
        in_specs=[
            pl.BlockSpec((1, HW, Cin), lambda b: (b, 0, 0)),         # x slab (real Cin)
            pl.BlockSpec((1, 2, Cout), lambda b: (b, 0, 0)),         # film (ta, tb)
            const_spec((HW, 1)), const_spec((HW, 1)),                # y_idx, x_idx
            const_spec((Cin, Cin)), const_spec((Cout, Cout)),        # proj1, proj2
            const_spec((1, Cin)), const_spec((1, Cin)),              # norm1 w/b
            const_spec((9 * Cin, Cout)), const_spec((1, Cout)),      # conv1 w/b
            const_spec((1, Cout)), const_spec((1, Cout)),            # norm2 w/b
            const_spec((9 * Cout, Cp_out)), const_spec((1, Cp_out)), # conv2 w/b
            const_spec((Cin, Cp_out)), const_spec((1, Cp_out)),      # conv3 w/b
        ],
        out_specs=pl.BlockSpec((1, HW, Cp_out), lambda b: (b, 0, 0)),
        compiler_params=pltpu.CompilerParams(
            dimension_semantics=("parallel",),       # shard batch over TCs (v7x)
            vmem_limit_bytes=32 * 1024 * 1024),      # tiny working set; fits all gens
    )(x, film,
      packed["y_idx"], packed["x_idx"], packed["proj1"], packed["proj2"],
      packed["gn1_w"], packed["gn1_b"], packed["conv1_w"], packed["conv1_b"],
      packed["gn2_w"], packed["gn2_b"], packed["conv2_w"], packed["conv2_b"],
      packed["conv3_w"], packed["conv3_b"])

    out = out[:, :, :Cout].reshape(B, H, W, Cout)
    return jnp.transpose(out, (0, 3, 1, 2))                          # back to NCHW


# ---------------------------------------------------------------------------
# Pure-JAX reference (mirrors the PyTorch forward) for validation
# ---------------------------------------------------------------------------
def resnet_reference(x_nchw, temb, params, *, num_groups):
    x = jnp.transpose(x_nchw, (0, 2, 3, 1)).astype(jnp.float32)
    B, H, W, Cin = x.shape
    Cout = params["conv1_w"].shape[-1]

    def gn(v, gamma, beta):
        C = v.shape[-1]
        G = num_groups
        vr = v.reshape(B, H * W, G, C // G)
        m = jnp.mean(vr, axis=(1, 3), keepdims=True)
        var = jnp.mean((vr - m) ** 2, axis=(1, 3), keepdims=True)
        vn = ((vr - m) / jnp.sqrt(var + EPS)).reshape(B, H, W, C)
        return vn * gamma.reshape(1, 1, 1, C) + beta.reshape(1, 1, 1, C)

    def conv3x3(v, w, bias):
        y = lax.conv_general_dilated(
            v, w, (1, 1), ((1, 1), (1, 1)),
            dimension_numbers=("NHWC", "HWIO", "NHWC"))
        return y + bias.reshape(1, 1, 1, -1)

    h = jax.nn.silu(gn(x, params["gn1_w"], params["gn1_b"]))
    h = conv3x3(h, params["conv1_w"], params["conv1_b"])
    tt = jax.nn.silu(temb) @ params["time_w"] + params["time_b"]
    ta = tt[:, :Cout].reshape(B, 1, 1, Cout)
    tb = tt[:, Cout:].reshape(B, 1, 1, Cout)
    h = jax.nn.silu(gn(h, params["gn2_w"], params["gn2_b"]) * (1.0 + ta) + tb)
    h = conv3x3(h, params["conv2_w"], params["conv2_b"])
    skip = jnp.einsum("bhwc,cd->bhwd", x, params["conv3_w"]) \
        + params["conv3_b"].reshape(1, 1, 1, -1)
    return jnp.transpose(h + skip, (0, 3, 1, 2))


# ---------------------------------------------------------------------------
# Deterministic parameter init (shapes per ResNet.__init__)
# ---------------------------------------------------------------------------
def init_params(key, Cin, Cout, T):
    ks = jax.random.split(key, 12)
    f32 = jnp.float32
    return {
        "gn1_w": 1.0 + 0.1 * jax.random.normal(ks[0], (1, Cin), f32),
        "gn1_b": 0.1 * jax.random.normal(ks[1], (1, Cin), f32),
        "conv1_w": 0.05 * jax.random.normal(ks[2], (3, 3, Cin, Cout), f32),
        "conv1_b": 0.05 * jax.random.normal(ks[3], (1, Cout), f32),
        "time_w": 0.05 * jax.random.normal(ks[4], (T, 2 * Cout), f32),
        "time_b": 0.05 * jax.random.normal(ks[5], (1, 2 * Cout), f32),
        "gn2_w": 1.0 + 0.1 * jax.random.normal(ks[6], (1, Cout), f32),
        "gn2_b": 0.1 * jax.random.normal(ks[7], (1, Cout), f32),
        # zero_module(conv2) only affects initialization; use NON-zero weights
        # here so the GN2 -> FiLM -> SiLU -> conv2 path is actually validated.
        "conv2_w": 0.05 * jax.random.normal(ks[8], (3, 3, Cout, Cout), f32),
        "conv2_b": 0.05 * jax.random.normal(ks[9], (1, Cout), f32),
        "conv3_w": 0.05 * jax.random.normal(ks[10], (Cin, Cout), f32),
        "conv3_b": 0.05 * jax.random.normal(ks[11], (1, Cout), f32),
    }


if __name__ == "__main__":
    # ResNetConfig(num_channels=32, output_channels=64, num_groups_norm=8)
    B, Cin, Cout, H, W, T, G = 2, 32, 64, 16, 16, 32, 8

    key = jax.random.PRNGKey(0)
    kx, kt, kp = jax.random.split(key, 3)
    x = jax.random.normal(kx, (B, Cin, H, W), jnp.float32)           # NCHW input
    temb = jax.random.normal(kt, (B, T), jnp.float32)
    params = init_params(kp, Cin, Cout, T)

    # One-time weight packing; per-call forward is jitted as a whole.
    packed = prepare_params(params, H=H, W=W, num_groups=G)
    fwd = jax.jit(resnet_forward)

    out = jax.block_until_ready(fwd(x, temb, packed))
    ref = jax.block_until_ready(resnet_reference(x, temb, params, num_groups=G))

    assert out.shape == (B, Cout, H, W), out.shape
    max_err = float(jnp.max(jnp.abs(out - ref)))
    assert max_err < 5e-2, f"max abs error {max_err}"

    print("KERNEL_OK")
</pallas_src>

<mosaic_0001>
module attributes {stable_mosaic.version = 11 : i64} {
  func.func @resnet_kernel(%arg0: i32, %arg1: memref<1x256x32xf32, #tpu.memory_space<vmem>>, %arg2: memref<1x2x64xf32, #tpu.memory_space<vmem>>, %arg3: memref<256x1xi32, #tpu.memory_space<vmem>>, %arg4: memref<256x1xi32, #tpu.memory_space<vmem>>, %arg5: memref<32x32xf32, #tpu.memory_space<vmem>>, %arg6: memref<64x64xf32, #tpu.memory_space<vmem>>, %arg7: memref<1x32xf32, #tpu.memory_space<vmem>>, %arg8: memref<1x32xf32, #tpu.memory_space<vmem>>, %arg9: memref<288x64xbf16, #tpu.memory_space<vmem>>, %arg10: memref<1x64xf32, #tpu.memory_space<vmem>>, %arg11: memref<1x64xf32, #tpu.memory_space<vmem>>, %arg12: memref<1x64xf32, #tpu.memory_space<vmem>>, %arg13: memref<576x128xbf16, #tpu.memory_space<vmem>>, %arg14: memref<1x128xf32, #tpu.memory_space<vmem>>, %arg15: memref<32x128xbf16, #tpu.memory_space<vmem>>, %arg16: memref<1x128xf32, #tpu.memory_space<vmem>>, %arg17: memref<1x256x128xf32, #tpu.memory_space<vmem>>) attributes {dimension_semantics = [#tpu.dimension_semantics<parallel>], iteration_bounds = array<i64: 2>, scalar_prefetch = 0 : i64, scratch_operands = 0 : i64, tpu.core_type = #tpu.core_type<tc>, window_params = [{transform_indices = @transform_0, window_bounds = array<i64: 1, 256, 32>}, {transform_indices = @transform_1, window_bounds = array<i64: 1, 2, 64>}, {pipeline_mode = #tpu.pipeline_mode<synchronous>, transform_indices = @transform_2, window_bounds = array<i64: 256, 1>}, {pipeline_mode = #tpu.pipeline_mode<synchronous>, transform_indices = @transform_3, window_bounds = array<i64: 256, 1>}, {pipeline_mode = #tpu.pipeline_mode<synchronous>, transform_indices = @transform_4, window_bounds = array<i64: 32, 32>}, {pipeline_mode = #tpu.pipeline_mode<synchronous>, transform_indices = @transform_5, window_bounds = array<i64: 64, 64>}, {pipeline_mode = #tpu.pipeline_mode<synchronous>, transform_indices = @transform_6, window_bounds = array<i64: 1, 32>}, {pipeline_mode = #tpu.pipeline_mode<synchronous>, transform_indices = @transform_7, window_bounds = array<i64: 1, 32>}, {pipeline_mode = #tpu.pipeline_mode<synchronous>, transform_indices = @transform_8, window_bounds = array<i64: 288, 64>}, {pipeline_mode = #tpu.pipeline_mode<synchronous>, transform_indices = @transform_9, window_bounds = array<i64: 1, 64>}, {pipeline_mode = #tpu.pipeline_mode<synchronous>, transform_indices = @transform_10, window_bounds = array<i64: 1, 64>}, {pipeline_mode = #tpu.pipeline_mode<synchronous>, transform_indices = @transform_11, window_bounds = array<i64: 1, 64>}, {pipeline_mode = #tpu.pipeline_mode<synchronous>, transform_indices = @transform_12, window_bounds = array<i64: 576, 128>}, {pipeline_mode = #tpu.pipeline_mode<synchronous>, transform_indices = @transform_13, window_bounds = array<i64: 1, 128>}, {pipeline_mode = #tpu.pipeline_mode<synchronous>, transform_indices = @transform_14, window_bounds = array<i64: 32, 128>}, {pipeline_mode = #tpu.pipeline_mode<synchronous>, transform_indices = @transform_15, window_bounds = array<i64: 1, 128>}, {transform_indices = @transform_16, window_bounds = array<i64: 1, 256, 128>}]} {
    %c0 = arith.constant 0 : index
    %c0_0 = arith.constant 0 : index
    %0 = vector.load %arg3[%c0, %c0_0] : memref<256x1xi32, #tpu.memory_space<vmem>>, vector<256x1xi32>
    %c0_1 = arith.constant 0 : index
    %c0_2 = arith.constant 0 : index
    %1 = vector.load %arg4[%c0_1, %c0_2] : memref<256x1xi32, #tpu.memory_space<vmem>>, vector<256x1xi32>
    %c0_3 = arith.constant 0 : index
    %c0_4 = arith.constant 0 : index
    %c0_5 = arith.constant 0 : index
    %2 = vector.load %arg1[%c0_3, %c0_4, %c0_5] : memref<1x256x32xf32, #tpu.memory_space<vmem>>, vector<1x256x32xf32>
    %3 = vector.shape_cast %2 : vector<1x256x32xf32> to vector<256x32xf32>
    %c0_6 = arith.constant 0 : index
    %c0_7 = arith.constant 0 : index
    %4 = vector.load %arg7[%c0_6, %c0_7] : memref<1x32xf32, #tpu.memory_space<vmem>>, vector<1x32xf32>
    %c0_8 = arith.constant 0 : index
    %c0_9 = arith.constant 0 : index
    %5 = vector.load %arg8[%c0_8, %c0_9] : memref<1x32xf32, #tpu.memory_space<vmem>>, vector<1x32xf32>
    %c0_10 = arith.constant 0 : index
    %c0_11 = arith.constant 0 : index
    %6 = vector.load %arg5[%c0_10, %c0_11] : memref<32x32xf32, #tpu.memory_space<vmem>>, vector<32x32xf32>
    %cst = arith.constant dense<0.000000e+00> : vector<32xf32>
    %7 = vector.multi_reduction <add>, %3, %cst [0] : vector<256x32xf32> to vector<32xf32>
    %8 = vector.shape_cast %7 : vector<32xf32> to vector<1x32xf32>
    %cst_12 = arith.constant dense<0.000000e+00> : vector<1x32xf32>
    %9 = tpu.matmul %8, %6, %cst_12 {dimension_numbers = #tpu.dot_dimension_numbers<[1], [0], [0], [1], [0, 0, 1, 1], [], []>} : vector<1x32xf32>, vector<32x32xf32>, vector<1x32xf32> -> vector<1x32xf32>
    %10 = vector.broadcast %9 : vector<1x32xf32> to vector<256x32xf32>
    %11 = arith.subf %3, %10 : vector<256x32xf32>
    %12 = arith.mulf %11, %11 : vector<256x32xf32>
    %cst_13 = arith.constant dense<0.000000e+00> : vector<32xf32>
    %13 = vector.multi_reduction <add>, %12, %cst_13 [0] : vector<256x32xf32> to vector<32xf32>
    %14 = vector.shape_cast %13 : vector<32xf32> to vector<1x32xf32>
    %cst_14 = arith.constant dense<0.000000e+00> : vector<1x32xf32>
    %15 = tpu.matmul %14, %6, %cst_14 {dimension_numbers = #tpu.dot_dimension_numbers<[1], [0], [0], [1], [0, 0, 1, 1], [], []>} : vector<1x32xf32>, vector<32x32xf32>, vector<1x32xf32> -> vector<1x32xf32>
    %cst_15 = arith.constant 9.99999974E-6 : f32
    %16 = vector.broadcast %cst_15 : f32 to vector<1x32xf32>
    %17 = arith.addf %15, %16 : vector<1x32xf32>
    %18 = math.rsqrt %17 : vector<1x32xf32>
    %19 = vector.broadcast %18 : vector<1x32xf32> to vector<256x32xf32>
    %20 = arith.mulf %11, %19 : vector<256x32xf32>
    %21 = vector.broadcast %4 : vector<1x32xf32> to vector<256x32xf32>
    %22 = arith.mulf %20, %21 : vector<256x32xf32>
    %23 = vector.broadcast %5 : vector<1x32xf32> to vector<256x32xf32>
    %24 = arith.addf %22, %23 : vector<256x32xf32>
    %25 = arith.negf %24 : vector<256x32xf32>
    %26 = math.exp %25 : vector<256x32xf32>
    %cst_16 = arith.constant 1.000000e+00 : f32
    %27 = vector.broadcast %cst_16 : f32 to vector<256x32xf32>
    %28 = arith.addf %27, %26 : vector<256x32xf32>
    %29 = arith.divf %27, %28 : vector<256x32xf32>
    %30 = arith.mulf %24, %29 : vector<256x32xf32>
    %c0_17 = arith.constant 0 : index
    %c0_18 = arith.constant 0 : index
    %31 = vector.load %arg10[%c0_17, %c0_18] : memref<1x64xf32, #tpu.memory_space<vmem>>, vector<1x64xf32>
    %c17_i32 = arith.constant 17 : i32
    %32 = tpu.dynamic_rotate %30 by %c17_i32 dim 0 : vector<256x32xf32>, i32 -> vector<256x32xf32>
    %c1_i32 = arith.constant 1 : i32
    %33 = vector.broadcast %c1_i32 : i32 to vector<256x1xi32>
    %34 = arith.cmpi sge, %0, %33 : vector<256x1xi32>
    %c1_i32_19 = arith.constant 1 : i32
    %35 = vector.broadcast %c1_i32_19 : i32 to vector<256x1xi32>
    %36 = arith.cmpi sge, %1, %35 : vector<256x1xi32>
    %37 = arith.andi %34, %36 : vector<256x1xi1>
    %cst_20 = arith.constant 0.000000e+00 : f32
    %38 = vector.shape_cast %37 : vector<256x1xi1> to vector<256x1xi1>
    %39 = vector.broadcast %38 : vector<256x1xi1> to vector<256x32xi1>
    %40 = vector.broadcast %cst_20 : f32 to vector<256x32xf32>
    %41 = arith.select %39, %32, %40 : vector<256x32xi1>, vector<256x32xf32>
    %42 = arith.truncf %41 : vector<256x32xf32> to vector<256x32xbf16>
    %c16_i32 = arith.constant 16 : i32
    %43 = tpu.dynamic_rotate %30 by %c16_i32 dim 0 : vector<256x32xf32>, i32 -> vector<256x32xf32>
    %c1_i32_21 = arith.constant 1 : i32
    %44 = vector.broadcast %c1_i32_21 : i32 to vector<256x1xi32>
    %45 = arith.cmpi sge, %0, %44 : vector<256x1xi32>
    %cst_22 = arith.constant 0.000000e+00 : f32
    %46 = vector.shape_cast %45 : vector<256x1xi1> to vector<256x1xi1>
    %47 = vector.broadcast %46 : vector<256x1xi1> to vector<256x32xi1>
    %48 = vector.broadcast %cst_22 : f32 to vector<256x32xf32>
    %49 = arith.select %47, %43, %48 : vector<256x32xi1>, vector<256x32xf32>
    %50 = arith.truncf %49 : vector<256x32xf32> to vector<256x32xbf16>
    %c15_i32 = arith.constant 15 : i32
    %51 = tpu.dynamic_rotate %30 by %c15_i32 dim 0 : vector<256x32xf32>, i32 -> vector<256x32xf32>
    %c1_i32_23 = arith.constant 1 : i32
    %52 = vector.broadcast %c1_i32_23 : i32 to vector<256x1xi32>
    %53 = arith.cmpi sge, %0, %52 : vector<256x1xi32>
    %c15_i32_24 = arith.constant 15 : i32
    %54 = vector.broadcast %c15_i32_24 : i32 to vector<256x1xi32>
    %55 = arith.cmpi slt, %1, %54 : vector<256x1xi32>
    %56 = arith.andi %53, %55 : vector<256x1xi1>
    %cst_25 = arith.constant 0.000000e+00 : f32
    %57 = vector.shape_cast %56 : vector<256x1xi1> to vector<256x1xi1>
    %58 = vector.broadcast %57 : vector<256x1xi1> to vector<256x32xi1>
    %59 = vector.broadcast %cst_25 : f32 to vector<256x32xf32>
    %60 = arith.select %58, %51, %59 : vector<256x32xi1>, vector<256x32xf32>
    %61 = arith.truncf %60 : vector<256x32xf32> to vector<256x32xbf16>
    %62 = tpu.concatenate %42, %50, %61 in 1 : vector<256x32xbf16>, vector<256x32xbf16>, vector<256x32xbf16> -> vector<256x96xbf16>
    %c0_26 = arith.constant 0 : index
    %c0_27 = arith.constant 0 : index
    %63 = vector.load %arg9[%c0_26, %c0_27] : memref<288x64xbf16, #tpu.memory_space<vmem>>, vector<96x64xbf16>
    %cst_28 = arith.constant dense<0.000000e+00> : vector<256x64xf32>
    %64 = tpu.matmul %62, %63, %cst_28 {dimension_numbers = #tpu.dot_dimension_numbers<[1], [0], [0], [1], [0, 0, 1, 1], [], []>} : vector<256x96xbf16>, vector<96x64xbf16>, vector<256x64xf32> -> vector<256x64xf32>
    %c1_i32_29 = arith.constant 1 : i32
    %65 = tpu.dynamic_rotate %30 by %c1_i32_29 dim 0 : vector<256x32xf32>, i32 -> vector<256x32xf32>
    %c1_i32_30 = arith.constant 1 : i32
    %66 = vector.broadcast %c1_i32_30 : i32 to vector<256x1xi32>
    %67 = arith.cmpi sge, %1, %66 : vector<256x1xi32>
    %cst_31 = arith.constant 0.000000e+00 : f32
    %68 = vector.shape_cast %67 : vector<256x1xi1> to vector<256x1xi1>
    %69 = vector.broadcast %68 : vector<256x1xi1> to vector<256x32xi1>
    %70 = vector.broadcast %cst_31 : f32 to vector<256x32xf32>
    %71 = arith.select %69, %65, %70 : vector<256x32xi1>, vector<256x32xf32>
    %72 = arith.truncf %71 : vector<256x32xf32> to vector<256x32xbf16>
    %73 = arith.truncf %30 : vector<256x32xf32> to vector<256x32xbf16>
    %c255_i32 = arith.constant 255 : i32
    %74 = tpu.dynamic_rotate %30 by %c255_i32 dim 0 : vector<256x32xf32>, i32 -> vector<256x32xf32>
    %c15_i32_32 = arith.constant 15 : i32
    %75 = vector.broadcast %c15_i32_32 : i32 to vector<256x1xi32>
    %76 = arith.cmpi slt, %1, %75 : vector<256x1xi32>
    %cst_33 = arith.constant 0.000000e+00 : f32
    %77 = vector.shape_cast %76 : vector<256x1xi1> to vector<256x1xi1>
    %78 = vector.broadcast %77 : vector<256x1xi1> to vector<256x32xi1>
    %79 = vector.broadcast %cst_33 : f32 to vector<256x32xf32>
    %80 = arith.select %78, %74, %79 : vector<256x32xi1>, vector<256x32xf32>
    %81 = arith.truncf %80 : vector<256x32xf32> to vector<256x32xbf16>
    %82 = tpu.concatenate %72, %73, %81 in 1 : vector<256x32xbf16>, vector<256x32xbf16>, vector<256x32xbf16> -> vector<256x96xbf16>
    %c96 = arith.constant 96 : index
    %c0_34 = arith.constant 0 : index
    %83 = vector.load %arg9[%c96, %c0_34] : memref<288x64xbf16, #tpu.memory_space<vmem>>, vector<96x64xbf16>
    %cst_35 = arith.constant dense<0.000000e+00> : vector<256x64xf32>
    %84 = tpu.matmul %82, %83, %cst_35 {dimension_numbers = #tpu.dot_dimension_numbers<[1], [0], [0], [1], [0, 0, 1, 1], [], []>} : vector<256x96xbf16>, vector<96x64xbf16>, vector<256x64xf32> -> vector<256x64xf32>
    %85 = arith.addf %64, %84 : vector<256x64xf32>
    %c241_i32 = arith.constant 241 : i32
    %86 = tpu.dynamic_rotate %30 by %c241_i32 dim 0 : vector<256x32xf32>, i32 -> vector<256x32xf32>
    %c15_i32_36 = arith.constant 15 : i32
    %87 = vector.broadcast %c15_i32_36 : i32 to vector<256x1xi32>
    %88 = arith.cmpi slt, %0, %87 : vector<256x1xi32>
    %c1_i32_37 = arith.constant 1 : i32
    %89 = vector.broadcast %c1_i32_37 : i32 to vector<256x1xi32>
    %90 = arith.cmpi sge, %1, %89 : vector<256x1xi32>
    %91 = arith.andi %88, %90 : vector<256x1xi1>
    %cst_38 = arith.constant 0.000000e+00 : f32
    %92 = vector.shape_cast %91 : vector<256x1xi1> to vector<256x1xi1>
    %93 = vector.broadcast %92 : vector<256x1xi1> to vector<256x32xi1>
    %94 = vector.broadcast %cst_38 : f32 to vector<256x32xf32>
    %95 = arith.select %93, %86, %94 : vector<256x32xi1>, vector<256x32xf32>
    %96 = arith.truncf %95 : vector<256x32xf32> to vector<256x32xbf16>
    %c240_i32 = arith.constant 240 : i32
    %97 = tpu.dynamic_rotate %30 by %c240_i32 dim 0 : vector<256x32xf32>, i32 -> vector<256x32xf32>
    %c15_i32_39 = arith.constant 15 : i32
    %98 = vector.broadcast %c15_i32_39 : i32 to vector<256x1xi32>
    %99 = arith.cmpi slt, %0, %98 : vector<256x1xi32>
    %cst_40 = arith.constant 0.000000e+00 : f32
    %100 = vector.shape_cast %99 : vector<256x1xi1> to vector<256x1xi1>
    %101 = vector.broadcast %100 : vector<256x1xi1> to vector<256x32xi1>
    %102 = vector.broadcast %cst_40 : f32 to vector<256x32xf32>
    %103 = arith.select %101, %97, %102 : vector<256x32xi1>, vector<256x32xf32>
    %104 = arith.truncf %103 : vector<256x32xf32> to vector<256x32xbf16>
    %c239_i32 = arith.constant 239 : i32
    %105 = tpu.dynamic_rotate %30 by %c239_i32 dim 0 : vector<256x32xf32>, i32 -> vector<256x32xf32>
    %c15_i32_41 = arith.constant 15 : i32
    %106 = vector.broadcast %c15_i32_41 : i32 to vector<256x1xi32>
    %107 = arith.cmpi slt, %0, %106 : vector<256x1xi32>
    %c15_i32_42 = arith.constant 15 : i32
    %108 = vector.broadcast %c15_i32_42 : i32 to vector<256x1xi32>
    %109 = arith.cmpi slt, %1, %108 : vector<256x1xi32>
    %110 = arith.andi %107, %109 : vector<256x1xi1>
    %cst_43 = arith.constant 0.000000e+00 : f32
    %111 = vector.shape_cast %110 : vector<256x1xi1> to vector<256x1xi1>
    %112 = vector.broadcast %111 : vector<256x1xi1> to vector<256x32xi1>
    %113 = vector.broadcast %cst_43 : f32 to vector<256x32xf32>
    %114 = arith.select %112, %105, %113 : vector<256x32xi1>, vector<256x32xf32>
    %115 = arith.truncf %114 : vector<256x32xf32> to vector<256x32xbf16>
    %116 = tpu.concatenate %96, %104, %115 in 1 : vector<256x32xbf16>, vector<256x32xbf16>, vector<256x32xbf16> -> vector<256x96xbf16>
    %c192 = arith.constant 192 : index
    %c0_44 = arith.constant 0 : index
    %117 = vector.load %arg9[%c192, %c0_44] : memref<288x64xbf16, #tpu.memory_space<vmem>>, vector<96x64xbf16>
    %cst_45 = arith.constant dense<0.000000e+00> : vector<256x64xf32>
    %118 = tpu.matmul %116, %117, %cst_45 {dimension_numbers = #tpu.dot_dimension_numbers<[1], [0], [0], [1], [0, 0, 1, 1], [], []>} : vector<256x96xbf16>, vector<96x64xbf16>, vector<256x64xf32> -> vector<256x64xf32>
    %119 = arith.addf %85, %118 : vector<256x64xf32>
    %120 = vector.broadcast %31 : vector<1x64xf32> to vector<256x64xf32>
    %121 = arith.addf %119, %120 : vector<256x64xf32>
    %c0_46 = arith.constant 0 : index
    %c0_47 = arith.constant 0 : index
    %c0_48 = arith.constant 0 : index
    %122 = vector.load %arg2[%c0_46, %c0_47, %c0_48] : memref<1x2x64xf32, #tpu.memory_space<vmem>>, vector<1x2x64xf32>
    %123 = vector.shape_cast %122 : vector<1x2x64xf32> to vector<2x64xf32>
    %124 = vector.extract_strided_slice %123 {offsets = [0, 0], sizes = [1, 64], strides = [1, 1]} : vector<2x64xf32> to vector<1x64xf32>
    %125 = vector.extract_strided_slice %123 {offsets = [1, 0], sizes = [1, 64], strides = [1, 1]} : vector<2x64xf32> to vector<1x64xf32>
    %c0_49 = arith.constant 0 : index
    %c0_50 = arith.constant 0 : index
    %126 = vector.load %arg11[%c0_49, %c0_50] : memref<1x64xf32, #tpu.memory_space<vmem>>, vector<1x64xf32>
    %c0_51 = arith.constant 0 : index
    %c0_52 = arith.constant 0 : index
    %127 = vector.load %arg12[%c0_51, %c0_52] : memref<1x64xf32, #tpu.memory_space<vmem>>, vector<1x64xf32>
    %c0_53 = arith.constant 0 : index
    %c0_54 = arith.constant 0 : index
    %128 = vector.load %arg6[%c0_53, %c0_54] : memref<64x64xf32, #tpu.memory_space<vmem>>, vector<64x64xf32>
    %cst_55 = arith.constant dense<0.000000e+00> : vector<64xf32>
    %129 = vector.multi_reduction <add>, %121, %cst_55 [0] : vector<256x64xf32> to vector<64xf32>
    %130 = vector.shape_cast %129 : vector<64xf32> to vector<1x64xf32>
    %cst_56 = arith.constant dense<0.000000e+00> : vector<1x64xf32>
    %131 = tpu.matmul %130, %128, %cst_56 {dimension_numbers = #tpu.dot_dimension_numbers<[1], [0], [0], [1], [0, 0, 1, 1], [], []>} : vector<1x64xf32>, vector<64x64xf32>, vector<1x64xf32> -> vector<1x64xf32>
    %132 = vector.broadcast %131 : vector<1x64xf32> to vector<256x64xf32>
    %133 = arith.subf %121, %132 : vector<256x64xf32>
    %134 = arith.mulf %133, %133 : vector<256x64xf32>
    %cst_57 = arith.constant dense<0.000000e+00> : vector<64xf32>
    %135 = vector.multi_reduction <add>, %134, %cst_57 [0] : vector<256x64xf32> to vector<64xf32>
    %136 = vector.shape_cast %135 : vector<64xf32> to vector<1x64xf32>
    %cst_58 = arith.constant dense<0.000000e+00> : vector<1x64xf32>
    %137 = tpu.matmul %136, %128, %cst_58 {dimension_numbers = #tpu.dot_dimension_numbers<[1], [0], [0], [1], [0, 0, 1, 1], [], []>} : vector<1x64xf32>, vector<64x64xf32>, vector<1x64xf32> -> vector<1x64xf32>
    %cst_59 = arith.constant 9.99999974E-6 : f32
    %138 = vector.broadcast %cst_59 : f32 to vector<1x64xf32>
    %139 = arith.addf %137, %138 : vector<1x64xf32>
    %140 = math.rsqrt %139 : vector<1x64xf32>
    %141 = vector.broadcast %140 : vector<1x64xf32> to vector<256x64xf32>
    %142 = arith.mulf %133, %141 : vector<256x64xf32>
    %143 = vector.broadcast %126 : vector<1x64xf32> to vector<256x64xf32>
    %144 = arith.mulf %142, %143 : vector<256x64xf32>
    %145 = vector.broadcast %127 : vector<1x64xf32> to vector<256x64xf32>
    %146 = arith.addf %144, %145 : vector<256x64xf32>
    %cst_60 = arith.constant 1.000000e+00 : f32
    %147 = vector.broadcast %cst_60 : f32 to vector<1x64xf32>
    %148 = arith.addf %147, %124 : vector<1x64xf32>
    %149 = vector.broadcast %148 : vector<1x64xf32> to vector<256x64xf32>
    %150 = arith.mulf %146, %149 : vector<256x64xf32>
    %151 = vector.broadcast %125 : vector<1x64xf32> to vector<256x64xf32>
    %152 = arith.addf %150, %151 : vector<256x64xf32>
    %153 = arith.negf %152 : vector<256x64xf32>
    %154 = math.exp %153 : vector<256x64xf32>
    %cst_61 = arith.constant 1.000000e+00 : f32
    %155 = vector.broadcast %cst_61 : f32 to vector<256x64xf32>
    %156 = arith.addf %155, %154 : vector<256x64xf32>
    %157 = arith.divf %155, %156 : vector<256x64xf32>
    %158 = arith.mulf %152, %157 : vector<256x64xf32>
    %c0_62 = arith.constant 0 : index
    %c0_63 = arith.constant 0 : index
    %159 = vector.load %arg14[%c0_62, %c0_63] : memref<1x128xf32, #tpu.memory_space<vmem>>, vector<1x128xf32>
    %c17_i32_64 = arith.constant 17 : i32
    %160 = tpu.dynamic_rotate %158 by %c17_i32_64 dim 0 : vector<256x64xf32>, i32 -> vector<256x64xf32>
    %c1_i32_65 = arith.constant 1 : i32
    %161 = vector.broadcast %c1_i32_65 : i32 to vector<256x1xi32>
    %162 = arith.cmpi sge, %0, %161 : vector<256x1xi32>
    %c1_i32_66 = arith.constant 1 : i32
    %163 = vector.broadcast %c1_i32_66 : i32 to vector<256x1xi32>
    %164 = arith.cmpi sge, %1, %163 : vector<256x1xi32>
    %165 = arith.andi %162, %164 : vector<256x1xi1>
    %cst_67 = arith.constant 0.000000e+00 : f32
    %166 = vector.shape_cast %165 : vector<256x1xi1> to vector<256x1xi1>
    %167 = vector.broadcast %166 : vector<256x1xi1> to vector<256x64xi1>
    %168 = vector.broadcast %cst_67 : f32 to vector<256x64xf32>
    %169 = arith.select %167, %160, %168 : vector<256x64xi1>, vector<256x64xf32>
    %170 = arith.truncf %169 : vector<256x64xf32> to vector<256x64xbf16>
    %c16_i32_68 = arith.constant 16 : i32
    %171 = tpu.dynamic_rotate %158 by %c16_i32_68 dim 0 : vector<256x64xf32>, i32 -> vector<256x64xf32>
    %c1_i32_69 = arith.constant 1 : i32
    %172 = vector.broadcast %c1_i32_69 : i32 to vector<256x1xi32>
    %173 = arith.cmpi sge, %0, %172 : vector<256x1xi32>
    %cst_70 = arith.constant 0.000000e+00 : f32
    %174 = vector.shape_cast %173 : vector<256x1xi1> to vector<256x1xi1>
    %175 = vector.broadcast %174 : vector<256x1xi1> to vector<256x64xi1>
    %176 = vector.broadcast %cst_70 : f32 to vector<256x64xf32>
    %177 = arith.select %175, %171, %176 : vector<256x64xi1>, vector<256x64xf32>
    %178 = arith.truncf %177 : vector<256x64xf32> to vector<256x64xbf16>
    %c15_i32_71 = arith.constant 15 : i32
    %179 = tpu.dynamic_rotate %158 by %c15_i32_71 dim 0 : vector<256x64xf32>, i32 -> vector<256x64xf32>
    %c1_i32_72 = arith.constant 1 : i32
    %180 = vector.broadcast %c1_i32_72 : i32 to vector<256x1xi32>
    %181 = arith.cmpi sge, %0, %180 : vector<256x1xi32>
    %c15_i32_73 = arith.constant 15 : i32
    %182 = vector.broadcast %c15_i32_73 : i32 to vector<256x1xi32>
    %183 = arith.cmpi slt, %1, %182 : vector<256x1xi32>
    %184 = arith.andi %181, %183 : vector<256x1xi1>
    %cst_74 = arith.constant 0.000000e+00 : f32
    %185 = vector.shape_cast %184 : vector<256x1xi1> to vector<256x1xi1>
    %186 = vector.broadcast %185 : vector<256x1xi1> to vector<256x64xi1>
    %187 = vector.broadcast %cst_74 : f32 to vector<256x64xf32>
    %188 = arith.select %186, %179, %187 : vector<256x64xi1>, vector<256x64xf32>
    %189 = arith.truncf %188 : vector<256x64xf32> to vector<256x64xbf16>
    %190 = tpu.concatenate %170, %178, %189 in 1 : vector<256x64xbf16>, vector<256x64xbf16>, vector<256x64xbf16> -> vector<256x192xbf16>
    %c0_75 = arith.constant 0 : index
    %c0_76 = arith.constant 0 : index
    %191 = vector.load %arg13[%c0_75, %c0_76] : memref<576x128xbf16, #tpu.memory_space<vmem>>, vector<192x128xbf16>
    %cst_77 = arith.constant dense<0.000000e+00> : vector<256x128xf32>
    %192 = tpu.matmul %190, %191, %cst_77 {dimension_numbers = #tpu.dot_dimension_numbers<[1], [0], [0], [1], [0, 0, 1, 1], [], []>} : vector<256x192xbf16>, vector<192x128xbf16>, vector<256x128xf32> -> vector<256x128xf32>
    %c1_i32_78 = arith.constant 1 : i32
    %193 = tpu.dynamic_rotate %158 by %c1_i32_78 dim 0 : vector<256x64xf32>, i32 -> vector<256x64xf32>
    %c1_i32_79 = arith.constant 1 : i32
    %194 = vector.broadcast %c1_i32_79 : i32 to vector<256x1xi32>
    %195 = arith.cmpi sge, %1, %194 : vector<256x1xi32>
    %cst_80 = arith.constant 0.000000e+00 : f32
    %196 = vector.shape_cast %195 : vector<256x1xi1> to vector<256x1xi1>
    %197 = vector.broadcast %196 : vector<256x1xi1> to vector<256x64xi1>
    %198 = vector.broadcast %cst_80 : f32 to vector<256x64xf32>
    %199 = arith.select %197, %193, %198 : vector<256x64xi1>, vector<256x64xf32>
    %200 = arith.truncf %199 : vector<256x64xf32> to vector<256x64xbf16>
    %201 = arith.truncf %158 : vector<256x64xf32> to vector<256x64xbf16>
    %c255_i32_81 = arith.constant 255 : i32
    %202 = tpu.dynamic_rotate %158 by %c255_i32_81 dim 0 : vector<256x64xf32>, i32 -> vector<256x64xf32>
    %c15_i32_82 = arith.constant 15 : i32
    %203 = vector.broadcast %c15_i32_82 : i32 to vector<256x1xi32>
    %204 = arith.cmpi slt, %1, %203 : vector<256x1xi32>
    %cst_83 = arith.constant 0.000000e+00 : f32
    %205 = vector.shape_cast %204 : vector<256x1xi1> to vector<256x1xi1>
    %206 = vector.broadcast %205 : vector<256x1xi1> to vector<256x64xi1>
    %207 = vector.broadcast %cst_83 : f32 to vector<256x64xf32>
    %208 = arith.select %206, %202, %207 : vector<256x64xi1>, vector<256x64xf32>
    %209 = arith.truncf %208 : vector<256x64xf32> to vector<256x64xbf16>
    %210 = tpu.concatenate %200, %201, %209 in 1 : vector<256x64xbf16>, vector<256x64xbf16>, vector<256x64xbf16> -> vector<256x192xbf16>
    %c192_84 = arith.constant 192 : index
    %c0_85 = arith.constant 0 : index
    %211 = vector.load %arg13[%c192_84, %c0_85] : memref<576x128xbf16, #tpu.memory_space<vmem>>, vector<192x128xbf16>
    %cst_86 = arith.constant dense<0.000000e+00> : vector<256x128xf32>
    %212 = tpu.matmul %210, %211, %cst_86 {dimension_numbers = #tpu.dot_dimension_numbers<[1], [0], [0], [1], [0, 0, 1, 1], [], []>} : vector<256x192xbf16>, vector<192x128xbf16>, vector<256x128xf32> -> vector<256x128xf32>
    %213 = arith.addf %192, %212 : vector<256x128xf32>
    %c241_i32_87 = arith.constant 241 : i32
    %214 = tpu.dynamic_rotate %158 by %c241_i32_87 dim 0 : vector<256x64xf32>, i32 -> vector<256x64xf32>
    %c15_i32_88 = arith.constant 15 : i32
    %215 = vector.broadcast %c15_i32_88 : i32 to vector<256x1xi32>
    %216 = arith.cmpi slt, %0, %215 : vector<256x1xi32>
    %c1_i32_89 = arith.constant 1 : i32
    %217 = vector.broadcast %c1_i32_89 : i32 to vector<256x1xi32>
    %218 = arith.cmpi sge, %1, %217 : vector<256x1xi32>
    %219 = arith.andi %216, %218 : vector<256x1xi1>
    %cst_90 = arith.constant 0.000000e+00 : f32
    %220 = vector.shape_cast %219 : vector<256x1xi1> to vector<256x1xi1>
    %221 = vector.broadcast %220 : vector<256x1xi1> to vector<256x64xi1>
    %222 = vector.broadcast %cst_90 : f32 to vector<256x64xf32>
    %223 = arith.select %221, %214, %222 : vector<256x64xi1>, vector<256x64xf32>
    %224 = arith.truncf %223 : vector<256x64xf32> to vector<256x64xbf16>
    %c240_i32_91 = arith.constant 240 : i32
    %225 = tpu.dynamic_rotate %158 by %c240_i32_91 dim 0 : vector<256x64xf32>, i32 -> vector<256x64xf32>
    %c15_i32_92 = arith.constant 15 : i32
    %226 = vector.broadcast %c15_i32_92 : i32 to vector<256x1xi32>
    %227 = arith.cmpi slt, %0, %226 : vector<256x1xi32>
    %cst_93 = arith.constant 0.000000e+00 : f32
    %228 = vector.shape_cast %227 : vector<256x1xi1> to vector<256x1xi1>
    %229 = vector.broadcast %228 : vector<256x1xi1> to vector<256x64xi1>
    %230 = vector.broadcast %cst_93 : f32 to vector<256x64xf32>
    %231 = arith.select %229, %225, %230 : vector<256x64xi1>, vector<256x64xf32>
    %232 = arith.truncf %231 : vector<256x64xf32> to vector<256x64xbf16>
    %c239_i32_94 = arith.constant 239 : i32
    %233 = tpu.dynamic_rotate %158 by %c239_i32_94 dim 0 : vector<256x64xf32>, i32 -> vector<256x64xf32>
    %c15_i32_95 = arith.constant 15 : i32
    %234 = vector.broadcast %c15_i32_95 : i32 to vector<256x1xi32>
    %235 = arith.cmpi slt, %0, %234 : vector<256x1xi32>
    %c15_i32_96 = arith.constant 15 : i32
    %236 = vector.broadcast %c15_i32_96 : i32 to vector<256x1xi32>
    %237 = arith.cmpi slt, %1, %236 : vector<256x1xi32>
    %238 = arith.andi %235, %237 : vector<256x1xi1>
    %cst_97 = arith.constant 0.000000e+00 : f32
    %239 = vector.shape_cast %238 : vector<256x1xi1> to vector<256x1xi1>
    %240 = vector.broadcast %239 : vector<256x1xi1> to vector<256x64xi1>
    %241 = vector.broadcast %cst_97 : f32 to vector<256x64xf32>
    %242 = arith.select %240, %233, %241 : vector<256x64xi1>, vector<256x64xf32>
    %243 = arith.truncf %242 : vector<256x64xf32> to vector<256x64xbf16>
    %244 = tpu.concatenate %224, %232, %243 in 1 : vector<256x64xbf16>, vector<256x64xbf16>, vector<256x64xbf16> -> vector<256x192xbf16>
    %c384 = arith.constant 384 : index
    %c0_98 = arith.constant 0 : index
    %245 = vector.load %arg13[%c384, %c0_98] : memref<576x128xbf16, #tpu.memory_space<vmem>>, vector<192x128xbf16>
    %cst_99 = arith.constant dense<0.000000e+00> : vector<256x128xf32>
    %246 = tpu.matmul %244, %245, %cst_99 {dimension_numbers = #tpu.dot_dimension_numbers<[1], [0], [0], [1], [0, 0, 1, 1], [], []>} : vector<256x192xbf16>, vector<192x128xbf16>, vector<256x128xf32> -> vector<256x128xf32>
    %247 = arith.addf %213, %246 : vector<256x128xf32>
    %248 = vector.broadcast %159 : vector<1x128xf32> to vector<256x128xf32>
    %249 = arith.addf %247, %248 : vector<256x128xf32>
    %250 = arith.truncf %3 : vector<256x32xf32> to vector<256x32xbf16>
    %c0_100 = arith.constant 0 : index
    %c0_101 = arith.constant 0 : index
    %251 = vector.load %arg15[%c0_100, %c0_101] : memref<32x128xbf16, #tpu.memory_space<vmem>>, vector<32x128xbf16>
    %cst_102 = arith.constant dense<0.000000e+00> : vector<256x128xf32>
    %252 = tpu.matmul %250, %251, %cst_102 {dimension_numbers = #tpu.dot_dimension_numbers<[1], [0], [0], [1], [0, 0, 1, 1], [], []>} : vector<256x32xbf16>, vector<32x128xbf16>, vector<256x128xf32> -> vector<256x128xf32>
    %c0_103 = arith.constant 0 : index
    %c0_104 = arith.constant 0 : index
    %253 = vector.load %arg16[%c0_103, %c0_104] : memref<1x128xf32, #tpu.memory_space<vmem>>, vector<1x128xf32>
    %254 = vector.broadcast %253 : vector<1x128xf32> to vector<256x128xf32>
    %255 = arith.addf %252, %254 : vector<256x128xf32>
    %256 = arith.addf %249, %255 : vector<256x128xf32>
    %c0_105 = arith.constant 0 : index
    %c0_106 = arith.constant 0 : index
    %c0_107 = arith.constant 0 : index
    %257 = vector.load %arg17[%c0_105, %c0_106, %c0_107] : memref<1x256x128xf32, #tpu.memory_space<vmem>>, vector<1x256x128xf32>
    %258 = vector.shape_cast %257 : vector<1x256x128xf32> to vector<256x128xf32>
    %259 = vector.shape_cast %256 : vector<256x128xf32> to vector<1x256x128xf32>
    tpu.vector_store %arg17[%c0_105, %c0_106, %c0_107], %259 {strides = array<i32>} : memref<1x256x128xf32, #tpu.memory_space<vmem>>, vector<1x256x128xf32>,
    return
  }
  func.func @transform_0(%arg0: i32) -> (i32, i32, i32) {
    %c0_i32 = arith.constant 0 : i32
    %c0_i32_0 = arith.constant 0 : i32
    %c0_i32_1 = arith.constant 0 : i32
    return %arg0, %c0_i32, %c0_i32_0 : i32, i32, i32
  }
  func.func @transform_1(%arg0: i32) -> (i32, i32, i32) {
    %c0_i32 = arith.constant 0 : i32
    %c0_i32_0 = arith.constant 0 : i32
    %c0_i32_1 = arith.constant 0 : i32
    return %arg0, %c0_i32, %c0_i32_0 : i32, i32, i32
  }
  func.func @transform_2(%arg0: i32) -> (i32, i32) {
    %c0_i32 = arith.constant 0 : i32
    %c0_i32_0 = arith.constant 0 : i32
    %c0_i32_1 = arith.constant 0 : i32
    return %c0_i32, %c0_i32_0 : i32, i32
  }
  func.func @transform_3(%arg0: i32) -> (i32, i32) {
    %c0_i32 = arith.constant 0 : i32
    %c0_i32_0 = arith.constant 0 : i32
    %c0_i32_1 = arith.constant 0 : i32
    return %c0_i32, %c0_i32_0 : i32, i32
  }
  func.func @transform_4(%arg0: i32) -> (i32, i32) {
    %c0_i32 = arith.constant 0 : i32
    %c0_i32_0 = arith.constant 0 : i32
    %c0_i32_1 = arith.constant 0 : i32
    return %c0_i32, %c0_i32_0 : i32, i32
  }
  func.func @transform_5(%arg0: i32) -> (i32, i32) {
    %c0_i32 = arith.constant 0 : i32
    %c0_i32_0 = arith.constant 0 : i32
    %c0_i32_1 = arith.constant 0 : i32
    return %c0_i32, %c0_i32_0 : i32, i32
  }
  func.func @transform_6(%arg0: i32) -> (i32, i32) {
    %c0_i32 = arith.constant 0 : i32
    %c0_i32_0 = arith.constant 0 : i32
    %c0_i32_1 = arith.constant 0 : i32
    return %c0_i32, %c0_i32_0 : i32, i32
  }
  func.func @transform_7(%arg0: i32) -> (i32, i32) {
    %c0_i32 = arith.constant 0 : i32
    %c0_i32_0 = arith.constant 0 : i32
    %c0_i32_1 = arith.constant 0 : i32
    return %c0_i32, %c0_i32_0 : i32, i32
  }
  func.func @transform_8(%arg0: i32) -> (i32, i32) {
    %c0_i32 = arith.constant 0 : i32
    %c0_i32_0 = arith.constant 0 : i32
    %c0_i32_1 = arith.constant 0 : i32
    return %c0_i32, %c0_i32_0 : i32, i32
  }
  func.func @transform_9(%arg0: i32) -> (i32, i32) {
    %c0_i32 = arith.constant 0 : i32
    %c0_i32_0 = arith.constant 0 : i32
    %c0_i32_1 = arith.constant 0 : i32
    return %c0_i32, %c0_i32_0 : i32, i32
  }
  func.func @transform_10(%arg0: i32) -> (i32, i32) {
    %c0_i32 = arith.constant 0 : i32
    %c0_i32_0 = arith.constant 0 : i32
    %c0_i32_1 = arith.constant 0 : i32
    return %c0_i32, %c0_i32_0 : i32, i32
  }
  func.func @transform_11(%arg0: i32) -> (i32, i32) {
    %c0_i32 = arith.constant 0 : i32
    %c0_i32_0 = arith.constant 0 : i32
    %c0_i32_1 = arith.constant 0 : i32
    return %c0_i32, %c0_i32_0 : i32, i32
  }
  func.func @transform_12(%arg0: i32) -> (i32, i32) {
    %c0_i32 = arith.constant 0 : i32
    %c0_i32_0 = arith.constant 0 : i32
    %c0_i32_1 = arith.constant 0 : i32
    return %c0_i32, %c0_i32_0 : i32, i32
  }
  func.func @transform_13(%arg0: i32) -> (i32, i32) {
    %c0_i32 = arith.constant 0 : i32
    %c0_i32_0 = arith.constant 0 : i32
    %c0_i32_1 = arith.constant 0 : i32
    return %c0_i32, %c0_i32_0 : i32, i32
  }
  func.func @transform_14(%arg0: i32) -> (i32, i32) {
    %c0_i32 = arith.constant 0 : i32
    %c0_i32_0 = arith.constant 0 : i32
    %c0_i32_1 = arith.constant 0 : i32
    return %c0_i32, %c0_i32_0 : i32, i32
  }
  func.func @transform_15(%arg0: i32) -> (i32, i32) {
    %c0_i32 = arith.constant 0 : i32
    %c0_i32_0 = arith.constant 0 : i32
    %c0_i32_1 = arith.constant 0 : i32
    return %c0_i32, %c0_i32_0 : i32, i32
  }
  func.func @transform_16(%arg0: i32) -> (i32, i32, i32) {
    %c0_i32 = arith.constant 0 : i32
    %c0_i32_0 = arith.constant 0 : i32
    %c0_i32_1 = arith.constant 0 : i32
    return %arg0, %c0_i32, %c0_i32_0 : i32, i32, i32
  }
}

</mosaic_0001>

<llo_original>
// kernel: resnet_forward.1
$region0: #{resnet_forward.1}
  #allocation0 [shape = 'u32[]', space=smem, size = 0x4, offset = 0x4, fixed_abs, tag = 'smem constant byte address 0x4 - core index']
  #allocation1 [shape = 'u32[72,128]{1,0:T(1,128)}', space=vmem, size = 0x9000, scoped, tag = 'internal scratch']
  %s0 = inlined_call_operand.vmem [shape: f32[2,256,32], index: 0, kind: input, shape index: {}]
  %s1 = inlined_call_operand.vmem [shape: f32[2,2,64], index: 1, kind: input, shape index: {}]
  %s2 = inlined_call_operand.vmem [shape: s32[256,1], index: 2, kind: input, shape index: {}]
  %s3 = inlined_call_operand.vmem [shape: s32[256,1], index: 3, kind: input, shape index: {}]
  %s4 = inlined_call_operand.hbm [shape: f32[32,32], index: 4, kind: input, shape index: {}]
  %s5 = inlined_call_operand.hbm [shape: f32[64,64], index: 5, kind: input, shape index: {}]
  %s6 = inlined_call_operand.vmem [shape: f32[1,32], index: 6, kind: input, shape index: {}]
  %s7 = inlined_call_operand.vmem [shape: f32[1,32], index: 7, kind: input, shape index: {}]
  %s8 = inlined_call_operand.vmem [shape: bf16[288,64], index: 8, kind: input, shape index: {}]
  %s9 = inlined_call_operand.vmem [shape: f32[1,64], index: 9, kind: input, shape index: {}]
  %s10 = inlined_call_operand.vmem [shape: f32[1,64], index: 10, kind: input, shape index: {}]
  %s11 = inlined_call_operand.vmem [shape: f32[1,64], index: 11, kind: input, shape index: {}]
  %s12 = inlined_call_operand.vmem [shape: bf16[576,128], index: 12, kind: input, shape index: {}]
  %s13 = inlined_call_operand.vmem [shape: f32[1,128], index: 13, kind: input, shape index: {}]
  %s14 = inlined_call_operand.hbm [shape: bf16[32,128], index: 14, kind: input, shape index: {}]
  %s15 = inlined_call_operand.vmem [shape: f32[1,128], index: 15, kind: input, shape index: {}]
  %s16 = inlined_call_operand.hbm [shape: f32[2,256,128], index: 16, kind: output, shape index: {}]
  %s17 = sld [smem:[#allocation0]]
  $region109: #{resnet_forward.1} parent=0
    _
  %s19 = ssub.s32 1, %s17
  %s20 = scalar_select 0, %s19, %s17
  $region1: #{resnet_forward.1} parent=0
    #allocation2 [shape = 'u8[16384]{0}', space=vmem, size = 0x4000, scoped, tag = 'input window, operand 4, single buffered']
    #allocation3 [shape = 's32[2]{0}', space=sflag, size = 0x8, scoped, tag = 'scoped memory for resnet_forward.1']
    #allocation4 [shape = 's32[2]{0}', space=sflag, size = 0x8, scoped, tag = 'scoped memory for resnet_forward.1']
    #allocation5 [shape = 'u8[32768]{0}', space=vmem, size = 0x8000, scoped, tag = 'input window, operand 5, single buffered']
    #allocation6 [shape = 's32[1]{0}', space=sflag, size = 0x4, scoped, tag = 'scoped memory for resnet_forward.1']
    #allocation7 [shape = 'u8[8192]{0}', space=vmem, size = 0x2000, scoped, tag = 'input window, operand 14, single buffered']
    #allocation8 [shape = 'u8[262144]{0}', space=vmem, size = 0x40000, scoped, tag = 'output window, operand 0']
    %21 = vsyncpa [#allocation3], 0
    %22 = vsyncpa [#allocation6], 0
    %23 = vsyncpa [#allocation4], 0
    %s24 = scalar_lea.sflag [#allocation4], 1
    %25 = vsyncpa %s24, 0
    loop: start=0, step=1, limit=4
    $region2: #{resnet_forward.1} parent=1 // loop_pre_header
      _
    $region3: #{resnet_forward.1} parent=1 // loop_header
      %s27 = sphi 0, %s31
      %p28 = scmp.ge.s32.totalorder %s27, 4
      %s37 = sphi 0, %s39
      %s40 = sphi 0, %s37
      %s41 = sphi 0, %s40
      %s57 = sphi 0, %s41
      %s63 = sphi 0, %s65
      %s66 = sphi 0, %s63
      %s67 = sphi 0, %s66
      %s83 = sphi 0, %s67
      %s87 = sphi 0, %s87
      %s89 = sphi 0, %s87
      %s90 = sphi 0, %s89
      %s104 = sphi 0, %s90
      %s108 = sphi 0, %s108
      %s110 = sphi 0, %s108
      %s111 = sphi 0, %s110
      %s125 = sphi 0, %s111
      %s129 = sphi 0, %s129
      %s131 = sphi 0, %s129
      %s132 = sphi 0, %s131
      %s146 = sphi 0, %s132
      %s150 = sphi 0, %s150
      %s152 = sphi 0, %s150
      %s153 = sphi 0, %s152
      %s167 = sphi 0, %s153
      %s171 = sphi 0, %s171
      %s173 = sphi 0, %s171
      %s174 = sphi 0, %s173
      %s188 = sphi 0, %s174
      %s192 = sphi 0, %s192
      %s194 = sphi 0, %s192
      %s195 = sphi 0, %s194
      %s209 = sphi 0, %s195
      %s213 = sphi 0, %s213
      %s215 = sphi 0, %s213
      %s216 = sphi 0, %s215
      %s230 = sphi 0, %s216
      %s234 = sphi 0, %s234
      %s236 = sphi 0, %s234
      %s237 = sphi 0, %s236
      %s251 = sphi 0, %s237
      %s255 = sphi 0, %s255
      %s257 = sphi 0, %s255
      %s258 = sphi 0, %s257
      %s272 = sphi 0, %s258
      %s276 = sphi 0, %s276
      %s278 = sphi 0, %s276
      %s279 = sphi 0, %s278
      %s293 = sphi 0, %s279
      %s297 = sphi 0, %s297
      %s299 = sphi 0, %s297
      %s300 = sphi 0, %s299
      %s314 = sphi 0, %s300
      %s318 = sphi 0, %s318
      %s320 = sphi 0, %s318
      %s321 = sphi 0, %s320
      %s335 = sphi 0, %s321
      %s339 = sphi 0, %s339
      %s341 = sphi 0, %s339
      %s342 = sphi 0, %s341
      %s356 = sphi 0, %s342
      %s360 = sphi 0, %s360
      %s362 = sphi 0, %s360
      %s363 = sphi 0, %s362
      %s377 = sphi 0, %s363
      %s383 = sphi 0, %s385
      %s386 = sphi 0, %s383
      %s387 = sphi 0, %s386
      %s403 = sphi 0, %s387
    $region4: #{resnet_forward.1} parent=1 // loop_header_branch
      %30 = sbr.rel (%p28) target = $region8
    $region5: #{resnet_forward.1} parent=1 // loop_body
      %s32 = ssub.s32 %s27, 1
      %s33 = ssub.s32 %s27, 2
      %s34 = sadd.s32 %s27, 1
      %s35 = ssub.s32 %s27, %s34
      %p36 = scmp.eq.s32.totalorder %s35, 0
      %s38 = sadd.s32 %s37, 1
      %s39 = scalar_select %p36, %s37, %s38
      %p42 = pneg %p36
      %p43 = scmp.eq.s32.totalorder %s27, 1
      %p44 = por %p42, %p43
      %p45 = scmp.ne.s32.totalorder %s37, %s40
      %p46 = scmp.eq.s32.totalorder %s27, 0
      %p47 = por %p45, %p46
      %p48 = scmp.ne.s32.totalorder %s37, %s40
      %p49 = scmp.eq.s32.totalorder %s32, 1
      %p50 = por %p48, %p49
      %p51 = scmp.ne.s32.totalorder %s40, %s41
      %p52 = scmp.eq.s32.totalorder %s32, 0
      %p53 = por %p51, %p52
      %p54 = scmp.ne.s32.totalorder %s40, %s41
      %p55 = scmp.eq.s32.totalorder %s33, 1
      %p56 = por %p54, %p55
      %p58 = scmp.ne.s32.totalorder %s41, %s57
      %p59 = scmp.eq.s32.totalorder %s33, 0
      %p60 = por %p58, %p59
      %s61 = ssub.s32 %s27, %s34
      %p62 = scmp.eq.s32.totalorder %s61, 0
      %s64 = sadd.s32 %s63, 1
      %s65 = scalar_select %p62, %s63, %s64
      %p68 = pneg %p62
      %p69 = scmp.eq.s32.totalorder %s27, 1
      %p70 = por %p68, %p69
      %p71 = scmp.ne.s32.totalorder %s63, %s66
      %p72 = scmp.eq.s32.totalorder %s27, 0
      %p73 = por %p71, %p72
      %p74 = scmp.ne.s32.totalorder %s63, %s66
      %p75 = scmp.eq.s32.totalorder %s32, 1
      %p76 = por %p74, %p75
      %p77 = scmp.ne.s32.totalorder %s66, %s67
      %p78 = scmp.eq.s32.totalorder %s32, 0
      %p79 = por %p77, %p78
      %p80 = scmp.ne.s32.totalorder %s66, %s67
      %p81 = scmp.eq.s32.totalorder %s33, 1
      %p82 = por %p80, %p81
      %p84 = scmp.ne.s32.totalorder %s67, %s83
      %p85 = scmp.eq.s32.totalorder %s33, 0
      %p86 = por %p84, %p85
      %s88 = sadd.s32 %s87, 1
      %p91 = scmp.eq.s32.totalorder %s27, 1
      %p92 = scmp.ne.s32.totalorder %s87, %s89
      %p93 = scmp.eq.s32.totalorder %s27, 0
      %p94 = por %p92, %p93
      %p95 = scmp.ne.s32.totalorder %s87, %s89
      %p96 = scmp.eq.s32.totalorder %s32, 1
      %p97 = por %p95, %p96
      %p98 = scmp.ne.s32.totalorder %s89, %s90
      %p99 = scmp.eq.s32.totalorder %s32, 0
      %p100 = por %p98, %p99
      %p101 = scmp.ne.s32.totalorder %s89, %s90
      %p102 = scmp.eq.s32.totalorder %s33, 1
      %p103 = por %p101, %p102
      %p105 = scmp.ne.s32.totalorder %s90, %s104
      %p106 = scmp.eq.s32.totalorder %s33, 0
      %p107 = por %p105, %p106
      %s109 = sadd.s32 %s108, 1
      %p112 = scmp.eq.s32.totalorder %s27, 1
      %p113 = scmp.ne.s32.totalorder %s108, %s110
      %p114 = scmp.eq.s32.totalorder %s27, 0
      %p115 = por %p113, %p114
      %p116 = scmp.ne.s32.totalorder %s108, %s110
      %p117 = scmp.eq.s32.totalorder %s32, 1
      %p118 = por %p116, %p117
      %p119 = scmp.ne.s32.totalorder %s110, %s111
      %p120 = scmp.eq.s32.totalorder %s32, 0
      %p121 = por %p119, %p120
      %p122 = scmp.ne.s32.totalorder %s110, %s111
      %p123 = scmp.eq.s32.totalorder %s33, 1
      %p124 = por %p122, %p123
      %p126 = scmp.ne.s32.totalorder %s111, %s125
      %p127 = scmp.eq.s32.totalorder %s33, 0
      %p128 = por %p126, %p127
      %s130 = sadd.s32 %s129, 1
      %p133 = scmp.eq.s32.totalorder %s27, 1
      %p134 = scmp.ne.s32.totalorder %s129, %s131
      %p135 = scmp.eq.s32.totalorder %s27, 0
      %p136 = por %p134, %p135
      %p137 = scmp.ne.s32.totalorder %s129, %s131
      %p138 = scmp.eq.s32.totalorder %s32, 1
      %p139 = por %p137, %p138
      %p140 = scmp.ne.s32.totalorder %s131, %s132
      %p141 = scmp.eq.s32.totalorder %s32, 0
      %p142 = por %p140, %p141
      %p143 = scmp.ne.s32.totalorder %s131, %s132
      %p144 = scmp.eq.s32.totalorder %s33, 1
      %p145 = por %p143, %p144
      %p147 = scmp.ne.s32.totalorder %s132, %s146
      %p148 = scmp.eq.s32.totalorder %s33, 0
      %p149 = por %p147, %p148
      %s151 = sadd.s32 %s150, 1
      %p154 = scmp.eq.s32.totalorder %s27, 1
      %p155 = scmp.ne.s32.totalorder %s150, %s152
      %p156 = scmp.eq.s32.totalorder %s27, 0
      %p157 = por %p155, %p156
      %p158 = scmp.ne.s32.totalorder %s150, %s152
      %p159 = scmp.eq.s32.totalorder %s32, 1
      %p160 = por %p158, %p159
      %p161 = scmp.ne.s32.totalorder %s152, %s153
      %p162 = scmp.eq.s32.totalorder %s32, 0
      %p163 = por %p161, %p162
      %p164 = scmp.ne.s32.totalorder %s152, %s153
      %p165 = scmp.eq.s32.totalorder %s33, 1
      %p166 = por %p164, %p165
      %p168 = scmp.ne.s32.totalorder %s153, %s167
      %p169 = scmp.eq.s32.totalorder %s33, 0
      %p170 = por %p168, %p169
      %s172 = sadd.s32 %s171, 1
      %p175 = scmp.eq.s32.totalorder %s27, 1
      %p176 = scmp.ne.s32.totalorder %s171, %s173
      %p177 = scmp.eq.s32.totalorder %s27, 0
      %p178 = por %p176, %p177
      %p179 = scmp.ne.s32.totalorder %s171, %s173
      %p180 = scmp.eq.s32.totalorder %s32, 1
      %p181 = por %p179, %p180
      %p182 = scmp.ne.s32.totalorder %s173, %s174
      %p183 = scmp.eq.s32.totalorder %s32, 0
      %p184 = por %p182, %p183
      %p185 = scmp.ne.s32.totalorder %s173, %s174
      %p186 = scmp.eq.s32.totalorder %s33, 1
      %p187 = por %p185, %p186
      %p189 = scmp.ne.s32.totalorder %s174, %s188
      %p190 = scmp.eq.s32.totalorder %s33, 0
      %p191 = por %p189, %p190
      %s193 = sadd.s32 %s192, 1
      %p196 = scmp.eq.s32.totalorder %s27, 1
      %p197 = scmp.ne.s32.totalorder %s192, %s194
      %p198 = scmp.eq.s32.totalorder %s27, 0
      %p199 = por %p197, %p198
      %p200 = scmp.ne.s32.totalorder %s192, %s194
      %p201 = scmp.eq.s32.totalorder %s32, 1
      %p202 = por %p200, %p201
      %p203 = scmp.ne.s32.totalorder %s194, %s195
      %p204 = scmp.eq.s32.totalorder %s32, 0
      %p205 = por %p203, %p204
      %p206 = scmp.ne.s32.totalorder %s194, %s195
      %p207 = scmp.eq.s32.totalorder %s33, 1
      %p208 = por %p206, %p207
      %p210 = scmp.ne.s32.totalorder %s195, %s209
      %p211 = scmp.eq.s32.totalorder %s33, 0
      %p212 = por %p210, %p211
      %s214 = sadd.s32 %s213, 1
      %p217 = scmp.eq.s32.totalorder %s27, 1
      %p218 = scmp.ne.s32.totalorder %s213, %s215
      %p219 = scmp.eq.s32.totalorder %s27, 0
      %p220 = por %p218, %p219
      %p221 = scmp.ne.s32.totalorder %s213, %s215
      %p222 = scmp.eq.s32.totalorder %s32, 1
      %p223 = por %p221, %p222
      %p224 = scmp.ne.s32.totalorder %s215, %s216
      %p225 = scmp.eq.s32.totalorder %s32, 0
      %p226 = por %p224, %p225
      %p227 = scmp.ne.s32.totalorder %s215, %s216
      %p228 = scmp.eq.s32.totalorder %s33, 1
      %p229 = por %p227, %p228
      %p231 = scmp.ne.s32.totalorder %s216, %s230
      %p232 = scmp.eq.s32.totalorder %s33, 0
      %p233 = por %p231, %p232
      %s235 = sadd.s32 %s234, 1
      %p238 = scmp.eq.s32.totalorder %s27, 1
      %p239 = scmp.ne.s32.totalorder %s234, %s236
      %p240 = scmp.eq.s32.totalorder %s27, 0
      %p241 = por %p239, %p240
      %p242 = scmp.ne.s32.totalorder %s234, %s236
      %p243 = scmp.eq.s32.totalorder %s32, 1
      %p244 = por %p242, %p243
      %p245 = scmp.ne.s32.totalorder %s236, %s237
      %p246 = scmp.eq.s32.totalorder %s32, 0
      %p247 = por %p245, %p246
      %p248 = scmp.ne.s32.totalorder %s236, %s237
      %p249 = scmp.eq.s32.totalorder %s33, 1
      %p250 = por %p248, %p249
      %p252 = scmp.ne.s32.totalorder %s237, %s251
      %p253 = scmp.eq.s32.totalorder %s33, 0
      %p254 = por %p252, %p253
      %s256 = sadd.s32 %s255, 1
      %p259 = scmp.eq.s32.totalorder %s27, 1
      %p260 = scmp.ne.s32.totalorder %s255, %s257
      %p261 = scmp.eq.s32.totalorder %s27, 0
      %p262 = por %p260, %p261
      %p263 = scmp.ne.s32.totalorder %s255, %s257
      %p264 = scmp.eq.s32.totalorder %s32, 1
      %p265 = por %p263, %p264
      %p266 = scmp.ne.s32.totalorder %s257, %s258
      %p267 = scmp.eq.s32.totalorder %s32, 0
      %p268 = por %p266, %p267
      %p269 = scmp.ne.s32.totalorder %s257, %s258
      %p270 = scmp.eq.s32.totalorder %s33, 1
      %p271 = por %p269, %p270
      %p273 = scmp.ne.s32.totalorder %s258, %s272
      %p274 = scmp.eq.s32.totalorder %s33, 0
      %p275 = por %p273, %p274
      %s277 = sadd.s32 %s276, 1
      %p280 = scmp.eq.s32.totalorder %s27, 1
      %p281 = scmp.ne.s32.totalorder %s276, %s278
      %p282 = scmp.eq.s32.totalorder %s27, 0
      %p283 = por %p281, %p282
      %p284 = scmp.ne.s32.totalorder %s276, %s278
      %p285 = scmp.eq.s32.totalorder %s32, 1
      %p286 = por %p284, %p285
      %p287 = scmp.ne.s32.totalorder %s278, %s279
      %p288 = scmp.eq.s32.totalorder %s32, 0
      %p289 = por %p287, %p288
      %p290 = scmp.ne.s32.totalorder %s278, %s279
      %p291 = scmp.eq.s32.totalorder %s33, 1
      %p292 = por %p290, %p291
      %p294 = scmp.ne.s32.totalorder %s279, %s293
      %p295 = scmp.eq.s32.totalorder %s33, 0
      %p296 = por %p294, %p295
      %s298 = sadd.s32 %s297, 1
      %p301 = scmp.eq.s32.totalorder %s27, 1
      %p302 = scmp.ne.s32.totalorder %s297, %s299
      %p303 = scmp.eq.s32.totalorder %s27, 0
      %p304 = por %p302, %p303
      %p305 = scmp.ne.s32.totalorder %s297, %s299
      %p306 = scmp.eq.s32.totalorder %s32, 1
      %p307 = por %p305, %p306
      %p308 = scmp.ne.s32.totalorder %s299, %s300
      %p309 = scmp.eq.s32.totalorder %s32, 0
      %p310 = por %p308, %p309
      %p311 = scmp.ne.s32.totalorder %s299, %s300
      %p312 = scmp.eq.s32.totalorder %s33, 1
      %p313 = por %p311, %p312
      %p315 = scmp.ne.s32.totalorder %s300, %s314
      %p316 = scmp.eq.s32.totalorder %s33, 0
      %p317 = por %p315, %p316
      %s319 = sadd.s32 %s318, 1
      %p322 = scmp.eq.s32.totalorder %s27, 1
      %p323 = scmp.ne.s32.totalorder %s318, %s320
      %p324 = scmp.eq.s32.totalorder %s27, 0
      %p325 = por %p323, %p324
      %p326 = scmp.ne.s32.totalorder %s318, %s320
      %p327 = scmp.eq.s32.totalorder %s32, 1
      %p328 = por %p326, %p327
      %p329 = scmp.ne.s32.totalorder %s320, %s321
      %p330 = scmp.eq.s32.totalorder %s32, 0
      %p331 = por %p329, %p330
      %p332 = scmp.ne.s32.totalorder %s320, %s321
      %p333 = scmp.eq.s32.totalorder %s33, 1
      %p334 = por %p332, %p333
      %p336 = scmp.ne.s32.totalorder %s321, %s335
      %p337 = scmp.eq.s32.totalorder %s33, 0
      %p338 = por %p336, %p337
      %s340 = sadd.s32 %s339, 1
      %p343 = scmp.eq.s32.totalorder %s27, 1
      %p344 = scmp.ne.s32.totalorder %s339, %s341
      %p345 = scmp.eq.s32.totalorder %s27, 0
      %p346 = por %p344, %p345
      %p347 = scmp.ne.s32.totalorder %s339, %s341
      %p348 = scmp.eq.s32.totalorder %s32, 1
      %p349 = por %p347, %p348
      %p350 = scmp.ne.s32.totalorder %s341, %s342
      %p351 = scmp.eq.s32.totalorder %s32, 0
      %p352 = por %p350, %p351
      %p353 = scmp.ne.s32.totalorder %s341, %s342
      %p354 = scmp.eq.s32.totalorder %s33, 1
      %p355 = por %p353, %p354
      %p357 = scmp.ne.s32.totalorder %s342, %s356
      %p358 = scmp.eq.s32.totalorder %s33, 0
      %p359 = por %p357, %p358
      %s361 = sadd.s32 %s360, 1
      %p364 = scmp.eq.s32.totalorder %s27, 1
      %p365 = scmp.ne.s32.totalorder %s360, %s362
      %p366 = scmp.eq.s32.totalorder %s27, 0
      %p367 = por %p365, %p366
      %p368 = scmp.ne.s32.totalorder %s360, %s362
      %p369 = scmp.eq.s32.totalorder %s32, 1
      %p370 = por %p368, %p369
      %p371 = scmp.ne.s32.totalorder %s362, %s363
      %p372 = scmp.eq.s32.totalorder %s32, 0
      %p373 = por %p371, %p372
      %p374 = scmp.ne.s32.totalorder %s362, %s363
      %p375 = scmp.eq.s32.totalorder %s33, 1
      %p376 = por %p374, %p375
      %p378 = scmp.ne.s32.totalorder %s363, %s377
      %p379 = scmp.eq.s32.totalorder %s33, 0
      %p380 = por %p378, %p379
      %s381 = ssub.s32 %s27, %s34
      %p382 = scmp.eq.s32.totalorder %s381, 0
      %s384 = sadd.s32 %s383, 1
      %s385 = scalar_select %p382, %s383, %s384
      %p388 = pneg %p382
      %p389 = scmp.eq.s32.totalorder %s27, 1
      %p390 = por %p388, %p389
      %p391 = scmp.ne.s32.totalorder %s383, %s386
      %p392 = scmp.eq.s32.totalorder %s27, 0
      %p393 = por %p391, %p392
      %p394 = scmp.ne.s32.totalorder %s383, %s386
      %p395 = scmp.eq.s32.totalorder %s32, 1
      %p396 = por %p394, %p395
      %p397 = scmp.ne.s32.totalorder %s386, %s387
      %p398 = scmp.eq.s32.totalorder %s32, 0
      %p399 = por %p397, %p398
      %p400 = scmp.ne.s32.totalorder %s386, %s387
      %p401 = scmp.eq.s32.totalorder %s33, 1
      %p402 = por %p400, %p401
      %p404 = scmp.ne.s32.totalorder %s387, %s403
      %p405 = scmp.eq.s32.totalorder %s33, 0
      %p406 = por %p404, %p405
      %p407 = scmp.le.s32.totalorder 1, %s27
      %p408 = scmp.lt.s32.totalorder %s27, 3
      %p409 = pnand %p407, %p408
      %p410 = pneg %p409
      // Predicated region
      $region9: #{resnet_forward.1} parent=5 // pred_check
        _
      $region10: #{resnet_forward.1} parent=5 // pred_check_branch
        %412 = sbr.rel (%p409) target = $region12
      $region11: #{resnet_forward.1} parent=5 // pred_region
        %s413 = ssub.s32 %s27, 1
        // Predicated region
        $region13: #{resnet_forward.1} parent=11 // pred_check
          %p414 = pneg %p100
        $region14: #{resnet_forward.1} parent=11 // pred_check_branch
          %416 = sbr.rel (%p414) target = $region16
        $region15: #{resnet_forward.1} parent=11 // pred_region
          _
        $region16: #{resnet_forward.1} parent=11 // pred_fallthru
          _
        // Predicated region
        $region17: #{resnet_forward.1} parent=11 // pred_check
          %p417 = pneg %p121
        $region18: #{resnet_forward.1} parent=11 // pred_check_branch
          %419 = sbr.rel (%p417) target = $region20
        $region19: #{resnet_forward.1} parent=11 // pred_region
          _
        $region20: #{resnet_forward.1} parent=11 // pred_fallthru
          _
        // Predicated region
        $region21: #{resnet_forward.1} parent=11 // pred_check
          %p420 = pneg %p142
        $region22: #{resnet_forward.1} parent=11 // pred_check_branch
          %422 = sbr.rel (%p420) target = $region24
        $region23: #{resnet_forward.1} parent=11 // pred_region
          %424 = vsyncadd [#allocation3], 0
          %s425 = sshll.u32 %s4, 4
          %s426 = int_to_ptr.hbm [resolvable:$true] %s425
          %s427 = sshll.u32 [#allocation2], 4
          %s428 = int_to_ptr.vmem [resolvable:$true] %s427
          %433 = dma.hbm_to_vmem [thread:$0]  %s426, 512, %s428, [#allocation3], 128, 128, 8
        $region24: #{resnet_forward.1} parent=11 // pred_fallthru
          _
        // Predicated region
        $region25: #{resnet_forward.1} parent=11 // pred_check
          %p434 = pneg %p163
        $region26: #{resnet_forward.1} parent=11 // pred_check_branch
          %436 = sbr.rel (%p434) target = $region28
        $region27: #{resnet_forward.1} parent=11 // pred_region
          %438 = vsyncadd [#allocation6], 0
          %s439 = sshll.u32 %s5, 4
          %s440 = int_to_ptr.hbm [resolvable:$true] %s439
          %s441 = sshll.u32 [#allocation5], 4
          %s442 = int_to_ptr.vmem [resolvable:$true] %s441
          %447 = dma.hbm_to_vmem [thread:$0]  %s440, 1024, %s442, [#allocation6], 128, 128, 8
        $region28: #{resnet_forward.1} parent=11 // pred_fallthru
          _
        // Predicated region
        $region29: #{resnet_forward.1} parent=11 // pred_check
          %p448 = pneg %p184
        $region30: #{resnet_forward.1} parent=11 // pred_check_branch
          %450 = sbr.rel (%p448) target = $region32
        $region31: #{resnet_forward.1} parent=11 // pred_region
          _
        $region32: #{resnet_forward.1} parent=11 // pred_fallthru
          _
        // Predicated region
        $region33: #{resnet_forward.1} parent=11 // pred_check
          %p451 = pneg %p205
        $region34: #{resnet_forward.1} parent=11 // pred_check_branch
          %453 = sbr.rel (%p451) target = $region36
        $region35: #{resnet_forward.1} parent=11 // pred_region
          _
        $region36: #{resnet_forward.1} parent=11 // pred_fallthru
          _
        // Predicated region
        $region37: #{resnet_forward.1} parent=11 // pred_check
          %p454 = pneg %p226
        $region38: #{resnet_forward.1} parent=11 // pred_check_branch
          %456 = sbr.rel (%p454) target = $region40
        $region39: #{resnet_forward.1} parent=11 // pred_region
          _
        $region40: #{resnet_forward.1} parent=11 // pred_fallthru
          _
        // Predicated region
        $region41: #{resnet_forward.1} parent=11 // pred_check
          %p457 = pneg %p247
        $region42: #{resnet_forward.1} parent=11 // pred_check_branch
          %459 = sbr.rel (%p457) target = $region44
        $region43: #{resnet_forward.1} parent=11 // pred_region
          _
        $region44: #{resnet_forward.1} parent=11 // pred_fallthru
          _
        // Predicated region
        $region45: #{resnet_forward.1} parent=11 // pred_check
          %p460 = pneg %p268
        $region46: #{resnet_forward.1} parent=11 // pred_check_branch
          %462 = sbr.rel (%p460) target = $region48
        $region47: #{resnet_forward.1} parent=11 // pred_region
          _
        $region48: #{resnet_forward.1} parent=11 // pred_fallthru
          _
        // Predicated region
        $region49: #{resnet_forward.1} parent=11 // pred_check
          %p463 = pneg %p289
        $region50: #{resnet_forward.1} parent=11 // pred_check_branch
          %465 = sbr.rel (%p463) target = $region52
        $region51: #{resnet_forward.1} parent=11 // pred_region
          _
        $region52: #{resnet_forward.1} parent=11 // pred_fallthru
          _
        // Predicated region
        $region53: #{resnet_forward.1} parent=11 // pred_check
          %p466 = pneg %p310
        $region54: #{resnet_forward.1} parent=11 // pred_check_branch
          %468 = sbr.rel (%p466) target = $region56
        $region55: #{resnet_forward.1} parent=11 // pred_region
          _
        $region56: #{resnet_forward.1} parent=11 // pred_fallthru
          _
        // Predicated region
        $region57: #{resnet_forward.1} parent=11 // pred_check
          %p469 = pneg %p331
        $region58: #{resnet_forward.1} parent=11 // pred_check_branch
          %471 = sbr.rel (%p469) target = $region60
        $region59: #{resnet_forward.1} parent=11 // pred_region
          _
        $region60: #{resnet_forward.1} parent=11 // pred_fallthru
          _
        // Predicated region
        $region61: #{resnet_forward.1} parent=11 // pred_check
          %p472 = pneg %p352
        $region62: #{resnet_forward.1} parent=11 // pred_check_branch
          %474 = sbr.rel (%p472) target = $region64
        $region63: #{resnet_forward.1} parent=11 // pred_region
          %476 = vsyncadd [#allocation6], 0
          %s477 = sshll.u32 %s14, 4
          %s478 = int_to_ptr.hbm [resolvable:$true] %s477
          %s479 = sshll.u32 [#allocation7], 4
          %s480 = int_to_ptr.vmem [resolvable:$true] %s479
          %485 = dma.hbm_to_vmem [thread:$0]  %s478, 256, %s480, [#allocation6], 64, 64, 4
        $region64: #{resnet_forward.1} parent=11 // pred_fallthru
          _
        // Predicated region
        $region65: #{resnet_forward.1} parent=11 // pred_check
          %p486 = pneg %p373
        $region66: #{resnet_forward.1} parent=11 // pred_check_branch
          %488 = sbr.rel (%p486) target = $region68
        $region67: #{resnet_forward.1} parent=11 // pred_region
          _
        $region68: #{resnet_forward.1} parent=11 // pred_fallthru
          _
      $region12: #{resnet_forward.1} parent=5 // pred_fallthru
        _
      %p489 = scmp.lt.s32.totalorder %s27, 2
      // Predicated region
      $region69: #{resnet_forward.1} parent=5 // pred_check
        %p490 = pneg %p489
      $region70: #{resnet_forward.1} parent=5 // pred_check_branch
        %492 = sbr.rel (%p490) target = $region72
      $region71: #{resnet_forward.1} parent=5 // pred_region
        // Predicated region
        $region73: #{resnet_forward.1} parent=71 // pred_check
          %p493 = pneg %p47
        $region74: #{resnet_forward.1} parent=71 // pred_check_branch
          %495 = sbr.rel (%p493) target = $region76
        $region75: #{resnet_forward.1} parent=71 // pred_region
          %p496 = scmp.lt.s32.totalorder %s27, 1
          %s497 = scalar_select %p496, %s27, 1
          %s498 = smul.addr %s497, 32
          %s499 = smul.addr %s498, 8
          %s500 = scalar_lea.vmem %s0, %s499
        $region76: #{resnet_forward.1} parent=71 // pred_fallthru
          _
        // Predicated region
        $region77: #{resnet_forward.1} parent=71 // pred_check
          %p501 = pneg %p73
        $region78: #{resnet_forward.1} parent=71 // pred_check_branch
          %503 = sbr.rel (%p501) target = $region80
        $region79: #{resnet_forward.1} parent=71 // pred_region
          %p504 = scmp.lt.s32.totalorder %s27, 1
          %s505 = scalar_select %p504, %s27, 1
          %s506 = smul.addr %s505, 2
          %s507 = scalar_lea.vmem %s1, %s506
        $region80: #{resnet_forward.1} parent=71 // pred_fallthru
          _
      $region72: #{resnet_forward.1} parent=5 // pred_fallthru
        _
      %p508 = scmp.le.s32.totalorder 1, %s27
      %p509 = scmp.lt.s32.totalorder %s27, 3
      %p510 = pnand %p508, %p509
      %p511 = pneg %p510
      // Predicated region
      $region81: #{resnet_forward.1} parent=5 // pred_check
        _
      $region82: #{resnet_forward.1} parent=5 // pred_check_branch
        %513 = sbr.rel (%p510) target = $region84
      $region83: #{resnet_forward.1} parent=5 // pred_region
        %s514 = ssub.s32 %s27, 1
        // Predicated region
        $region85: #{resnet_forward.1} parent=83 // pred_check
          %p515 = pneg %p142
        $region86: #{resnet_forward.1} parent=83 // pred_check_branch
          %517 = sbr.rel (%p515) target = $region88
        $region87: #{resnet_forward.1} parent=83 // pred_region
          %519 = dma.done [#allocation3], 512
        $region88: #{resnet_forward.1} parent=83 // pred_fallthru
          _
        // Predicated region
        $region89: #{resnet_forward.1} parent=83 // pred_check
          %p520 = pneg %p163
        $region90: #{resnet_forward.1} parent=83 // pred_check_branch
          %522 = sbr.rel (%p520) target = $region92
        $region91: #{resnet_forward.1} parent=83 // pred_region
          %524 = dma.done [#allocation6], 1024
        $region92: #{resnet_forward.1} parent=83 // pred_fallthru
          _
        // Predicated region
        $region93: #{resnet_forward.1} parent=83 // pred_check
          %p525 = pneg %p352
        $region94: #{resnet_forward.1} parent=83 // pred_check_branch
          %527 = sbr.rel (%p525) target = $region96
        $region95: #{resnet_forward.1} parent=83 // pred_region
          %529 = dma.done [#allocation6], 256
        $region96: #{resnet_forward.1} parent=83 // pred_fallthru
          _
        %p530 = scmp.lt.s32.totalorder %s32, 1
        %s531 = scalar_select %p530, %s32, 1
        %s532 = smul.addr %s531, 32
        %s533 = smul.addr %s532, 8
        %s534 = scalar_lea.vmem %s0, %s533
        %p535 = pneg %p53
        %p536 = pneg %p50
        %p537 = scmp.lt.s32.totalorder %s32, 1
        %s538 = scalar_select %p537, %s32, 1
        %s539 = smul.addr %s538, 2
        %s540 = scalar_lea.vmem %s1, %s539
        %p541 = pneg %p79
        %p542 = pneg %p76
        %p543 = pneg %p100
        %p544 = pneg %p97
        %p545 = pneg %p121
        %p546 = pneg %p118
        %p547 = pneg %p142
        %p548 = pneg %p139
        %p549 = pneg %p163
        %p550 = pneg %p160
        %p551 = pneg %p184
        %p552 = pneg %p181
        %p553 = pneg %p205
        %p554 = pneg %p202
        %p555 = pneg %p226
        %p556 = pneg %p223
        %p557 = pneg %p247
        %p558 = pneg %p244
        %p559 = pneg %p268
        %p560 = pneg %p265
        %p561 = pneg %p289
        %p562 = pneg %p286
        %p563 = pneg %p310
        %p564 = pneg %p307
        %p565 = pneg %p331
        %p566 = pneg %p328
        %p567 = pneg %p352
        %p568 = pneg %p349
        %p569 = pneg %p373
        %p570 = pneg %p370
        %p571 = pneg %p399
        %p572 = pneg %p396
        %s573 = sand.u32 %s386, 1
        %s574 = scalar_lea.sflag [#allocation4], %s573
        %s575 = sand.u32 %s386, 1
        %s576 = smul.addr %s575, 256
        %s577 = scalar_lea.vmem [#allocation8], %s576
        %p578 = scmp.lt.s32.totalorder %s32, 1
        %s579 = scalar_select %p578, %s32, 1
        %s580 = smul.addr %s579, 32
        %s581 = smul.addr %s580, 8
        %s582 = scalar_lea.vmem %s0, %s581
        %p583 = scmp.lt.s32.totalorder %s32, 1
        %s584 = scalar_select %p583, %s32, 1
        %s585 = smul.addr %s584, 2
        %s586 = scalar_lea.vmem %s1, %s585
        %v588 = vld [vmem:[%s2] sm:$0xff]
        %v589 = vld [vmem:[%s2 + $0x8] sm:$0xff]
        %v590 = vld [vmem:[%s2 + $0x10] sm:$0xff]
        %v591 = vld [vmem:[%s2 + $0x18] sm:$0xff]
        %v592 = vld [vmem:[%s2 + $0x20] sm:$0xff]
        %v593 = vld [vmem:[%s2 + $0x28] sm:$0xff]
        %v594 = vld [vmem:[%s2 + $0x30] sm:$0xff]
        %v595 = vld [vmem:[%s2 + $0x38] sm:$0xff]
        %v596 = vld [vmem:[%s2 + $0x40] sm:$0xff]
        %v597 = vld [vmem:[%s2 + $0x48] sm:$0xff]
        %v598 = vld [vmem:[%s2 + $0x50] sm:$0xff]
        %v599 = vld [vmem:[%s2 + $0x58] sm:$0xff]
        %v600 = vld [vmem:[%s2 + $0x60] sm:$0xff]
        %v601 = vld [vmem:[%s2 + $0x68] sm:$0xff]
        %v602 = vld [vmem:[%s2 + $0x70] sm:$0xff]
        %v603 = vld [vmem:[%s2 + $0x78] sm:$0xff]
        %v604 = vld [vmem:[%s2 + $0x80] sm:$0xff]
        %v605 = vld [vmem:[%s2 + $0x88] sm:$0xff]
        %v606 = vld [vmem:[%s2 + $0x90] sm:$0xff]
        %v607 = vld [vmem:[%s2 + $0x98] sm:$0xff]
        %v608 = vld [vmem:[%s2 + $0xa0] sm:$0xff]
        %v609 = vld [vmem:[%s2 + $0xa8] sm:$0xff]
        %v610 = vld [vmem:[%s2 + $0xb0] sm:$0xff]
        %v611 = vld [vmem:[%s2 + $0xb8] sm:$0xff]
        %v612 = vld [vmem:[%s2 + $0xc0] sm:$0xff]
        %v613 = vld [vmem:[%s2 + $0xc8] sm:$0xff]
        %v614 = vld [vmem:[%s2 + $0xd0] sm:$0xff]
        %v615 = vld [vmem:[%s2 + $0xd8] sm:$0xff]
        %v616 = vld [vmem:[%s2 + $0xe0] sm:$0xff]
        %v617 = vld [vmem:[%s2 + $0xe8] sm:$0xff]
        %v618 = vld [vmem:[%s2 + $0xf0] sm:$0xff]
        %v619 = vld [vmem:[%s2 + $0xf8] sm:$0xff]
        %v620 = vld [vmem:[%s3] sm:$0xff]
        %v621 = vld [vmem:[%s3 + $0x8] sm:$0xff]
        %v622 = vld [vmem:[%s3 + $0x10] sm:$0xff]
        %v623 = vld [vmem:[%s3 + $0x18] sm:$0xff]
        %v624 = vld [vmem:[%s3 + $0x20] sm:$0xff]
        %v625 = vld [vmem:[%s3 + $0x28] sm:$0xff]
        %v626 = vld [vmem:[%s3 + $0x30] sm:$0xff]
        %v627 = vld [vmem:[%s3 + $0x38] sm:$0xff]
        %v628 = vld [vmem:[%s3 + $0x40] sm:$0xff]
        %v629 = vld [vmem:[%s3 + $0x48] sm:$0xff]
        %v630 = vld [vmem:[%s3 + $0x50] sm:$0xff]
        %v631 = vld [vmem:[%s3 + $0x58] sm:$0xff]
        %v632 = vld [vmem:[%s3 + $0x60] sm:$0xff]
        %v633 = vld [vmem:[%s3 + $0x68] sm:$0xff]
        %v634 = vld [vmem:[%s3 + $0x70] sm:$0xff]
        %v635 = vld [vmem:[%s3 + $0x78] sm:$0xff]
        %v636 = vld [vmem:[%s3 + $0x80] sm:$0xff]
        %v637 = vld [vmem:[%s3 + $0x88] sm:$0xff]
        %v638 = vld [vmem:[%s3 + $0x90] sm:$0xff]
        %v639 = vld [vmem:[%s3 + $0x98] sm:$0xff]
        %v640 = vld [vmem:[%s3 + $0xa0] sm:$0xff]
        %v641 = vld [vmem:[%s3 + $0xa8] sm:$0xff]
        %v642 = vld [vmem:[%s3 + $0xb0] sm:$0xff]
        %v643 = vld [vmem:[%s3 + $0xb8] sm:$0xff]
        %v644 = vld [vmem:[%s3 + $0xc0] sm:$0xff]
        %v645 = vld [vmem:[%s3 + $0xc8] sm:$0xff]
        %v646 = vld [vmem:[%s3 + $0xd0] sm:$0xff]
        %v647 = vld [vmem:[%s3 + $0xd8] sm:$0xff]
        %v648 = vld [vmem:[%s3 + $0xe0] sm:$0xff]
        %v649 = vld [vmem:[%s3 + $0xe8] sm:$0xff]
        %v650 = vld [vmem:[%s3 + $0xf0] sm:$0xff]
        %v651 = vld [vmem:[%s3 + $0xf8] sm:$0xff]
        %v652 = vld [vmem:[%s582] sm:$0xff]
        %v653 = vld [vmem:[%s582 + $0x8] sm:$0xff]
        %v654 = vld [vmem:[%s582 + $0x10] sm:$0xff]
        %v655 = vld [vmem:[%s582 + $0x18] sm:$0xff]
        %v656 = vld [vmem:[%s582 + $0x20] sm:$0xff]
        %v657 = vld [vmem:[%s582 + $0x28] sm:$0xff]
        %v658 = vld [vmem:[%s582 + $0x30] sm:$0xff]
        %v659 = vld [vmem:[%s582 + $0x38] sm:$0xff]
        %v660 = vld [vmem:[%s582 + $0x40] sm:$0xff]
        %v661 = vld [vmem:[%s582 + $0x48] sm:$0xff]
        %v662 = vld [vmem:[%s582 + $0x50] sm:$0xff]
        %v663 = vld [vmem:[%s582 + $0x58] sm:$0xff]
        %v664 = vld [vmem:[%s582 + $0x60] sm:$0xff]
        %v665 = vld [vmem:[%s582 + $0x68] sm:$0xff]
        %v666 = vld [vmem:[%s582 + $0x70] sm:$0xff]
        %v667 = vld [vmem:[%s582 + $0x78] sm:$0xff]
        %v668 = vld [vmem:[%s582 + $0x80] sm:$0xff]
        %v669 = vld [vmem:[%s582 + $0x88] sm:$0xff]
        %v670 = vld [vmem:[%s582 + $0x90] sm:$0xff]
        %v671 = vld [vmem:[%s582 + $0x98] sm:$0xff]
        %v672 = vld [vmem:[%s582 + $0xa0] sm:$0xff]
        %v673 = vld [vmem:[%s582 + $0xa8] sm:$0xff]
        %v674 = vld [vmem:[%s582 + $0xb0] sm:$0xff]
        %v675 = vld [vmem:[%s582 + $0xb8] sm:$0xff]
        %v676 = vld [vmem:[%s582 + $0xc0] sm:$0xff]
        %v677 = vld [vmem:[%s582 + $0xc8] sm:$0xff]
        %v678 = vld [vmem:[%s582 + $0xd0] sm:$0xff]
        %v679 = vld [vmem:[%s582 + $0xd8] sm:$0xff]
        %v680 = vld [vmem:[%s582 + $0xe0] sm:$0xff]
        %v681 = vld [vmem:[%s582 + $0xe8] sm:$0xff]
        %v682 = vld [vmem:[%s582 + $0xf0] sm:$0xff]
        %v683 = vld [vmem:[%s582 + $0xf8] sm:$0xff]
        %v684 = vld [vmem:[%s6] sm:$0x1]
        %v685 = vld [vmem:[%s7] sm:$0x1]
        %v686 = vld [vmem:[#allocation2] sm:$0xff]
        %v687 = vld [vmem:[#allocation2 + $0x8] sm:$0xff]
        %v688 = vld [vmem:[#allocation2 + $0x10] sm:$0xff]
        %v689 = vld [vmem:[#allocation2 + $0x18] sm:$0xff]
        %vm690 = vcmask 261120
        %v691 = vsel %vm690, %v652, 0.0
        %v692 = vsel %vm690, %v653, 0.0
        %v693 = vadd.f32 %v691, %v692
        %v694 = vsel %vm690, %v654, 0.0
        %v695 = vadd.f32 %v693, %v694
        %v696 = vsel %vm690, %v655, 0.0
        %v697 = vadd.f32 %v695, %v696
        %v698 = vsel %vm690, %v656, 0.0
        %v699 = vadd.f32 %v697, %v698
        %v700 = vsel %vm690, %v657, 0.0
        %v701 = vadd.f32 %v699, %v700
        %v702 = vsel %vm690, %v658, 0.0
        %v703 = vadd.f32 %v701, %v702
        %v704 = vsel %vm690, %v659, 0.0
        %v705 = vadd.f32 %v703, %v704
        %v706 = vsel %vm690, %v660, 0.0
        %v707 = vadd.f32 %v705, %v706
        %v708 = vsel %vm690, %v661, 0.0
        %v709 = vadd.f32 %v707, %v708
        %v710 = vsel %vm690, %v662, 0.0
        %v711 = vadd.f32 %v709, %v710
        %v712 = vsel %vm690, %v663, 0.0
        %v713 = vadd.f32 %v711, %v712
        %v714 = vsel %vm690, %v664, 0.0
        %v715 = vadd.f32 %v713, %v714
        %v716 = vsel %vm690, %v665, 0.0
        %v717 = vadd.f32 %v715, %v716
        %v718 = vsel %vm690, %v666, 0.0
        %v719 = vadd.f32 %v717, %v718
        %v720 = vsel %vm690, %v667, 0.0
        %v721 = vadd.f32 %v719, %v720
        %v722 = vsel %vm690, %v668, 0.0
        %v723 = vadd.f32 %v721, %v722
        %v724 = vsel %vm690, %v669, 0.0
        %v725 = vadd.f32 %v723, %v724
        %v726 = vsel %vm690, %v670, 0.0
        %v727 = vadd.f32 %v725, %v726
        %v728 = vsel %vm690, %v671, 0.0
        %v729 = vadd.f32 %v727, %v728
        %v730 = vsel %vm690, %v672, 0.0
        %v731 = vadd.f32 %v729, %v730
        %v732 = vsel %vm690, %v673, 0.0
        %v733 = vadd.f32 %v731, %v732
        %v734 = vsel %vm690, %v674, 0.0
        %v735 = vadd.f32 %v733, %v734
        %v736 = vsel %vm690, %v675, 0.0
        %v737 = vadd.f32 %v735, %v736
        %v738 = vsel %vm690, %v676, 0.0
        %v739 = vadd.f32 %v737, %v738
        %v740 = vsel %vm690, %v677, 0.0
        %v741 = vadd.f32 %v739, %v740
        %v742 = vsel %vm690, %v678, 0.0
        %v743 = vadd.f32 %v741, %v742
        %v744 = vsel %vm690, %v679, 0.0
        %v745 = vadd.f32 %v743, %v744
        %v746 = vsel %vm690, %v680, 0.0
        %v747 = vadd.f32 %v745, %v746
        %v748 = vsel %vm690, %v681, 0.0
        %v749 = vadd.f32 %v747, %v748
        %v750 = vsel %vm690, %v682, 0.0
        %v751 = vadd.f32 %v749, %v750
        %v752 = vsel %vm690, %v683, 0.0
        %v753 = vadd.f32 %v751, %v752
        %v754 = vrot.slane %v753, 4
        %v755 = vadd.f32 %v753, %v754
        %v756 = vrot.slane %v755, 2
        %v757 = vadd.f32 %v755, %v756
        %v758 = vrot.slane %v757, 1
        %v759 = vadd.f32 %v757, %v758
        %v761 = vsel %vm690, %v759, 0
        %763 = vmatpush.msra.mxu0 0.0
        %764 = vmatpush.msra.mxu0 0.0
        %765 = vmatpush.msra.mxu0 0.0
        %766 = vmatpush.msra.mxu0 0.0
        %767 = vmatpush.msra.mxu0 0.0
        %768 = vmatpush.msra.mxu0 0.0
        %769 = vmatpush.msra.mxu0 0.0
        %770 = vmatpush.msra.mxu0 0.0
        %771 = vmatpush.msra.mxu0 0.0
        %772 = vmatpush.msra.mxu0 0.0
        %773 = vmatpush.msra.mxu0 0.0
        %774 = vmatpush.msra.mxu0 0.0
        %775 = vmatpush.msra.mxu0 %v689
        %776 = vmatpush.msra.mxu0 %v688
        %777 = vmatpush.msra.mxu0 %v687
        %778 = vmatpush.msra.mxu0 %v686
        %779 = vmatmul.f32.gmra.mxu0 %v761
        %v780 = vpop.f32.mrf.mxu0
        %v781 = vadd.f32 0.0, %v780
        %782 = vdwg.mxu0
        %v783 = vperm.slane %v781, 0
        %v784 = vsub.f32 %v652, %v783
        %v785 = vsub.f32 %v653, %v783
        %v786 = vsub.f32 %v654, %v783
        %v787 = vsub.f32 %v655, %v783
        %v788 = vsub.f32 %v656, %v783
        %v789 = vsub.f32 %v657, %v783
        %v790 = vsub.f32 %v658, %v783
        %v791 = vsub.f32 %v659, %v783
        %v792 = vsub.f32 %v660, %v783
        %v793 = vsub.f32 %v661, %v783
        %v794 = vsub.f32 %v662, %v783
        %v795 = vsub.f32 %v663, %v783
        %v796 = vsub.f32 %v664, %v783
        %v797 = vsub.f32 %v665, %v783
        %v798 = vsub.f32 %v666, %v783
        %v799 = vsub.f32 %v667, %v783
        %v800 = vsub.f32 %v668, %v783
        %v801 = vsub.f32 %v669, %v783
        %v802 = vsub.f32 %v670, %v783
        %v803 = vsub.f32 %v671, %v783
        %v804 = vsub.f32 %v672, %v783
        %v805 = vsub.f32 %v673, %v783
        %v806 = vsub.f32 %v674, %v783
        %v807 = vsub.f32 %v675, %v783
        %v808 = vsub.f32 %v676, %v783
        %v809 = vsub.f32 %v677, %v783
        %v810 = vsub.f32 %v678, %v783
        %v811 = vsub.f32 %v679, %v783
        %v812 = vsub.f32 %v680, %v783
        %v813 = vsub.f32 %v681, %v783
        %v814 = vsub.f32 %v682, %v783
        %v815 = vsub.f32 %v683, %v783
        %v816 = vmul.f32 %v784, %v784
        %v817 = vmul.f32 %v785, %v785
        %v818 = vmul.f32 %v786, %v786
        %v819 = vmul.f32 %v787, %v787
        %v820 = vmul.f32 %v788, %v788
        %v821 = vmul.f32 %v789, %v789
        %v822 = vmul.f32 %v790, %v790
        %v823 = vmul.f32 %v791, %v791
        %v824 = vmul.f32 %v792, %v792
        %v825 = vmul.f32 %v793, %v793
        %v826 = vmul.f32 %v794, %v794
        %v827 = vmul.f32 %v795, %v795
        %v828 = vmul.f32 %v796, %v796
        %v829 = vmul.f32 %v797, %v797
        %v830 = vmul.f32 %v798, %v798
        %v831 = vmul.f32 %v799, %v799
        %v832 = vmul.f32 %v800, %v800
        %v833 = vmul.f32 %v801, %v801
        %v834 = vmul.f32 %v802, %v802
        %v835 = vmul.f32 %v803, %v803
        %v836 = vmul.f32 %v804, %v804
        %v837 = vmul.f32 %v805, %v805
        %v838 = vmul.f32 %v806, %v806
        %v839 = vmul.f32 %v807, %v807
        %v840 = vmul.f32 %v808, %v808
        %v841 = vmul.f32 %v809, %v809
        %v842 = vmul.f32 %v810, %v810
        %v843 = vmul.f32 %v811, %v811
        %v844 = vmul.f32 %v812, %v812
        %v845 = vmul.f32 %v813, %v813
        %v846 = vmul.f32 %v814, %v814
        %v847 = vmul.f32 %v815, %v815
        %v848 = vsel %vm690, %v816, 0.0
        %v849 = vsel %vm690, %v817, 0.0
        %v850 = vadd.f32 %v848, %v849
        %v851 = vsel %vm690, %v818, 0.0
        %v852 = vadd.f32 %v850, %v851
        %v853 = vsel %vm690, %v819, 0.0
        %v854 = vadd.f32 %v852, %v853
        %v855 = vsel %vm690, %v820, 0.0
        %v856 = vadd.f32 %v854, %v855
        %v857 = vsel %vm690, %v821, 0.0
        %v858 = vadd.f32 %v856, %v857
        %v859 = vsel %vm690, %v822, 0.0
        %v860 = vadd.f32 %v858, %v859
        %v861 = vsel %vm690, %v823, 0.0
        %v862 = vadd.f32 %v860, %v861
        %v863 = vsel %vm690, %v824, 0.0
        %v864 = vadd.f32 %v862, %v863
        %v865 = vsel %vm690, %v825, 0.0
        %v866 = vadd.f32 %v864, %v865
        %v867 = vsel %vm690, %v826, 0.0
        %v868 = vadd.f32 %v866, %v867
        %v869 = vsel %vm690, %v827, 0.0
        %v870 = vadd.f32 %v868, %v869
        %v871 = vsel %vm690, %v828, 0.0
        %v872 = vadd.f32 %v870, %v871
        %v873 = vsel %vm690, %v829, 0.0
        %v874 = vadd.f32 %v872, %v873
        %v875 = vsel %vm690, %v830, 0.0
        %v876 = vadd.f32 %v874, %v875
        %v877 = vsel %vm690, %v831, 0.0
        %v878 = vadd.f32 %v876, %v877
        %v879 = vsel %vm690, %v832, 0.0
        %v880 = vadd.f32 %v878, %v879
        %v881 = vsel %vm690, %v833, 0.0
        %v882 = vadd.f32 %v880, %v881
        %v883 = vsel %vm690, %v834, 0.0
        %v884 = vadd.f32 %v882, %v883
        %v885 = vsel %vm690, %v835, 0.0
        %v886 = vadd.f32 %v884, %v885
        %v887 = vsel %vm690, %v836, 0.0
        %v888 = vadd.f32 %v886, %v887
        %v889 = vsel %vm690, %v837, 0.0
        %v890 = vadd.f32 %v888, %v889
        %v891 = vsel %vm690, %v838, 0.0
        %v892 = vadd.f32 %v890, %v891
        %v893 = vsel %vm690, %v839, 0.0
        %v894 = vadd.f32 %v892, %v893
        %v895 = vsel %vm690, %v840, 0.0
        %v896 = vadd.f32 %v894, %v895
        %v897 = vsel %vm690, %v841, 0.0
        %v898 = vadd.f32 %v896, %v897
        %v899 = vsel %vm690, %v842, 0.0
        %v900 = vadd.f32 %v898, %v899
        %v901 = vsel %vm690, %v843, 0.0
        %v902 = vadd.f32 %v900, %v901
        %v903 = vsel %vm690, %v844, 0.0
        %v904 = vadd.f32 %v902, %v903
        %v905 = vsel %vm690, %v845, 0.0
        %v906 = vadd.f32 %v904, %v905
        %v907 = vsel %vm690, %v846, 0.0
        %v908 = vadd.f32 %v906, %v907
        %v909 = vsel %vm690, %v847, 0.0
        %v910 = vadd.f32 %v908, %v909
        %v911 = vrot.slane %v910, 4
        %v912 = vadd.f32 %v910, %v911
        %v913 = vrot.slane %v912, 2
        %v914 = vadd.f32 %v912, %v913
        %v915 = vrot.slane %v914, 1
        %v916 = vadd.f32 %v914, %v915
        %v918 = vsel %vm690, %v916, 0
        %920 = vmatpush.msra.mxu0 0.0
        %921 = vmatpush.msra.mxu0 0.0
        %922 = vmatpush.msra.mxu0 0.0
        %923 = vmatpush.msra.mxu0 0.0
        %924 = vmatpush.msra.mxu0 0.0
        %925 = vmatpush.msra.mxu0 0.0
        %926 = vmatpush.msra.mxu0 0.0
        %927 = vmatpush.msra.mxu0 0.0
        %928 = vmatpush.msra.mxu0 0.0
        %929 = vmatpush.msra.mxu0 0.0
        %930 = vmatpush.msra.mxu0 0.0
        %931 = vmatpush.msra.mxu0 0.0
        %932 = vmatpush.msra.mxu0 %v689
        %933 = vmatpush.msra.mxu0 %v688
        %934 = vmatpush.msra.mxu0 %v687
        %935 = vmatpush.msra.mxu0 %v686
        %936 = vmatmul.f32.gmra.mxu0 %v918
        %v937 = vpop.f32.mrf.mxu0
        %v938 = vadd.f32 1e-05, %v937
        %939 = vdwg.mxu0
        %v940 = vrsqrt.pop %v938
        %v941 = vmul.f32 %v940, %v938
        %v942 = vmul.f32 %v941, %v940
        %v943 = vmul.f32 0.5, %v942
        %v944 = vsub.f32 1.5, %v943
        %v945 = vmul.f32 %v940, %v944
        %vm946 = vweird.f32 %v938
        %vm947 = vweird.f32 %v940
        %vm948 = vmor %vm946, %vm947
        %v949 = vsel %vm948, %v940, %v945
        %v950 = vperm.slane %v949, 0
        %v951 = vmul.f32 %v784, %v950
        %v952 = vmul.f32 %v785, %v950
        %v953 = vmul.f32 %v786, %v950
        %v954 = vmul.f32 %v787, %v950
        %v955 = vmul.f32 %v788, %v950
        %v956 = vmul.f32 %v789, %v950
        %v957 = vmul.f32 %v790, %v950
        %v958 = vmul.f32 %v791, %v950
        %v959 = vmul.f32 %v792, %v950
        %v960 = vmul.f32 %v793, %v950
        %v961 = vmul.f32 %v794, %v950
        %v962 = vmul.f32 %v795, %v950
        %v963 = vmul.f32 %v796, %v950
        %v964 = vmul.f32 %v797, %v950
        %v965 = vmul.f32 %v798, %v950
        %v966 = vmul.f32 %v799, %v950
        %v967 = vmul.f32 %v800, %v950
        %v968 = vmul.f32 %v801, %v950
        %v969 = vmul.f32 %v802, %v950
        %v970 = vmul.f32 %v803, %v950
        %v971 = vmul.f32 %v804, %v950
        %v972 = vmul.f32 %v805, %v950
        %v973 = vmul.f32 %v806, %v950
        %v974 = vmul.f32 %v807, %v950
        %v975 = vmul.f32 %v808, %v950
        %v976 = vmul.f32 %v809, %v950
        %v977 = vmul.f32 %v810, %v950
        %v978 = vmul.f32 %v811, %v950
        %v979 = vmul.f32 %v812, %v950
        %v980 = vmul.f32 %v813, %v950
        %v981 = vmul.f32 %v814, %v950
        %v982 = vmul.f32 %v815, %v950
        %v984 = vperm.slane %v684, 0
        %v986 = vmul.f32 %v951, %v984
        %v987 = vmul.f32 %v952, %v984
        %v988 = vmul.f32 %v953, %v984
        %v989 = vmul.f32 %v954, %v984
        %v990 = vmul.f32 %v955, %v984
        %v991 = vmul.f32 %v956, %v984
        %v992 = vmul.f32 %v957, %v984
        %v993 = vmul.f32 %v958, %v984
        %v994 = vmul.f32 %v959, %v984
        %v995 = vmul.f32 %v960, %v984
        %v996 = vmul.f32 %v961, %v984
        %v997 = vmul.f32 %v962, %v984
        %v998 = vmul.f32 %v963, %v984
        %v999 = vmul.f32 %v964, %v984
        %v1000 = vmul.f32 %v965, %v984
        %v1001 = vmul.f32 %v966, %v984
        %v1002 = vmul.f32 %v967, %v984
        %v1003 = vmul.f32 %v968, %v984
        %v1004 = vmul.f32 %v969, %v984
        %v1005 = vmul.f32 %v970, %v984
        %v1006 = vmul.f32 %v971, %v984
        %v1007 = vmul.f32 %v972, %v984
        %v1008 = vmul.f32 %v973, %v984
        %v1009 = vmul.f32 %v974, %v984
        %v1010 = vmul.f32 %v975, %v984
        %v1011 = vmul.f32 %v976, %v984
        %v1012 = vmul.f32 %v977, %v984
        %v1013 = vmul.f32 %v978, %v984
        %v1014 = vmul.f32 %v979, %v984
        %v1015 = vmul.f32 %v980, %v984
        %v1016 = vmul.f32 %v981, %v984
        %v1017 = vmul.f32 %v982, %v984
        %v1019 = vperm.slane %v685, 0
        %v1021 = vadd.f32 %v986, %v1019
        %v1022 = vadd.f32 %v987, %v1019
        %v1023 = vadd.f32 %v988, %v1019
        %v1024 = vadd.f32 %v989, %v1019
        %v1025 = vadd.f32 %v990, %v1019
        %v1026 = vadd.f32 %v991, %v1019
        %v1027 = vadd.f32 %v992, %v1019
        %v1028 = vadd.f32 %v993, %v1019
        %v1029 = vadd.f32 %v994, %v1019
        %v1030 = vadd.f32 %v995, %v1019
        %v1031 = vadd.f32 %v996, %v1019
        %v1032 = vadd.f32 %v997, %v1019
        %v1033 = vadd.f32 %v998, %v1019
        %v1034 = vadd.f32 %v999, %v1019
        %v1035 = vadd.f32 %v1000, %v1019
        %v1036 = vadd.f32 %v1001, %v1019
        %v1037 = vadd.f32 %v1002, %v1019
        %v1038 = vadd.f32 %v1003, %v1019
        %v1039 = vadd.f32 %v1004, %v1019
        %v1040 = vadd.f32 %v1005, %v1019
        %v1041 = vadd.f32 %v1006, %v1019
        %v1042 = vadd.f32 %v1007, %v1019
        %v1043 = vadd.f32 %v1008, %v1019
        %v1044 = vadd.f32 %v1009, %v1019
        %v1045 = vadd.f32 %v1010, %v1019
        %v1046 = vadd.f32 %v1011, %v1019
        %v1047 = vadd.f32 %v1012, %v1019
        %v1048 = vadd.f32 %v1013, %v1019
        %v1049 = vadd.f32 %v1014, %v1019
        %v1050 = vadd.f32 %v1015, %v1019
        %v1051 = vadd.f32 %v1016, %v1019
        %v1052 = vadd.f32 %v1017, %v1019
        %v1053 = vxor.u32 %v1021, 2147483648
        %v1054 = vxor.u32 %v1022, 2147483648
        %v1055 = vxor.u32 %v1023, 2147483648
        %v1056 = vxor.u32 %v1024, 2147483648
        %v1057 = vxor.u32 %v1025, 2147483648
        %v1058 = vxor.u32 %v1026, 2147483648
        %v1059 = vxor.u32 %v1027, 2147483648
        %v1060 = vxor.u32 %v1028, 2147483648
        %v1061 = vxor.u32 %v1029, 2147483648
        %v1062 = vxor.u32 %v1030, 2147483648
        %v1063 = vxor.u32 %v1031, 2147483648
        %v1064 = vxor.u32 %v1032, 2147483648
        %v1065 = vxor.u32 %v1033, 2147483648
        %v1066 = vxor.u32 %v1034, 2147483648
        %v1067 = vxor.u32 %v1035, 2147483648
        %v1068 = vxor.u32 %v1036, 2147483648
        %v1069 = vxor.u32 %v1037, 2147483648
        %v1070 = vxor.u32 %v1038, 2147483648
        %v1071 = vxor.u32 %v1039, 2147483648
        %v1072 = vxor.u32 %v1040, 2147483648
        %v1073 = vxor.u32 %v1041, 2147483648
        %v1074 = vxor.u32 %v1042, 2147483648
        %v1075 = vxor.u32 %v1043, 2147483648
        %v1076 = vxor.u32 %v1044, 2147483648
        %v1077 = vxor.u32 %v1045, 2147483648
        %v1078 = vxor.u32 %v1046, 2147483648
        %v1079 = vxor.u32 %v1047, 2147483648
        %v1080 = vxor.u32 %v1048, 2147483648
        %v1081 = vxor.u32 %v1049, 2147483648
        %v1082 = vxor.u32 %v1050, 2147483648
        %v1083 = vxor.u32 %v1051, 2147483648
        %v1084 = vxor.u32 %v1052, 2147483648
        %v1085 = vmul.f32 %v1053, 1.442695
        %v1086 = vpow.pop %v1085
        %v1087 = vmul.f32 %v1054, 1.442695
        %v1088 = vpow.pop %v1087
        %v1089 = vmul.f32 %v1055, 1.442695
        %v1090 = vpow.pop %v1089
        %v1091 = vmul.f32 %v1056, 1.442695
        %v1092 = vpow.pop %v1091
        %v1093 = vmul.f32 %v1057, 1.442695
        %v1094 = vpow.pop %v1093
        %v1095 = vmul.f32 %v1058, 1.442695
        %v1096 = vpow.pop %v1095
        %v1097 = vmul.f32 %v1059, 1.442695
        %v1098 = vpow.pop %v1097
        %v1099 = vmul.f32 %v1060, 1.442695
        %v1100 = vpow.pop %v1099
        %v1101 = vmul.f32 %v1061, 1.442695
        %v1102 = vpow.pop %v1101
        %v1103 = vmul.f32 %v1062, 1.442695
        %v1104 = vpow.pop %v1103
        %v1105 = vmul.f32 %v1063, 1.442695
        %v1106 = vpow.pop %v1105
        %v1107 = vmul.f32 %v1064, 1.442695
        %v1108 = vpow.pop %v1107
        %v1109 = vmul.f32 %v1065, 1.442695
        %v1110 = vpow.pop %v1109
        %v1111 = vmul.f32 %v1066, 1.442695
        %v1112 = vpow.pop %v1111
        %v1113 = vmul.f32 %v1067, 1.442695
        %v1114 = vpow.pop %v1113
        %v1115 = vmul.f32 %v1068, 1.442695
        %v1116 = vpow.pop %v1115
        %v1117 = vmul.f32 %v1069, 1.442695
        %v1118 = vpow.pop %v1117
        %v1119 = vmul.f32 %v1070, 1.442695
        %v1120 = vpow.pop %v1119
        %v1121 = vmul.f32 %v1071, 1.442695
        %v1122 = vpow.pop %v1121
        %v1123 = vmul.f32 %v1072, 1.442695
        %v1124 = vpow.pop %v1123
        %v1125 = vmul.f32 %v1073, 1.442695
        %v1126 = vpow.pop %v1125
        %v1127 = vmul.f32 %v1074, 1.442695
        %v1128 = vpow.pop %v1127
        %v1129 = vmul.f32 %v1075, 1.442695
        %v1130 = vpow.pop %v1129
        %v1131 = vmul.f32 %v1076, 1.442695
        %v1132 = vpow.pop %v1131
        %v1133 = vmul.f32 %v1077, 1.442695
        %v1134 = vpow.pop %v1133
        %v1135 = vmul.f32 %v1078, 1.442695
        %v1136 = vpow.pop %v1135
        %v1137 = vmul.f32 %v1079, 1.442695
        %v1138 = vpow.pop %v1137
        %v1139 = vmul.f32 %v1080, 1.442695
        %v1140 = vpow.pop %v1139
        %v1141 = vmul.f32 %v1081, 1.442695
        %v1142 = vpow.pop %v1141
        %v1143 = vmul.f32 %v1082, 1.442695
        %v1144 = vpow.pop %v1143
        %v1145 = vmul.f32 %v1083, 1.442695
        %v1146 = vpow.pop %v1145
        %v1147 = vmul.f32 %v1084, 1.442695
        %v1148 = vpow.pop %v1147
        %v1149 = vadd.f32 %v1086, 1.0
        %v1150 = vadd.f32 %v1088, 1.0
        %v1151 = vadd.f32 %v1090, 1.0
        %v1152 = vadd.f32 %v1092, 1.0
        %v1153 = vadd.f32 %v1094, 1.0
        %v1154 = vadd.f32 %v1096, 1.0
        %v1155 = vadd.f32 %v1098, 1.0
        %v1156 = vadd.f32 %v1100, 1.0
        %v1157 = vadd.f32 %v1102, 1.0
        %v1158 = vadd.f32 %v1104, 1.0
        %v1159 = vadd.f32 %v1106, 1.0
        %v1160 = vadd.f32 %v1108, 1.0
        %v1161 = vadd.f32 %v1110, 1.0
        %v1162 = vadd.f32 %v1112, 1.0
        %v1163 = vadd.f32 %v1114, 1.0
        %v1164 = vadd.f32 %v1116, 1.0
        %v1165 = vadd.f32 %v1118, 1.0
        %v1166 = vadd.f32 %v1120, 1.0
        %v1167 = vadd.f32 %v1122, 1.0
        %v1168 = vadd.f32 %v1124, 1.0
        %v1169 = vadd.f32 %v1126, 1.0
        %v1170 = vadd.f32 %v1128, 1.0
        %v1171 = vadd.f32 %v1130, 1.0
        %v1172 = vadd.f32 %v1132, 1.0
        %v1173 = vadd.f32 %v1134, 1.0
        %v1174 = vadd.f32 %v1136, 1.0
        %v1175 = vadd.f32 %v1138, 1.0
        %v1176 = vadd.f32 %v1140, 1.0
        %v1177 = vadd.f32 %v1142, 1.0
        %v1178 = vadd.f32 %v1144, 1.0
        %v1179 = vadd.f32 %v1146, 1.0
        %v1180 = vadd.f32 %v1148, 1.0
        %v1181 = vrcp.pop %v1149
        %v1182 = vmul.f32 %v1149, %v1181
        %v1183 = vsub.f32 1.0, %v1182
        %v1184 = vmul.f32 %v1181, %v1183
        %v1185 = vadd.f32 %v1181, %v1184
        %vm1186 = vweird.f32 %v1149
        %vm1187 = vweird.f32 %v1181
        %vm1188 = vmor %vm1186, %vm1187
        %v1189 = vsel %vm1188, %v1181, %v1185
        %v1190 = vand.u32 2147483647, %v1149
        %vm1191 = vcmp.eq.f32.partialorder %v1190, 8.507059e+37
        %v1192 = vand.u32 %v1149, 2147483648
        %v1193 = vor.u32 1.1754944e-38, %v1192
        %v1194 = vsel %vm1191, %v1193, %v1189
        %v1195 = vmul.f32 1.0, %v1194
        %v1196 = vrcp.pop %v1150
        %v1197 = vmul.f32 %v1150, %v1196
        %v1198 = vsub.f32 1.0, %v1197
        %v1199 = vmul.f32 %v1196, %v1198
        %v1200 = vadd.f32 %v1196, %v1199
        %vm1201 = vweird.f32 %v1150
        %vm1202 = vweird.f32 %v1196
        %vm1203 = vmor %vm1201, %vm1202
        %v1204 = vsel %vm1203, %v1196, %v1200
        %v1205 = vand.u32 2147483647, %v1150
        %vm1206 = vcmp.eq.f32.partialorder %v1205, 8.507059e+37
        %v1207 = vand.u32 %v1150, 2147483648
        %v1208 = vor.u32 1.1754944e-38, %v1207
        %v1209 = vsel %vm1206, %v1208, %v1204
        %v1210 = vmul.f32 1.0, %v1209
        %v1211 = vrcp.pop %v1151
        %v1212 = vmul.f32 %v1151, %v1211
        %v1213 = vsub.f32 1.0, %v1212
        %v1214 = vmul.f32 %v1211, %v1213
        %v1215 = vadd.f32 %v1211, %v1214
        %vm1216 = vweird.f32 %v1151
        %vm1217 = vweird.f32 %v1211
        %vm1218 = vmor %vm1216, %vm1217
        %v1219 = vsel %vm1218, %v1211, %v1215
        %v1220 = vand.u32 2147483647, %v1151
        %vm1221 = vcmp.eq.f32.partialorder %v1220, 8.507059e+37
        %v1222 = vand.u32 %v1151, 2147483648
        %v1223 = vor.u32 1.1754944e-38, %v1222
        %v1224 = vsel %vm1221, %v1223, %v1219
        %v1225 = vmul.f32 1.0, %v1224
        %v1226 = vrcp.pop %v1152
        %v1227 = vmul.f32 %v1152, %v1226
        %v1228 = vsub.f32 1.0, %v1227
        %v1229 = vmul.f32 %v1226, %v1228
        %v1230 = vadd.f32 %v1226, %v1229
        %vm1231 = vweird.f32 %v1152
        %vm1232 = vweird.f32 %v1226
        %vm1233 = vmor %vm1231, %vm1232
        %v1234 = vsel %vm1233, %v1226, %v1230
        %v1235 = vand.u32 2147483647, %v1152
        %vm1236 = vcmp.eq.f32.partialorder %v1235, 8.507059e+37
        %v1237 = vand.u32 %v1152, 2147483648
        %v1238 = vor.u32 1.1754944e-38, %v1237
        %v1239 = vsel %vm1236, %v1238, %v1234
        %v1240 = vmul.f32 1.0, %v1239
        %v1241 = vrcp.pop %v1153
        %v1242 = vmul.f32 %v1153, %v1241
        %v1243 = vsub.f32 1.0, %v1242
        %v1244 = vmul.f32 %v1241, %v1243
        %v1245 = vadd.f32 %v1241, %v1244
        %vm1246 = vweird.f32 %v1153
        %vm1247 = vweird.f32 %v1241
        %vm1248 = vmor %vm1246, %vm1247
        %v1249 = vsel %vm1248, %v1241, %v1245
        %v1250 = vand.u32 2147483647, %v1153
        %vm1251 = vcmp.eq.f32.partialorder %v1250, 8.507059e+37
        %v1252 = vand.u32 %v1153, 2147483648
        %v1253 = vor.u32 1.1754944e-38, %v1252
        %v1254 = vsel %vm1251, %v1253, %v1249
        %v1255 = vmul.f32 1.0, %v1254
        %v1256 = vrcp.pop %v1154
        %v1257 = vmul.f32 %v1154, %v1256
        %v1258 = vsub.f32 1.0, %v1257
        %v1259 = vmul.f32 %v1256, %v1258
        %v1260 = vadd.f32 %v1256, %v1259
        %vm1261 = vweird.f32 %v1154
        %vm1262 = vweird.f32 %v1256
        %vm1263 = vmor %vm1261, %vm1262
        %v1264 = vsel %vm1263, %v1256, %v1260
        %v1265 = vand.u32 2147483647, %v1154
        %vm1266 = vcmp.eq.f32.partialorder %v1265, 8.507059e+37
        %v1267 = vand.u32 %v1154, 2147483648
        %v1268 = vor.u32 1.1754944e-38, %v1267
        %v1269 = vsel %vm1266, %v1268, %v1264
        %v1270 = vmul.f32 1.0, %v1269
        %v1271 = vrcp.pop %v1155
        %v1272 = vmul.f32 %v1155, %v1271
        %v1273 = vsub.f32 1.0, %v1272
        %v1274 = vmul.f32 %v1271, %v1273
        %v1275 = vadd.f32 %v1271, %v1274
        %vm1276 = vweird.f32 %v1155
        %vm1277 = vweird.f32 %v1271
        %vm1278 = vmor %vm1276, %vm1277
        %v1279 = vsel %vm1278, %v1271, %v1275
        %v1280 = vand.u32 2147483647, %v1155
        %vm1281 = vcmp.eq.f32.partialorder %v1280, 8.507059e+37
        %v1282 = vand.u32 %v1155, 2147483648
        %v1283 = vor.u32 1.1754944e-38, %v1282
        %v1284 = vsel %vm1281, %v1283, %v1279
        %v1285 = vmul.f32 1.0, %v1284
        %v1286 = vrcp.pop %v1156
        %v1287 = vmul.f32 %v1156, %v1286
        %v1288 = vsub.f32 1.0, %v1287
        %v1289 = vmul.f32 %v1286, %v1288
        %v1290 = vadd.f32 %v1286, %v1289
        %vm1291 = vweird.f32 %v1156
        %vm1292 = vweird.f32 %v1286
        %vm1293 = vmor %vm1291, %vm1292
        %v1294 = vsel %vm1293, %v1286, %v1290
        %v1295 = vand.u32 2147483647, %v1156
        %vm1296 = vcmp.eq.f32.partialorder %v1295, 8.507059e+37
        %v1297 = vand.u32 %v1156, 2147483648
        %v1298 = vor.u32 1.1754944e-38, %v1297
        %v1299 = vsel %vm1296, %v1298, %v1294
        %v1300 = vmul.f32 1.0, %v1299
        %v1301 = vrcp.pop %v1157
        %v1302 = vmul.f32 %v1157, %v1301
        %v1303 = vsub.f32 1.0, %v1302
        %v1304 = vmul.f32 %v1301, %v1303
        %v1305 = vadd.f32 %v1301, %v1304
        %vm1306 = vweird.f32 %v1157
        %vm1307 = vweird.f32 %v1301
        %vm1308 = vmor %vm1306, %vm1307
        %v1309 = vsel %vm1308, %v1301, %v1305
        %v1310 = vand.u32 2147483647, %v1157
        %vm1311 = vcmp.eq.f32.partialorder %v1310, 8.507059e+37
        %v1312 = vand.u32 %v1157, 2147483648
        %v1313 = vor.u32 1.1754944e-38, %v1312
        %v1314 = vsel %vm1311, %v1313, %v1309
        %v1315 = vmul.f32 1.0, %v1314
        %v1316 = vrcp.pop %v1158
        %v1317 = vmul.f32 %v1158, %v1316
        %v1318 = vsub.f32 1.0, %v1317
        %v1319 = vmul.f32 %v1316, %v1318
        %v1320 = vadd.f32 %v1316, %v1319
        %vm1321 = vweird.f32 %v1158
        %vm1322 = vweird.f32 %v1316
        %vm1323 = vmor %vm1321, %vm1322
        %v1324 = vsel %vm1323, %v1316, %v1320
        %v1325 = vand.u32 2147483647, %v1158
        %vm1326 = vcmp.eq.f32.partialorder %v1325, 8.507059e+37
        %v1327 = vand.u32 %v1158, 2147483648
        %v1328 = vor.u32 1.1754944e-38, %v1327
        %v1329 = vsel %vm1326, %v1328, %v1324
        %v1330 = vmul.f32 1.0, %v1329
        %v1331 = vrcp.pop %v1159
        %v1332 = vmul.f32 %v1159, %v1331
        %v1333 = vsub.f32 1.0, %v1332
        %v1334 = vmul.f32 %v1331, %v1333
        %v1335 = vadd.f32 %v1331, %v1334
        %vm1336 = vweird.f32 %v1159
        %vm1337 = vweird.f32 %v1331
        %vm1338 = vmor %vm1336, %vm1337
        %v1339 = vsel %vm1338, %v1331, %v1335
        %v1340 = vand.u32 2147483647, %v1159
        %vm1341 = vcmp.eq.f32.partialorder %v1340, 8.507059e+37
        %v1342 = vand.u32 %v1159, 2147483648
        %v1343 = vor.u32 1.1754944e-38, %v1342
        %v1344 = vsel %vm1341, %v1343, %v1339
        %v1345 = vmul.f32 1.0, %v1344
        %v1346 = vrcp.pop %v1160
        %v1347 = vmul.f32 %v1160, %v1346
        %v1348 = vsub.f32 1.0, %v1347
        %v1349 = vmul.f32 %v1346, %v1348
        %v1350 = vadd.f32 %v1346, %v1349
        %vm1351 = vweird.f32 %v1160
        %vm1352 = vweird.f32 %v1346
        %vm1353 = vmor %vm1351, %vm1352
        %v1354 = vsel %vm1353, %v1346, %v1350
        %v1355 = vand.u32 2147483647, %v1160
        %vm1356 = vcmp.eq.f32.partialorder %v1355, 8.507059e+37
        %v1357 = vand.u32 %v1160, 2147483648
        %v1358 = vor.u32 1.1754944e-38, %v1357
        %v1359 = vsel %vm1356, %v1358, %v1354
        %v1360 = vmul.f32 1.0, %v1359
        %v1361 = vrcp.pop %v1161
        %v1362 = vmul.f32 %v1161, %v1361
        %v1363 = vsub.f32 1.0, %v1362
        %v1364 = vmul.f32 %v1361, %v1363
        %v1365 = vadd.f32 %v1361, %v1364
        %vm1366 = vweird.f32 %v1161
        %vm1367 = vweird.f32 %v1361
        %vm1368 = vmor %vm1366, %vm1367
        %v1369 = vsel %vm1368, %v1361, %v1365
        %v1370 = vand.u32 2147483647, %v1161
        %vm1371 = vcmp.eq.f32.partialorder %v1370, 8.507059e+37
        %v1372 = vand.u32 %v1161, 2147483648
        %v1373 = vor.u32 1.1754944e-38, %v1372
        %v1374 = vsel %vm1371, %v1373, %v1369
        %v1375 = vmul.f32 1.0, %v1374
        %v1376 = vrcp.pop %v1162
        %v1377 = vmul.f32 %v1162, %v1376
        %v1378 = vsub.f32 1.0, %v1377
        %v1379 = vmul.f32 %v1376, %v1378
        %v1380 = vadd.f32 %v1376, %v1379
        %vm1381 = vweird.f32 %v1162
        %vm1382 = vweird.f32 %v1376
        %vm1383 = vmor %vm1381, %vm1382
        %v1384 = vsel %vm1383, %v1376, %v1380
        %v1385 = vand.u32 2147483647, %v1162
        %vm1386 = vcmp.eq.f32.partialorder %v1385, 8.507059e+37
        %v1387 = vand.u32 %v1162, 2147483648
        %v1388 = vor.u32 1.1754944e-38, %v1387
        %v1389 = vsel %vm1386, %v1388, %v1384
        %v1390 = vmul.f32 1.0, %v1389
        %v1391 = vrcp.pop %v1163
        %v1392 = vmul.f32 %v1163, %v1391
        %v1393 = vsub.f32 1.0, %v1392
        %v1394 = vmul.f32 %v1391, %v1393
        %v1395 = vadd.f32 %v1391, %v1394
        %vm1396 = vweird.f32 %v1163
        %vm1397 = vweird.f32 %v1391
        %vm1398 = vmor %vm1396, %vm1397
        %v1399 = vsel %vm1398, %v1391, %v1395
        %v1400 = vand.u32 2147483647, %v1163
        %vm1401 = vcmp.eq.f32.partialorder %v1400, 8.507059e+37
        %v1402 = vand.u32 %v1163, 2147483648
        %v1403 = vor.u32 1.1754944e-38, %v1402
        %v1404 = vsel %vm1401, %v1403, %v1399
        %v1405 = vmul.f32 1.0, %v1404
        %v1406 = vrcp.pop %v1164
        %v1407 = vmul.f32 %v1164, %v1406
        %v1408 = vsub.f32 1.0, %v1407
        %v1409 = vmul.f32 %v1406, %v1408
        %v1410 = vadd.f32 %v1406, %v1409
        %vm1411 = vweird.f32 %v1164
        %vm1412 = vweird.f32 %v1406
        %vm1413 = vmor %vm1411, %vm1412
        %v1414 = vsel %vm1413, %v1406, %v1410
        %v1415 = vand.u32 2147483647, %v1164
        %vm1416 = vcmp.eq.f32.partialorder %v1415, 8.507059e+37
        %v1417 = vand.u32 %v1164, 2147483648
        %v1418 = vor.u32 1.1754944e-38, %v1417
        %v1419 = vsel %vm1416, %v1418, %v1414
        %v1420 = vmul.f32 1.0, %v1419
        %v1421 = vrcp.pop %v1165
        %v1422 = vmul.f32 %v1165, %v1421
        %v1423 = vsub.f32 1.0, %v1422
        %v1424 = vmul.f32 %v1421, %v1423
        %v1425 = vadd.f32 %v1421, %v1424
        %vm1426 = vweird.f32 %v1165
        %vm1427 = vweird.f32 %v1421
        %vm1428 = vmor %vm1426, %vm1427
        %v1429 = vsel %vm1428, %v1421, %v1425
        %v1430 = vand.u32 2147483647, %v1165
        %vm1431 = vcmp.eq.f32.partialorder %v1430, 8.507059e+37
        %v1432 = vand.u32 %v1165, 2147483648
        %v1433 = vor.u32 1.1754944e-38, %v1432
        %v1434 = vsel %vm1431, %v1433, %v1429
        %v1435 = vmul.f32 1.0, %v1434
        %v1436 = vrcp.pop %v1166
        %v1437 = vmul.f32 %v1166, %v1436
        %v1438 = vsub.f32 1.0, %v1437
        %v1439 = vmul.f32 %v1436, %v1438
        %v1440 = vadd.f32 %v1436, %v1439
        %vm1441 = vweird.f32 %v1166
        %vm1442 = vweird.f32 %v1436
        %vm1443 = vmor %vm1441, %vm1442
        %v1444 = vsel %vm1443, %v1436, %v1440
        %v1445 = vand.u32 2147483647, %v1166
        %vm1446 = vcmp.eq.f32.partialorder %v1445, 8.507059e+37
        %v1447 = vand.u32 %v1166, 2147483648
        %v1448 = vor.u32 1.1754944e-38, %v1447
        %v1449 = vsel %vm1446, %v1448, %v1444
        %v1450 = vmul.f32 1.0, %v1449
        %v1451 = vrcp.pop %v1167
        %v1452 = vmul.f32 %v1167, %v1451
        %v1453 = vsub.f32 1.0, %v1452
        %v1454 = vmul.f32 %v1451, %v1453
        %v1455 = vadd.f32 %v1451, %v1454
        %vm1456 = vweird.f32 %v1167
        %vm1457 = vweird.f32 %v1451
        %vm1458 = vmor %vm1456, %vm1457
        %v1459 = vsel %vm1458, %v1451, %v1455
        %v1460 = vand.u32 2147483647, %v1167
        %vm1461 = vcmp.eq.f32.partialorder %v1460, 8.507059e+37
        %v1462 = vand.u32 %v1167, 2147483648
        %v1463 = vor.u32 1.1754944e-38, %v1462
        %v1464 = vsel %vm1461, %v1463, %v1459
        %v1465 = vmul.f32 1.0, %v1464
        %v1466 = vrcp.pop %v1168
        %v1467 = vmul.f32 %v1168, %v1466
        %v1468 = vsub.f32 1.0, %v1467
        %v1469 = vmul.f32 %v1466, %v1468
        %v1470 = vadd.f32 %v1466, %v1469
        %vm1471 = vweird.f32 %v1168
        %vm1472 = vweird.f32 %v1466
        %vm1473 = vmor %vm1471, %vm1472
        %v1474 = vsel %vm1473, %v1466, %v1470
        %v1475 = vand.u32 2147483647, %v1168
        %vm1476 = vcmp.eq.f32.partialorder %v1475, 8.507059e+37
        %v1477 = vand.u32 %v1168, 2147483648
        %v1478 = vor.u32 1.1754944e-38, %v1477
        %v1479 = vsel %vm1476, %v1478, %v1474
        %v1480 = vmul.f32 1.0, %v1479
        %v1481 = vrcp.pop %v1169
        %v1482 = vmul.f32 %v1169, %v1481
        %v1483 = vsub.f32 1.0, %v1482
        %v1484 = vmul.f32 %v1481, %v1483
        %v1485 = vadd.f32 %v1481, %v1484
        %vm1486 = vweird.f32 %v1169
        %vm1487 = vweird.f32 %v1481
        %vm1488 = vmor %vm1486, %vm1487
        %v1489 = vsel %vm1488, %v1481, %v1485
        %v1490 = vand.u32 2147483647, %v1169
        %vm1491 = vcmp.eq.f32.partialorder %v1490, 8.507059e+37
        %v1492 = vand.u32 %v1169, 2147483648
        %v1493 = vor.u32 1.1754944e-38, %v1492
        %v1494 = vsel %vm1491, %v1493, %v1489
        %v1495 = vmul.f32 1.0, %v1494
        %v1496 = vrcp.pop %v1170
        %v1497 = vmul.f32 %v1170, %v1496
        %v1498 = vsub.f32 1.0, %v1497
        %v1499 = vmul.f32 %v1496, %v1498
        %v1500 = vadd.f32 %v1496, %v1499
        %vm1501 = vweird.f32 %v1170
        %vm1502 = vweird.f32 %v1496
        %vm1503 = vmor %vm1501, %vm1502
        %v1504 = vsel %vm1503, %v1496, %v1500
        %v1505 = vand.u32 2147483647, %v1170
        %vm1506 = vcmp.eq.f32.partialorder %v1505, 8.507059e+37
        %v1507 = vand.u32 %v1170, 2147483648
        %v1508 = vor.u32 1.1754944e-38, %v1507
        %v1509 = vsel %vm1506, %v1508, %v1504
        %v1510 = vmul.f32 1.0, %v1509
        %v1511 = vrcp.pop %v1171
        %v1512 = vmul.f32 %v1171, %v1511
        %v1513 = vsub.f32 1.0, %v1512
        %v1514 = vmul.f32 %v1511, %v1513
        %v1515 = vadd.f32 %v1511, %v1514
        %vm1516 = vweird.f32 %v1171
        %vm1517 = vweird.f32 %v1511
        %vm1518 = vmor %vm1516, %vm1517
        %v1519 = vsel %vm1518, %v1511, %v1515
        %v1520 = vand.u32 2147483647, %v1171
        %vm1521 = vcmp.eq.f32.partialorder %v1520, 8.507059e+37
        %v1522 = vand.u32 %v1171, 2147483648
        %v1523 = vor.u32 1.1754944e-38, %v1522
        %v1524 = vsel %vm1521, %v1523, %v1519
        %v1525 = vmul.f32 1.0, %v1524
        %v1526 = vrcp.pop %v1172
        %v1527 = vmul.f32 %v1172, %v1526
        %v1528 = vsub.f32 1.0, %v1527
        %v1529 = vmul.f32 %v1526, %v1528
        %v1530 = vadd.f32 %v1526, %v1529
        %vm1531 = vweird.f32 %v1172
        %vm1532 = vweird.f32 %v1526
        %vm1533 = vmor %vm1531, %vm1532
        %v1534 = vsel %vm1533, %v1526, %v1530
        %v1535 = vand.u32 2147483647, %v1172
        %vm1536 = vcmp.eq.f32.partialorder %v1535, 8.507059e+37
        %v1537 = vand.u32 %v1172, 2147483648
        %v1538 = vor.u32 1.1754944e-38, %v1537
        %v1539 = vsel %vm1536, %v1538, %v1534
        %v1540 = vmul.f32 1.0, %v1539
        %v1541 = vrcp.pop %v1173
        %v1542 = vmul.f32 %v1173, %v1541
        %v1543 = vsub.f32 1.0, %v1542
        %v1544 = vmul.f32 %v1541, %v1543
        %v1545 = vadd.f32 %v1541, %v1544
        %vm1546 = vweird.f32 %v1173
        %vm1547 = vweird.f32 %v1541
        %vm1548 = vmor %vm1546, %vm1547
        %v1549 = vsel %vm1548, %v1541, %v1545
        %v1550 = vand.u32 2147483647, %v1173
        %vm1551 = vcmp.eq.f32.partialorder %v1550, 8.507059e+37
        %v1552 = vand.u32 %v1173, 2147483648
        %v1553 = vor.u32 1.1754944e-38, %v1552
        %v1554 = vsel %vm1551, %v1553, %v1549
        %v1555 = vmul.f32 1.0, %v1554
        %v1556 = vrcp.pop %v1174
        %v1557 = vmul.f32 %v1174, %v1556
        %v1558 = vsub.f32 1.0, %v1557
        %v1559 = vmul.f32 %v1556, %v1558
        %v1560 = vadd.f32 %v1556, %v1559
        %vm1561 = vweird.f32 %v1174
        %vm1562 = vweird.f32 %v1556
        %vm1563 = vmor %vm1561, %vm1562
        %v1564 = vsel %vm1563, %v1556, %v1560
        %v1565 = vand.u32 2147483647, %v1174
        %vm1566 = vcmp.eq.f32.partialorder %v1565, 8.507059e+37
        %v1567 = vand.u32 %v1174, 2147483648
        %v1568 = vor.u32 1.1754944e-38, %v1567
        %v1569 = vsel %vm1566, %v1568, %v1564
        %v1570 = vmul.f32 1.0, %v1569
        %v1571 = vrcp.pop %v1175
        %v1572 = vmul.f32 %v1175, %v1571
        %v1573 = vsub.f32 1.0, %v1572
        %v1574 = vmul.f32 %v1571, %v1573
        %v1575 = vadd.f32 %v1571, %v1574
        %vm1576 = vweird.f32 %v1175
        %vm1577 = vweird.f32 %v1571
        %vm1578 = vmor %vm1576, %vm1577
        %v1579 = vsel %vm1578, %v1571, %v1575
        %v1580 = vand.u32 2147483647, %v1175
        %vm1581 = vcmp.eq.f32.partialorder %v1580, 8.507059e+37
        %v1582 = vand.u32 %v1175, 2147483648
        %v1583 = vor.u32 1.1754944e-38, %v1582
        %v1584 = vsel %vm1581, %v1583, %v1579
        %v1585 = vmul.f32 1.0, %v1584
        %v1586 = vrcp.pop %v1176
        %v1587 = vmul.f32 %v1176, %v1586
        %v1588 = vsub.f32 1.0, %v1587
        %v1589 = vmul.f32 %v1586, %v1588
        %v1590 = vadd.f32 %v1586, %v1589
        %vm1591 = vweird.f32 %v1176
        %vm1592 = vweird.f32 %v1586
        %vm1593 = vmor %vm1591, %vm1592
        %v1594 = vsel %vm1593, %v1586, %v1590
        %v1595 = vand.u32 2147483647, %v1176
        %vm1596 = vcmp.eq.f32.partialorder %v1595, 8.507059e+37
        %v1597 = vand.u32 %v1176, 2147483648
        %v1598 = vor.u32 1.1754944e-38, %v1597
        %v1599 = vsel %vm1596, %v1598, %v1594
        %v1600 = vmul.f32 1.0, %v1599
        %v1601 = vrcp.pop %v1177
        %v1602 = vmul.f32 %v1177, %v1601
        %v1603 = vsub.f32 1.0, %v1602
        %v1604 = vmul.f32 %v1601, %v1603
        %v1605 = vadd.f32 %v1601, %v1604
        %vm1606 = vweird.f32 %v1177
        %vm1607 = vweird.f32 %v1601
        %vm1608 = vmor %vm1606, %vm1607
        %v1609 = vsel %vm1608, %v1601, %v1605
        %v1610 = vand.u32 2147483647, %v1177
        %vm1611 = vcmp.eq.f32.partialorder %v1610, 8.507059e+37
        %v1612 = vand.u32 %v1177, 2147483648
        %v1613 = vor.u32 1.1754944e-38, %v1612
        %v1614 = vsel %vm1611, %v1613, %v1609
        %v1615 = vmul.f32 1.0, %v1614
        %v1616 = vrcp.pop %v1178
        %v1617 = vmul.f32 %v1178, %v1616
        %v1618 = vsub.f32 1.0, %v1617
        %v1619 = vmul.f32 %v1616, %v1618
        %v1620 = vadd.f32 %v1616, %v1619
        %vm1621 = vweird.f32 %v1178
        %vm1622 = vweird.f32 %v1616
        %vm1623 = vmor %vm1621, %vm1622
        %v1624 = vsel %vm1623, %v1616, %v1620
        %v1625 = vand.u32 2147483647, %v1178
        %vm1626 = vcmp.eq.f32.partialorder %v1625, 8.507059e+37
        %v1627 = vand.u32 %v1178, 2147483648
        %v1628 = vor.u32 1.1754944e-38, %v1627
        %v1629 = vsel %vm1626, %v1628, %v1624
        %v1630 = vmul.f32 1.0, %v1629
        %v1631 = vrcp.pop %v1179
        %v1632 = vmul.f32 %v1179, %v1631
        %v1633 = vsub.f32 1.0, %v1632
        %v1634 = vmul.f32 %v1631, %v1633
        %v1635 = vadd.f32 %v1631, %v1634
        %vm1636 = vweird.f32 %v1179
        %vm1637 = vweird.f32 %v1631
        %vm1638 = vmor %vm1636, %vm1637
        %v1639 = vsel %vm1638, %v1631, %v1635
        %v1640 = vand.u32 2147483647, %v1179
        %vm1641 = vcmp.eq.f32.partialorder %v1640, 8.507059e+37
        %v1642 = vand.u32 %v1179, 2147483648
        %v1643 = vor.u32 1.1754944e-38, %v1642
        %v1644 = vsel %vm1641, %v1643, %v1639
        %v1645 = vmul.f32 1.0, %v1644
        %v1646 = vrcp.pop %v1180
        %v1647 = vmul.f32 %v1180, %v1646
        %v1648 = vsub.f32 1.0, %v1647
        %v1649 = vmul.f32 %v1646, %v1648
        %v1650 = vadd.f32 %v1646, %v1649
        %vm1651 = vweird.f32 %v1180
        %vm1652 = vweird.f32 %v1646
        %vm1653 = vmor %vm1651, %vm1652
        %v1654 = vsel %vm1653, %v1646, %v1650
        %v1655 = vand.u32 2147483647, %v1180
        %vm1656 = vcmp.eq.f32.partialorder %v1655, 8.507059e+37
        %v1657 = vand.u32 %v1180, 2147483648
        %v1658 = vor.u32 1.1754944e-38, %v1657
        %v1659 = vsel %vm1656, %v1658, %v1654
        %v1660 = vmul.f32 1.0, %v1659
        %v1661 = vmul.f32 %v1021, %v1195
        %v1662 = vmul.f32 %v1022, %v1210
        %v1663 = vmul.f32 %v1023, %v1225
        %v1664 = vmul.f32 %v1024, %v1240
        %v1665 = vmul.f32 %v1025, %v1255
        %v1666 = vmul.f32 %v1026, %v1270
        %v1667 = vmul.f32 %v1027, %v1285
        %v1668 = vmul.f32 %v1028, %v1300
        %v1669 = vmul.f32 %v1029, %v1315
        %v1670 = vmul.f32 %v1030, %v1330
        %v1671 = vmul.f32 %v1031, %v1345
        %v1672 = vmul.f32 %v1032, %v1360
        %v1673 = vmul.f32 %v1033, %v1375
        %v1674 = vmul.f32 %v1034, %v1390
        %v1675 = vmul.f32 %v1035, %v1405
        %v1676 = vmul.f32 %v1036, %v1420
        %v1677 = vmul.f32 %v1037, %v1435
        %v1678 = vmul.f32 %v1038, %v1450
        %v1679 = vmul.f32 %v1039, %v1465
        %v1680 = vmul.f32 %v1040, %v1480
        %v1681 = vmul.f32 %v1041, %v1495
        %v1682 = vmul.f32 %v1042, %v1510
        %v1683 = vmul.f32 %v1043, %v1525
        %v1684 = vmul.f32 %v1044, %v1540
        %v1685 = vmul.f32 %v1045, %v1555
        %v1686 = vmul.f32 %v1046, %v1570
        %v1687 = vmul.f32 %v1047, %v1585
        %v1688 = vmul.f32 %v1048, %v1600
        %v1689 = vmul.f32 %v1049, %v1615
        %v1690 = vmul.f32 %v1050, %v1630
        %v1691 = vmul.f32 %v1051, %v1645
        %v1692 = vmul.f32 %v1052, %v1660
        %v1693 = vld [vmem:[%s9] sm:$0x1]
        %v1694 = vrot.slane %v1661, 7
        %v1695 = vrot.slane %v1662, 7
        %v1696 = vrot.slane %v1663, 7
        %v1697 = vrot.slane %v1664, 7
        %v1698 = vrot.slane %v1665, 7
        %v1699 = vrot.slane %v1666, 7
        %v1700 = vrot.slane %v1667, 7
        %v1701 = vrot.slane %v1668, 7
        %v1702 = vrot.slane %v1669, 7
        %v1703 = vrot.slane %v1670, 7
        %v1704 = vrot.slane %v1671, 7
        %v1705 = vrot.slane %v1672, 7
        %v1706 = vrot.slane %v1673, 7
        %v1707 = vrot.slane %v1674, 7
        %v1708 = vrot.slane %v1675, 7
        %v1709 = vrot.slane %v1676, 7
        %v1710 = vrot.slane %v1677, 7
        %v1711 = vrot.slane %v1678, 7
        %v1712 = vrot.slane %v1679, 7
        %v1713 = vrot.slane %v1680, 7
        %v1714 = vrot.slane %v1681, 7
        %v1715 = vrot.slane %v1682, 7
        %v1716 = vrot.slane %v1683, 7
        %v1717 = vrot.slane %v1684, 7
        %v1718 = vrot.slane %v1685, 7
        %v1719 = vrot.slane %v1686, 7
        %v1720 = vrot.slane %v1687, 7
        %v1721 = vrot.slane %v1688, 7
        %v1722 = vrot.slane %v1689, 7
        %v1723 = vrot.slane %v1690, 7
        %v1724 = vrot.slane %v1691, 7
        %v1725 = vrot.slane %v1692, 7
        %v1726 = vlaneseq
        %v1727 = vshrl.u32 %v1726, 7
        %vm1728 = vcmp.lt.s32.totalorder %v1727, 1
        %v1729 = vsel %vm1728, %v1724, %v1725
        %v1730 = vsel %vm1728, %v1723, %v1724
        %v1731 = vsel %vm1728, %v1722, %v1723
        %v1732 = vsel %vm1728, %v1721, %v1722
        %v1733 = vsel %vm1728, %v1720, %v1721
        %v1734 = vsel %vm1728, %v1719, %v1720
        %v1735 = vsel %vm1728, %v1718, %v1719
        %v1736 = vsel %vm1728, %v1717, %v1718
        %v1737 = vsel %vm1728, %v1716, %v1717
        %v1738 = vsel %vm1728, %v1715, %v1716
        %v1739 = vsel %vm1728, %v1714, %v1715
        %v1740 = vsel %vm1728, %v1713, %v1714
        %v1741 = vsel %vm1728, %v1712, %v1713
        %v1742 = vsel %vm1728, %v1711, %v1712
        %v1743 = vsel %vm1728, %v1710, %v1711
        %v1744 = vsel %vm1728, %v1709, %v1710
        %v1745 = vsel %vm1728, %v1708, %v1709
        %v1746 = vsel %vm1728, %v1707, %v1708
        %v1747 = vsel %vm1728, %v1706, %v1707
        %v1748 = vsel %vm1728, %v1705, %v1706
        %v1749 = vsel %vm1728, %v1704, %v1705
        %v1750 = vsel %vm1728, %v1703, %v1704
        %v1751 = vsel %vm1728, %v1702, %v1703
        %v1752 = vsel %vm1728, %v1701, %v1702
        %v1753 = vsel %vm1728, %v1700, %v1701
        %v1754 = vsel %vm1728, %v1699, %v1700
        %v1755 = vsel %vm1728, %v1698, %v1699
        %v1756 = vsel %vm1728, %v1697, %v1698
        %v1757 = vsel %vm1728, %v1696, %v1697
        %v1758 = vsel %vm1728, %v1695, %v1696
        %v1759 = vsel %vm1728, %v1694, %v1695
        %v1760 = vsel %vm1728, %v1725, %v1694
        %vm1761 = vcmp.ge.s32.totalorder %v588, 1
        %vm1762 = vcmp.ge.s32.totalorder %v589, 1
        %vm1763 = vcmp.ge.s32.totalorder %v590, 1
        %vm1764 = vcmp.ge.s32.totalorder %v591, 1
        %vm1765 = vcmp.ge.s32.totalorder %v592, 1
        %vm1766 = vcmp.ge.s32.totalorder %v593, 1
        %vm1767 = vcmp.ge.s32.totalorder %v594, 1
        %vm1768 = vcmp.ge.s32.totalorder %v595, 1
        %vm1769 = vcmp.ge.s32.totalorder %v596, 1
        %vm1770 = vcmp.ge.s32.totalorder %v597, 1
        %vm1771 = vcmp.ge.s32.totalorder %v598, 1
        %vm1772 = vcmp.ge.s32.totalorder %v599, 1
        %vm1773 = vcmp.ge.s32.totalorder %v600, 1
        %vm1774 = vcmp.ge.s32.totalorder %v601, 1
        %vm1775 = vcmp.ge.s32.totalorder %v602, 1
        %vm1776 = vcmp.ge.s32.totalorder %v603, 1
        %vm1777 = vcmp.ge.s32.totalorder %v604, 1
        %vm1778 = vcmp.ge.s32.totalorder %v605, 1
        %vm1779 = vcmp.ge.s32.totalorder %v606, 1
        %vm1780 = vcmp.ge.s32.totalorder %v607, 1
        %vm1781 = vcmp.ge.s32.totalorder %v608, 1
        %vm1782 = vcmp.ge.s32.totalorder %v609, 1
        %vm1783 = vcmp.ge.s32.totalorder %v610, 1
        %vm1784 = vcmp.ge.s32.totalorder %v611, 1
        %vm1785 = vcmp.ge.s32.totalorder %v612, 1
        %vm1786 = vcmp.ge.s32.totalorder %v613, 1
        %vm1787 = vcmp.ge.s32.totalorder %v614, 1
        %vm1788 = vcmp.ge.s32.totalorder %v615, 1
        %vm1789 = vcmp.ge.s32.totalorder %v616, 1
        %vm1790 = vcmp.ge.s32.totalorder %v617, 1
        %vm1791 = vcmp.ge.s32.totalorder %v618, 1
        %vm1792 = vcmp.ge.s32.totalorder %v619, 1
        %vm1793 = vcmp.ge.s32.totalorder %v620, 1
        %vm1794 = vcmp.ge.s32.totalorder %v621, 1
        %vm1795 = vcmp.ge.s32.totalorder %v622, 1
        %vm1796 = vcmp.ge.s32.totalorder %v623, 1
        %vm1797 = vcmp.ge.s32.totalorder %v624, 1
        %vm1798 = vcmp.ge.s32.totalorder %v625, 1
        %vm1799 = vcmp.ge.s32.totalorder %v626, 1
        %vm1800 = vcmp.ge.s32.totalorder %v627, 1
        %vm1801 = vcmp.ge.s32.totalorder %v628, 1
        %vm1802 = vcmp.ge.s32.totalorder %v629, 1
        %vm1803 = vcmp.ge.s32.totalorder %v630, 1
        %vm1804 = vcmp.ge.s32.totalorder %v631, 1
        %vm1805 = vcmp.ge.s32.totalorder %v632, 1
        %vm1806 = vcmp.ge.s32.totalorder %v633, 1
        %vm1807 = vcmp.ge.s32.totalorder %v634, 1
        %vm1808 = vcmp.ge.s32.totalorder %v635, 1
        %vm1809 = vcmp.ge.s32.totalorder %v636, 1
        %vm1810 = vcmp.ge.s32.totalorder %v637, 1
        %vm1811 = vcmp.ge.s32.totalorder %v638, 1
        %vm1812 = vcmp.ge.s32.totalorder %v639, 1
        %vm1813 = vcmp.ge.s32.totalorder %v640, 1
        %vm1814 = vcmp.ge.s32.totalorder %v641, 1
        %vm1815 = vcmp.ge.s32.totalorder %v642, 1
        %vm1816 = vcmp.ge.s32.totalorder %v643, 1
        %vm1817 = vcmp.ge.s32.totalorder %v644, 1
        %vm1818 = vcmp.ge.s32.totalorder %v645, 1
        %vm1819 = vcmp.ge.s32.totalorder %v646, 1
        %vm1820 = vcmp.ge.s32.totalorder %v647, 1
        %vm1821 = vcmp.ge.s32.totalorder %v648, 1
        %vm1822 = vcmp.ge.s32.totalorder %v649, 1
        %vm1823 = vcmp.ge.s32.totalorder %v650, 1
        %vm1824 = vcmp.ge.s32.totalorder %v651, 1
        %vm1825 = vmand %vm1761, %vm1793
        %vm1826 = vmand %vm1762, %vm1794
        %vm1827 = vmand %vm1763, %vm1795
        %vm1828 = vmand %vm1764, %vm1796
        %vm1829 = vmand %vm1765, %vm1797
        %vm1830 = vmand %vm1766, %vm1798
        %vm1831 = vmand %vm1767, %vm1799
        %vm1832 = vmand %vm1768, %vm1800
        %vm1833 = vmand %vm1769, %vm1801
        %vm1834 = vmand %vm1770, %vm1802
        %vm1835 = vmand %vm1771, %vm1803
        %vm1836 = vmand %vm1772, %vm1804
        %vm1837 = vmand %vm1773, %vm1805
        %vm1838 = vmand %vm1774, %vm1806
        %vm1839 = vmand %vm1775, %vm1807
        %vm1840 = vmand %vm1776, %vm1808
        %vm1841 = vmand %vm1777, %vm1809
        %vm1842 = vmand %vm1778, %vm1810
        %vm1843 = vmand %vm1779, %vm1811
        %vm1844 = vmand %vm1780, %vm1812
        %vm1845 = vmand %vm1781, %vm1813
        %vm1846 = vmand %vm1782, %vm1814
        %vm1847 = vmand %vm1783, %vm1815
        %vm1848 = vmand %vm1784, %vm1816
        %vm1849 = vmand %vm1785, %vm1817
        %vm1850 = vmand %vm1786, %vm1818
        %vm1851 = vmand %vm1787, %vm1819
        %vm1852 = vmand %vm1788, %vm1820
        %vm1853 = vmand %vm1789, %vm1821
        %vm1854 = vmand %vm1790, %vm1822
        %vm1855 = vmand %vm1791, %vm1823
        %vm1856 = vmand %vm1792, %vm1824
        %v1857 = vsel %vm1825, 1, 0
        %v1858 = vsel %vm1826, 1, 0
        %v1859 = vsel %vm1827, 1, 0
        %v1860 = vsel %vm1828, 1, 0
        %v1861 = vsel %vm1829, 1, 0
        %v1862 = vsel %vm1830, 1, 0
        %v1863 = vsel %vm1831, 1, 0
        %v1864 = vsel %vm1832, 1, 0
        %v1865 = vsel %vm1833, 1, 0
        %v1866 = vsel %vm1834, 1, 0
        %v1867 = vsel %vm1835, 1, 0
        %v1868 = vsel %vm1836, 1, 0
        %v1869 = vsel %vm1837, 1, 0
        %v1870 = vsel %vm1838, 1, 0
        %v1871 = vsel %vm1839, 1, 0
        %v1872 = vsel %vm1840, 1, 0
        %v1873 = vsel %vm1841, 1, 0
        %v1874 = vsel %vm1842, 1, 0
        %v1875 = vsel %vm1843, 1, 0
        %v1876 = vsel %vm1844, 1, 0
        %v1877 = vsel %vm1845, 1, 0
        %v1878 = vsel %vm1846, 1, 0
        %v1879 = vsel %vm1847, 1, 0
        %v1880 = vsel %vm1848, 1, 0
        %v1881 = vsel %vm1849, 1, 0
        %v1882 = vsel %vm1850, 1, 0
        %v1883 = vsel %vm1851, 1, 0
        %v1884 = vsel %vm1852, 1, 0
        %v1885 = vsel %vm1853, 1, 0
        %v1886 = vsel %vm1854, 1, 0
        %v1887 = vsel %vm1855, 1, 0
        %v1888 = vsel %vm1856, 1, 0
        %1889 = vset.pattern.permute.xlu0 0
        %1890 = vperm.xlu0 %1889, %v1857
        %v1891 = vpop.permute.xlu0 %1890
        %1892 = vset.pattern.permute.xlu0 0
        %1893 = vperm.xlu0 %1892, %v1858
        %v1894 = vpop.permute.xlu0 %1893
        %1895 = vset.pattern.permute.xlu0 0
        %1896 = vperm.xlu0 %1895, %v1859
        %v1897 = vpop.permute.xlu0 %1896
        %1898 = vset.pattern.permute.xlu0 0
        %1899 = vperm.xlu0 %1898, %v1860
        %v1900 = vpop.permute.xlu0 %1899
        %1901 = vset.pattern.permute.xlu0 0
        %1902 = vperm.xlu0 %1901, %v1861
        %v1903 = vpop.permute.xlu0 %1902
        %1904 = vset.pattern.permute.xlu0 0
        %1905 = vperm.xlu0 %1904, %v1862
        %v1906 = vpop.permute.xlu0 %1905
        %1907 = vset.pattern.permute.xlu0 0
        %1908 = vperm.xlu0 %1907, %v1863
        %v1909 = vpop.permute.xlu0 %1908
        %1910 = vset.pattern.permute.xlu0 0
        %1911 = vperm.xlu0 %1910, %v1864
        %v1912 = vpop.permute.xlu0 %1911
        %1913 = vset.pattern.permute.xlu0 0
        %1914 = vperm.xlu0 %1913, %v1865
        %v1915 = vpop.permute.xlu0 %1914
        %1916 = vset.pattern.permute.xlu0 0
        %1917 = vperm.xlu0 %1916, %v1866
        %v1918 = vpop.permute.xlu0 %1917
        %1919 = vset.pattern.permute.xlu0 0
        %1920 = vperm.xlu0 %1919, %v1867
        %v1921 = vpop.permute.xlu0 %1920
        %1922 = vset.pattern.permute.xlu0 0
        %1923 = vperm.xlu0 %1922, %v1868
        %v1924 = vpop.permute.xlu0 %1923
        %1925 = vset.pattern.permute.xlu0 0
        %1926 = vperm.xlu0 %1925, %v1869
        %v1927 = vpop.permute.xlu0 %1926
        %1928 = vset.pattern.permute.xlu0 0
        %1929 = vperm.xlu0 %1928, %v1870
        %v1930 = vpop.permute.xlu0 %1929
        %1931 = vset.pattern.permute.xlu0 0
        %1932 = vperm.xlu0 %1931, %v1871
        %v1933 = vpop.permute.xlu0 %1932
        %1934 = vset.pattern.permute.xlu0 0
        %1935 = vperm.xlu0 %1934, %v1872
        %v1936 = vpop.permute.xlu0 %1935
        %1937 = vset.pattern.permute.xlu0 0
        %1938 = vperm.xlu0 %1937, %v1873
        %v1939 = vpop.permute.xlu0 %1938
        %1940 = vset.pattern.permute.xlu0 0
        %1941 = vperm.xlu0 %1940, %v1874
        %v1942 = vpop.permute.xlu0 %1941
        %1943 = vset.pattern.permute.xlu0 0
        %1944 = vperm.xlu0 %1943, %v1875
        %v1945 = vpop.permute.xlu0 %1944
        %1946 = vset.pattern.permute.xlu0 0
        %1947 = vperm.xlu0 %1946, %v1876
        %v1948 = vpop.permute.xlu0 %1947
        %1949 = vset.pattern.permute.xlu0 0
        %1950 = vperm.xlu0 %1949, %v1877
        %v1951 = vpop.permute.xlu0 %1950
        %1952 = vset.pattern.permute.xlu0 0
        %1953 = vperm.xlu0 %1952, %v1878
        %v1954 = vpop.permute.xlu0 %1953
        %1955 = vset.pattern.permute.xlu0 0
        %1956 = vperm.xlu0 %1955, %v1879
        %v1957 = vpop.permute.xlu0 %1956
        %1958 = vset.pattern.permute.xlu0 0
        %1959 = vperm.xlu0 %1958, %v1880
        %v1960 = vpop.permute.xlu0 %1959
        %1961 = vset.pattern.permute.xlu0 0
        %1962 = vperm.xlu0 %1961, %v1881
        %v1963 = vpop.permute.xlu0 %1962
        %1964 = vset.pattern.permute.xlu0 0
        %1965 = vperm.xlu0 %1964, %v1882
        %v1966 = vpop.permute.xlu0 %1965
        %1967 = vset.pattern.permute.xlu0 0
        %1968 = vperm.xlu0 %1967, %v1883
        %v1969 = vpop.permute.xlu0 %1968
        %1970 = vset.pattern.permute.xlu0 0
        %1971 = vperm.xlu0 %1970, %v1884
        %v1972 = vpop.permute.xlu0 %1971
        %1973 = vset.pattern.permute.xlu0 0
        %1974 = vperm.xlu0 %1973, %v1885
        %v1975 = vpop.permute.xlu0 %1974
        %1976 = vset.pattern.permute.xlu0 0
        %1977 = vperm.xlu0 %1976, %v1886
        %v1978 = vpop.permute.xlu0 %1977
        %1979 = vset.pattern.permute.xlu0 0
        %1980 = vperm.xlu0 %1979, %v1887
        %v1981 = vpop.permute.xlu0 %1980
        %1982 = vset.pattern.permute.xlu0 0
        %1983 = vperm.xlu0 %1982, %v1888
        %v1984 = vpop.permute.xlu0 %1983
        %vm1985 = vcmp.eq.s32.totalorder %v1891, 1
        %vm1986 = vcmp.eq.s32.totalorder %v1894, 1
        %vm1987 = vcmp.eq.s32.totalorder %v1897, 1
        %vm1988 = vcmp.eq.s32.totalorder %v1900, 1
        %vm1989 = vcmp.eq.s32.totalorder %v1903, 1
        %vm1990 = vcmp.eq.s32.totalorder %v1906, 1
        %vm1991 = vcmp.eq.s32.totalorder %v1909, 1
        %vm1992 = vcmp.eq.s32.totalorder %v1912, 1
        %vm1993 = vcmp.eq.s32.totalorder %v1915, 1
        %vm1994 = vcmp.eq.s32.totalorder %v1918, 1
        %vm1995 = vcmp.eq.s32.totalorder %v1921, 1
        %vm1996 = vcmp.eq.s32.totalorder %v1924, 1
        %vm1997 = vcmp.eq.s32.totalorder %v1927, 1
        %vm1998 = vcmp.eq.s32.totalorder %v1930, 1
        %vm1999 = vcmp.eq.s32.totalorder %v1933, 1
        %vm2000 = vcmp.eq.s32.totalorder %v1936, 1
        %vm2001 = vcmp.eq.s32.totalorder %v1939, 1
        %vm2002 = vcmp.eq.s32.totalorder %v1942, 1
        %vm2003 = vcmp.eq.s32.totalorder %v1945, 1
        %vm2004 = vcmp.eq.s32.totalorder %v1948, 1
        %vm2005 = vcmp.eq.s32.totalorder %v1951, 1
        %vm2006 = vcmp.eq.s32.totalorder %v1954, 1
        %vm2007 = vcmp.eq.s32.totalorder %v1957, 1
        %vm2008 = vcmp.eq.s32.totalorder %v1960, 1
        %vm2009 = vcmp.eq.s32.totalorder %v1963, 1
        %vm2010 = vcmp.eq.s32.totalorder %v1966, 1
        %vm2011 = vcmp.eq.s32.totalorder %v1969, 1
        %vm2012 = vcmp.eq.s32.totalorder %v1972, 1
        %vm2013 = vcmp.eq.s32.totalorder %v1975, 1
        %vm2014 = vcmp.eq.s32.totalorder %v1978, 1
        %vm2015 = vcmp.eq.s32.totalorder %v1981, 1
        %vm2016 = vcmp.eq.s32.totalorder %v1984, 1
        %v2017 = vsel %vm1985, %v1730, 0.0
        %v2018 = vsel %vm1986, %v1729, 0.0
        %v2019 = vsel %vm1987, %v1760, 0.0
        %v2020 = vsel %vm1988, %v1759, 0.0
        %v2021 = vsel %vm1989, %v1758, 0.0
        %v2022 = vsel %vm1990, %v1757, 0.0
        %v2023 = vsel %vm1991, %v1756, 0.0
        %v2024 = vsel %vm1992, %v1755, 0.0
        %v2025 = vsel %vm1993, %v1754, 0.0
        %v2026 = vsel %vm1994, %v1753, 0.0
        %v2027 = vsel %vm1995, %v1752, 0.0
        %v2028 = vsel %vm1996, %v1751, 0.0
        %v2029 = vsel %vm1997, %v1750, 0.0
        %v2030 = vsel %vm1998, %v1749, 0.0
        %v2031 = vsel %vm1999, %v1748, 0.0
        %v2032 = vsel %vm2000, %v1747, 0.0
        %v2033 = vsel %vm2001, %v1746, 0.0
        %v2034 = vsel %vm2002, %v1745, 0.0
        %v2035 = vsel %vm2003, %v1744, 0.0
        %v2036 = vsel %vm2004, %v1743, 0.0
        %v2037 = vsel %vm2005, %v1742, 0.0
        %v2038 = vsel %vm2006, %v1741, 0.0
        %v2039 = vsel %vm2007, %v1740, 0.0
        %v2040 = vsel %vm2008, %v1739, 0.0
        %v2041 = vsel %vm2009, %v1738, 0.0
        %v2042 = vsel %vm2010, %v1737, 0.0
        %v2043 = vsel %vm2011, %v1736, 0.0
        %v2044 = vsel %vm2012, %v1735, 0.0
        %v2045 = vsel %vm2013, %v1734, 0.0
        %v2046 = vsel %vm2014, %v1733, 0.0
        %v2047 = vsel %vm2015, %v1732, 0.0
        %v2048 = vsel %vm2016, %v1731, 0.0
        %v2049 = vpack.c.bf16 %v2017, %v2017
        %v2050 = vpack.c.bf16 %v2018, %v2018
        %v2051 = vpack.c.bf16 %v2019, %v2019
        %v2052 = vpack.c.bf16 %v2020, %v2020
        %v2053 = vpack.c.bf16 %v2021, %v2021
        %v2054 = vpack.c.bf16 %v2022, %v2022
        %v2055 = vpack.c.bf16 %v2023, %v2023
        %v2056 = vpack.c.bf16 %v2024, %v2024
        %v2057 = vpack.c.bf16 %v2025, %v2025
        %v2058 = vpack.c.bf16 %v2026, %v2026
        %v2059 = vpack.c.bf16 %v2027, %v2027
        %v2060 = vpack.c.bf16 %v2028, %v2028
        %v2061 = vpack.c.bf16 %v2029, %v2029
        %v2062 = vpack.c.bf16 %v2030, %v2030
        %v2063 = vpack.c.bf16 %v2031, %v2031
        %v2064 = vpack.c.bf16 %v2032, %v2032
        %v2065 = vpack.c.bf16 %v2033, %v2033
        %v2066 = vpack.c.bf16 %v2034, %v2034
        %v2067 = vpack.c.bf16 %v2035, %v2035
        %v2068 = vpack.c.bf16 %v2036, %v2036
        %v2069 = vpack.c.bf16 %v2037, %v2037
        %v2070 = vpack.c.bf16 %v2038, %v2038
        %v2071 = vpack.c.bf16 %v2039, %v2039
        %v2072 = vpack.c.bf16 %v2040, %v2040
        %v2073 = vpack.c.bf16 %v2041, %v2041
        %v2074 = vpack.c.bf16 %v2042, %v2042
        %v2075 = vpack.c.bf16 %v2043, %v2043
        %v2076 = vpack.c.bf16 %v2044, %v2044
        %v2077 = vpack.c.bf16 %v2045, %v2045
        %v2078 = vpack.c.bf16 %v2046, %v2046
        %v2079 = vpack.c.bf16 %v2047, %v2047
        %v2080 = vpack.c.bf16 %v2048, %v2048
        %v2081 = vsel %vm1761, 1, 0
        %v2082 = vsel %vm1762, 1, 0
        %v2083 = vsel %vm1763, 1, 0
        %v2084 = vsel %vm1764, 1, 0
        %v2085 = vsel %vm1765, 1, 0
        %v2086 = vsel %vm1766, 1, 0
        %v2087 = vsel %vm1767, 1, 0
        %v2088 = vsel %vm1768, 1, 0
        %v2089 = vsel %vm1769, 1, 0
        %v2090 = vsel %vm1770, 1, 0
        %v2091 = vsel %vm1771, 1, 0
        %v2092 = vsel %vm1772, 1, 0
        %v2093 = vsel %vm1773, 1, 0
        %v2094 = vsel %vm1774, 1, 0
        %v2095 = vsel %vm1775, 1, 0
        %v2096 = vsel %vm1776, 1, 0
        %v2097 = vsel %vm1777, 1, 0
        %v2098 = vsel %vm1778, 1, 0
        %v2099 = vsel %vm1779, 1, 0
        %v2100 = vsel %vm1780, 1, 0
        %v2101 = vsel %vm1781, 1, 0
        %v2102 = vsel %vm1782, 1, 0
        %v2103 = vsel %vm1783, 1, 0
        %v2104 = vsel %vm1784, 1, 0
        %v2105 = vsel %vm1785, 1, 0
        %v2106 = vsel %vm1786, 1, 0
        %v2107 = vsel %vm1787, 1, 0
        %v2108 = vsel %vm1788, 1, 0
        %v2109 = vsel %vm1789, 1, 0
        %v2110 = vsel %vm1790, 1, 0
        %v2111 = vsel %vm1791, 1, 0
        %v2112 = vsel %vm1792, 1, 0
        %2113 = vset.pattern.permute.xlu0 0
        %2114 = vperm.xlu0 %2113, %v2081
        %v2115 = vpop.permute.xlu0 %2114
        %2116 = vset.pattern.permute.xlu0 0
        %2117 = vperm.xlu0 %2116, %v2082
        %v2118 = vpop.permute.xlu0 %2117
        %2119 = vset.pattern.permute.xlu0 0
        %2120 = vperm.xlu0 %2119, %v2083
        %v2121 = vpop.permute.xlu0 %2120
        %2122 = vset.pattern.permute.xlu0 0
        %2123 = vperm.xlu0 %2122, %v2084
        %v2124 = vpop.permute.xlu0 %2123
        %2125 = vset.pattern.permute.xlu0 0
        %2126 = vperm.xlu0 %2125, %v2085
        %v2127 = vpop.permute.xlu0 %2126
        %2128 = vset.pattern.permute.xlu0 0
        %2129 = vperm.xlu0 %2128, %v2086
        %v2130 = vpop.permute.xlu0 %2129
        %2131 = vset.pattern.permute.xlu0 0
        %2132 = vperm.xlu0 %2131, %v2087
        %v2133 = vpop.permute.xlu0 %2132
        %2134 = vset.pattern.permute.xlu0 0
        %2135 = vperm.xlu0 %2134, %v2088
        %v2136 = vpop.permute.xlu0 %2135
        %2137 = vset.pattern.permute.xlu0 0
        %2138 = vperm.xlu0 %2137, %v2089
        %v2139 = vpop.permute.xlu0 %2138
        %2140 = vset.pattern.permute.xlu0 0
        %2141 = vperm.xlu0 %2140, %v2090
        %v2142 = vpop.permute.xlu0 %2141
        %2143 = vset.pattern.permute.xlu0 0
        %2144 = vperm.xlu0 %2143, %v2091
        %v2145 = vpop.permute.xlu0 %2144
        %2146 = vset.pattern.permute.xlu0 0
        %2147 = vperm.xlu0 %2146, %v2092
        %v2148 = vpop.permute.xlu0 %2147
        %2149 = vset.pattern.permute.xlu0 0
        %2150 = vperm.xlu0 %2149, %v2093
        %v2151 = vpop.permute.xlu0 %2150
        %2152 = vset.pattern.permute.xlu0 0
        %2153 = vperm.xlu0 %2152, %v2094
        %v2154 = vpop.permute.xlu0 %2153
        %2155 = vset.pattern.permute.xlu0 0
        %2156 = vperm.xlu0 %2155, %v2095
        %v2157 = vpop.permute.xlu0 %2156
        %2158 = vset.pattern.permute.xlu0 0
        %2159 = vperm.xlu0 %2158, %v2096
        %v2160 = vpop.permute.xlu0 %2159
        %2161 = vset.pattern.permute.xlu0 0
        %2162 = vperm.xlu0 %2161, %v2097
        %v2163 = vpop.permute.xlu0 %2162
        %2164 = vset.pattern.permute.xlu0 0
        %2165 = vperm.xlu0 %2164, %v2098
        %v2166 = vpop.permute.xlu0 %2165
        %2167 = vset.pattern.permute.xlu0 0
        %2168 = vperm.xlu0 %2167, %v2099
        %v2169 = vpop.permute.xlu0 %2168
        %2170 = vset.pattern.permute.xlu0 0
        %2171 = vperm.xlu0 %2170, %v2100
        %v2172 = vpop.permute.xlu0 %2171
        %2173 = vset.pattern.permute.xlu0 0
        %2174 = vperm.xlu0 %2173, %v2101
        %v2175 = vpop.permute.xlu0 %2174
        %2176 = vset.pattern.permute.xlu0 0
        %2177 = vperm.xlu0 %2176, %v2102
        %v2178 = vpop.permute.xlu0 %2177
        %2179 = vset.pattern.permute.xlu0 0
        %2180 = vperm.xlu0 %2179, %v2103
        %v2181 = vpop.permute.xlu0 %2180
        %2182 = vset.pattern.permute.xlu0 0
        %2183 = vperm.xlu0 %2182, %v2104
        %v2184 = vpop.permute.xlu0 %2183
        %2185 = vset.pattern.permute.xlu0 0
        %2186 = vperm.xlu0 %2185, %v2105
        %v2187 = vpop.permute.xlu0 %2186
        %2188 = vset.pattern.permute.xlu0 0
        %2189 = vperm.xlu0 %2188, %v2106
        %v2190 = vpop.permute.xlu0 %2189
        %2191 = vset.pattern.permute.xlu0 0
        %2192 = vperm.xlu0 %2191, %v2107
        %v2193 = vpop.permute.xlu0 %2192
        %2194 = vset.pattern.permute.xlu0 0
        %2195 = vperm.xlu0 %2194, %v2108
        %v2196 = vpop.permute.xlu0 %2195
        %2197 = vset.pattern.permute.xlu0 0
        %2198 = vperm.xlu0 %2197, %v2109
        %v2199 = vpop.permute.xlu0 %2198
        %2200 = vset.pattern.permute.xlu0 0
        %2201 = vperm.xlu0 %2200, %v2110
        %v2202 = vpop.permute.xlu0 %2201
        %2203 = vset.pattern.permute.xlu0 0
        %2204 = vperm.xlu0 %2203, %v2111
        %v2205 = vpop.permute.xlu0 %2204
        %2206 = vset.pattern.permute.xlu0 0
        %2207 = vperm.xlu0 %2206, %v2112
        %v2208 = vpop.permute.xlu0 %2207
        %vm2209 = vcmp.eq.s32.totalorder %v2115, 1
        %vm2210 = vcmp.eq.s32.totalorder %v2118, 1
        %vm2211 = vcmp.eq.s32.totalorder %v2121, 1
        %vm2212 = vcmp.eq.s32.totalorder %v2124, 1
        %vm2213 = vcmp.eq.s32.totalorder %v2127, 1
        %vm2214 = vcmp.eq.s32.totalorder %v2130, 1
        %vm2215 = vcmp.eq.s32.totalorder %v2133, 1
        %vm2216 = vcmp.eq.s32.totalorder %v2136, 1
        %vm2217 = vcmp.eq.s32.totalorder %v2139, 1
        %vm2218 = vcmp.eq.s32.totalorder %v2142, 1
        %vm2219 = vcmp.eq.s32.totalorder %v2145, 1
        %vm2220 = vcmp.eq.s32.totalorder %v2148, 1
        %vm2221 = vcmp.eq.s32.totalorder %v2151, 1
        %vm2222 = vcmp.eq.s32.totalorder %v2154, 1
        %vm2223 = vcmp.eq.s32.totalorder %v2157, 1
        %vm2224 = vcmp.eq.s32.totalorder %v2160, 1
        %vm2225 = vcmp.eq.s32.totalorder %v2163, 1
        %vm2226 = vcmp.eq.s32.totalorder %v2166, 1
        %vm2227 = vcmp.eq.s32.totalorder %v2169, 1
        %vm2228 = vcmp.eq.s32.totalorder %v2172, 1
        %vm2229 = vcmp.eq.s32.totalorder %v2175, 1
        %vm2230 = vcmp.eq.s32.totalorder %v2178, 1
        %vm2231 = vcmp.eq.s32.totalorder %v2181, 1
        %vm2232 = vcmp.eq.s32.totalorder %v2184, 1
        %vm2233 = vcmp.eq.s32.totalorder %v2187, 1
        %vm2234 = vcmp.eq.s32.totalorder %v2190, 1
        %vm2235 = vcmp.eq.s32.totalorder %v2193, 1
        %vm2236 = vcmp.eq.s32.totalorder %v2196, 1
        %vm2237 = vcmp.eq.s32.totalorder %v2199, 1
        %vm2238 = vcmp.eq.s32.totalorder %v2202, 1
        %vm2239 = vcmp.eq.s32.totalorder %v2205, 1
        %vm2240 = vcmp.eq.s32.totalorder %v2208, 1
        %v2241 = vsel %vm2209, %v1691, 0.0
        %v2242 = vsel %vm2210, %v1692, 0.0
        %v2243 = vsel %vm2211, %v1661, 0.0
        %v2244 = vsel %vm2212, %v1662, 0.0
        %v2245 = vsel %vm2213, %v1663, 0.0
        %v2246 = vsel %vm2214, %v1664, 0.0
        %v2247 = vsel %vm2215, %v1665, 0.0
        %v2248 = vsel %vm2216, %v1666, 0.0
        %v2249 = vsel %vm2217, %v1667, 0.0
        %v2250 = vsel %vm2218, %v1668, 0.0
        %v2251 = vsel %vm2219, %v1669, 0.0
        %v2252 = vsel %vm2220, %v1670, 0.0
        %v2253 = vsel %vm2221, %v1671, 0.0
        %v2254 = vsel %vm2222, %v1672, 0.0
        %v2255 = vsel %vm2223, %v1673, 0.0
        %v2256 = vsel %vm2224, %v1674, 0.0
        %v2257 = vsel %vm2225, %v1675, 0.0
        %v2258 = vsel %vm2226, %v1676, 0.0
        %v2259 = vsel %vm2227, %v1677, 0.0
        %v2260 = vsel %vm2228, %v1678, 0.0
        %v2261 = vsel %vm2229, %v1679, 0.0
        %v2262 = vsel %vm2230, %v1680, 0.0
        %v2263 = vsel %vm2231, %v1681, 0.0
        %v2264 = vsel %vm2232, %v1682, 0.0
        %v2265 = vsel %vm2233, %v1683, 0.0
        %v2266 = vsel %vm2234, %v1684, 0.0
        %v2267 = vsel %vm2235, %v1685, 0.0
        %v2268 = vsel %vm2236, %v1686, 0.0
        %v2269 = vsel %vm2237, %v1687, 0.0
        %v2270 = vsel %vm2238, %v1688, 0.0
        %v2271 = vsel %vm2239, %v1689, 0.0
        %v2272 = vsel %vm2240, %v1690, 0.0
        %v2273 = vpack.c.bf16 %v2241, %v2241
        %v2274 = vpack.c.bf16 %v2242, %v2242
        %v2275 = vpack.c.bf16 %v2243, %v2243
        %v2276 = vpack.c.bf16 %v2244, %v2244
        %v2277 = vpack.c.bf16 %v2245, %v2245
        %v2278 = vpack.c.bf16 %v2246, %v2246
        %v2279 = vpack.c.bf16 %v2247, %v2247
        %v2280 = vpack.c.bf16 %v2248, %v2248
        %v2281 = vpack.c.bf16 %v2249, %v2249
        %v2282 = vpack.c.bf16 %v2250, %v2250
        %v2283 = vpack.c.bf16 %v2251, %v2251
        %v2284 = vpack.c.bf16 %v2252, %v2252
        %v2285 = vpack.c.bf16 %v2253, %v2253
        %v2286 = vpack.c.bf16 %v2254, %v2254
        %v2287 = vpack.c.bf16 %v2255, %v2255
        %v2288 = vpack.c.bf16 %v2256, %v2256
        %v2289 = vpack.c.bf16 %v2257, %v2257
        %v2290 = vpack.c.bf16 %v2258, %v2258
        %v2291 = vpack.c.bf16 %v2259, %v2259
        %v2292 = vpack.c.bf16 %v2260, %v2260
        %v2293 = vpack.c.bf16 %v2261, %v2261
        %v2294 = vpack.c.bf16 %v2262, %v2262
        %v2295 = vpack.c.bf16 %v2263, %v2263
        %v2296 = vpack.c.bf16 %v2264, %v2264
        %v2297 = vpack.c.bf16 %v2265, %v2265
        %v2298 = vpack.c.bf16 %v2266, %v2266
        %v2299 = vpack.c.bf16 %v2267, %v2267
        %v2300 = vpack.c.bf16 %v2268, %v2268
        %v2301 = vpack.c.bf16 %v2269, %v2269
        %v2302 = vpack.c.bf16 %v2270, %v2270
        %v2303 = vpack.c.bf16 %v2271, %v2271
        %v2304 = vpack.c.bf16 %v2272, %v2272
        %v2305 = vrot.slane %v1661, 1
        %v2306 = vrot.slane %v1662, 1
        %v2307 = vrot.slane %v1663, 1
        %v2308 = vrot.slane %v1664, 1
        %v2309 = vrot.slane %v1665, 1
        %v2310 = vrot.slane %v1666, 1
        %v2311 = vrot.slane %v1667, 1
        %v2312 = vrot.slane %v1668, 1
        %v2313 = vrot.slane %v1669, 1
        %v2314 = vrot.slane %v1670, 1
        %v2315 = vrot.slane %v1671, 1
        %v2316 = vrot.slane %v1672, 1
        %v2317 = vrot.slane %v1673, 1
        %v2318 = vrot.slane %v1674, 1
        %v2319 = vrot.slane %v1675, 1
        %v2320 = vrot.slane %v1676, 1
        %v2321 = vrot.slane %v1677, 1
        %v2322 = vrot.slane %v1678, 1
        %v2323 = vrot.slane %v1679, 1
        %v2324 = vrot.slane %v1680, 1
        %v2325 = vrot.slane %v1681, 1
        %v2326 = vrot.slane %v1682, 1
        %v2327 = vrot.slane %v1683, 1
        %v2328 = vrot.slane %v1684, 1
        %v2329 = vrot.slane %v1685, 1
        %v2330 = vrot.slane %v1686, 1
        %v2331 = vrot.slane %v1687, 1
        %v2332 = vrot.slane %v1688, 1
        %v2333 = vrot.slane %v1689, 1
        %v2334 = vrot.slane %v1690, 1
        %v2335 = vrot.slane %v1691, 1
        %v2336 = vrot.slane %v1692, 1
        %vm2337 = vcmp.lt.s32.totalorder %v1727, 7
        %v2338 = vsel %vm2337, %v2335, %v2336
        %v2339 = vsel %vm2337, %v2334, %v2335
        %v2340 = vsel %vm2337, %v2333, %v2334
        %v2341 = vsel %vm2337, %v2332, %v2333
        %v2342 = vsel %vm2337, %v2331, %v2332
        %v2343 = vsel %vm2337, %v2330, %v2331
        %v2344 = vsel %vm2337, %v2329, %v2330
        %v2345 = vsel %vm2337, %v2328, %v2329
        %v2346 = vsel %vm2337, %v2327, %v2328
        %v2347 = vsel %vm2337, %v2326, %v2327
        %v2348 = vsel %vm2337, %v2325, %v2326
        %v2349 = vsel %vm2337, %v2324, %v2325
        %v2350 = vsel %vm2337, %v2323, %v2324
        %v2351 = vsel %vm2337, %v2322, %v2323
        %v2352 = vsel %vm2337, %v2321, %v2322
        %v2353 = vsel %vm2337, %v2320, %v2321
        %v2354 = vsel %vm2337, %v2319, %v2320
        %v2355 = vsel %vm2337, %v2318, %v2319
        %v2356 = vsel %vm2337, %v2317, %v2318
        %v2357 = vsel %vm2337, %v2316, %v2317
        %v2358 = vsel %vm2337, %v2315, %v2316
        %v2359 = vsel %vm2337, %v2314, %v2315
        %v2360 = vsel %vm2337, %v2313, %v2314
        %v2361 = vsel %vm2337, %v2312, %v2313
        %v2362 = vsel %vm2337, %v2311, %v2312
        %v2363 = vsel %vm2337, %v2310, %v2311
        %v2364 = vsel %vm2337, %v2309, %v2310
        %v2365 = vsel %vm2337, %v2308, %v2309
        %v2366 = vsel %vm2337, %v2307, %v2308
        %v2367 = vsel %vm2337, %v2306, %v2307
        %v2368 = vsel %vm2337, %v2305, %v2306
        %v2369 = vsel %vm2337, %v2336, %v2305
        %vm2370 = vcmp.lt.s32.totalorder %v620, 15
        %vm2371 = vcmp.lt.s32.totalorder %v621, 15
        %vm2372 = vcmp.lt.s32.totalorder %v622, 15
        %vm2373 = vcmp.lt.s32.totalorder %v623, 15
        %vm2374 = vcmp.lt.s32.totalorder %v624, 15
        %vm2375 = vcmp.lt.s32.totalorder %v625, 15
        %vm2376 = vcmp.lt.s32.totalorder %v626, 15
        %vm2377 = vcmp.lt.s32.totalorder %v627, 15
        %vm2378 = vcmp.lt.s32.totalorder %v628, 15
        %vm2379 = vcmp.lt.s32.totalorder %v629, 15
        %vm2380 = vcmp.lt.s32.totalorder %v630, 15
        %vm2381 = vcmp.lt.s32.totalorder %v631, 15
        %vm2382 = vcmp.lt.s32.totalorder %v632, 15
        %vm2383 = vcmp.lt.s32.totalorder %v633, 15
        %vm2384 = vcmp.lt.s32.totalorder %v634, 15
        %vm2385 = vcmp.lt.s32.totalorder %v635, 15
        %vm2386 = vcmp.lt.s32.totalorder %v636, 15
        %vm2387 = vcmp.lt.s32.totalorder %v637, 15
        %vm2388 = vcmp.lt.s32.totalorder %v638, 15
        %vm2389 = vcmp.lt.s32.totalorder %v639, 15
        %vm2390 = vcmp.lt.s32.totalorder %v640, 15
        %vm2391 = vcmp.lt.s32.totalorder %v641, 15
        %vm2392 = vcmp.lt.s32.totalorder %v642, 15
        %vm2393 = vcmp.lt.s32.totalorder %v643, 15
        %vm2394 = vcmp.lt.s32.totalorder %v644, 15
        %vm2395 = vcmp.lt.s32.totalorder %v645, 15
        %vm2396 = vcmp.lt.s32.totalorder %v646, 15
        %vm2397 = vcmp.lt.s32.totalorder %v647, 15
        %vm2398 = vcmp.lt.s32.totalorder %v648, 15
        %vm2399 = vcmp.lt.s32.totalorder %v649, 15
        %vm2400 = vcmp.lt.s32.totalorder %v650, 15
        %vm2401 = vcmp.lt.s32.totalorder %v651, 15
        %vm2402 = vmand %vm1761, %vm2370
        %vm2403 = vmand %vm1762, %vm2371
        %vm2404 = vmand %vm1763, %vm2372
        %vm2405 = vmand %vm1764, %vm2373
        %vm2406 = vmand %vm1765, %vm2374
        %vm2407 = vmand %vm1766, %vm2375
        %vm2408 = vmand %vm1767, %vm2376
        %vm2409 = vmand %vm1768, %vm2377
        %vm2410 = vmand %vm1769, %vm2378
        %vm2411 = vmand %vm1770, %vm2379
        %vm2412 = vmand %vm1771, %vm2380
        %vm2413 = vmand %vm1772, %vm2381
        %vm2414 = vmand %vm1773, %vm2382
        %vm2415 = vmand %vm1774, %vm2383
        %vm2416 = vmand %vm1775, %vm2384
        %vm2417 = vmand %vm1776, %vm2385
        %vm2418 = vmand %vm1777, %vm2386
        %vm2419 = vmand %vm1778, %vm2387
        %vm2420 = vmand %vm1779, %vm2388
        %vm2421 = vmand %vm1780, %vm2389
        %vm2422 = vmand %vm1781, %vm2390
        %vm2423 = vmand %vm1782, %vm2391
        %vm2424 = vmand %vm1783, %vm2392
        %vm2425 = vmand %vm1784, %vm2393
        %vm2426 = vmand %vm1785, %vm2394
        %vm2427 = vmand %vm1786, %vm2395
        %vm2428 = vmand %vm1787, %vm2396
        %vm2429 = vmand %vm1788, %vm2397
        %vm2430 = vmand %vm1789, %vm2398
        %vm2431 = vmand %vm1790, %vm2399
        %vm2432 = vmand %vm1791, %vm2400
        %vm2433 = vmand %vm1792, %vm2401
        %v2434 = vsel %vm2402, 1, 0
        %v2435 = vsel %vm2403, 1, 0
        %v2436 = vsel %vm2404, 1, 0
        %v2437 = vsel %vm2405, 1, 0
        %v2438 = vsel %vm2406, 1, 0
        %v2439 = vsel %vm2407, 1, 0
        %v2440 = vsel %vm2408, 1, 0
        %v2441 = vsel %vm2409, 1, 0
        %v2442 = vsel %vm2410, 1, 0
        %v2443 = vsel %vm2411, 1, 0
        %v2444 = vsel %vm2412, 1, 0
        %v2445 = vsel %vm2413, 1, 0
        %v2446 = vsel %vm2414, 1, 0
        %v2447 = vsel %vm2415, 1, 0
        %v2448 = vsel %vm2416, 1, 0
        %v2449 = vsel %vm2417, 1, 0
        %v2450 = vsel %vm2418, 1, 0
        %v2451 = vsel %vm2419, 1, 0
        %v2452 = vsel %vm2420, 1, 0
        %v2453 = vsel %vm2421, 1, 0
        %v2454 = vsel %vm2422, 1, 0
        %v2455 = vsel %vm2423, 1, 0
        %v2456 = vsel %vm2424, 1, 0
        %v2457 = vsel %vm2425, 1, 0
        %v2458 = vsel %vm2426, 1, 0
        %v2459 = vsel %vm2427, 1, 0
        %v2460 = vsel %vm2428, 1, 0
        %v2461 = vsel %vm2429, 1, 0
        %v2462 = vsel %vm2430, 1, 0
        %v2463 = vsel %vm2431, 1, 0
        %v2464 = vsel %vm2432, 1, 0
        %v2465 = vsel %vm2433, 1, 0
        %2466 = vset.pattern.permute.xlu0 0
        %2467 = vperm.xlu0 %2466, %v2434
        %v2468 = vpop.permute.xlu0 %2467
        %2469 = vset.pattern.permute.xlu0 0
        %2470 = vperm.xlu0 %2469, %v2435
        %v2471 = vpop.permute.xlu0 %2470
        %2472 = vset.pattern.permute.xlu0 0
        %2473 = vperm.xlu0 %2472, %v2436
        %v2474 = vpop.permute.xlu0 %2473
        %2475 = vset.pattern.permute.xlu0 0
        %2476 = vperm.xlu0 %2475, %v2437
        %v2477 = vpop.permute.xlu0 %2476
        %2478 = vset.pattern.permute.xlu0 0
        %2479 = vperm.xlu0 %2478, %v2438
        %v2480 = vpop.permute.xlu0 %2479
        %2481 = vset.pattern.permute.xlu0 0
        %2482 = vperm.xlu0 %2481, %v2439
        %v2483 = vpop.permute.xlu0 %2482
        %2484 = vset.pattern.permute.xlu0 0
        %2485 = vperm.xlu0 %2484, %v2440
        %v2486 = vpop.permute.xlu0 %2485
        %2487 = vset.pattern.permute.xlu0 0
        %2488 = vperm.xlu0 %2487, %v2441
        %v2489 = vpop.permute.xlu0 %2488
        %2490 = vset.pattern.permute.xlu0 0
        %2491 = vperm.xlu0 %2490, %v2442
        %v2492 = vpop.permute.xlu0 %2491
        %2493 = vset.pattern.permute.xlu0 0
        %2494 = vperm.xlu0 %2493, %v2443
        %v2495 = vpop.permute.xlu0 %2494
        %2496 = vset.pattern.permute.xlu0 0
        %2497 = vperm.xlu0 %2496, %v2444
        %v2498 = vpop.permute.xlu0 %2497
        %2499 = vset.pattern.permute.xlu0 0
        %2500 = vperm.xlu0 %2499, %v2445
        %v2501 = vpop.permute.xlu0 %2500
        %2502 = vset.pattern.permute.xlu0 0
        %2503 = vperm.xlu0 %2502, %v2446
        %v2504 = vpop.permute.xlu0 %2503
        %2505 = vset.pattern.permute.xlu0 0
        %2506 = vperm.xlu0 %2505, %v2447
        %v2507 = vpop.permute.xlu0 %2506
        %2508 = vset.pattern.permute.xlu0 0
        %2509 = vperm.xlu0 %2508, %v2448
        %v2510 = vpop.permute.xlu0 %2509
        %2511 = vset.pattern.permute.xlu0 0
        %2512 = vperm.xlu0 %2511, %v2449
        %v2513 = vpop.permute.xlu0 %2512
        %2514 = vset.pattern.permute.xlu0 0
        %2515 = vperm.xlu0 %2514, %v2450
        %v2516 = vpop.permute.xlu0 %2515
        %2517 = vset.pattern.permute.xlu0 0
        %2518 = vperm.xlu0 %2517, %v2451
        %v2519 = vpop.permute.xlu0 %2518
        %2520 = vset.pattern.permute.xlu0 0
        %2521 = vperm.xlu0 %2520, %v2452
        %v2522 = vpop.permute.xlu0 %2521
        %2523 = vset.pattern.permute.xlu0 0
        %2524 = vperm.xlu0 %2523, %v2453
        %v2525 = vpop.permute.xlu0 %2524
        %2526 = vset.pattern.permute.xlu0 0
        %2527 = vperm.xlu0 %2526, %v2454
        %v2528 = vpop.permute.xlu0 %2527
        %2529 = vset.pattern.permute.xlu0 0
        %2530 = vperm.xlu0 %2529, %v2455
        %v2531 = vpop.permute.xlu0 %2530
        %2532 = vset.pattern.permute.xlu0 0
        %2533 = vperm.xlu0 %2532, %v2456
        %v2534 = vpop.permute.xlu0 %2533
        %2535 = vset.pattern.permute.xlu0 0
        %2536 = vperm.xlu0 %2535, %v2457
        %v2537 = vpop.permute.xlu0 %2536
        %2538 = vset.pattern.permute.xlu0 0
        %2539 = vperm.xlu0 %2538, %v2458
        %v2540 = vpop.permute.xlu0 %2539
        %2541 = vset.pattern.permute.xlu0 0
        %2542 = vperm.xlu0 %2541, %v2459
        %v2543 = vpop.permute.xlu0 %2542
        %2544 = vset.pattern.permute.xlu0 0
        %2545 = vperm.xlu0 %2544, %v2460
        %v2546 = vpop.permute.xlu0 %2545
        %2547 = vset.pattern.permute.xlu0 0
        %2548 = vperm.xlu0 %2547, %v2461
        %v2549 = vpop.permute.xlu0 %2548
        %2550 = vset.pattern.permute.xlu0 0
        %2551 = vperm.xlu0 %2550, %v2462
        %v2552 = vpop.permute.xlu0 %2551
        %2553 = vset.pattern.permute.xlu0 0
        %2554 = vperm.xlu0 %2553, %v2463
        %v2555 = vpop.permute.xlu0 %2554
        %2556 = vset.pattern.permute.xlu0 0
        %2557 = vperm.xlu0 %2556, %v2464
        %v2558 = vpop.permute.xlu0 %2557
        %2559 = vset.pattern.permute.xlu0 0
        %2560 = vperm.xlu0 %2559, %v2465
        %v2561 = vpop.permute.xlu0 %2560
        %vm2562 = vcmp.eq.s32.totalorder %v2468, 1
        %vm2563 = vcmp.eq.s32.totalorder %v2471, 1
        %vm2564 = vcmp.eq.s32.totalorder %v2474, 1
        %vm2565 = vcmp.eq.s32.totalorder %v2477, 1
        %vm2566 = vcmp.eq.s32.totalorder %v2480, 1
        %vm2567 = vcmp.eq.s32.totalorder %v2483, 1
        %vm2568 = vcmp.eq.s32.totalorder %v2486, 1
        %vm2569 = vcmp.eq.s32.totalorder %v2489, 1
        %vm2570 = vcmp.eq.s32.totalorder %v2492, 1
        %vm2571 = vcmp.eq.s32.totalorder %v2495, 1
        %vm2572 = vcmp.eq.s32.totalorder %v2498, 1
        %vm2573 = vcmp.eq.s32.totalorder %v2501, 1
        %vm2574 = vcmp.eq.s32.totalorder %v2504, 1
        %vm2575 = vcmp.eq.s32.totalorder %v2507, 1
        %vm2576 = vcmp.eq.s32.totalorder %v2510, 1
        %vm2577 = vcmp.eq.s32.totalorder %v2513, 1
        %vm2578 = vcmp.eq.s32.totalorder %v2516, 1
        %vm2579 = vcmp.eq.s32.totalorder %v2519, 1
        %vm2580 = vcmp.eq.s32.totalorder %v2522, 1
        %vm2581 = vcmp.eq.s32.totalorder %v2525, 1
        %vm2582 = vcmp.eq.s32.totalorder %v2528, 1
        %vm2583 = vcmp.eq.s32.totalorder %v2531, 1
        %vm2584 = vcmp.eq.s32.totalorder %v2534, 1
        %vm2585 = vcmp.eq.s32.totalorder %v2537, 1
        %vm2586 = vcmp.eq.s32.totalorder %v2540, 1
        %vm2587 = vcmp.eq.s32.totalorder %v2543, 1
        %vm2588 = vcmp.eq.s32.totalorder %v2546, 1
        %vm2589 = vcmp.eq.s32.totalorder %v2549, 1
        %vm2590 = vcmp.eq.s32.totalorder %v2552, 1
        %vm2591 = vcmp.eq.s32.totalorder %v2555, 1
        %vm2592 = vcmp.eq.s32.totalorder %v2558, 1
        %vm2593 = vcmp.eq.s32.totalorder %v2561, 1
        %v2594 = vsel %vm2562, %v2338, 0.0
        %v2595 = vsel %vm2563, %v2369, 0.0
        %v2596 = vsel %vm2564, %v2368, 0.0
        %v2597 = vsel %vm2565, %v2367, 0.0
        %v2598 = vsel %vm2566, %v2366, 0.0
        %v2599 = vsel %vm2567, %v2365, 0.0
        %v2600 = vsel %vm2568, %v2364, 0.0
        %v2601 = vsel %vm2569, %v2363, 0.0
        %v2602 = vsel %vm2570, %v2362, 0.0
        %v2603 = vsel %vm2571, %v2361, 0.0
        %v2604 = vsel %vm2572, %v2360, 0.0
        %v2605 = vsel %vm2573, %v2359, 0.0
        %v2606 = vsel %vm2574, %v2358, 0.0
        %v2607 = vsel %vm2575, %v2357, 0.0
        %v2608 = vsel %vm2576, %v2356, 0.0
        %v2609 = vsel %vm2577, %v2355, 0.0
        %v2610 = vsel %vm2578, %v2354, 0.0
        %v2611 = vsel %vm2579, %v2353, 0.0
        %v2612 = vsel %vm2580, %v2352, 0.0
        %v2613 = vsel %vm2581, %v2351, 0.0
        %v2614 = vsel %vm2582, %v2350, 0.0
        %v2615 = vsel %vm2583, %v2349, 0.0
        %v2616 = vsel %vm2584, %v2348, 0.0
        %v2617 = vsel %vm2585, %v2347, 0.0
        %v2618 = vsel %vm2586, %v2346, 0.0
        %v2619 = vsel %vm2587, %v2345, 0.0
        %v2620 = vsel %vm2588, %v2344, 0.0
        %v2621 = vsel %vm2589, %v2343, 0.0
        %v2622 = vsel %vm2590, %v2342, 0.0
        %v2623 = vsel %vm2591, %v2341, 0.0
        %v2624 = vsel %vm2592, %v2340, 0.0
        %v2625 = vsel %vm2593, %v2339, 0.0
        %v2626 = vpack.c.bf16 %v2594, %v2594
        %v2627 = vpack.c.bf16 %v2595, %v2595
        %v2628 = vpack.c.bf16 %v2596, %v2596
        %v2629 = vpack.c.bf16 %v2597, %v2597
        %v2630 = vpack.c.bf16 %v2598, %v2598
        %v2631 = vpack.c.bf16 %v2599, %v2599
        %v2632 = vpack.c.bf16 %v2600, %v2600
        %v2633 = vpack.c.bf16 %v2601, %v2601
        %v2634 = vpack.c.bf16 %v2602, %v2602
        %v2635 = vpack.c.bf16 %v2603, %v2603
        %v2636 = vpack.c.bf16 %v2604, %v2604
        %v2637 = vpack.c.bf16 %v2605, %v2605
        %v2638 = vpack.c.bf16 %v2606, %v2606
        %v2639 = vpack.c.bf16 %v2607, %v2607
        %v2640 = vpack.c.bf16 %v2608, %v2608
        %v2641 = vpack.c.bf16 %v2609, %v2609
        %v2642 = vpack.c.bf16 %v2610, %v2610
        %v2643 = vpack.c.bf16 %v2611, %v2611
        %v2644 = vpack.c.bf16 %v2612, %v2612
        %v2645 = vpack.c.bf16 %v2613, %v2613
        %v2646 = vpack.c.bf16 %v2614, %v2614
        %v2647 = vpack.c.bf16 %v2615, %v2615
        %v2648 = vpack.c.bf16 %v2616, %v2616
        %v2649 = vpack.c.bf16 %v2617, %v2617
        %v2650 = vpack.c.bf16 %v2618, %v2618
        %v2651 = vpack.c.bf16 %v2619, %v2619
        %v2652 = vpack.c.bf16 %v2620, %v2620
        %v2653 = vpack.c.bf16 %v2621, %v2621
        %v2654 = vpack.c.bf16 %v2622, %v2622
        %v2655 = vpack.c.bf16 %v2623, %v2623
        %v2656 = vpack.c.bf16 %v2624, %v2624
        %v2657 = vpack.c.bf16 %v2625, %v2625
        %v2690 = vunpack.c.l.b16 %v2049
        %v2691 = vunpack.c.l.b16 %v2050
        %v2692 = vunpack.c.l.b16 %v2051
        %v2693 = vunpack.c.l.b16 %v2052
        %v2694 = vunpack.c.l.b16 %v2053
        %v2695 = vunpack.c.l.b16 %v2054
        %v2696 = vunpack.c.l.b16 %v2055
        %v2697 = vunpack.c.l.b16 %v2056
        %v2698 = vunpack.c.l.b16 %v2057
        %v2699 = vunpack.c.l.b16 %v2058
        %v2700 = vunpack.c.l.b16 %v2059
        %v2701 = vunpack.c.l.b16 %v2060
        %v2702 = vunpack.c.l.b16 %v2061
        %v2703 = vunpack.c.l.b16 %v2062
        %v2704 = vunpack.c.l.b16 %v2063
        %v2705 = vunpack.c.l.b16 %v2064
        %v2706 = vunpack.c.l.b16 %v2065
        %v2707 = vunpack.c.l.b16 %v2066
        %v2708 = vunpack.c.l.b16 %v2067
        %v2709 = vunpack.c.l.b16 %v2068
        %v2710 = vunpack.c.l.b16 %v2069
        %v2711 = vunpack.c.l.b16 %v2070
        %v2712 = vunpack.c.l.b16 %v2071
        %v2713 = vunpack.c.l.b16 %v2072
        %v2714 = vunpack.c.l.b16 %v2073
        %v2715 = vunpack.c.l.b16 %v2074
        %v2716 = vunpack.c.l.b16 %v2075
        %v2717 = vunpack.c.l.b16 %v2076
        %v2718 = vunpack.c.l.b16 %v2077
        %v2719 = vunpack.c.l.b16 %v2078
        %v2720 = vunpack.c.l.b16 %v2079
        %v2721 = vunpack.c.l.b16 %v2080
        %v2722 = vpack.c.b16 %v2691, %v2690
        %v2723 = vpack.c.b16 %v2693, %v2692
        %v2724 = vpack.c.b16 %v2695, %v2694
        %v2725 = vpack.c.b16 %v2697, %v2696
        %v2726 = vpack.c.b16 %v2699, %v2698
        %v2727 = vpack.c.b16 %v2701, %v2700
        %v2728 = vpack.c.b16 %v2703, %v2702
        %v2729 = vpack.c.b16 %v2705, %v2704
        %v2730 = vpack.c.b16 %v2707, %v2706
        %v2731 = vpack.c.b16 %v2709, %v2708
        %v2732 = vpack.c.b16 %v2711, %v2710
        %v2733 = vpack.c.b16 %v2713, %v2712
        %v2734 = vpack.c.b16 %v2715, %v2714
        %v2735 = vpack.c.b16 %v2717, %v2716
        %v2736 = vpack.c.b16 %v2719, %v2718
        %v2737 = vpack.c.b16 %v2721, %v2720
        %v2770 = vunpack.c.l.b16 %v2273
        %v2771 = vunpack.c.l.b16 %v2274
        %v2772 = vunpack.c.l.b16 %v2275
        %v2773 = vunpack.c.l.b16 %v2276
        %v2774 = vunpack.c.l.b16 %v2277
        %v2775 = vunpack.c.l.b16 %v2278
        %v2776 = vunpack.c.l.b16 %v2279
        %v2777 = vunpack.c.l.b16 %v2280
        %v2778 = vunpack.c.l.b16 %v2281
        %v2779 = vunpack.c.l.b16 %v2282
        %v2780 = vunpack.c.l.b16 %v2283
        %v2781 = vunpack.c.l.b16 %v2284
        %v2782 = vunpack.c.l.b16 %v2285
        %v2783 = vunpack.c.l.b16 %v2286
        %v2784 = vunpack.c.l.b16 %v2287
        %v2785 = vunpack.c.l.b16 %v2288
        %v2786 = vunpack.c.l.b16 %v2289
        %v2787 = vunpack.c.l.b16 %v2290
        %v2788 = vunpack.c.l.b16 %v2291
        %v2789 = vunpack.c.l.b16 %v2292
        %v2790 = vunpack.c.l.b16 %v2293
        %v2791 = vunpack.c.l.b16 %v2294
        %v2792 = vunpack.c.l.b16 %v2295
        %v2793 = vunpack.c.l.b16 %v2296
        %v2794 = vunpack.c.l.b16 %v2297
        %v2795 = vunpack.c.l.b16 %v2298
        %v2796 = vunpack.c.l.b16 %v2299
        %v2797 = vunpack.c.l.b16 %v2300
        %v2798 = vunpack.c.l.b16 %v2301
        %v2799 = vunpack.c.l.b16 %v2302
        %v2800 = vunpack.c.l.b16 %v2303
        %v2801 = vunpack.c.l.b16 %v2304
        %v2802 = vpack.c.b16 %v2771, %v2770
        %v2803 = vpack.c.b16 %v2773, %v2772
        %v2804 = vpack.c.b16 %v2775, %v2774
        %v2805 = vpack.c.b16 %v2777, %v2776
        %v2806 = vpack.c.b16 %v2779, %v2778
        %v2807 = vpack.c.b16 %v2781, %v2780
        %v2808 = vpack.c.b16 %v2783, %v2782
        %v2809 = vpack.c.b16 %v2785, %v2784
        %v2810 = vpack.c.b16 %v2787, %v2786
        %v2811 = vpack.c.b16 %v2789, %v2788
        %v2812 = vpack.c.b16 %v2791, %v2790
        %v2813 = vpack.c.b16 %v2793, %v2792
        %v2814 = vpack.c.b16 %v2795, %v2794
        %v2815 = vpack.c.b16 %v2797, %v2796
        %v2816 = vpack.c.b16 %v2799, %v2798
        %v2817 = vpack.c.b16 %v2801, %v2800
        %2818 = vrot.lane.b32.xlu0 %v2802, 32
        %v2819 = vpop.permute.xlu0 %2818
        %2820 = vrot.lane.b32.xlu0 %v2803, 32
        %v2821 = vpop.permute.xlu0 %2820
        %2822 = vrot.lane.b32.xlu0 %v2804, 32
        %v2823 = vpop.permute.xlu0 %2822
        %2824 = vrot.lane.b32.xlu0 %v2805, 32
        %v2825 = vpop.permute.xlu0 %2824
        %2826 = vrot.lane.b32.xlu0 %v2806, 32
        %v2827 = vpop.permute.xlu0 %2826
        %2828 = vrot.lane.b32.xlu0 %v2807, 32
        %v2829 = vpop.permute.xlu0 %2828
        %2830 = vrot.lane.b32.xlu0 %v2808, 32
        %v2831 = vpop.permute.xlu0 %2830
        %2832 = vrot.lane.b32.xlu0 %v2809, 32
        %v2833 = vpop.permute.xlu0 %2832
        %2834 = vrot.lane.b32.xlu0 %v2810, 32
        %v2835 = vpop.permute.xlu0 %2834
        %2836 = vrot.lane.b32.xlu0 %v2811, 32
        %v2837 = vpop.permute.xlu0 %2836
        %2838 = vrot.lane.b32.xlu0 %v2812, 32
        %v2839 = vpop.permute.xlu0 %2838
        %2840 = vrot.lane.b32.xlu0 %v2813, 32
        %v2841 = vpop.permute.xlu0 %2840
        %2842 = vrot.lane.b32.xlu0 %v2814, 32
        %v2843 = vpop.permute.xlu0 %2842
        %2844 = vrot.lane.b32.xlu0 %v2815, 32
        %v2845 = vpop.permute.xlu0 %2844
        %2846 = vrot.lane.b32.xlu0 %v2816, 32
        %v2847 = vpop.permute.xlu0 %2846
        %2848 = vrot.lane.b32.xlu0 %v2817, 32
        %v2849 = vpop.permute.xlu0 %2848
        %v2882 = vunpack.c.l.b16 %v2626
        %v2883 = vunpack.c.l.b16 %v2627
        %v2884 = vunpack.c.l.b16 %v2628
        %v2885 = vunpack.c.l.b16 %v2629
        %v2886 = vunpack.c.l.b16 %v2630
        %v2887 = vunpack.c.l.b16 %v2631
        %v2888 = vunpack.c.l.b16 %v2632
        %v2889 = vunpack.c.l.b16 %v2633
        %v2890 = vunpack.c.l.b16 %v2634
        %v2891 = vunpack.c.l.b16 %v2635
        %v2892 = vunpack.c.l.b16 %v2636
        %v2893 = vunpack.c.l.b16 %v2637
        %v2894 = vunpack.c.l.b16 %v2638
        %v2895 = vunpack.c.l.b16 %v2639
        %v2896 = vunpack.c.l.b16 %v2640
        %v2897 = vunpack.c.l.b16 %v2641
        %v2898 = vunpack.c.l.b16 %v2642
        %v2899 = vunpack.c.l.b16 %v2643
        %v2900 = vunpack.c.l.b16 %v2644
        %v2901 = vunpack.c.l.b16 %v2645
        %v2902 = vunpack.c.l.b16 %v2646
        %v2903 = vunpack.c.l.b16 %v2647
        %v2904 = vunpack.c.l.b16 %v2648
        %v2905 = vunpack.c.l.b16 %v2649
        %v2906 = vunpack.c.l.b16 %v2650
        %v2907 = vunpack.c.l.b16 %v2651
        %v2908 = vunpack.c.l.b16 %v2652
        %v2909 = vunpack.c.l.b16 %v2653
        %v2910 = vunpack.c.l.b16 %v2654
        %v2911 = vunpack.c.l.b16 %v2655
        %v2912 = vunpack.c.l.b16 %v2656
        %v2913 = vunpack.c.l.b16 %v2657
        %v2914 = vpack.c.b16 %v2883, %v2882
        %v2915 = vpack.c.b16 %v2885, %v2884
        %v2916 = vpack.c.b16 %v2887, %v2886
        %v2917 = vpack.c.b16 %v2889, %v2888
        %v2918 = vpack.c.b16 %v2891, %v2890
        %v2919 = vpack.c.b16 %v2893, %v2892
        %v2920 = vpack.c.b16 %v2895, %v2894
        %v2921 = vpack.c.b16 %v2897, %v2896
        %v2922 = vpack.c.b16 %v2899, %v2898
        %v2923 = vpack.c.b16 %v2901, %v2900
        %v2924 = vpack.c.b16 %v2903, %v2902
        %v2925 = vpack.c.b16 %v2905, %v2904
        %v2926 = vpack.c.b16 %v2907, %v2906
        %v2927 = vpack.c.b16 %v2909, %v2908
        %v2928 = vpack.c.b16 %v2911, %v2910
        %v2929 = vpack.c.b16 %v2913, %v2912
        %2930 = vrot.lane.b32.xlu0 %v2914, 64
        %v2931 = vpop.permute.xlu0 %2930
        %2932 = vrot.lane.b32.xlu0 %v2915, 64
        %v2933 = vpop.permute.xlu0 %2932
        %2934 = vrot.lane.b32.xlu0 %v2916, 64
        %v2935 = vpop.permute.xlu0 %2934
        %2936 = vrot.lane.b32.xlu0 %v2917, 64
        %v2937 = vpop.permute.xlu0 %2936
        %2938 = vrot.lane.b32.xlu0 %v2918, 64
        %v2939 = vpop.permute.xlu0 %2938
        %2940 = vrot.lane.b32.xlu0 %v2919, 64
        %v2941 = vpop.permute.xlu0 %2940
        %2942 = vrot.lane.b32.xlu0 %v2920, 64
        %v2943 = vpop.permute.xlu0 %2942
        %2944 = vrot.lane.b32.xlu0 %v2921, 64
        %v2945 = vpop.permute.xlu0 %2944
        %2946 = vrot.lane.b32.xlu0 %v2922, 64
        %v2947 = vpop.permute.xlu0 %2946
        %2948 = vrot.lane.b32.xlu0 %v2923, 64
        %v2949 = vpop.permute.xlu0 %2948
        %2950 = vrot.lane.b32.xlu0 %v2924, 64
        %v2951 = vpop.permute.xlu0 %2950
        %2952 = vrot.lane.b32.xlu0 %v2925, 64
        %v2953 = vpop.permute.xlu0 %2952
        %2954 = vrot.lane.b32.xlu0 %v2926, 64
        %v2955 = vpop.permute.xlu0 %2954
        %2956 = vrot.lane.b32.xlu0 %v2927, 64
        %v2957 = vpop.permute.xlu0 %2956
        %2958 = vrot.lane.b32.xlu0 %v2928, 64
        %v2959 = vpop.permute.xlu0 %2958
        %2960 = vrot.lane.b32.xlu0 %v2929, 64
        %v2961 = vpop.permute.xlu0 %2960
        %v2964 = vsel %vm690, %v2722, %v2819
        %v2967 = vsel %vm690, %v2723, %v2821
        %v2970 = vsel %vm690, %v2724, %v2823
        %v2973 = vsel %vm690, %v2725, %v2825
        %v2976 = vsel %vm690, %v2726, %v2827
        %v2979 = vsel %vm690, %v2727, %v2829
        %v2982 = vsel %vm690, %v2728, %v2831
        %v2985 = vsel %vm690, %v2729, %v2833
        %v2988 = vsel %vm690, %v2730, %v2835
        %v2991 = vsel %vm690, %v2731, %v2837
        %v2994 = vsel %vm690, %v2732, %v2839
        %v2997 = vsel %vm690, %v2733, %v2841
        %v3000 = vsel %vm690, %v2734, %v2843
        %v3003 = vsel %vm690, %v2735, %v2845
        %v3006 = vsel %vm690, %v2736, %v2847
        %v3009 = vsel %vm690, %v2737, %v2849
        %vm3010 = vcmask 523264
        %v3012 = vsel %vm3010, %v2964, %v2931
        %v3014 = vsel %vm3010, %v2967, %v2933
        %v3016 = vsel %vm3010, %v2970, %v2935
        %v3018 = vsel %vm3010, %v2973, %v2937
        %v3020 = vsel %vm3010, %v2976, %v2939
        %v3022 = vsel %vm3010, %v2979, %v2941
        %v3024 = vsel %vm3010, %v2982, %v2943
        %v3026 = vsel %vm3010, %v2985, %v2945
        %v3028 = vsel %vm3010, %v2988, %v2947
        %v3030 = vsel %vm3010, %v2991, %v2949
        %v3032 = vsel %vm3010, %v2994, %v2951
        %v3034 = vsel %vm3010, %v2997, %v2953
        %v3036 = vsel %vm3010, %v3000, %v2955
        %v3038 = vsel %vm3010, %v3003, %v2957
        %v3040 = vsel %vm3010, %v3006, %v2959
        %v3042 = vsel %vm3010, %v3009, %v2961
        %v3043 = vld [vmem:[%s8] sm:$0xf]
        %v3044 = vld [vmem:[%s8 + $0x4] sm:$0xf]
        %v3045 = vld [vmem:[%s8 + $0x8] sm:$0xf]
        %v3046 = vld [vmem:[%s8 + $0xc] sm:$0xf]
        %v3047 = vld [vmem:[%s8 + $0x10] sm:$0xf]
        %v3048 = vld [vmem:[%s8 + $0x14] sm:$0xf]
        %v3049 = vld [vmem:[%s8 + $0x18] sm:$0xf]
        %v3050 = vld [vmem:[%s8 + $0x1c] sm:$0xf]
        %v3051 = vld [vmem:[%s8 + $0x20] sm:$0xf]
        %v3052 = vld [vmem:[%s8 + $0x24] sm:$0xf]
        %v3053 = vld [vmem:[%s8 + $0x28] sm:$0xf]
        %v3054 = vld [vmem:[%s8 + $0x2c] sm:$0xf]
        %v3055 = vsel %vm1793, 1, 0
        %v3056 = vsel %vm1794, 1, 0
        %v3057 = vsel %vm1795, 1, 0
        %v3058 = vsel %vm1796, 1, 0
        %v3059 = vsel %vm1797, 1, 0
        %v3060 = vsel %vm1798, 1, 0
        %v3061 = vsel %vm1799, 1, 0
        %v3062 = vsel %vm1800, 1, 0
        %v3063 = vsel %vm1801, 1, 0
        %v3064 = vsel %vm1802, 1, 0
        %v3065 = vsel %vm1803, 1, 0
        %v3066 = vsel %vm1804, 1, 0
        %v3067 = vsel %vm1805, 1, 0
        %v3068 = vsel %vm1806, 1, 0
        %v3069 = vsel %vm1807, 1, 0
        %v3070 = vsel %vm1808, 1, 0
        %v3071 = vsel %vm1809, 1, 0
        %v3072 = vsel %vm1810, 1, 0
        %v3073 = vsel %vm1811, 1, 0
        %v3074 = vsel %vm1812, 1, 0
        %v3075 = vsel %vm1813, 1, 0
        %v3076 = vsel %vm1814, 1, 0
        %v3077 = vsel %vm1815, 1, 0
        %v3078 = vsel %vm1816, 1, 0
        %v3079 = vsel %vm1817, 1, 0
        %v3080 = vsel %vm1818, 1, 0
        %v3081 = vsel %vm1819, 1, 0
        %v3082 = vsel %vm1820, 1, 0
        %v3083 = vsel %vm1821, 1, 0
        %v3084 = vsel %vm1822, 1, 0
        %v3085 = vsel %vm1823, 1, 0
        %v3086 = vsel %vm1824, 1, 0
        %3087 = vset.pattern.permute.xlu0 0
        %3088 = vperm.xlu0 %3087, %v3055
        %v3089 = vpop.permute.xlu0 %3088
        %3090 = vset.pattern.permute.xlu0 0
        %3091 = vperm.xlu0 %3090, %v3056
        %v3092 = vpop.permute.xlu0 %3091
        %3093 = vset.pattern.permute.xlu0 0
        %3094 = vperm.xlu0 %3093, %v3057
        %v3095 = vpop.permute.xlu0 %3094
        %3096 = vset.pattern.permute.xlu0 0
        %3097 = vperm.xlu0 %3096, %v3058
        %v3098 = vpop.permute.xlu0 %3097
        %3099 = vset.pattern.permute.xlu0 0
        %3100 = vperm.xlu0 %3099, %v3059
        %v3101 = vpop.permute.xlu0 %3100
        %3102 = vset.pattern.permute.xlu0 0
        %3103 = vperm.xlu0 %3102, %v3060
        %v3104 = vpop.permute.xlu0 %3103
        %3105 = vset.pattern.permute.xlu0 0
        %3106 = vperm.xlu0 %3105, %v3061
        %v3107 = vpop.permute.xlu0 %3106
        %3108 = vset.pattern.permute.xlu0 0
        %3109 = vperm.xlu0 %3108, %v3062
        %v3110 = vpop.permute.xlu0 %3109
        %3111 = vset.pattern.permute.xlu0 0
        %3112 = vperm.xlu0 %3111, %v3063
        %v3113 = vpop.permute.xlu0 %3112
        %3114 = vset.pattern.permute.xlu0 0
        %3115 = vperm.xlu0 %3114, %v3064
        %v3116 = vpop.permute.xlu0 %3115
        %3117 = vset.pattern.permute.xlu0 0
        %3118 = vperm.xlu0 %3117, %v3065
        %v3119 = vpop.permute.xlu0 %3118
        %3120 = vset.pattern.permute.xlu0 0
        %3121 = vperm.xlu0 %3120, %v3066
        %v3122 = vpop.permute.xlu0 %3121
        %3123 = vset.pattern.permute.xlu0 0
        %3124 = vperm.xlu0 %3123, %v3067
        %v3125 = vpop.permute.xlu0 %3124
        %3126 = vset.pattern.permute.xlu0 0
        %3127 = vperm.xlu0 %3126, %v3068
        %v3128 = vpop.permute.xlu0 %3127
        %3129 = vset.pattern.permute.xlu0 0
        %3130 = vperm.xlu0 %3129, %v3069
        %v3131 = vpop.permute.xlu0 %3130
        %3132 = vset.pattern.permute.xlu0 0
        %3133 = vperm.xlu0 %3132, %v3070
        %v3134 = vpop.permute.xlu0 %3133
        %3135 = vset.pattern.permute.xlu0 0
        %3136 = vperm.xlu0 %3135, %v3071
        %v3137 = vpop.permute.xlu0 %3136
        %3138 = vset.pattern.permute.xlu0 0
        %3139 = vperm.xlu0 %3138, %v3072
        %v3140 = vpop.permute.xlu0 %3139
        %3141 = vset.pattern.permute.xlu0 0
        %3142 = vperm.xlu0 %3141, %v3073
        %v3143 = vpop.permute.xlu0 %3142
        %3144 = vset.pattern.permute.xlu0 0
        %3145 = vperm.xlu0 %3144, %v3074
        %v3146 = vpop.permute.xlu0 %3145
        %3147 = vset.pattern.permute.xlu0 0
        %3148 = vperm.xlu0 %3147, %v3075
        %v3149 = vpop.permute.xlu0 %3148
        %3150 = vset.pattern.permute.xlu0 0
        %3151 = vperm.xlu0 %3150, %v3076
        %v3152 = vpop.permute.xlu0 %3151
        %3153 = vset.pattern.permute.xlu0 0
        %3154 = vperm.xlu0 %3153, %v3077
        %v3155 = vpop.permute.xlu0 %3154
        %3156 = vset.pattern.permute.xlu0 0
        %3157 = vperm.xlu0 %3156, %v3078
        %v3158 = vpop.permute.xlu0 %3157
        %3159 = vset.pattern.permute.xlu0 0
        %3160 = vperm.xlu0 %3159, %v3079
        %v3161 = vpop.permute.xlu0 %3160
        %3162 = vset.pattern.permute.xlu0 0
        %3163 = vperm.xlu0 %3162, %v3080
        %v3164 = vpop.permute.xlu0 %3163
        %3165 = vset.pattern.permute.xlu0 0
        %3166 = vperm.xlu0 %3165, %v3081
        %v3167 = vpop.permute.xlu0 %3166
        %3168 = vset.pattern.permute.xlu0 0
        %3169 = vperm.xlu0 %3168, %v3082
        %v3170 = vpop.permute.xlu0 %3169
        %3171 = vset.pattern.permute.xlu0 0
        %3172 = vperm.xlu0 %3171, %v3083
        %v3173 = vpop.permute.xlu0 %3172
        %3174 = vset.pattern.permute.xlu0 0
        %3175 = vperm.xlu0 %3174, %v3084
        %v3176 = vpop.permute.xlu0 %3175
        %3177 = vset.pattern.permute.xlu0 0
        %3178 = vperm.xlu0 %3177, %v3085
        %v3179 = vpop.permute.xlu0 %3178
        %3180 = vset.pattern.permute.xlu0 0
        %3181 = vperm.xlu0 %3180, %v3086
        %v3182 = vpop.permute.xlu0 %3181
        %vm3183 = vcmp.eq.s32.totalorder %v3089, 1
        %vm3184 = vcmp.eq.s32.totalorder %v3092, 1
        %vm3185 = vcmp.eq.s32.totalorder %v3095, 1
        %vm3186 = vcmp.eq.s32.totalorder %v3098, 1
        %vm3187 = vcmp.eq.s32.totalorder %v3101, 1
        %vm3188 = vcmp.eq.s32.totalorder %v3104, 1
        %vm3189 = vcmp.eq.s32.totalorder %v3107, 1
        %vm3190 = vcmp.eq.s32.totalorder %v3110, 1
        %vm3191 = vcmp.eq.s32.totalorder %v3113, 1
        %vm3192 = vcmp.eq.s32.totalorder %v3116, 1
        %vm3193 = vcmp.eq.s32.totalorder %v3119, 1
        %vm3194 = vcmp.eq.s32.totalorder %v3122, 1
        %vm3195 = vcmp.eq.s32.totalorder %v3125, 1
        %vm3196 = vcmp.eq.s32.totalorder %v3128, 1
        %vm3197 = vcmp.eq.s32.totalorder %v3131, 1
        %vm3198 = vcmp.eq.s32.totalorder %v3134, 1
        %vm3199 = vcmp.eq.s32.totalorder %v3137, 1
        %vm3200 = vcmp.eq.s32.totalorder %v3140, 1
        %vm3201 = vcmp.eq.s32.totalorder %v3143, 1
        %vm3202 = vcmp.eq.s32.totalorder %v3146, 1
        %vm3203 = vcmp.eq.s32.totalorder %v3149, 1
        %vm3204 = vcmp.eq.s32.totalorder %v3152, 1
        %vm3205 = vcmp.eq.s32.totalorder %v3155, 1
        %vm3206 = vcmp.eq.s32.totalorder %v3158, 1
        %vm3207 = vcmp.eq.s32.totalorder %v3161, 1
        %vm3208 = vcmp.eq.s32.totalorder %v3164, 1
        %vm3209 = vcmp.eq.s32.totalorder %v3167, 1
        %vm3210 = vcmp.eq.s32.totalorder %v3170, 1
        %vm3211 = vcmp.eq.s32.totalorder %v3173, 1
        %vm3212 = vcmp.eq.s32.totalorder %v3176, 1
        %vm3213 = vcmp.eq.s32.totalorder %v3179, 1
        %vm3214 = vcmp.eq.s32.totalorder %v3182, 1
        %v3215 = vsel %vm3183, %v1760, 0.0
        %v3216 = vsel %vm3184, %v1759, 0.0
        %v3217 = vsel %vm3185, %v1758, 0.0
        %v3218 = vsel %vm3186, %v1757, 0.0
        %v3219 = vsel %vm3187, %v1756, 0.0
        %v3220 = vsel %vm3188, %v1755, 0.0
        %v3221 = vsel %vm3189, %v1754, 0.0
        %v3222 = vsel %vm3190, %v1753, 0.0
        %v3223 = vsel %vm3191, %v1752, 0.0
        %v3224 = vsel %vm3192, %v1751, 0.0
        %v3225 = vsel %vm3193, %v1750, 0.0
        %v3226 = vsel %vm3194, %v1749, 0.0
        %v3227 = vsel %vm3195, %v1748, 0.0
        %v3228 = vsel %vm3196, %v1747, 0.0
        %v3229 = vsel %vm3197, %v1746, 0.0
        %v3230 = vsel %vm3198, %v1745, 0.0
        %v3231 = vsel %vm3199, %v1744, 0.0
        %v3232 = vsel %vm3200, %v1743, 0.0
        %v3233 = vsel %vm3201, %v1742, 0.0
        %v3234 = vsel %vm3202, %v1741, 0.0
        %v3235 = vsel %vm3203, %v1740, 0.0
        %v3236 = vsel %vm3204, %v1739, 0.0
        %v3237 = vsel %vm3205, %v1738, 0.0
        %v3238 = vsel %vm3206, %v1737, 0.0
        %v3239 = vsel %vm3207, %v1736, 0.0
        %v3240 = vsel %vm3208, %v1735, 0.0
        %v3241 = vsel %vm3209, %v1734, 0.0
        %v3242 = vsel %vm3210, %v1733, 0.0
        %v3243 = vsel %vm3211, %v1732, 0.0
        %v3244 = vsel %vm3212, %v1731, 0.0
        %v3245 = vsel %vm3213, %v1730, 0.0
        %v3246 = vsel %vm3214, %v1729, 0.0
        %v3247 = vpack.c.bf16 %v3215, %v3215
        %v3248 = vpack.c.bf16 %v3216, %v3216
        %v3249 = vpack.c.bf16 %v3217, %v3217
        %v3250 = vpack.c.bf16 %v3218, %v3218
        %v3251 = vpack.c.bf16 %v3219, %v3219
        %v3252 = vpack.c.bf16 %v3220, %v3220
        %v3253 = vpack.c.bf16 %v3221, %v3221
        %v3254 = vpack.c.bf16 %v3222, %v3222
        %v3255 = vpack.c.bf16 %v3223, %v3223
        %v3256 = vpack.c.bf16 %v3224, %v3224
        %v3257 = vpack.c.bf16 %v3225, %v3225
        %v3258 = vpack.c.bf16 %v3226, %v3226
        %v3259 = vpack.c.bf16 %v3227, %v3227
        %v3260 = vpack.c.bf16 %v3228, %v3228
        %v3261 = vpack.c.bf16 %v3229, %v3229
        %v3262 = vpack.c.bf16 %v3230, %v3230
        %v3263 = vpack.c.bf16 %v3231, %v3231
        %v3264 = vpack.c.bf16 %v3232, %v3232
        %v3265 = vpack.c.bf16 %v3233, %v3233
        %v3266 = vpack.c.bf16 %v3234, %v3234
        %v3267 = vpack.c.bf16 %v3235, %v3235
        %v3268 = vpack.c.bf16 %v3236, %v3236
        %v3269 = vpack.c.bf16 %v3237, %v3237
        %v3270 = vpack.c.bf16 %v3238, %v3238
        %v3271 = vpack.c.bf16 %v3239, %v3239
        %v3272 = vpack.c.bf16 %v3240, %v3240
        %v3273 = vpack.c.bf16 %v3241, %v3241
        %v3274 = vpack.c.bf16 %v3242, %v3242
        %v3275 = vpack.c.bf16 %v3243, %v3243
        %v3276 = vpack.c.bf16 %v3244, %v3244
        %v3277 = vpack.c.bf16 %v3245, %v3245
        %v3278 = vpack.c.bf16 %v3246, %v3246
        %v3279 = vpack.c.bf16 %v1661, %v1661
        %v3280 = vpack.c.bf16 %v1662, %v1662
        %v3281 = vpack.c.bf16 %v1663, %v1663
        %v3282 = vpack.c.bf16 %v1664, %v1664
        %v3283 = vpack.c.bf16 %v1665, %v1665
        %v3284 = vpack.c.bf16 %v1666, %v1666
        %v3285 = vpack.c.bf16 %v1667, %v1667
        %v3286 = vpack.c.bf16 %v1668, %v1668
        %v3287 = vpack.c.bf16 %v1669, %v1669
        %v3288 = vpack.c.bf16 %v1670, %v1670
        %v3289 = vpack.c.bf16 %v1671, %v1671
        %v3290 = vpack.c.bf16 %v1672, %v1672
        %v3291 = vpack.c.bf16 %v1673, %v1673
        %v3292 = vpack.c.bf16 %v1674, %v1674
        %v3293 = vpack.c.bf16 %v1675, %v1675
        %v3294 = vpack.c.bf16 %v1676, %v1676
        %v3295 = vpack.c.bf16 %v1677, %v1677
        %v3296 = vpack.c.bf16 %v1678, %v1678
        %v3297 = vpack.c.bf16 %v1679, %v1679
        %v3298 = vpack.c.bf16 %v1680, %v1680
        %v3299 = vpack.c.bf16 %v1681, %v1681
        %v3300 = vpack.c.bf16 %v1682, %v1682
        %v3301 = vpack.c.bf16 %v1683, %v1683
        %v3302 = vpack.c.bf16 %v1684, %v1684
        %v3303 = vpack.c.bf16 %v1685, %v1685
        %v3304 = vpack.c.bf16 %v1686, %v1686
        %v3305 = vpack.c.bf16 %v1687, %v1687
        %v3306 = vpack.c.bf16 %v1688, %v1688
        %v3307 = vpack.c.bf16 %v1689, %v1689
        %v3308 = vpack.c.bf16 %v1690, %v1690
        %v3309 = vpack.c.bf16 %v1691, %v1691
        %v3310 = vpack.c.bf16 %v1692, %v1692
        %v3311 = vsel %vm2370, 1, 0
        %v3312 = vsel %vm2371, 1, 0
        %v3313 = vsel %vm2372, 1, 0
        %v3314 = vsel %vm2373, 1, 0
        %v3315 = vsel %vm2374, 1, 0
        %v3316 = vsel %vm2375, 1, 0
        %v3317 = vsel %vm2376, 1, 0
        %v3318 = vsel %vm2377, 1, 0
        %v3319 = vsel %vm2378, 1, 0
        %v3320 = vsel %vm2379, 1, 0
        %v3321 = vsel %vm2380, 1, 0
        %v3322 = vsel %vm2381, 1, 0
        %v3323 = vsel %vm2382, 1, 0
        %v3324 = vsel %vm2383, 1, 0
        %v3325 = vsel %vm2384, 1, 0
        %v3326 = vsel %vm2385, 1, 0
        %v3327 = vsel %vm2386, 1, 0
        %v3328 = vsel %vm2387, 1, 0
        %v3329 = vsel %vm2388, 1, 0
        %v3330 = vsel %vm2389, 1, 0
        %v3331 = vsel %vm2390, 1, 0
        %v3332 = vsel %vm2391, 1, 0
        %v3333 = vsel %vm2392, 1, 0
        %v3334 = vsel %vm2393, 1, 0
        %v3335 = vsel %vm2394, 1, 0
        %v3336 = vsel %vm2395, 1, 0
        %v3337 = vsel %vm2396, 1, 0
        %v3338 = vsel %vm2397, 1, 0
        %v3339 = vsel %vm2398, 1, 0
        %v3340 = vsel %vm2399, 1, 0
        %v3341 = vsel %vm2400, 1, 0
        %v3342 = vsel %vm2401, 1, 0
        %3343 = vset.pattern.permute.xlu0 0
        %3344 = vperm.xlu0 %3343, %v3311
        %v3345 = vpop.permute.xlu0 %3344
        %3346 = vset.pattern.permute.xlu0 0
        %3347 = vperm.xlu0 %3346, %v3312
        %v3348 = vpop.permute.xlu0 %3347
        %3349 = vset.pattern.permute.xlu0 0
        %3350 = vperm.xlu0 %3349, %v3313
        %v3351 = vpop.permute.xlu0 %3350
        %3352 = vset.pattern.permute.xlu0 0
        %3353 = vperm.xlu0 %3352, %v3314
        %v3354 = vpop.permute.xlu0 %3353
        %3355 = vset.pattern.permute.xlu0 0
        %3356 = vperm.xlu0 %3355, %v3315
        %v3357 = vpop.permute.xlu0 %3356
        %3358 = vset.pattern.permute.xlu0 0
        %3359 = vperm.xlu0 %3358, %v3316
        %v3360 = vpop.permute.xlu0 %3359
        %3361 = vset.pattern.permute.xlu0 0
        %3362 = vperm.xlu0 %3361, %v3317
        %v3363 = vpop.permute.xlu0 %3362
        %3364 = vset.pattern.permute.xlu0 0
        %3365 = vperm.xlu0 %3364, %v3318
        %v3366 = vpop.permute.xlu0 %3365
        %3367 = vset.pattern.permute.xlu0 0
        %3368 = vperm.xlu0 %3367, %v3319
        %v3369 = vpop.permute.xlu0 %3368
        %3370 = vset.pattern.permute.xlu0 0
        %3371 = vperm.xlu0 %3370, %v3320
        %v3372 = vpop.permute.xlu0 %3371
        %3373 = vset.pattern.permute.xlu0 0
        %3374 = vperm.xlu0 %3373, %v3321
        %v3375 = vpop.permute.xlu0 %3374
        %3376 = vset.pattern.permute.xlu0 0
        %3377 = vperm.xlu0 %3376, %v3322
        %v3378 = vpop.permute.xlu0 %3377
        %3379 = vset.pattern.permute.xlu0 0
        %3380 = vperm.xlu0 %3379, %v3323
        %v3381 = vpop.permute.xlu0 %3380
        %3382 = vset.pattern.permute.xlu0 0
        %3383 = vperm.xlu0 %3382, %v3324
        %v3384 = vpop.permute.xlu0 %3383
        %3385 = vset.pattern.permute.xlu0 0
        %3386 = vperm.xlu0 %3385, %v3325
        %v3387 = vpop.permute.xlu0 %3386
        %3388 = vset.pattern.permute.xlu0 0
        %3389 = vperm.xlu0 %3388, %v3326
        %v3390 = vpop.permute.xlu0 %3389
        %3391 = vset.pattern.permute.xlu0 0
        %3392 = vperm.xlu0 %3391, %v3327
        %v3393 = vpop.permute.xlu0 %3392
        %3394 = vset.pattern.permute.xlu0 0
        %3395 = vperm.xlu0 %3394, %v3328
        %v3396 = vpop.permute.xlu0 %3395
        %3397 = vset.pattern.permute.xlu0 0
        %3398 = vperm.xlu0 %3397, %v3329
        %v3399 = vpop.permute.xlu0 %3398
        %3400 = vset.pattern.permute.xlu0 0
        %3401 = vperm.xlu0 %3400, %v3330
        %v3402 = vpop.permute.xlu0 %3401
        %3403 = vset.pattern.permute.xlu0 0
        %3404 = vperm.xlu0 %3403, %v3331
        %v3405 = vpop.permute.xlu0 %3404
        %3406 = vset.pattern.permute.xlu0 0
        %3407 = vperm.xlu0 %3406, %v3332
        %v3408 = vpop.permute.xlu0 %3407
        %3409 = vset.pattern.permute.xlu0 0
        %3410 = vperm.xlu0 %3409, %v3333
        %v3411 = vpop.permute.xlu0 %3410
        %3412 = vset.pattern.permute.xlu0 0
        %3413 = vperm.xlu0 %3412, %v3334
        %v3414 = vpop.permute.xlu0 %3413
        %3415 = vset.pattern.permute.xlu0 0
        %3416 = vperm.xlu0 %3415, %v3335
        %v3417 = vpop.permute.xlu0 %3416
        %3418 = vset.pattern.permute.xlu0 0
        %3419 = vperm.xlu0 %3418, %v3336
        %v3420 = vpop.permute.xlu0 %3419
        %3421 = vset.pattern.permute.xlu0 0
        %3422 = vperm.xlu0 %3421, %v3337
        %v3423 = vpop.permute.xlu0 %3422
        %3424 = vset.pattern.permute.xlu0 0
        %3425 = vperm.xlu0 %3424, %v3338
        %v3426 = vpop.permute.xlu0 %3425
        %3427 = vset.pattern.permute.xlu0 0
        %3428 = vperm.xlu0 %3427, %v3339
        %v3429 = vpop.permute.xlu0 %3428
        %3430 = vset.pattern.permute.xlu0 0
        %3431 = vperm.xlu0 %3430, %v3340
        %v3432 = vpop.permute.xlu0 %3431
        %3433 = vset.pattern.permute.xlu0 0
        %3434 = vperm.xlu0 %3433, %v3341
        %v3435 = vpop.permute.xlu0 %3434
        %3436 = vset.pattern.permute.xlu0 0
        %3437 = vperm.xlu0 %3436, %v3342
        %v3438 = vpop.permute.xlu0 %3437
        %vm3439 = vcmp.eq.s32.totalorder %v3345, 1
        %vm3440 = vcmp.eq.s32.totalorder %v3348, 1
        %vm3441 = vcmp.eq.s32.totalorder %v3351, 1
        %vm3442 = vcmp.eq.s32.totalorder %v3354, 1
        %vm3443 = vcmp.eq.s32.totalorder %v3357, 1
        %vm3444 = vcmp.eq.s32.totalorder %v3360, 1
        %vm3445 = vcmp.eq.s32.totalorder %v3363, 1
        %vm3446 = vcmp.eq.s32.totalorder %v3366, 1
        %vm3447 = vcmp.eq.s32.totalorder %v3369, 1
        %vm3448 = vcmp.eq.s32.totalorder %v3372, 1
        %vm3449 = vcmp.eq.s32.totalorder %v3375, 1
        %vm3450 = vcmp.eq.s32.totalorder %v3378, 1
        %vm3451 = vcmp.eq.s32.totalorder %v3381, 1
        %vm3452 = vcmp.eq.s32.totalorder %v3384, 1
        %vm3453 = vcmp.eq.s32.totalorder %v3387, 1
        %vm3454 = vcmp.eq.s32.totalorder %v3390, 1
        %vm3455 = vcmp.eq.s32.totalorder %v3393, 1
        %vm3456 = vcmp.eq.s32.totalorder %v3396, 1
        %vm3457 = vcmp.eq.s32.totalorder %v3399, 1
        %vm3458 = vcmp.eq.s32.totalorder %v3402, 1
        %vm3459 = vcmp.eq.s32.totalorder %v3405, 1
        %vm3460 = vcmp.eq.s32.totalorder %v3408, 1
        %vm3461 = vcmp.eq.s32.totalorder %v3411, 1
        %vm3462 = vcmp.eq.s32.totalorder %v3414, 1
        %vm3463 = vcmp.eq.s32.totalorder %v3417, 1
        %vm3464 = vcmp.eq.s32.totalorder %v3420, 1
        %vm3465 = vcmp.eq.s32.totalorder %v3423, 1
        %vm3466 = vcmp.eq.s32.totalorder %v3426, 1
        %vm3467 = vcmp.eq.s32.totalorder %v3429, 1
        %vm3468 = vcmp.eq.s32.totalorder %v3432, 1
        %vm3469 = vcmp.eq.s32.totalorder %v3435, 1
        %vm3470 = vcmp.eq.s32.totalorder %v3438, 1
        %v3471 = vsel %vm3439, %v2368, 0.0
        %v3472 = vsel %vm3440, %v2367, 0.0
        %v3473 = vsel %vm3441, %v2366, 0.0
        %v3474 = vsel %vm3442, %v2365, 0.0
        %v3475 = vsel %vm3443, %v2364, 0.0
        %v3476 = vsel %vm3444, %v2363, 0.0
        %v3477 = vsel %vm3445, %v2362, 0.0
        %v3478 = vsel %vm3446, %v2361, 0.0
        %v3479 = vsel %vm3447, %v2360, 0.0
        %v3480 = vsel %vm3448, %v2359, 0.0
        %v3481 = vsel %vm3449, %v2358, 0.0
        %v3482 = vsel %vm3450, %v2357, 0.0
        %v3483 = vsel %vm3451, %v2356, 0.0
        %v3484 = vsel %vm3452, %v2355, 0.0
        %v3485 = vsel %vm3453, %v2354, 0.0
        %v3486 = vsel %vm3454, %v2353, 0.0
        %v3487 = vsel %vm3455, %v2352, 0.0
        %v3488 = vsel %vm3456, %v2351, 0.0
        %v3489 = vsel %vm3457, %v2350, 0.0
        %v3490 = vsel %vm3458, %v2349, 0.0
        %v3491 = vsel %vm3459, %v2348, 0.0
        %v3492 = vsel %vm3460, %v2347, 0.0
        %v3493 = vsel %vm3461, %v2346, 0.0
        %v3494 = vsel %vm3462, %v2345, 0.0
        %v3495 = vsel %vm3463, %v2344, 0.0
        %v3496 = vsel %vm3464, %v2343, 0.0
        %v3497 = vsel %vm3465, %v2342, 0.0
        %v3498 = vsel %vm3466, %v2341, 0.0
        %v3499 = vsel %vm3467, %v2340, 0.0
        %v3500 = vsel %vm3468, %v2339, 0.0
        %v3501 = vsel %vm3469, %v2338, 0.0
        %v3502 = vsel %vm3470, %v2369, 0.0
        %v3503 = vpack.c.bf16 %v3471, %v3471
        %v3504 = vpack.c.bf16 %v3472, %v3472
        %v3505 = vpack.c.bf16 %v3473, %v3473
        %v3506 = vpack.c.bf16 %v3474, %v3474
        %v3507 = vpack.c.bf16 %v3475, %v3475
        %v3508 = vpack.c.bf16 %v3476, %v3476
        %v3509 = vpack.c.bf16 %v3477, %v3477
        %v3510 = vpack.c.bf16 %v3478, %v3478
        %v3511 = vpack.c.bf16 %v3479, %v3479
        %v3512 = vpack.c.bf16 %v3480, %v3480
        %v3513 = vpack.c.bf16 %v3481, %v3481
        %v3514 = vpack.c.bf16 %v3482, %v3482
        %v3515 = vpack.c.bf16 %v3483, %v3483
        %v3516 = vpack.c.bf16 %v3484, %v3484
        %v3517 = vpack.c.bf16 %v3485, %v3485
        %v3518 = vpack.c.bf16 %v3486, %v3486
        %v3519 = vpack.c.bf16 %v3487, %v3487
        %v3520 = vpack.c.bf16 %v3488, %v3488
        %v3521 = vpack.c.bf16 %v3489, %v3489
        %v3522 = vpack.c.bf16 %v3490, %v3490
        %v3523 = vpack.c.bf16 %v3491, %v3491
        %v3524 = vpack.c.bf16 %v3492, %v3492
        %v3525 = vpack.c.bf16 %v3493, %v3493
        %v3526 = vpack.c.bf16 %v3494, %v3494
        %v3527 = vpack.c.bf16 %v3495, %v3495
        %v3528 = vpack.c.bf16 %v3496, %v3496
        %v3529 = vpack.c.bf16 %v3497, %v3497
        %v3530 = vpack.c.bf16 %v3498, %v3498
        %v3531 = vpack.c.bf16 %v3499, %v3499
        %v3532 = vpack.c.bf16 %v3500, %v3500
        %v3533 = vpack.c.bf16 %v3501, %v3501
        %v3534 = vpack.c.bf16 %v3502, %v3502
        %v3567 = vunpack.c.l.b16 %v3247
        %v3568 = vunpack.c.l.b16 %v3248
        %v3569 = vunpack.c.l.b16 %v3249
        %v3570 = vunpack.c.l.b16 %v3250
        %v3571 = vunpack.c.l.b16 %v3251
        %v3572 = vunpack.c.l.b16 %v3252
        %v3573 = vunpack.c.l.b16 %v3253
        %v3574 = vunpack.c.l.b16 %v3254
        %v3575 = vunpack.c.l.b16 %v3255
        %v3576 = vunpack.c.l.b16 %v3256
        %v3577 = vunpack.c.l.b16 %v3257
        %v3578 = vunpack.c.l.b16 %v3258
        %v3579 = vunpack.c.l.b16 %v3259
        %v3580 = vunpack.c.l.b16 %v3260
        %v3581 = vunpack.c.l.b16 %v3261
        %v3582 = vunpack.c.l.b16 %v3262
        %v3583 = vunpack.c.l.b16 %v3263
        %v3584 = vunpack.c.l.b16 %v3264
        %v3585 = vunpack.c.l.b16 %v3265
        %v3586 = vunpack.c.l.b16 %v3266
        %v3587 = vunpack.c.l.b16 %v3267
        %v3588 = vunpack.c.l.b16 %v3268
        %v3589 = vunpack.c.l.b16 %v3269
        %v3590 = vunpack.c.l.b16 %v3270
        %v3591 = vunpack.c.l.b16 %v3271
        %v3592 = vunpack.c.l.b16 %v3272
        %v3593 = vunpack.c.l.b16 %v3273
        %v3594 = vunpack.c.l.b16 %v3274
        %v3595 = vunpack.c.l.b16 %v3275
        %v3596 = vunpack.c.l.b16 %v3276
        %v3597 = vunpack.c.l.b16 %v3277
        %v3598 = vunpack.c.l.b16 %v3278
        %v3599 = vpack.c.b16 %v3568, %v3567
        %v3600 = vpack.c.b16 %v3570, %v3569
        %v3601 = vpack.c.b16 %v3572, %v3571
        %v3602 = vpack.c.b16 %v3574, %v3573
        %v3603 = vpack.c.b16 %v3576, %v3575
        %v3604 = vpack.c.b16 %v3578, %v3577
        %v3605 = vpack.c.b16 %v3580, %v3579
        %v3606 = vpack.c.b16 %v3582, %v3581
        %v3607 = vpack.c.b16 %v3584, %v3583
        %v3608 = vpack.c.b16 %v3586, %v3585
        %v3609 = vpack.c.b16 %v3588, %v3587
        %v3610 = vpack.c.b16 %v3590, %v3589
        %v3611 = vpack.c.b16 %v3592, %v3591
        %v3612 = vpack.c.b16 %v3594, %v3593
        %v3613 = vpack.c.b16 %v3596, %v3595
        %v3614 = vpack.c.b16 %v3598, %v3597
        %v3647 = vunpack.c.l.b16 %v3279
        %v3648 = vunpack.c.l.b16 %v3280
        %v3649 = vunpack.c.l.b16 %v3281
        %v3650 = vunpack.c.l.b16 %v3282
        %v3651 = vunpack.c.l.b16 %v3283
        %v3652 = vunpack.c.l.b16 %v3284
        %v3653 = vunpack.c.l.b16 %v3285
        %v3654 = vunpack.c.l.b16 %v3286
        %v3655 = vunpack.c.l.b16 %v3287
        %v3656 = vunpack.c.l.b16 %v3288
        %v3657 = vunpack.c.l.b16 %v3289
        %v3658 = vunpack.c.l.b16 %v3290
        %v3659 = vunpack.c.l.b16 %v3291
        %v3660 = vunpack.c.l.b16 %v3292
        %v3661 = vunpack.c.l.b16 %v3293
        %v3662 = vunpack.c.l.b16 %v3294
        %v3663 = vunpack.c.l.b16 %v3295
        %v3664 = vunpack.c.l.b16 %v3296
        %v3665 = vunpack.c.l.b16 %v3297
        %v3666 = vunpack.c.l.b16 %v3298
        %v3667 = vunpack.c.l.b16 %v3299
        %v3668 = vunpack.c.l.b16 %v3300
        %v3669 = vunpack.c.l.b16 %v3301
        %v3670 = vunpack.c.l.b16 %v3302
        %v3671 = vunpack.c.l.b16 %v3303
        %v3672 = vunpack.c.l.b16 %v3304
        %v3673 = vunpack.c.l.b16 %v3305
        %v3674 = vunpack.c.l.b16 %v3306
        %v3675 = vunpack.c.l.b16 %v3307
        %v3676 = vunpack.c.l.b16 %v3308
        %v3677 = vunpack.c.l.b16 %v3309
        %v3678 = vunpack.c.l.b16 %v3310
        %v3679 = vpack.c.b16 %v3648, %v3647
        %v3680 = vpack.c.b16 %v3650, %v3649
        %v3681 = vpack.c.b16 %v3652, %v3651
        %v3682 = vpack.c.b16 %v3654, %v3653
        %v3683 = vpack.c.b16 %v3656, %v3655
        %v3684 = vpack.c.b16 %v3658, %v3657
        %v3685 = vpack.c.b16 %v3660, %v3659
        %v3686 = vpack.c.b16 %v3662, %v3661
        %v3687 = vpack.c.b16 %v3664, %v3663
        %v3688 = vpack.c.b16 %v3666, %v3665
        %v3689 = vpack.c.b16 %v3668, %v3667
        %v3690 = vpack.c.b16 %v3670, %v3669
        %v3691 = vpack.c.b16 %v3672, %v3671
        %v3692 = vpack.c.b16 %v3674, %v3673
        %v3693 = vpack.c.b16 %v3676, %v3675
        %v3694 = vpack.c.b16 %v3678, %v3677
        %3695 = vrot.lane.b32.xlu0 %v3679, 32
        %v3696 = vpop.permute.xlu0 %3695
        %3697 = vrot.lane.b32.xlu0 %v3680, 32
        %v3698 = vpop.permute.xlu0 %3697
        %3699 = vrot.lane.b32.xlu0 %v3681, 32
        %v3700 = vpop.permute.xlu0 %3699
        %3701 = vrot.lane.b32.xlu0 %v3682, 32
        %v3702 = vpop.permute.xlu0 %3701
        %3703 = vrot.lane.b32.xlu0 %v3683, 32
        %v3704 = vpop.permute.xlu0 %3703
        %3705 = vrot.lane.b32.xlu0 %v3684, 32
        %v3706 = vpop.permute.xlu0 %3705
        %3707 = vrot.lane.b32.xlu0 %v3685, 32
        %v3708 = vpop.permute.xlu0 %3707
        %3709 = vrot.lane.b32.xlu0 %v3686, 32
        %v3710 = vpop.permute.xlu0 %3709
        %3711 = vrot.lane.b32.xlu0 %v3687, 32
        %v3712 = vpop.permute.xlu0 %3711
        %3713 = vrot.lane.b32.xlu0 %v3688, 32
        %v3714 = vpop.permute.xlu0 %3713
        %3715 = vrot.lane.b32.xlu0 %v3689, 32
        %v3716 = vpop.permute.xlu0 %3715
        %3717 = vrot.lane.b32.xlu0 %v3690, 32
        %v3718 = vpop.permute.xlu0 %3717
        %3719 = vrot.lane.b32.xlu0 %v3691, 32
        %v3720 = vpop.permute.xlu0 %3719
        %3721 = vrot.lane.b32.xlu0 %v3692, 32
        %v3722 = vpop.permute.xlu0 %3721
        %3723 = vrot.lane.b32.xlu0 %v3693, 32
        %v3724 = vpop.permute.xlu0 %3723
        %3725 = vrot.lane.b32.xlu0 %v3694, 32
        %v3726 = vpop.permute.xlu0 %3725
        %v3759 = vunpack.c.l.b16 %v3503
        %v3760 = vunpack.c.l.b16 %v3504
        %v3761 = vunpack.c.l.b16 %v3505
        %v3762 = vunpack.c.l.b16 %v3506
        %v3763 = vunpack.c.l.b16 %v3507
        %v3764 = vunpack.c.l.b16 %v3508
        %v3765 = vunpack.c.l.b16 %v3509
        %v3766 = vunpack.c.l.b16 %v3510
        %v3767 = vunpack.c.l.b16 %v3511
        %v3768 = vunpack.c.l.b16 %v3512
        %v3769 = vunpack.c.l.b16 %v3513
        %v3770 = vunpack.c.l.b16 %v3514
        %v3771 = vunpack.c.l.b16 %v3515
        %v3772 = vunpack.c.l.b16 %v3516
        %v3773 = vunpack.c.l.b16 %v3517
        %v3774 = vunpack.c.l.b16 %v3518
        %v3775 = vunpack.c.l.b16 %v3519
        %v3776 = vunpack.c.l.b16 %v3520
        %v3777 = vunpack.c.l.b16 %v3521
        %v3778 = vunpack.c.l.b16 %v3522
        %v3779 = vunpack.c.l.b16 %v3523
        %v3780 = vunpack.c.l.b16 %v3524
        %v3781 = vunpack.c.l.b16 %v3525
        %v3782 = vunpack.c.l.b16 %v3526
        %v3783 = vunpack.c.l.b16 %v3527
        %v3784 = vunpack.c.l.b16 %v3528
        %v3785 = vunpack.c.l.b16 %v3529
        %v3786 = vunpack.c.l.b16 %v3530
        %v3787 = vunpack.c.l.b16 %v3531
        %v3788 = vunpack.c.l.b16 %v3532
        %v3789 = vunpack.c.l.b16 %v3533
        %v3790 = vunpack.c.l.b16 %v3534
        %v3791 = vpack.c.b16 %v3760, %v3759
        %v3792 = vpack.c.b16 %v3762, %v3761
        %v3793 = vpack.c.b16 %v3764, %v3763
        %v3794 = vpack.c.b16 %v3766, %v3765
        %v3795 = vpack.c.b16 %v3768, %v3767
        %v3796 = vpack.c.b16 %v3770, %v3769
        %v3797 = vpack.c.b16 %v3772, %v3771
        %v3798 = vpack.c.b16 %v3774, %v3773
        %v3799 = vpack.c.b16 %v3776, %v3775
        %v3800 = vpack.c.b16 %v3778, %v3777
        %v3801 = vpack.c.b16 %v3780, %v3779
        %v3802 = vpack.c.b16 %v3782, %v3781
        %v3803 = vpack.c.b16 %v3784, %v3783
        %v3804 = vpack.c.b16 %v3786, %v3785
        %v3805 = vpack.c.b16 %v3788, %v3787
        %v3806 = vpack.c.b16 %v3790, %v3789
        %3807 = vrot.lane.b32.xlu0 %v3791, 64
        %v3808 = vpop.permute.xlu0 %3807
        %3809 = vrot.lane.b32.xlu0 %v3792, 64
        %v3810 = vpop.permute.xlu0 %3809
        %3811 = vrot.lane.b32.xlu0 %v3793, 64
        %v3812 = vpop.permute.xlu0 %3811
        %3813 = vrot.lane.b32.xlu0 %v3794, 64
        %v3814 = vpop.permute.xlu0 %3813
        %3815 = vrot.lane.b32.xlu0 %v3795, 64
        %v3816 = vpop.permute.xlu0 %3815
        %3817 = vrot.lane.b32.xlu0 %v3796, 64
        %v3818 = vpop.permute.xlu0 %3817
        %3819 = vrot.lane.b32.xlu0 %v3797, 64
        %v3820 = vpop.permute.xlu0 %3819
        %3821 = vrot.lane.b32.xlu0 %v3798, 64
        %v3822 = vpop.permute.xlu0 %3821
        %3823 = vrot.lane.b32.xlu0 %v3799, 64
        %v3824 = vpop.permute.xlu0 %3823
        %3825 = vrot.lane.b32.xlu0 %v3800, 64
        %v3826 = vpop.permute.xlu0 %3825
        %3827 = vrot.lane.b32.xlu0 %v3801, 64
        %v3828 = vpop.permute.xlu0 %3827
        %3829 = vrot.lane.b32.xlu0 %v3802, 64
        %v3830 = vpop.permute.xlu0 %3829
        %3831 = vrot.lane.b32.xlu0 %v3803, 64
        %v3832 = vpop.permute.xlu0 %3831
        %3833 = vrot.lane.b32.xlu0 %v3804, 64
        %v3834 = vpop.permute.xlu0 %3833
        %3835 = vrot.lane.b32.xlu0 %v3805, 64
        %v3836 = vpop.permute.xlu0 %3835
        %3837 = vrot.lane.b32.xlu0 %v3806, 64
        %v3838 = vpop.permute.xlu0 %3837
        %v3841 = vsel %vm690, %v3599, %v3696
        %v3844 = vsel %vm690, %v3600, %v3698
        %v3847 = vsel %vm690, %v3601, %v3700
        %v3850 = vsel %vm690, %v3602, %v3702
        %v3853 = vsel %vm690, %v3603, %v3704
        %v3856 = vsel %vm690, %v3604, %v3706
        %v3859 = vsel %vm690, %v3605, %v3708
        %v3862 = vsel %vm690, %v3606, %v3710
        %v3865 = vsel %vm690, %v3607, %v3712
        %v3868 = vsel %vm690, %v3608, %v3714
        %v3871 = vsel %vm690, %v3609, %v3716
        %v3874 = vsel %vm690, %v3610, %v3718
        %v3877 = vsel %vm690, %v3611, %v3720
        %v3880 = vsel %vm690, %v3612, %v3722
        %v3883 = vsel %vm690, %v3613, %v3724
        %v3886 = vsel %vm690, %v3614, %v3726
        %v3888 = vsel %vm3010, %v3841, %v3808
        %v3890 = vsel %vm3010, %v3844, %v3810
        %v3892 = vsel %vm3010, %v3847, %v3812
        %v3894 = vsel %vm3010, %v3850, %v3814
        %v3896 = vsel %vm3010, %v3853, %v3816
        %v3898 = vsel %vm3010, %v3856, %v3818
        %v3900 = vsel %vm3010, %v3859, %v3820
        %v3902 = vsel %vm3010, %v3862, %v3822
        %v3904 = vsel %vm3010, %v3865, %v3824
        %v3906 = vsel %vm3010, %v3868, %v3826
        %v3908 = vsel %vm3010, %v3871, %v3828
        %v3910 = vsel %vm3010, %v3874, %v3830
        %v3912 = vsel %vm3010, %v3877, %v3832
        %v3914 = vsel %vm3010, %v3880, %v3834
        %v3916 = vsel %vm3010, %v3883, %v3836
        %v3918 = vsel %vm3010, %v3886, %v3838
        %v3919 = vld [vmem:[%s8 + $0x30] sm:$0xf]
        %v3920 = vld [vmem:[%s8 + $0x34] sm:$0xf]
        %v3921 = vld [vmem:[%s8 + $0x38] sm:$0xf]
        %v3922 = vld [vmem:[%s8 + $0x3c] sm:$0xf]
        %v3923 = vld [vmem:[%s8 + $0x40] sm:$0xf]
        %v3924 = vld [vmem:[%s8 + $0x44] sm:$0xf]
        %v3925 = vld [vmem:[%s8 + $0x48] sm:$0xf]
        %v3926 = vld [vmem:[%s8 + $0x4c] sm:$0xf]
        %v3927 = vld [vmem:[%s8 + $0x50] sm:$0xf]
        %v3928 = vld [vmem:[%s8 + $0x54] sm:$0xf]
        %v3929 = vld [vmem:[%s8 + $0x58] sm:$0xf]
        %v3930 = vld [vmem:[%s8 + $0x5c] sm:$0xf]
        %v3943 = vunpack.c.l.b16 %v3919
        %v3944 = vunpack.c.l.b16 %v3920
        %v3945 = vunpack.c.l.b16 %v3921
        %v3946 = vunpack.c.l.b16 %v3922
        %v3947 = vunpack.c.l.b16 %v3923
        %v3948 = vunpack.c.l.b16 %v3924
        %v3949 = vunpack.c.l.b16 %v3925
        %v3950 = vunpack.c.l.b16 %v3926
        %v3951 = vunpack.c.l.b16 %v3927
        %v3952 = vunpack.c.l.b16 %v3928
        %v3953 = vunpack.c.l.b16 %v3929
        %v3954 = vunpack.c.l.b16 %v3930
        %v3955 = vpack.c.b16 %v3944, %v3943
        %v3956 = vpack.c.b16 %v3946, %v3945
        %v3957 = vpack.c.b16 %v3948, %v3947
        %v3958 = vpack.c.b16 %v3950, %v3949
        %v3959 = vpack.c.b16 %v3952, %v3951
        %v3960 = vpack.c.b16 %v3954, %v3953
        %vm3967 = vcmask 785408
        %v3968 = vsel %vm3967, %v3888, 0
        %v3970 = vsel %vm3967, %v3890, 0
        %v3972 = vsel %vm3967, %v3892, 0
        %v3974 = vsel %vm3967, %v3894, 0
        %v3976 = vsel %vm3967, %v3896, 0
        %v3978 = vsel %vm3967, %v3898, 0
        %v3980 = vsel %vm3967, %v3900, 0
        %v3982 = vsel %vm3967, %v3902, 0
        %v3984 = vsel %vm3967, %v3904, 0
        %v3986 = vsel %vm3967, %v3906, 0
        %v3988 = vsel %vm3967, %v3908, 0
        %v3990 = vsel %vm3967, %v3910, 0
        %v3992 = vsel %vm3967, %v3912, 0
        %v3994 = vsel %vm3967, %v3914, 0
        %v3996 = vsel %vm3967, %v3916, 0
        %v3998 = vsel %vm3967, %v3918, 0
        %4000 = vmatpush.bf16.msra.mxu0 0
        %4001 = vmatpush.bf16.msra.mxu0 0
        %4002 = vmatpush.bf16.msra.mxu0 %v3960
        %4003 = vmatpush.bf16.msra.mxu0 %v3959
        %4004 = vmatpush.bf16.msra.mxu0 %v3958
        %4005 = vmatpush.bf16.msra.mxu0 %v3957
        %4006 = vmatpush.bf16.msra.mxu0 %v3956
        %4007 = vmatpush.bf16.msra.mxu0 %v3955
        %4008 = vmatmul.bf16.gmra.mxu0 %v3968
        %v4009 = vpop.f32.mrf.mxu0
        %v4010 = vadd.f32 0.0, %v4009
        %v4011 = vpop.f32.mrf.mxu0
        %v4012 = vadd.f32 0.0, %v4011
        %4013 = vmatmul.bf16.gmra.mxu0 %v3970
        %v4014 = vpop.f32.mrf.mxu0
        %v4015 = vadd.f32 0.0, %v4014
        %v4016 = vpop.f32.mrf.mxu0
        %v4017 = vadd.f32 0.0, %v4016
        %4018 = vmatmul.bf16.gmra.mxu0 %v3972
        %v4019 = vpop.f32.mrf.mxu0
        %v4020 = vadd.f32 0.0, %v4019
        %v4021 = vpop.f32.mrf.mxu0
        %v4022 = vadd.f32 0.0, %v4021
        %4023 = vmatmul.bf16.gmra.mxu0 %v3974
        %v4024 = vpop.f32.mrf.mxu0
        %v4025 = vadd.f32 0.0, %v4024
        %v4026 = vpop.f32.mrf.mxu0
        %v4027 = vadd.f32 0.0, %v4026
        %4028 = vmatmul.bf16.gmra.mxu0 %v3976
        %v4029 = vpop.f32.mrf.mxu0
        %v4030 = vadd.f32 0.0, %v4029
        %v4031 = vpop.f32.mrf.mxu0
        %v4032 = vadd.f32 0.0, %v4031
        %4033 = vmatmul.bf16.gmra.mxu0 %v3978
        %v4034 = vpop.f32.mrf.mxu0
        %v4035 = vadd.f32 0.0, %v4034
        %v4036 = vpop.f32.mrf.mxu0
        %v4037 = vadd.f32 0.0, %v4036
        %4038 = vmatmul.bf16.gmra.mxu0 %v3980
        %v4039 = vpop.f32.mrf.mxu0
        %v4040 = vadd.f32 0.0, %v4039
        %v4041 = vpop.f32.mrf.mxu0
        %v4042 = vadd.f32 0.0, %v4041
        %4043 = vmatmul.bf16.gmra.mxu0 %v3982
        %v4044 = vpop.f32.mrf.mxu0
        %v4045 = vadd.f32 0.0, %v4044
        %v4046 = vpop.f32.mrf.mxu0
        %v4047 = vadd.f32 0.0, %v4046
        %4048 = vmatmul.bf16.gmra.mxu0 %v3984
        %v4049 = vpop.f32.mrf.mxu0
        %v4050 = vadd.f32 0.0, %v4049
        %v4051 = vpop.f32.mrf.mxu0
        %v4052 = vadd.f32 0.0, %v4051
        %4053 = vmatmul.bf16.gmra.mxu0 %v3986
        %v4054 = vpop.f32.mrf.mxu0
        %v4055 = vadd.f32 0.0, %v4054
        %v4056 = vpop.f32.mrf.mxu0
        %v4057 = vadd.f32 0.0, %v4056
        %4058 = vmatmul.bf16.gmra.mxu0 %v3988
        %v4059 = vpop.f32.mrf.mxu0
        %v4060 = vadd.f32 0.0, %v4059
        %v4061 = vpop.f32.mrf.mxu0
        %v4062 = vadd.f32 0.0, %v4061
        %4063 = vmatmul.bf16.gmra.mxu0 %v3990
        %v4064 = vpop.f32.mrf.mxu0
        %v4065 = vadd.f32 0.0, %v4064
        %v4066 = vpop.f32.mrf.mxu0
        %v4067 = vadd.f32 0.0, %v4066
        %4068 = vmatmul.bf16.gmra.mxu0 %v3992
        %v4069 = vpop.f32.mrf.mxu0
        %v4070 = vadd.f32 0.0, %v4069
        %v4071 = vpop.f32.mrf.mxu0
        %v4072 = vadd.f32 0.0, %v4071
        %4073 = vmatmul.bf16.gmra.mxu0 %v3994
        %v4074 = vpop.f32.mrf.mxu0
        %v4075 = vadd.f32 0.0, %v4074
        %v4076 = vpop.f32.mrf.mxu0
        %v4077 = vadd.f32 0.0, %v4076
        %4078 = vmatmul.bf16.gmra.mxu0 %v3996
        %v4079 = vpop.f32.mrf.mxu0
        %v4080 = vadd.f32 0.0, %v4079
        %v4081 = vpop.f32.mrf.mxu0
        %v4082 = vadd.f32 0.0, %v4081
        %4083 = vmatmul.bf16.gmra.mxu0 %v3998
        %v4084 = vpop.f32.mrf.mxu0
        %v4085 = vadd.f32 0.0, %v4084
        %v4086 = vpop.f32.mrf.mxu0
        %v4087 = vadd.f32 0.0, %v4086
        %4088 = vdwg.mxu0
        %v4101 = vunpack.c.l.b16 %v3043
        %v4102 = vunpack.c.l.b16 %v3044
        %v4103 = vunpack.c.l.b16 %v3045
        %v4104 = vunpack.c.l.b16 %v3046
        %v4105 = vunpack.c.l.b16 %v3047
        %v4106 = vunpack.c.l.b16 %v3048
        %v4107 = vunpack.c.l.b16 %v3049
        %v4108 = vunpack.c.l.b16 %v3050
        %v4109 = vunpack.c.l.b16 %v3051
        %v4110 = vunpack.c.l.b16 %v3052
        %v4111 = vunpack.c.l.b16 %v3053
        %v4112 = vunpack.c.l.b16 %v3054
        %v4113 = vpack.c.b16 %v4102, %v4101
        %v4114 = vpack.c.b16 %v4104, %v4103
        %v4115 = vpack.c.b16 %v4106, %v4105
        %v4116 = vpack.c.b16 %v4108, %v4107
        %v4117 = vpack.c.b16 %v4110, %v4109
        %v4118 = vpack.c.b16 %v4112, %v4111
        %v4125 = vsel %vm3967, %v3012, 0
        %v4127 = vsel %vm3967, %v3014, 0
        %v4129 = vsel %vm3967, %v3016, 0
        %v4131 = vsel %vm3967, %v3018, 0
        %v4133 = vsel %vm3967, %v3020, 0
        %v4135 = vsel %vm3967, %v3022, 0
        %v4137 = vsel %vm3967, %v3024, 0
        %v4139 = vsel %vm3967, %v3026, 0
        %v4141 = vsel %vm3967, %v3028, 0
        %v4143 = vsel %vm3967, %v3030, 0
        %v4145 = vsel %vm3967, %v3032, 0
        %v4147 = vsel %vm3967, %v3034, 0
        %v4149 = vsel %vm3967, %v3036, 0
        %v4151 = vsel %vm3967, %v3038, 0
        %v4153 = vsel %vm3967, %v3040, 0
        %v4155 = vsel %vm3967, %v3042, 0
        %4157 = vmatpush.bf16.msra.mxu0 0
        %4158 = vmatpush.bf16.msra.mxu0 0
        %4159 = vmatpush.bf16.msra.mxu0 %v4118
        %4160 = vmatpush.bf16.msra.mxu0 %v4117
        %4161 = vmatpush.bf16.msra.mxu0 %v4116
        %4162 = vmatpush.bf16.msra.mxu0 %v4115
        %4163 = vmatpush.bf16.msra.mxu0 %v4114
        %4164 = vmatpush.bf16.msra.mxu0 %v4113
        %4165 = vmatmul.bf16.gmra.mxu0 %v4125
        %v4166 = vpop.f32.mrf.mxu0
        %v4167 = vadd.f32 %v4010, %v4166
        %v4168 = vpop.f32.mrf.mxu0
        %v4169 = vadd.f32 %v4012, %v4168
        %4170 = vmatmul.bf16.gmra.mxu0 %v4127
        %v4171 = vpop.f32.mrf.mxu0
        %v4172 = vadd.f32 %v4015, %v4171
        %v4173 = vpop.f32.mrf.mxu0
        %v4174 = vadd.f32 %v4017, %v4173
        %4175 = vmatmul.bf16.gmra.mxu0 %v4129
        %v4176 = vpop.f32.mrf.mxu0
        %v4177 = vadd.f32 %v4020, %v4176
        %v4178 = vpop.f32.mrf.mxu0
        %v4179 = vadd.f32 %v4022, %v4178
        %4180 = vmatmul.bf16.gmra.mxu0 %v4131
        %v4181 = vpop.f32.mrf.mxu0
        %v4182 = vadd.f32 %v4025, %v4181
        %v4183 = vpop.f32.mrf.mxu0
        %v4184 = vadd.f32 %v4027, %v4183
        %4185 = vmatmul.bf16.gmra.mxu0 %v4133
        %v4186 = vpop.f32.mrf.mxu0
        %v4187 = vadd.f32 %v4030, %v4186
        %v4188 = vpop.f32.mrf.mxu0
        %v4189 = vadd.f32 %v4032, %v4188
        %4190 = vmatmul.bf16.gmra.mxu0 %v4135
        %v4191 = vpop.f32.mrf.mxu0
        %v4192 = vadd.f32 %v4035, %v4191
        %v4193 = vpop.f32.mrf.mxu0
        %v4194 = vadd.f32 %v4037, %v4193
        %4195 = vmatmul.bf16.gmra.mxu0 %v4137
        %v4196 = vpop.f32.mrf.mxu0
        %v4197 = vadd.f32 %v4040, %v4196
        %v4198 = vpop.f32.mrf.mxu0
        %v4199 = vadd.f32 %v4042, %v4198
        %4200 = vmatmul.bf16.gmra.mxu0 %v4139
        %v4201 = vpop.f32.mrf.mxu0
        %v4202 = vadd.f32 %v4045, %v4201
        %v4203 = vpop.f32.mrf.mxu0
        %v4204 = vadd.f32 %v4047, %v4203
        %4205 = vmatmul.bf16.gmra.mxu0 %v4141
        %v4206 = vpop.f32.mrf.mxu0
        %v4207 = vadd.f32 %v4050, %v4206
        %v4208 = vpop.f32.mrf.mxu0
        %v4209 = vadd.f32 %v4052, %v4208
        %4210 = vmatmul.bf16.gmra.mxu0 %v4143
        %v4211 = vpop.f32.mrf.mxu0
        %v4212 = vadd.f32 %v4055, %v4211
        %v4213 = vpop.f32.mrf.mxu0
        %v4214 = vadd.f32 %v4057, %v4213
        %4215 = vmatmul.bf16.gmra.mxu0 %v4145
        %v4216 = vpop.f32.mrf.mxu0
        %v4217 = vadd.f32 %v4060, %v4216
        %v4218 = vpop.f32.mrf.mxu0
        %v4219 = vadd.f32 %v4062, %v4218
        %4220 = vmatmul.bf16.gmra.mxu0 %v4147
        %v4221 = vpop.f32.mrf.mxu0
        %v4222 = vadd.f32 %v4065, %v4221
        %v4223 = vpop.f32.mrf.mxu0
        %v4224 = vadd.f32 %v4067, %v4223
        %4225 = vmatmul.bf16.gmra.mxu0 %v4149
        %v4226 = vpop.f32.mrf.mxu0
        %v4227 = vadd.f32 %v4070, %v4226
        %v4228 = vpop.f32.mrf.mxu0
        %v4229 = vadd.f32 %v4072, %v4228
        %4230 = vmatmul.bf16.gmra.mxu0 %v4151
        %v4231 = vpop.f32.mrf.mxu0
        %v4232 = vadd.f32 %v4075, %v4231
        %v4233 = vpop.f32.mrf.mxu0
        %v4234 = vadd.f32 %v4077, %v4233
        %4235 = vmatmul.bf16.gmra.mxu0 %v4153
        %v4236 = vpop.f32.mrf.mxu0
        %v4237 = vadd.f32 %v4080, %v4236
        %v4238 = vpop.f32.mrf.mxu0
        %v4239 = vadd.f32 %v4082, %v4238
        %4240 = vmatmul.bf16.gmra.mxu0 %v4155
        %v4241 = vpop.f32.mrf.mxu0
        %v4242 = vadd.f32 %v4085, %v4241
        %v4243 = vpop.f32.mrf.mxu0
        %v4244 = vadd.f32 %v4087, %v4243
        %4245 = vdwg.mxu0
        %vm4246 = vcmp.lt.s32.totalorder %v588, 15
        %vm4247 = vcmp.lt.s32.totalorder %v589, 15
        %vm4248 = vcmp.lt.s32.totalorder %v590, 15
        %vm4249 = vcmp.lt.s32.totalorder %v591, 15
        %vm4250 = vcmp.lt.s32.totalorder %v592, 15
        %vm4251 = vcmp.lt.s32.totalorder %v593, 15
        %vm4252 = vcmp.lt.s32.totalorder %v594, 15
        %vm4253 = vcmp.lt.s32.totalorder %v595, 15
        %vm4254 = vcmp.lt.s32.totalorder %v596, 15
        %vm4255 = vcmp.lt.s32.totalorder %v597, 15
        %vm4256 = vcmp.lt.s32.totalorder %v598, 15
        %vm4257 = vcmp.lt.s32.totalorder %v599, 15
        %vm4258 = vcmp.lt.s32.totalorder %v600, 15
        %vm4259 = vcmp.lt.s32.totalorder %v601, 15
        %vm4260 = vcmp.lt.s32.totalorder %v602, 15
        %vm4261 = vcmp.lt.s32.totalorder %v603, 15
        %vm4262 = vcmp.lt.s32.totalorder %v604, 15
        %vm4263 = vcmp.lt.s32.totalorder %v605, 15
        %vm4264 = vcmp.lt.s32.totalorder %v606, 15
        %vm4265 = vcmp.lt.s32.totalorder %v607, 15
        %vm4266 = vcmp.lt.s32.totalorder %v608, 15
        %vm4267 = vcmp.lt.s32.totalorder %v609, 15
        %vm4268 = vcmp.lt.s32.totalorder %v610, 15
        %vm4269 = vcmp.lt.s32.totalorder %v611, 15
        %vm4270 = vcmp.lt.s32.totalorder %v612, 15
        %vm4271 = vcmp.lt.s32.totalorder %v613, 15
        %vm4272 = vcmp.lt.s32.totalorder %v614, 15
        %vm4273 = vcmp.lt.s32.totalorder %v615, 15
        %vm4274 = vcmp.lt.s32.totalorder %v616, 15
        %vm4275 = vcmp.lt.s32.totalorder %v617, 15
        %vm4276 = vcmp.lt.s32.totalorder %v618, 15
        %vm4277 = vcmp.lt.s32.totalorder %v619, 15
        %vm4278 = vmand %vm4246, %vm1793
        %vm4279 = vmand %vm4247, %vm1794
        %vm4280 = vmand %vm4248, %vm1795
        %vm4281 = vmand %vm4249, %vm1796
        %vm4282 = vmand %vm4250, %vm1797
        %vm4283 = vmand %vm4251, %vm1798
        %vm4284 = vmand %vm4252, %vm1799
        %vm4285 = vmand %vm4253, %vm1800
        %vm4286 = vmand %vm4254, %vm1801
        %vm4287 = vmand %vm4255, %vm1802
        %vm4288 = vmand %vm4256, %vm1803
        %vm4289 = vmand %vm4257, %vm1804
        %vm4290 = vmand %vm4258, %vm1805
        %vm4291 = vmand %vm4259, %vm1806
        %vm4292 = vmand %vm4260, %vm1807
        %vm4293 = vmand %vm4261, %vm1808
        %vm4294 = vmand %vm4262, %vm1809
        %vm4295 = vmand %vm4263, %vm1810
        %vm4296 = vmand %vm4264, %vm1811
        %vm4297 = vmand %vm4265, %vm1812
        %vm4298 = vmand %vm4266, %vm1813
        %vm4299 = vmand %vm4267, %vm1814
        %vm4300 = vmand %vm4268, %vm1815
        %vm4301 = vmand %vm4269, %vm1816
        %vm4302 = vmand %vm4270, %vm1817
        %vm4303 = vmand %vm4271, %vm1818
        %vm4304 = vmand %vm4272, %vm1819
        %vm4305 = vmand %vm4273, %vm1820
        %vm4306 = vmand %vm4274, %vm1821
        %vm4307 = vmand %vm4275, %vm1822
        %vm4308 = vmand %vm4276, %vm1823
        %vm4309 = vmand %vm4277, %vm1824
        %v4310 = vsel %vm4278, 1, 0
        %v4311 = vsel %vm4279, 1, 0
        %v4312 = vsel %vm4280, 1, 0
        %v4313 = vsel %vm4281, 1, 0
        %v4314 = vsel %vm4282, 1, 0
        %v4315 = vsel %vm4283, 1, 0
        %v4316 = vsel %vm4284, 1, 0
        %v4317 = vsel %vm4285, 1, 0
        %v4318 = vsel %vm4286, 1, 0
        %v4319 = vsel %vm4287, 1, 0
        %v4320 = vsel %vm4288, 1, 0
        %v4321 = vsel %vm4289, 1, 0
        %v4322 = vsel %vm4290, 1, 0
        %v4323 = vsel %vm4291, 1, 0
        %v4324 = vsel %vm4292, 1, 0
        %v4325 = vsel %vm4293, 1, 0
        %v4326 = vsel %vm4294, 1, 0
        %v4327 = vsel %vm4295, 1, 0
        %v4328 = vsel %vm4296, 1, 0
        %v4329 = vsel %vm4297, 1, 0
        %v4330 = vsel %vm4298, 1, 0
        %v4331 = vsel %vm4299, 1, 0
        %v4332 = vsel %vm4300, 1, 0
        %v4333 = vsel %vm4301, 1, 0
        %v4334 = vsel %vm4302, 1, 0
        %v4335 = vsel %vm4303, 1, 0
        %v4336 = vsel %vm4304, 1, 0
        %v4337 = vsel %vm4305, 1, 0
        %v4338 = vsel %vm4306, 1, 0
        %v4339 = vsel %vm4307, 1, 0
        %v4340 = vsel %vm4308, 1, 0
        %v4341 = vsel %vm4309, 1, 0
        %4342 = vset.pattern.permute.xlu0 0
        %4343 = vperm.xlu0 %4342, %v4310
        %v4344 = vpop.permute.xlu0 %4343
        %4345 = vset.pattern.permute.xlu0 0
        %4346 = vperm.xlu0 %4345, %v4311
        %v4347 = vpop.permute.xlu0 %4346
        %4348 = vset.pattern.permute.xlu0 0
        %4349 = vperm.xlu0 %4348, %v4312
        %v4350 = vpop.permute.xlu0 %4349
        %4351 = vset.pattern.permute.xlu0 0
        %4352 = vperm.xlu0 %4351, %v4313
        %v4353 = vpop.permute.xlu0 %4352
        %4354 = vset.pattern.permute.xlu0 0
        %4355 = vperm.xlu0 %4354, %v4314
        %v4356 = vpop.permute.xlu0 %4355
        %4357 = vset.pattern.permute.xlu0 0
        %4358 = vperm.xlu0 %4357, %v4315
        %v4359 = vpop.permute.xlu0 %4358
        %4360 = vset.pattern.permute.xlu0 0
        %4361 = vperm.xlu0 %4360, %v4316
        %v4362 = vpop.permute.xlu0 %4361
        %4363 = vset.pattern.permute.xlu0 0
        %4364 = vperm.xlu0 %4363, %v4317
        %v4365 = vpop.permute.xlu0 %4364
        %4366 = vset.pattern.permute.xlu0 0
        %4367 = vperm.xlu0 %4366, %v4318
        %v4368 = vpop.permute.xlu0 %4367
        %4369 = vset.pattern.permute.xlu0 0
        %4370 = vperm.xlu0 %4369, %v4319
        %v4371 = vpop.permute.xlu0 %4370
        %4372 = vset.pattern.permute.xlu0 0
        %4373 = vperm.xlu0 %4372, %v4320
        %v4374 = vpop.permute.xlu0 %4373
        %4375 = vset.pattern.permute.xlu0 0
        %4376 = vperm.xlu0 %4375, %v4321
        %v4377 = vpop.permute.xlu0 %4376
        %4378 = vset.pattern.permute.xlu0 0
        %4379 = vperm.xlu0 %4378, %v4322
        %v4380 = vpop.permute.xlu0 %4379
        %4381 = vset.pattern.permute.xlu0 0
        %4382 = vperm.xlu0 %4381, %v4323
        %v4383 = vpop.permute.xlu0 %4382
        %4384 = vset.pattern.permute.xlu0 0
        %4385 = vperm.xlu0 %4384, %v4324
        %v4386 = vpop.permute.xlu0 %4385
        %4387 = vset.pattern.permute.xlu0 0
        %4388 = vperm.xlu0 %4387, %v4325
        %v4389 = vpop.permute.xlu0 %4388
        %4390 = vset.pattern.permute.xlu0 0
        %4391 = vperm.xlu0 %4390, %v4326
        %v4392 = vpop.permute.xlu0 %4391
        %4393 = vset.pattern.permute.xlu0 0
        %4394 = vperm.xlu0 %4393, %v4327
        %v4395 = vpop.permute.xlu0 %4394
        %4396 = vset.pattern.permute.xlu0 0
        %4397 = vperm.xlu0 %4396, %v4328
        %v4398 = vpop.permute.xlu0 %4397
        %4399 = vset.pattern.permute.xlu0 0
        %4400 = vperm.xlu0 %4399, %v4329
        %v4401 = vpop.permute.xlu0 %4400
        %4402 = vset.pattern.permute.xlu0 0
        %4403 = vperm.xlu0 %4402, %v4330
        %v4404 = vpop.permute.xlu0 %4403
        %4405 = vset.pattern.permute.xlu0 0
        %4406 = vperm.xlu0 %4405, %v4331
        %v4407 = vpop.permute.xlu0 %4406
        %4408 = vset.pattern.permute.xlu0 0
        %4409 = vperm.xlu0 %4408, %v4332
        %v4410 = vpop.permute.xlu0 %4409
        %4411 = vset.pattern.permute.xlu0 0
        %4412 = vperm.xlu0 %4411, %v4333
        %v4413 = vpop.permute.xlu0 %4412
        %4414 = vset.pattern.permute.xlu0 0
        %4415 = vperm.xlu0 %4414, %v4334
        %v4416 = vpop.permute.xlu0 %4415
        %4417 = vset.pattern.permute.xlu0 0
        %4418 = vperm.xlu0 %4417, %v4335
        %v4419 = vpop.permute.xlu0 %4418
        %4420 = vset.pattern.permute.xlu0 0
        %4421 = vperm.xlu0 %4420, %v4336
        %v4422 = vpop.permute.xlu0 %4421
        %4423 = vset.pattern.permute.xlu0 0
        %4424 = vperm.xlu0 %4423, %v4337
        %v4425 = vpop.permute.xlu0 %4424
        %4426 = vset.pattern.permute.xlu0 0
        %4427 = vperm.xlu0 %4426, %v4338
        %v4428 = vpop.permute.xlu0 %4427
        %4429 = vset.pattern.permute.xlu0 0
        %4430 = vperm.xlu0 %4429, %v4339
        %v4431 = vpop.permute.xlu0 %4430
        %4432 = vset.pattern.permute.xlu0 0
        %4433 = vperm.xlu0 %4432, %v4340
        %v4434 = vpop.permute.xlu0 %4433
        %4435 = vset.pattern.permute.xlu0 0
        %4436 = vperm.xlu0 %4435, %v4341
        %v4437 = vpop.permute.xlu0 %4436
        %vm4438 = vcmp.eq.s32.totalorder %v4344, 1
        %vm4439 = vcmp.eq.s32.totalorder %v4347, 1
        %vm4440 = vcmp.eq.s32.totalorder %v4350, 1
        %vm4441 = vcmp.eq.s32.totalorder %v4353, 1
        %vm4442 = vcmp.eq.s32.totalorder %v4356, 1
        %vm4443 = vcmp.eq.s32.totalorder %v4359, 1
        %vm4444 = vcmp.eq.s32.totalorder %v4362, 1
        %vm4445 = vcmp.eq.s32.totalorder %v4365, 1
        %vm4446 = vcmp.eq.s32.totalorder %v4368, 1
        %vm4447 = vcmp.eq.s32.totalorder %v4371, 1
        %vm4448 = vcmp.eq.s32.totalorder %v4374, 1
        %vm4449 = vcmp.eq.s32.totalorder %v4377, 1
        %vm4450 = vcmp.eq.s32.totalorder %v4380, 1
        %vm4451 = vcmp.eq.s32.totalorder %v4383, 1
        %vm4452 = vcmp.eq.s32.totalorder %v4386, 1
        %vm4453 = vcmp.eq.s32.totalorder %v4389, 1
        %vm4454 = vcmp.eq.s32.totalorder %v4392, 1
        %vm4455 = vcmp.eq.s32.totalorder %v4395, 1
        %vm4456 = vcmp.eq.s32.totalorder %v4398, 1
        %vm4457 = vcmp.eq.s32.totalorder %v4401, 1
        %vm4458 = vcmp.eq.s32.totalorder %v4404, 1
        %vm4459 = vcmp.eq.s32.totalorder %v4407, 1
        %vm4460 = vcmp.eq.s32.totalorder %v4410, 1
        %vm4461 = vcmp.eq.s32.totalorder %v4413, 1
        %vm4462 = vcmp.eq.s32.totalorder %v4416, 1
        %vm4463 = vcmp.eq.s32.totalorder %v4419, 1
        %vm4464 = vcmp.eq.s32.totalorder %v4422, 1
        %vm4465 = vcmp.eq.s32.totalorder %v4425, 1
        %vm4466 = vcmp.eq.s32.totalorder %v4428, 1
        %vm4467 = vcmp.eq.s32.totalorder %v4431, 1
        %vm4468 = vcmp.eq.s32.totalorder %v4434, 1
        %vm4469 = vcmp.eq.s32.totalorder %v4437, 1
        %v4470 = vsel %vm4438, %v1758, 0.0
        %v4471 = vsel %vm4439, %v1757, 0.0
        %v4472 = vsel %vm4440, %v1756, 0.0
        %v4473 = vsel %vm4441, %v1755, 0.0
        %v4474 = vsel %vm4442, %v1754, 0.0
        %v4475 = vsel %vm4443, %v1753, 0.0
        %v4476 = vsel %vm4444, %v1752, 0.0
        %v4477 = vsel %vm4445, %v1751, 0.0
        %v4478 = vsel %vm4446, %v1750, 0.0
        %v4479 = vsel %vm4447, %v1749, 0.0
        %v4480 = vsel %vm4448, %v1748, 0.0
        %v4481 = vsel %vm4449, %v1747, 0.0
        %v4482 = vsel %vm4450, %v1746, 0.0
        %v4483 = vsel %vm4451, %v1745, 0.0
        %v4484 = vsel %vm4452, %v1744, 0.0
        %v4485 = vsel %vm4453, %v1743, 0.0
        %v4486 = vsel %vm4454, %v1742, 0.0
        %v4487 = vsel %vm4455, %v1741, 0.0
        %v4488 = vsel %vm4456, %v1740, 0.0
        %v4489 = vsel %vm4457, %v1739, 0.0
        %v4490 = vsel %vm4458, %v1738, 0.0
        %v4491 = vsel %vm4459, %v1737, 0.0
        %v4492 = vsel %vm4460, %v1736, 0.0
        %v4493 = vsel %vm4461, %v1735, 0.0
        %v4494 = vsel %vm4462, %v1734, 0.0
        %v4495 = vsel %vm4463, %v1733, 0.0
        %v4496 = vsel %vm4464, %v1732, 0.0
        %v4497 = vsel %vm4465, %v1731, 0.0
        %v4498 = vsel %vm4466, %v1730, 0.0
        %v4499 = vsel %vm4467, %v1729, 0.0
        %v4500 = vsel %vm4468, %v1760, 0.0
        %v4501 = vsel %vm4469, %v1759, 0.0
        %v4502 = vpack.c.bf16 %v4470, %v4470
        %v4503 = vpack.c.bf16 %v4471, %v4471
        %v4504 = vpack.c.bf16 %v4472, %v4472
        %v4505 = vpack.c.bf16 %v4473, %v4473
        %v4506 = vpack.c.bf16 %v4474, %v4474
        %v4507 = vpack.c.bf16 %v4475, %v4475
        %v4508 = vpack.c.bf16 %v4476, %v4476
        %v4509 = vpack.c.bf16 %v4477, %v4477
        %v4510 = vpack.c.bf16 %v4478, %v4478
        %v4511 = vpack.c.bf16 %v4479, %v4479
        %v4512 = vpack.c.bf16 %v4480, %v4480
        %v4513 = vpack.c.bf16 %v4481, %v4481
        %v4514 = vpack.c.bf16 %v4482, %v4482
        %v4515 = vpack.c.bf16 %v4483, %v4483
        %v4516 = vpack.c.bf16 %v4484, %v4484
        %v4517 = vpack.c.bf16 %v4485, %v4485
        %v4518 = vpack.c.bf16 %v4486, %v4486
        %v4519 = vpack.c.bf16 %v4487, %v4487
        %v4520 = vpack.c.bf16 %v4488, %v4488
        %v4521 = vpack.c.bf16 %v4489, %v4489
        %v4522 = vpack.c.bf16 %v4490, %v4490
        %v4523 = vpack.c.bf16 %v4491, %v4491
        %v4524 = vpack.c.bf16 %v4492, %v4492
        %v4525 = vpack.c.bf16 %v4493, %v4493
        %v4526 = vpack.c.bf16 %v4494, %v4494
        %v4527 = vpack.c.bf16 %v4495, %v4495
        %v4528 = vpack.c.bf16 %v4496, %v4496
        %v4529 = vpack.c.bf16 %v4497, %v4497
        %v4530 = vpack.c.bf16 %v4498, %v4498
        %v4531 = vpack.c.bf16 %v4499, %v4499
        %v4532 = vpack.c.bf16 %v4500, %v4500
        %v4533 = vpack.c.bf16 %v4501, %v4501
        %v4534 = vsel %vm4246, 1, 0
        %v4535 = vsel %vm4247, 1, 0
        %v4536 = vsel %vm4248, 1, 0
        %v4537 = vsel %vm4249, 1, 0
        %v4538 = vsel %vm4250, 1, 0
        %v4539 = vsel %vm4251, 1, 0
        %v4540 = vsel %vm4252, 1, 0
        %v4541 = vsel %vm4253, 1, 0
        %v4542 = vsel %vm4254, 1, 0
        %v4543 = vsel %vm4255, 1, 0
        %v4544 = vsel %vm4256, 1, 0
        %v4545 = vsel %vm4257, 1, 0
        %v4546 = vsel %vm4258, 1, 0
        %v4547 = vsel %vm4259, 1, 0
        %v4548 = vsel %vm4260, 1, 0
        %v4549 = vsel %vm4261, 1, 0
        %v4550 = vsel %vm4262, 1, 0
        %v4551 = vsel %vm4263, 1, 0
        %v4552 = vsel %vm4264, 1, 0
        %v4553 = vsel %vm4265, 1, 0
        %v4554 = vsel %vm4266, 1, 0
        %v4555 = vsel %vm4267, 1, 0
        %v4556 = vsel %vm4268, 1, 0
        %v4557 = vsel %vm4269, 1, 0
        %v4558 = vsel %vm4270, 1, 0
        %v4559 = vsel %vm4271, 1, 0
        %v4560 = vsel %vm4272, 1, 0
        %v4561 = vsel %vm4273, 1, 0
        %v4562 = vsel %vm4274, 1, 0
        %v4563 = vsel %vm4275, 1, 0
        %v4564 = vsel %vm4276, 1, 0
        %v4565 = vsel %vm4277, 1, 0
        %4566 = vset.pattern.permute.xlu0 0
        %4567 = vperm.xlu0 %4566, %v4534
        %v4568 = vpop.permute.xlu0 %4567
        %4569 = vset.pattern.permute.xlu0 0
        %4570 = vperm.xlu0 %4569, %v4535
        %v4571 = vpop.permute.xlu0 %4570
        %4572 = vset.pattern.permute.xlu0 0
        %4573 = vperm.xlu0 %4572, %v4536
        %v4574 = vpop.permute.xlu0 %4573
        %4575 = vset.pattern.permute.xlu0 0
        %4576 = vperm.xlu0 %4575, %v4537
        %v4577 = vpop.permute.xlu0 %4576
        %4578 = vset.pattern.permute.xlu0 0
        %4579 = vperm.xlu0 %4578, %v4538
        %v4580 = vpop.permute.xlu0 %4579
        %4581 = vset.pattern.permute.xlu0 0
        %4582 = vperm.xlu0 %4581, %v4539
        %v4583 = vpop.permute.xlu0 %4582
        %4584 = vset.pattern.permute.xlu0 0
        %4585 = vperm.xlu0 %4584, %v4540
        %v4586 = vpop.permute.xlu0 %4585
        %4587 = vset.pattern.permute.xlu0 0
        %4588 = vperm.xlu0 %4587, %v4541
        %v4589 = vpop.permute.xlu0 %4588
        %4590 = vset.pattern.permute.xlu0 0
        %4591 = vperm.xlu0 %4590, %v4542
        %v4592 = vpop.permute.xlu0 %4591
        %4593 = vset.pattern.permute.xlu0 0
        %4594 = vperm.xlu0 %4593, %v4543
        %v4595 = vpop.permute.xlu0 %4594
        %4596 = vset.pattern.permute.xlu0 0
        %4597 = vperm.xlu0 %4596, %v4544
        %v4598 = vpop.permute.xlu0 %4597
        %4599 = vset.pattern.permute.xlu0 0
        %4600 = vperm.xlu0 %4599, %v4545
        %v4601 = vpop.permute.xlu0 %4600
        %4602 = vset.pattern.permute.xlu0 0
        %4603 = vperm.xlu0 %4602, %v4546
        %v4604 = vpop.permute.xlu0 %4603
        %4605 = vset.pattern.permute.xlu0 0
        %4606 = vperm.xlu0 %4605, %v4547
        %v4607 = vpop.permute.xlu0 %4606
        %4608 = vset.pattern.permute.xlu0 0
        %4609 = vperm.xlu0 %4608, %v4548
        %v4610 = vpop.permute.xlu0 %4609
        %4611 = vset.pattern.permute.xlu0 0
        %4612 = vperm.xlu0 %4611, %v4549
        %v4613 = vpop.permute.xlu0 %4612
        %4614 = vset.pattern.permute.xlu0 0
        %4615 = vperm.xlu0 %4614, %v4550
        %v4616 = vpop.permute.xlu0 %4615
        %4617 = vset.pattern.permute.xlu0 0
        %4618 = vperm.xlu0 %4617, %v4551
        %v4619 = vpop.permute.xlu0 %4618
        %4620 = vset.pattern.permute.xlu0 0
        %4621 = vperm.xlu0 %4620, %v4552
        %v4622 = vpop.permute.xlu0 %4621
        %4623 = vset.pattern.permute.xlu0 0
        %4624 = vperm.xlu0 %4623, %v4553
        %v4625 = vpop.permute.xlu0 %4624
        %4626 = vset.pattern.permute.xlu0 0
        %4627 = vperm.xlu0 %4626, %v4554
        %v4628 = vpop.permute.xlu0 %4627
        %4629 = vset.pattern.permute.xlu0 0
        %4630 = vperm.xlu0 %4629, %v4555
        %v4631 = vpop.permute.xlu0 %4630
        %4632 = vset.pattern.permute.xlu0 0
        %4633 = vperm.xlu0 %4632, %v4556
        %v4634 = vpop.permute.xlu0 %4633
        %4635 = vset.pattern.permute.xlu0 0
        %4636 = vperm.xlu0 %4635, %v4557
        %v4637 = vpop.permute.xlu0 %4636
        %4638 = vset.pattern.permute.xlu0 0
        %4639 = vperm.xlu0 %4638, %v4558
        %v4640 = vpop.permute.xlu0 %4639
        %4641 = vset.pattern.permute.xlu0 0
        %4642 = vperm.xlu0 %4641, %v4559
        %v4643 = vpop.permute.xlu0 %4642
        %4644 = vset.pattern.permute.xlu0 0
        %4645 = vperm.xlu0 %4644, %v4560
        %v4646 = vpop.permute.xlu0 %4645
        %4647 = vset.pattern.permute.xlu0 0
        %4648 = vperm.xlu0 %4647, %v4561
        %v4649 = vpop.permute.xlu0 %4648
        %4650 = vset.pattern.permute.xlu0 0
        %4651 = vperm.xlu0 %4650, %v4562
        %v4652 = vpop.permute.xlu0 %4651
        %4653 = vset.pattern.permute.xlu0 0
        %4654 = vperm.xlu0 %4653, %v4563
        %v4655 = vpop.permute.xlu0 %4654
        %4656 = vset.pattern.permute.xlu0 0
        %4657 = vperm.xlu0 %4656, %v4564
        %v4658 = vpop.permute.xlu0 %4657
        %4659 = vset.pattern.permute.xlu0 0
        %4660 = vperm.xlu0 %4659, %v4565
        %v4661 = vpop.permute.xlu0 %4660
        %vm4662 = vcmp.eq.s32.totalorder %v4568, 1
        %vm4663 = vcmp.eq.s32.totalorder %v4571, 1
        %vm4664 = vcmp.eq.s32.totalorder %v4574, 1
        %vm4665 = vcmp.eq.s32.totalorder %v4577, 1
        %vm4666 = vcmp.eq.s32.totalorder %v4580, 1
        %vm4667 = vcmp.eq.s32.totalorder %v4583, 1
        %vm4668 = vcmp.eq.s32.totalorder %v4586, 1
        %vm4669 = vcmp.eq.s32.totalorder %v4589, 1
        %vm4670 = vcmp.eq.s32.totalorder %v4592, 1
        %vm4671 = vcmp.eq.s32.totalorder %v4595, 1
        %vm4672 = vcmp.eq.s32.totalorder %v4598, 1
        %vm4673 = vcmp.eq.s32.totalorder %v4601, 1
        %vm4674 = vcmp.eq.s32.totalorder %v4604, 1
        %vm4675 = vcmp.eq.s32.totalorder %v4607, 1
        %vm4676 = vcmp.eq.s32.totalorder %v4610, 1
        %vm4677 = vcmp.eq.s32.totalorder %v4613, 1
        %vm4678 = vcmp.eq.s32.totalorder %v4616, 1
        %vm4679 = vcmp.eq.s32.totalorder %v4619, 1
        %vm4680 = vcmp.eq.s32.totalorder %v4622, 1
        %vm4681 = vcmp.eq.s32.totalorder %v4625, 1
        %vm4682 = vcmp.eq.s32.totalorder %v4628, 1
        %vm4683 = vcmp.eq.s32.totalorder %v4631, 1
        %vm4684 = vcmp.eq.s32.totalorder %v4634, 1
        %vm4685 = vcmp.eq.s32.totalorder %v4637, 1
        %vm4686 = vcmp.eq.s32.totalorder %v4640, 1
        %vm4687 = vcmp.eq.s32.totalorder %v4643, 1
        %vm4688 = vcmp.eq.s32.totalorder %v4646, 1
        %vm4689 = vcmp.eq.s32.totalorder %v4649, 1
        %vm4690 = vcmp.eq.s32.totalorder %v4652, 1
        %vm4691 = vcmp.eq.s32.totalorder %v4655, 1
        %vm4692 = vcmp.eq.s32.totalorder %v4658, 1
        %vm4693 = vcmp.eq.s32.totalorder %v4661, 1
        %v4694 = vsel %vm4662, %v1663, 0.0
        %v4695 = vsel %vm4663, %v1664, 0.0
        %v4696 = vsel %vm4664, %v1665, 0.0
        %v4697 = vsel %vm4665, %v1666, 0.0
        %v4698 = vsel %vm4666, %v1667, 0.0
        %v4699 = vsel %vm4667, %v1668, 0.0
        %v4700 = vsel %vm4668, %v1669, 0.0
        %v4701 = vsel %vm4669, %v1670, 0.0
        %v4702 = vsel %vm4670, %v1671, 0.0
        %v4703 = vsel %vm4671, %v1672, 0.0
        %v4704 = vsel %vm4672, %v1673, 0.0
        %v4705 = vsel %vm4673, %v1674, 0.0
        %v4706 = vsel %vm4674, %v1675, 0.0
        %v4707 = vsel %vm4675, %v1676, 0.0
        %v4708 = vsel %vm4676, %v1677, 0.0
        %v4709 = vsel %vm4677, %v1678, 0.0
        %v4710 = vsel %vm4678, %v1679, 0.0
        %v4711 = vsel %vm4679, %v1680, 0.0
        %v4712 = vsel %vm4680, %v1681, 0.0
        %v4713 = vsel %vm4681, %v1682, 0.0
        %v4714 = vsel %vm4682, %v1683, 0.0
        %v4715 = vsel %vm4683, %v1684, 0.0
        %v4716 = vsel %vm4684, %v1685, 0.0
        %v4717 = vsel %vm4685, %v1686, 0.0
        %v4718 = vsel %vm4686, %v1687, 0.0
        %v4719 = vsel %vm4687, %v1688, 0.0
        %v4720 = vsel %vm4688, %v1689, 0.0
        %v4721 = vsel %vm4689, %v1690, 0.0
        %v4722 = vsel %vm4690, %v1691, 0.0
        %v4723 = vsel %vm4691, %v1692, 0.0
        %v4724 = vsel %vm4692, %v1661, 0.0
        %v4725 = vsel %vm4693, %v1662, 0.0
        %v4726 = vpack.c.bf16 %v4694, %v4694
        %v4727 = vpack.c.bf16 %v4695, %v4695
        %v4728 = vpack.c.bf16 %v4696, %v4696
        %v4729 = vpack.c.bf16 %v4697, %v4697
        %v4730 = vpack.c.bf16 %v4698, %v4698
        %v4731 = vpack.c.bf16 %v4699, %v4699
        %v4732 = vpack.c.bf16 %v4700, %v4700
        %v4733 = vpack.c.bf16 %v4701, %v4701
        %v4734 = vpack.c.bf16 %v4702, %v4702
        %v4735 = vpack.c.bf16 %v4703, %v4703
        %v4736 = vpack.c.bf16 %v4704, %v4704
        %v4737 = vpack.c.bf16 %v4705, %v4705
        %v4738 = vpack.c.bf16 %v4706, %v4706
        %v4739 = vpack.c.bf16 %v4707, %v4707
        %v4740 = vpack.c.bf16 %v4708, %v4708
        %v4741 = vpack.c.bf16 %v4709, %v4709
        %v4742 = vpack.c.bf16 %v4710, %v4710
        %v4743 = vpack.c.bf16 %v4711, %v4711
        %v4744 = vpack.c.bf16 %v4712, %v4712
        %v4745 = vpack.c.bf16 %v4713, %v4713
        %v4746 = vpack.c.bf16 %v4714, %v4714
        %v4747 = vpack.c.bf16 %v4715, %v4715
        %v4748 = vpack.c.bf16 %v4716, %v4716
        %v4749 = vpack.c.bf16 %v4717, %v4717
        %v4750 = vpack.c.bf16 %v4718, %v4718
        %v4751 = vpack.c.bf16 %v4719, %v4719
        %v4752 = vpack.c.bf16 %v4720, %v4720
        %v4753 = vpack.c.bf16 %v4721, %v4721
        %v4754 = vpack.c.bf16 %v4722, %v4722
        %v4755 = vpack.c.bf16 %v4723, %v4723
        %v4756 = vpack.c.bf16 %v4724, %v4724
        %v4757 = vpack.c.bf16 %v4725, %v4725
        %vm4758 = vmand %vm4246, %vm2370
        %vm4759 = vmand %vm4247, %vm2371
        %vm4760 = vmand %vm4248, %vm2372
        %vm4761 = vmand %vm4249, %vm2373
        %vm4762 = vmand %vm4250, %vm2374
        %vm4763 = vmand %vm4251, %vm2375
        %vm4764 = vmand %vm4252, %vm2376
        %vm4765 = vmand %vm4253, %vm2377
        %vm4766 = vmand %vm4254, %vm2378
        %vm4767 = vmand %vm4255, %vm2379
        %vm4768 = vmand %vm4256, %vm2380
        %vm4769 = vmand %vm4257, %vm2381
        %vm4770 = vmand %vm4258, %vm2382
        %vm4771 = vmand %vm4259, %vm2383
        %vm4772 = vmand %vm4260, %vm2384
        %vm4773 = vmand %vm4261, %vm2385
        %vm4774 = vmand %vm4262, %vm2386
        %vm4775 = vmand %vm4263, %vm2387
        %vm4776 = vmand %vm4264, %vm2388
        %vm4777 = vmand %vm4265, %vm2389
        %vm4778 = vmand %vm4266, %vm2390
        %vm4779 = vmand %vm4267, %vm2391
        %vm4780 = vmand %vm4268, %vm2392
        %vm4781 = vmand %vm4269, %vm2393
        %vm4782 = vmand %vm4270, %vm2394
        %vm4783 = vmand %vm4271, %vm2395
        %vm4784 = vmand %vm4272, %vm2396
        %vm4785 = vmand %vm4273, %vm2397
        %vm4786 = vmand %vm4274, %vm2398
        %vm4787 = vmand %vm4275, %vm2399
        %vm4788 = vmand %vm4276, %vm2400
        %vm4789 = vmand %vm4277, %vm2401
        %v4790 = vsel %vm4758, 1, 0
        %v4791 = vsel %vm4759, 1, 0
        %v4792 = vsel %vm4760, 1, 0
        %v4793 = vsel %vm4761, 1, 0
        %v4794 = vsel %vm4762, 1, 0
        %v4795 = vsel %vm4763, 1, 0
        %v4796 = vsel %vm4764, 1, 0
        %v4797 = vsel %vm4765, 1, 0
        %v4798 = vsel %vm4766, 1, 0
        %v4799 = vsel %vm4767, 1, 0
        %v4800 = vsel %vm4768, 1, 0
        %v4801 = vsel %vm4769, 1, 0
        %v4802 = vsel %vm4770, 1, 0
        %v4803 = vsel %vm4771, 1, 0
        %v4804 = vsel %vm4772, 1, 0
        %v4805 = vsel %vm4773, 1, 0
        %v4806 = vsel %vm4774, 1, 0
        %v4807 = vsel %vm4775, 1, 0
        %v4808 = vsel %vm4776, 1, 0
        %v4809 = vsel %vm4777, 1, 0
        %v4810 = vsel %vm4778, 1, 0
        %v4811 = vsel %vm4779, 1, 0
        %v4812 = vsel %vm4780, 1, 0
        %v4813 = vsel %vm4781, 1, 0
        %v4814 = vsel %vm4782, 1, 0
        %v4815 = vsel %vm4783, 1, 0
        %v4816 = vsel %vm4784, 1, 0
        %v4817 = vsel %vm4785, 1, 0
        %v4818 = vsel %vm4786, 1, 0
        %v4819 = vsel %vm4787, 1, 0
        %v4820 = vsel %vm4788, 1, 0
        %v4821 = vsel %vm4789, 1, 0
        %4822 = vset.pattern.permute.xlu0 0
        %4823 = vperm.xlu0 %4822, %v4790
        %v4824 = vpop.permute.xlu0 %4823
        %4825 = vset.pattern.permute.xlu0 0
        %4826 = vperm.xlu0 %4825, %v4791
        %v4827 = vpop.permute.xlu0 %4826
        %4828 = vset.pattern.permute.xlu0 0
        %4829 = vperm.xlu0 %4828, %v4792
        %v4830 = vpop.permute.xlu0 %4829
        %4831 = vset.pattern.permute.xlu0 0
        %4832 = vperm.xlu0 %4831, %v4793
        %v4833 = vpop.permute.xlu0 %4832
        %4834 = vset.pattern.permute.xlu0 0
        %4835 = vperm.xlu0 %4834, %v4794
        %v4836 = vpop.permute.xlu0 %4835
        %4837 = vset.pattern.permute.xlu0 0
        %4838 = vperm.xlu0 %4837, %v4795
        %v4839 = vpop.permute.xlu0 %4838
        %4840 = vset.pattern.permute.xlu0 0
        %4841 = vperm.xlu0 %4840, %v4796
        %v4842 = vpop.permute.xlu0 %4841
        %4843 = vset.pattern.permute.xlu0 0
        %4844 = vperm.xlu0 %4843, %v4797
        %v4845 = vpop.permute.xlu0 %4844
        %4846 = vset.pattern.permute.xlu0 0
        %4847 = vperm.xlu0 %4846, %v4798
        %v4848 = vpop.permute.xlu0 %4847
        %4849 = vset.pattern.permute.xlu0 0
        %4850 = vperm.xlu0 %4849, %v4799
        %v4851 = vpop.permute.xlu0 %4850
        %4852 = vset.pattern.permute.xlu0 0
        %4853 = vperm.xlu0 %4852, %v4800
        %v4854 = vpop.permute.xlu0 %4853
        %4855 = vset.pattern.permute.xlu0 0
        %4856 = vperm.xlu0 %4855, %v4801
        %v4857 = vpop.permute.xlu0 %4856
        %4858 = vset.pattern.permute.xlu0 0
        %4859 = vperm.xlu0 %4858, %v4802
        %v4860 = vpop.permute.xlu0 %4859
        %4861 = vset.pattern.permute.xlu0 0
        %4862 = vperm.xlu0 %4861, %v4803
        %v4863 = vpop.permute.xlu0 %4862
        %4864 = vset.pattern.permute.xlu0 0
        %4865 = vperm.xlu0 %4864, %v4804
        %v4866 = vpop.permute.xlu0 %4865
        %4867 = vset.pattern.permute.xlu0 0
        %4868 = vperm.xlu0 %4867, %v4805
        %v4869 = vpop.permute.xlu0 %4868
        %4870 = vset.pattern.permute.xlu0 0
        %4871 = vperm.xlu0 %4870, %v4806
        %v4872 = vpop.permute.xlu0 %4871
        %4873 = vset.pattern.permute.xlu0 0
        %4874 = vperm.xlu0 %4873, %v4807
        %v4875 = vpop.permute.xlu0 %4874
        %4876 = vset.pattern.permute.xlu0 0
        %4877 = vperm.xlu0 %4876, %v4808
        %v4878 = vpop.permute.xlu0 %4877
        %4879 = vset.pattern.permute.xlu0 0
        %4880 = vperm.xlu0 %4879, %v4809
        %v4881 = vpop.permute.xlu0 %4880
        %4882 = vset.pattern.permute.xlu0 0
        %4883 = vperm.xlu0 %4882, %v4810
        %v4884 = vpop.permute.xlu0 %4883
        %4885 = vset.pattern.permute.xlu0 0
        %4886 = vperm.xlu0 %4885, %v4811
        %v4887 = vpop.permute.xlu0 %4886
        %4888 = vset.pattern.permute.xlu0 0
        %4889 = vperm.xlu0 %4888, %v4812
        %v4890 = vpop.permute.xlu0 %4889
        %4891 = vset.pattern.permute.xlu0 0
        %4892 = vperm.xlu0 %4891, %v4813
        %v4893 = vpop.permute.xlu0 %4892
        %4894 = vset.pattern.permute.xlu0 0
        %4895 = vperm.xlu0 %4894, %v4814
        %v4896 = vpop.permute.xlu0 %4895
        %4897 = vset.pattern.permute.xlu0 0
        %4898 = vperm.xlu0 %4897, %v4815
        %v4899 = vpop.permute.xlu0 %4898
        %4900 = vset.pattern.permute.xlu0 0
        %4901 = vperm.xlu0 %4900, %v4816
        %v4902 = vpop.permute.xlu0 %4901
        %4903 = vset.pattern.permute.xlu0 0
        %4904 = vperm.xlu0 %4903, %v4817
        %v4905 = vpop.permute.xlu0 %4904
        %4906 = vset.pattern.permute.xlu0 0
        %4907 = vperm.xlu0 %4906, %v4818
        %v4908 = vpop.permute.xlu0 %4907
        %4909 = vset.pattern.permute.xlu0 0
        %4910 = vperm.xlu0 %4909, %v4819
        %v4911 = vpop.permute.xlu0 %4910
        %4912 = vset.pattern.permute.xlu0 0
        %4913 = vperm.xlu0 %4912, %v4820
        %v4914 = vpop.permute.xlu0 %4913
        %4915 = vset.pattern.permute.xlu0 0
        %4916 = vperm.xlu0 %4915, %v4821
        %v4917 = vpop.permute.xlu0 %4916
        %vm4918 = vcmp.eq.s32.totalorder %v4824, 1
        %vm4919 = vcmp.eq.s32.totalorder %v4827, 1
        %vm4920 = vcmp.eq.s32.totalorder %v4830, 1
        %vm4921 = vcmp.eq.s32.totalorder %v4833, 1
        %vm4922 = vcmp.eq.s32.totalorder %v4836, 1
        %vm4923 = vcmp.eq.s32.totalorder %v4839, 1
        %vm4924 = vcmp.eq.s32.totalorder %v4842, 1
        %vm4925 = vcmp.eq.s32.totalorder %v4845, 1
        %vm4926 = vcmp.eq.s32.totalorder %v4848, 1
        %vm4927 = vcmp.eq.s32.totalorder %v4851, 1
        %vm4928 = vcmp.eq.s32.totalorder %v4854, 1
        %vm4929 = vcmp.eq.s32.totalorder %v4857, 1
        %vm4930 = vcmp.eq.s32.totalorder %v4860, 1
        %vm4931 = vcmp.eq.s32.totalorder %v4863, 1
        %vm4932 = vcmp.eq.s32.totalorder %v4866, 1
        %vm4933 = vcmp.eq.s32.totalorder %v4869, 1
        %vm4934 = vcmp.eq.s32.totalorder %v4872, 1
        %vm4935 = vcmp.eq.s32.totalorder %v4875, 1
        %vm4936 = vcmp.eq.s32.totalorder %v4878, 1
        %vm4937 = vcmp.eq.s32.totalorder %v4881, 1
        %vm4938 = vcmp.eq.s32.totalorder %v4884, 1
        %vm4939 = vcmp.eq.s32.totalorder %v4887, 1
        %vm4940 = vcmp.eq.s32.totalorder %v4890, 1
        %vm4941 = vcmp.eq.s32.totalorder %v4893, 1
        %vm4942 = vcmp.eq.s32.totalorder %v4896, 1
        %vm4943 = vcmp.eq.s32.totalorder %v4899, 1
        %vm4944 = vcmp.eq.s32.totalorder %v4902, 1
        %vm4945 = vcmp.eq.s32.totalorder %v4905, 1
        %vm4946 = vcmp.eq.s32.totalorder %v4908, 1
        %vm4947 = vcmp.eq.s32.totalorder %v4911, 1
        %vm4948 = vcmp.eq.s32.totalorder %v4914, 1
        %vm4949 = vcmp.eq.s32.totalorder %v4917, 1
        %v4950 = vsel %vm4918, %v2366, 0.0
        %v4951 = vsel %vm4919, %v2365, 0.0
        %v4952 = vsel %vm4920, %v2364, 0.0
        %v4953 = vsel %vm4921, %v2363, 0.0
        %v4954 = vsel %vm4922, %v2362, 0.0
        %v4955 = vsel %vm4923, %v2361, 0.0
        %v4956 = vsel %vm4924, %v2360, 0.0
        %v4957 = vsel %vm4925, %v2359, 0.0
        %v4958 = vsel %vm4926, %v2358, 0.0
        %v4959 = vsel %vm4927, %v2357, 0.0
        %v4960 = vsel %vm4928, %v2356, 0.0
        %v4961 = vsel %vm4929, %v2355, 0.0
        %v4962 = vsel %vm4930, %v2354, 0.0
        %v4963 = vsel %vm4931, %v2353, 0.0
        %v4964 = vsel %vm4932, %v2352, 0.0
        %v4965 = vsel %vm4933, %v2351, 0.0
        %v4966 = vsel %vm4934, %v2350, 0.0
        %v4967 = vsel %vm4935, %v2349, 0.0
        %v4968 = vsel %vm4936, %v2348, 0.0
        %v4969 = vsel %vm4937, %v2347, 0.0
        %v4970 = vsel %vm4938, %v2346, 0.0
        %v4971 = vsel %vm4939, %v2345, 0.0
        %v4972 = vsel %vm4940, %v2344, 0.0
        %v4973 = vsel %vm4941, %v2343, 0.0
        %v4974 = vsel %vm4942, %v2342, 0.0
        %v4975 = vsel %vm4943, %v2341, 0.0
        %v4976 = vsel %vm4944, %v2340, 0.0
        %v4977 = vsel %vm4945, %v2339, 0.0
        %v4978 = vsel %vm4946, %v2338, 0.0
        %v4979 = vsel %vm4947, %v2369, 0.0
        %v4980 = vsel %vm4948, %v2368, 0.0
        %v4981 = vsel %vm4949, %v2367, 0.0
        %v4982 = vpack.c.bf16 %v4950, %v4950
        %v4983 = vpack.c.bf16 %v4951, %v4951
        %v4984 = vpack.c.bf16 %v4952, %v4952
        %v4985 = vpack.c.bf16 %v4953, %v4953
        %v4986 = vpack.c.bf16 %v4954, %v4954
        %v4987 = vpack.c.bf16 %v4955, %v4955
        %v4988 = vpack.c.bf16 %v4956, %v4956
        %v4989 = vpack.c.bf16 %v4957, %v4957
        %v4990 = vpack.c.bf16 %v4958, %v4958
        %v4991 = vpack.c.bf16 %v4959, %v4959
        %v4992 = vpack.c.bf16 %v4960, %v4960
        %v4993 = vpack.c.bf16 %v4961, %v4961
        %v4994 = vpack.c.bf16 %v4962, %v4962
        %v4995 = vpack.c.bf16 %v4963, %v4963
        %v4996 = vpack.c.bf16 %v4964, %v4964
        %v4997 = vpack.c.bf16 %v4965, %v4965
        %v4998 = vpack.c.bf16 %v4966, %v4966
        %v4999 = vpack.c.bf16 %v4967, %v4967
        %v5000 = vpack.c.bf16 %v4968, %v4968
        %v5001 = vpack.c.bf16 %v4969, %v4969
        %v5002 = vpack.c.bf16 %v4970, %v4970
        %v5003 = vpack.c.bf16 %v4971, %v4971
        %v5004 = vpack.c.bf16 %v4972, %v4972
        %v5005 = vpack.c.bf16 %v4973, %v4973
        %v5006 = vpack.c.bf16 %v4974, %v4974
        %v5007 = vpack.c.bf16 %v4975, %v4975
        %v5008 = vpack.c.bf16 %v4976, %v4976
        %v5009 = vpack.c.bf16 %v4977, %v4977
        %v5010 = vpack.c.bf16 %v4978, %v4978
        %v5011 = vpack.c.bf16 %v4979, %v4979
        %v5012 = vpack.c.bf16 %v4980, %v4980
        %v5013 = vpack.c.bf16 %v4981, %v4981
        %v5046 = vunpack.c.l.b16 %v4502
        %v5047 = vunpack.c.l.b16 %v4503
        %v5048 = vunpack.c.l.b16 %v4504
        %v5049 = vunpack.c.l.b16 %v4505
        %v5050 = vunpack.c.l.b16 %v4506
        %v5051 = vunpack.c.l.b16 %v4507
        %v5052 = vunpack.c.l.b16 %v4508
        %v5053 = vunpack.c.l.b16 %v4509
        %v5054 = vunpack.c.l.b16 %v4510
        %v5055 = vunpack.c.l.b16 %v4511
        %v5056 = vunpack.c.l.b16 %v4512
        %v5057 = vunpack.c.l.b16 %v4513
        %v5058 = vunpack.c.l.b16 %v4514
        %v5059 = vunpack.c.l.b16 %v4515
        %v5060 = vunpack.c.l.b16 %v4516
        %v5061 = vunpack.c.l.b16 %v4517
        %v5062 = vunpack.c.l.b16 %v4518
        %v5063 = vunpack.c.l.b16 %v4519
        %v5064 = vunpack.c.l.b16 %v4520
        %v5065 = vunpack.c.l.b16 %v4521
        %v5066 = vunpack.c.l.b16 %v4522
        %v5067 = vunpack.c.l.b16 %v4523
        %v5068 = vunpack.c.l.b16 %v4524
        %v5069 = vunpack.c.l.b16 %v4525
        %v5070 = vunpack.c.l.b16 %v4526
        %v5071 = vunpack.c.l.b16 %v4527
        %v5072 = vunpack.c.l.b16 %v4528
        %v5073 = vunpack.c.l.b16 %v4529
        %v5074 = vunpack.c.l.b16 %v4530
        %v5075 = vunpack.c.l.b16 %v4531
        %v5076 = vunpack.c.l.b16 %v4532
        %v5077 = vunpack.c.l.b16 %v4533
        %v5078 = vpack.c.b16 %v5047, %v5046
        %v5079 = vpack.c.b16 %v5049, %v5048
        %v5080 = vpack.c.b16 %v5051, %v5050
        %v5081 = vpack.c.b16 %v5053, %v5052
        %v5082 = vpack.c.b16 %v5055, %v5054
        %v5083 = vpack.c.b16 %v5057, %v5056
        %v5084 = vpack.c.b16 %v5059, %v5058
        %v5085 = vpack.c.b16 %v5061, %v5060
        %v5086 = vpack.c.b16 %v5063, %v5062
        %v5087 = vpack.c.b16 %v5065, %v5064
        %v5088 = vpack.c.b16 %v5067, %v5066
        %v5089 = vpack.c.b16 %v5069, %v5068
        %v5090 = vpack.c.b16 %v5071, %v5070
        %v5091 = vpack.c.b16 %v5073, %v5072
        %v5092 = vpack.c.b16 %v5075, %v5074
        %v5093 = vpack.c.b16 %v5077, %v5076
        %v5126 = vunpack.c.l.b16 %v4726
        %v5127 = vunpack.c.l.b16 %v4727
        %v5128 = vunpack.c.l.b16 %v4728
        %v5129 = vunpack.c.l.b16 %v4729
        %v5130 = vunpack.c.l.b16 %v4730
        %v5131 = vunpack.c.l.b16 %v4731
        %v5132 = vunpack.c.l.b16 %v4732
        %v5133 = vunpack.c.l.b16 %v4733
        %v5134 = vunpack.c.l.b16 %v4734
        %v5135 = vunpack.c.l.b16 %v4735
        %v5136 = vunpack.c.l.b16 %v4736
        %v5137 = vunpack.c.l.b16 %v4737
        %v5138 = vunpack.c.l.b16 %v4738
        %v5139 = vunpack.c.l.b16 %v4739
        %v5140 = vunpack.c.l.b16 %v4740
        %v5141 = vunpack.c.l.b16 %v4741
        %v5142 = vunpack.c.l.b16 %v4742
        %v5143 = vunpack.c.l.b16 %v4743
        %v5144 = vunpack.c.l.b16 %v4744
        %v5145 = vunpack.c.l.b16 %v4745
        %v5146 = vunpack.c.l.b16 %v4746
        %v5147 = vunpack.c.l.b16 %v4747
        %v5148 = vunpack.c.l.b16 %v4748
        %v5149 = vunpack.c.l.b16 %v4749
        %v5150 = vunpack.c.l.b16 %v4750
        %v5151 = vunpack.c.l.b16 %v4751
        %v5152 = vunpack.c.l.b16 %v4752
        %v5153 = vunpack.c.l.b16 %v4753
        %v5154 = vunpack.c.l.b16 %v4754
        %v5155 = vunpack.c.l.b16 %v4755
        %v5156 = vunpack.c.l.b16 %v4756
        %v5157 = vunpack.c.l.b16 %v4757
        %v5158 = vpack.c.b16 %v5127, %v5126
        %v5159 = vpack.c.b16 %v5129, %v5128
        %v5160 = vpack.c.b16 %v5131, %v5130
        %v5161 = vpack.c.b16 %v5133, %v5132
        %v5162 = vpack.c.b16 %v5135, %v5134
        %v5163 = vpack.c.b16 %v5137, %v5136
        %v5164 = vpack.c.b16 %v5139, %v5138
        %v5165 = vpack.c.b16 %v5141, %v5140
        %v5166 = vpack.c.b16 %v5143, %v5142
        %v5167 = vpack.c.b16 %v5145, %v5144
        %v5168 = vpack.c.b16 %v5147, %v5146
        %v5169 = vpack.c.b16 %v5149, %v5148
        %v5170 = vpack.c.b16 %v5151, %v5150
        %v5171 = vpack.c.b16 %v5153, %v5152
        %v5172 = vpack.c.b16 %v5155, %v5154
        %v5173 = vpack.c.b16 %v5157, %v5156
        %5174 = vrot.lane.b32.xlu0 %v5158, 32
        %v5175 = vpop.permute.xlu0 %5174
        %5176 = vrot.lane.b32.xlu0 %v5159, 32
        %v5177 = vpop.permute.xlu0 %5176
        %5178 = vrot.lane.b32.xlu0 %v5160, 32
        %v5179 = vpop.permute.xlu0 %5178
        %5180 = vrot.lane.b32.xlu0 %v5161, 32
        %v5181 = vpop.permute.xlu0 %5180
        %5182 = vrot.lane.b32.xlu0 %v5162, 32
        %v5183 = vpop.permute.xlu0 %5182
        %5184 = vrot.lane.b32.xlu0 %v5163, 32
        %v5185 = vpop.permute.xlu0 %5184
        %5186 = vrot.lane.b32.xlu0 %v5164, 32
        %v5187 = vpop.permute.xlu0 %5186
        %5188 = vrot.lane.b32.xlu0 %v5165, 32
        %v5189 = vpop.permute.xlu0 %5188
        %5190 = vrot.lane.b32.xlu0 %v5166, 32
        %v5191 = vpop.permute.xlu0 %5190
        %5192 = vrot.lane.b32.xlu0 %v5167, 32
        %v5193 = vpop.permute.xlu0 %5192
        %5194 = vrot.lane.b32.xlu0 %v5168, 32
        %v5195 = vpop.permute.xlu0 %5194
        %5196 = vrot.lane.b32.xlu0 %v5169, 32
        %v5197 = vpop.permute.xlu0 %5196
        %5198 = vrot.lane.b32.xlu0 %v5170, 32
        %v5199 = vpop.permute.xlu0 %5198
        %5200 = vrot.lane.b32.xlu0 %v5171, 32
        %v5201 = vpop.permute.xlu0 %5200
        %5202 = vrot.lane.b32.xlu0 %v5172, 32
        %v5203 = vpop.permute.xlu0 %5202
        %5204 = vrot.lane.b32.xlu0 %v5173, 32
        %v5205 = vpop.permute.xlu0 %5204
        %v5238 = vunpack.c.l.b16 %v4982
        %v5239 = vunpack.c.l.b16 %v4983
        %v5240 = vunpack.c.l.b16 %v4984
        %v5241 = vunpack.c.l.b16 %v4985
        %v5242 = vunpack.c.l.b16 %v4986
        %v5243 = vunpack.c.l.b16 %v4987
        %v5244 = vunpack.c.l.b16 %v4988
        %v5245 = vunpack.c.l.b16 %v4989
        %v5246 = vunpack.c.l.b16 %v4990
        %v5247 = vunpack.c.l.b16 %v4991
        %v5248 = vunpack.c.l.b16 %v4992
        %v5249 = vunpack.c.l.b16 %v4993
        %v5250 = vunpack.c.l.b16 %v4994
        %v5251 = vunpack.c.l.b16 %v4995
        %v5252 = vunpack.c.l.b16 %v4996
        %v5253 = vunpack.c.l.b16 %v4997
        %v5254 = vunpack.c.l.b16 %v4998
        %v5255 = vunpack.c.l.b16 %v4999
        %v5256 = vunpack.c.l.b16 %v5000
        %v5257 = vunpack.c.l.b16 %v5001
        %v5258 = vunpack.c.l.b16 %v5002
        %v5259 = vunpack.c.l.b16 %v5003
        %v5260 = vunpack.c.l.b16 %v5004
        %v5261 = vunpack.c.l.b16 %v5005
        %v5262 = vunpack.c.l.b16 %v5006
        %v5263 = vunpack.c.l.b16 %v5007
        %v5264 = vunpack.c.l.b16 %v5008
        %v5265 = vunpack.c.l.b16 %v5009
        %v5266 = vunpack.c.l.b16 %v5010
        %v5267 = vunpack.c.l.b16 %v5011
        %v5268 = vunpack.c.l.b16 %v5012
        %v5269 = vunpack.c.l.b16 %v5013
        %v5270 = vpack.c.b16 %v5239, %v5238
        %v5271 = vpack.c.b16 %v5241, %v5240
        %v5272 = vpack.c.b16 %v5243, %v5242
        %v5273 = vpack.c.b16 %v5245, %v5244
        %v5274 = vpack.c.b16 %v5247, %v5246
        %v5275 = vpack.c.b16 %v5249, %v5248
        %v5276 = vpack.c.b16 %v5251, %v5250
        %v5277 = vpack.c.b16 %v5253, %v5252
        %v5278 = vpack.c.b16 %v5255, %v5254
        %v5279 = vpack.c.b16 %v5257, %v5256
        %v5280 = vpack.c.b16 %v5259, %v5258
        %v5281 = vpack.c.b16 %v5261, %v5260
        %v5282 = vpack.c.b16 %v5263, %v5262
        %v5283 = vpack.c.b16 %v5265, %v5264
        %v5284 = vpack.c.b16 %v5267, %v5266
        %v5285 = vpack.c.b16 %v5269, %v5268
        %5286 = vrot.lane.b32.xlu0 %v5270, 64
        %v5287 = vpop.permute.xlu0 %5286
        %5288 = vrot.lane.b32.xlu0 %v5271, 64
        %v5289 = vpop.permute.xlu0 %5288
        %5290 = vrot.lane.b32.xlu0 %v5272, 64
        %v5291 = vpop.permute.xlu0 %5290
        %5292 = vrot.lane.b32.xlu0 %v5273, 64
        %v5293 = vpop.permute.xlu0 %5292
        %5294 = vrot.lane.b32.xlu0 %v5274, 64
        %v5295 = vpop.permute.xlu0 %5294
        %5296 = vrot.lane.b32.xlu0 %v5275, 64
        %v5297 = vpop.permute.xlu0 %5296
        %5298 = vrot.lane.b32.xlu0 %v5276, 64
        %v5299 = vpop.permute.xlu0 %5298
        %5300 = vrot.lane.b32.xlu0 %v5277, 64
        %v5301 = vpop.permute.xlu0 %5300
        %5302 = vrot.lane.b32.xlu0 %v5278, 64
        %v5303 = vpop.permute.xlu0 %5302
        %5304 = vrot.lane.b32.xlu0 %v5279, 64
        %v5305 = vpop.permute.xlu0 %5304
        %5306 = vrot.lane.b32.xlu0 %v5280, 64
        %v5307 = vpop.permute.xlu0 %5306
        %5308 = vrot.lane.b32.xlu0 %v5281, 64
        %v5309 = vpop.permute.xlu0 %5308
        %5310 = vrot.lane.b32.xlu0 %v5282, 64
        %v5311 = vpop.permute.xlu0 %5310
        %5312 = vrot.lane.b32.xlu0 %v5283, 64
        %v5313 = vpop.permute.xlu0 %5312
        %5314 = vrot.lane.b32.xlu0 %v5284, 64
        %v5315 = vpop.permute.xlu0 %5314
        %5316 = vrot.lane.b32.xlu0 %v5285, 64
        %v5317 = vpop.permute.xlu0 %5316
        %v5320 = vsel %vm690, %v5078, %v5175
        %v5323 = vsel %vm690, %v5079, %v5177
        %v5326 = vsel %vm690, %v5080, %v5179
        %v5329 = vsel %vm690, %v5081, %v5181
        %v5332 = vsel %vm690, %v5082, %v5183
        %v5335 = vsel %vm690, %v5083, %v5185
        %v5338 = vsel %vm690, %v5084, %v5187
        %v5341 = vsel %vm690, %v5085, %v5189
        %v5344 = vsel %vm690, %v5086, %v5191
        %v5347 = vsel %vm690, %v5087, %v5193
        %v5350 = vsel %vm690, %v5088, %v5195
        %v5353 = vsel %vm690, %v5089, %v5197
        %v5356 = vsel %vm690, %v5090, %v5199
        %v5359 = vsel %vm690, %v5091, %v5201
        %v5362 = vsel %vm690, %v5092, %v5203
        %v5365 = vsel %vm690, %v5093, %v5205
        %v5367 = vsel %vm3010, %v5320, %v5287
        %v5369 = vsel %vm3010, %v5323, %v5289
        %v5371 = vsel %vm3010, %v5326, %v5291
        %v5373 = vsel %vm3010, %v5329, %v5293
        %v5375 = vsel %vm3010, %v5332, %v5295
        %v5377 = vsel %vm3010, %v5335, %v5297
        %v5379 = vsel %vm3010, %v5338, %v5299
        %v5381 = vsel %vm3010, %v5341, %v5301
        %v5383 = vsel %vm3010, %v5344, %v5303
        %v5385 = vsel %vm3010, %v5347, %v5305
        %v5387 = vsel %vm3010, %v5350, %v5307
        %v5389 = vsel %vm3010, %v5353, %v5309
        %v5391 = vsel %vm3010, %v5356, %v5311
        %v5393 = vsel %vm3010, %v5359, %v5313
        %v5395 = vsel %vm3010, %v5362, %v5315
        %v5397 = vsel %vm3010, %v5365, %v5317
        %v5398 = vld [vmem:[%s8 + $0x60] sm:$0xf]
        %v5399 = vld [vmem:[%s8 + $0x64] sm:$0xf]
        %v5400 = vld [vmem:[%s8 + $0x68] sm:$0xf]
        %v5401 = vld [vmem:[%s8 + $0x6c] sm:$0xf]
        %v5402 = vld [vmem:[%s8 + $0x70] sm:$0xf]
        %v5403 = vld [vmem:[%s8 + $0x74] sm:$0xf]
        %v5404 = vld [vmem:[%s8 + $0x78] sm:$0xf]
        %v5405 = vld [vmem:[%s8 + $0x7c] sm:$0xf]
        %v5406 = vld [vmem:[%s8 + $0x80] sm:$0xf]
        %v5407 = vld [vmem:[%s8 + $0x84] sm:$0xf]
        %v5408 = vld [vmem:[%s8 + $0x88] sm:$0xf]
        %v5409 = vld [vmem:[%s8 + $0x8c] sm:$0xf]
        %v5422 = vunpack.c.l.b16 %v5398
        %v5423 = vunpack.c.l.b16 %v5399
        %v5424 = vunpack.c.l.b16 %v5400
        %v5425 = vunpack.c.l.b16 %v5401
        %v5426 = vunpack.c.l.b16 %v5402
        %v5427 = vunpack.c.l.b16 %v5403
        %v5428 = vunpack.c.l.b16 %v5404
        %v5429 = vunpack.c.l.b16 %v5405
        %v5430 = vunpack.c.l.b16 %v5406
        %v5431 = vunpack.c.l.b16 %v5407
        %v5432 = vunpack.c.l.b16 %v5408
        %v5433 = vunpack.c.l.b16 %v5409
        %v5434 = vpack.c.b16 %v5423, %v5422
        %v5435 = vpack.c.b16 %v5425, %v5424
        %v5436 = vpack.c.b16 %v5427, %v5426
        %v5437 = vpack.c.b16 %v5429, %v5428
        %v5438 = vpack.c.b16 %v5431, %v5430
        %v5439 = vpack.c.b16 %v5433, %v5432
        %v5446 = vsel %vm3967, %v5367, 0
        %v5448 = vsel %vm3967, %v5369, 0
        %v5450 = vsel %vm3967, %v5371, 0
        %v5452 = vsel %vm3967, %v5373, 0
        %v5454 = vsel %vm3967, %v5375, 0
        %v5456 = vsel %vm3967, %v5377, 0
        %v5458 = vsel %vm3967, %v5379, 0
        %v5460 = vsel %vm3967, %v5381, 0
        %v5462 = vsel %vm3967, %v5383, 0
        %v5464 = vsel %vm3967, %v5385, 0
        %v5466 = vsel %vm3967, %v5387, 0
        %v5468 = vsel %vm3967, %v5389, 0
        %v5470 = vsel %vm3967, %v5391, 0
        %v5472 = vsel %vm3967, %v5393, 0
        %v5474 = vsel %vm3967, %v5395, 0
        %v5476 = vsel %vm3967, %v5397, 0
        %5478 = vmatpush.bf16.msra.mxu0 0
        %5479 = vmatpush.bf16.msra.mxu0 0
        %5480 = vmatpush.bf16.msra.mxu0 %v5439
        %5481 = vmatpush.bf16.msra.mxu0 %v5438
        %5482 = vmatpush.bf16.msra.mxu0 %v5437
        %5483 = vmatpush.bf16.msra.mxu0 %v5436
        %5484 = vmatpush.bf16.msra.mxu0 %v5435
        %5485 = vmatpush.bf16.msra.mxu0 %v5434
        %5486 = vmatmul.bf16.gmra.mxu0 %v5446
        %v5487 = vpop.f32.mrf.mxu0
        %v5488 = vadd.f32 0.0, %v5487
        %v5489 = vpop.f32.mrf.mxu0
        %v5490 = vadd.f32 0.0, %v5489
        %5491 = vmatmul.bf16.gmra.mxu0 %v5448
        %v5492 = vpop.f32.mrf.mxu0
        %v5493 = vadd.f32 0.0, %v5492
        %v5494 = vpop.f32.mrf.mxu0
        %v5495 = vadd.f32 0.0, %v5494
        %5496 = vmatmul.bf16.gmra.mxu0 %v5450
        %v5497 = vpop.f32.mrf.mxu0
        %v5498 = vadd.f32 0.0, %v5497
        %v5499 = vpop.f32.mrf.mxu0
        %v5500 = vadd.f32 0.0, %v5499
        %5501 = vmatmul.bf16.gmra.mxu0 %v5452
        %v5502 = vpop.f32.mrf.mxu0
        %v5503 = vadd.f32 0.0, %v5502
        %v5504 = vpop.f32.mrf.mxu0
        %v5505 = vadd.f32 0.0, %v5504
        %5506 = vmatmul.bf16.gmra.mxu0 %v5454
        %v5507 = vpop.f32.mrf.mxu0
        %v5508 = vadd.f32 0.0, %v5507
        %v5509 = vpop.f32.mrf.mxu0
        %v5510 = vadd.f32 0.0, %v5509
        %5511 = vmatmul.bf16.gmra.mxu0 %v5456
        %v5512 = vpop.f32.mrf.mxu0
        %v5513 = vadd.f32 0.0, %v5512
        %v5514 = vpop.f32.mrf.mxu0
        %v5515 = vadd.f32 0.0, %v5514
        %5516 = vmatmul.bf16.gmra.mxu0 %v5458
        %v5517 = vpop.f32.mrf.mxu0
        %v5518 = vadd.f32 0.0, %v5517
        %v5519 = vpop.f32.mrf.mxu0
        %v5520 = vadd.f32 0.0, %v5519
        %5521 = vmatmul.bf16.gmra.mxu0 %v5460
        %v5522 = vpop.f32.mrf.mxu0
        %v5523 = vadd.f32 0.0, %v5522
        %v5524 = vpop.f32.mrf.mxu0
        %v5525 = vadd.f32 0.0, %v5524
        %5526 = vmatmul.bf16.gmra.mxu0 %v5462
        %v5527 = vpop.f32.mrf.mxu0
        %v5528 = vadd.f32 0.0, %v5527
        %v5529 = vpop.f32.mrf.mxu0
        %v5530 = vadd.f32 0.0, %v5529
        %5531 = vmatmul.bf16.gmra.mxu0 %v5464
        %v5532 = vpop.f32.mrf.mxu0
        %v5533 = vadd.f32 0.0, %v5532
        %v5534 = vpop.f32.mrf.mxu0
        %v5535 = vadd.f32 0.0, %v5534
        %5536 = vmatmul.bf16.gmra.mxu0 %v5466
        %v5537 = vpop.f32.mrf.mxu0
        %v5538 = vadd.f32 0.0, %v5537
        %v5539 = vpop.f32.mrf.mxu0
        %v5540 = vadd.f32 0.0, %v5539
        %5541 = vmatmul.bf16.gmra.mxu0 %v5468
        %v5542 = vpop.f32.mrf.mxu0
        %v5543 = vadd.f32 0.0, %v5542
        %v5544 = vpop.f32.mrf.mxu0
        %v5545 = vadd.f32 0.0, %v5544
        %5546 = vmatmul.bf16.gmra.mxu0 %v5470
        %v5547 = vpop.f32.mrf.mxu0
        %v5548 = vadd.f32 0.0, %v5547
        %v5549 = vpop.f32.mrf.mxu0
        %v5550 = vadd.f32 0.0, %v5549
        %5551 = vmatmul.bf16.gmra.mxu0 %v5472
        %v5552 = vpop.f32.mrf.mxu0
        %v5553 = vadd.f32 0.0, %v5552
        %v5554 = vpop.f32.mrf.mxu0
        %v5555 = vadd.f32 0.0, %v5554
        %5556 = vmatmul.bf16.gmra.mxu0 %v5474
        %v5557 = vpop.f32.mrf.mxu0
        %v5558 = vadd.f32 0.0, %v5557
        %v5559 = vpop.f32.mrf.mxu0
        %v5560 = vadd.f32 0.0, %v5559
        %5561 = vmatmul.bf16.gmra.mxu0 %v5476
        %v5562 = vpop.f32.mrf.mxu0
        %v5563 = vadd.f32 0.0, %v5562
        %v5564 = vpop.f32.mrf.mxu0
        %v5565 = vadd.f32 0.0, %v5564
        %5566 = vdwg.mxu0
        %v5567 = vadd.f32 %v4167, %v5488
        %v5568 = vadd.f32 %v4169, %v5490
        %v5569 = vadd.f32 %v4172, %v5493
        %v5570 = vadd.f32 %v4174, %v5495
        %v5571 = vadd.f32 %v4177, %v5498
        %v5572 = vadd.f32 %v4179, %v5500
        %v5573 = vadd.f32 %v4182, %v5503
        %v5574 = vadd.f32 %v4184, %v5505
        %v5575 = vadd.f32 %v4187, %v5508
        %v5576 = vadd.f32 %v4189, %v5510
        %v5577 = vadd.f32 %v4192, %v5513
        %v5578 = vadd.f32 %v4194, %v5515
        %v5579 = vadd.f32 %v4197, %v5518
        %v5580 = vadd.f32 %v4199, %v5520
        %v5581 = vadd.f32 %v4202, %v5523
        %v5582 = vadd.f32 %v4204, %v5525
        %v5583 = vadd.f32 %v4207, %v5528
        %v5584 = vadd.f32 %v4209, %v5530
        %v5585 = vadd.f32 %v4212, %v5533
        %v5586 = vadd.f32 %v4214, %v5535
        %v5587 = vadd.f32 %v4217, %v5538
        %v5588 = vadd.f32 %v4219, %v5540
        %v5589 = vadd.f32 %v4222, %v5543
        %v5590 = vadd.f32 %v4224, %v5545
        %v5591 = vadd.f32 %v4227, %v5548
        %v5592 = vadd.f32 %v4229, %v5550
        %v5593 = vadd.f32 %v4232, %v5553
        %v5594 = vadd.f32 %v4234, %v5555
        %v5595 = vadd.f32 %v4237, %v5558
        %v5596 = vadd.f32 %v4239, %v5560
        %v5597 = vadd.f32 %v4242, %v5563
        %v5598 = vadd.f32 %v4244, %v5565
        %v5600 = vperm.slane %v1693, 0
        %v5602 = vadd.f32 %v5567, %v5600
        %v5603 = vadd.f32 %v5568, %v5600
        %v5604 = vadd.f32 %v5569, %v5600
        %v5605 = vadd.f32 %v5570, %v5600
        %v5606 = vadd.f32 %v5571, %v5600
        %v5607 = vadd.f32 %v5572, %v5600
        %v5608 = vadd.f32 %v5573, %v5600
        %v5609 = vadd.f32 %v5574, %v5600
        %v5610 = vadd.f32 %v5575, %v5600
        %v5611 = vadd.f32 %v5576, %v5600
        %v5612 = vadd.f32 %v5577, %v5600
        %v5613 = vadd.f32 %v5578, %v5600
        %v5614 = vadd.f32 %v5579, %v5600
        %v5615 = vadd.f32 %v5580, %v5600
        %v5616 = vadd.f32 %v5581, %v5600
        %v5617 = vadd.f32 %v5582, %v5600
        %v5618 = vadd.f32 %v5583, %v5600
        %v5619 = vadd.f32 %v5584, %v5600
        %v5620 = vadd.f32 %v5585, %v5600
        %v5621 = vadd.f32 %v5586, %v5600
        %v5622 = vadd.f32 %v5587, %v5600
        %v5623 = vadd.f32 %v5588, %v5600
        %v5624 = vadd.f32 %v5589, %v5600
        %v5625 = vadd.f32 %v5590, %v5600
        %v5626 = vadd.f32 %v5591, %v5600
        %v5627 = vadd.f32 %v5592, %v5600
        %v5628 = vadd.f32 %v5593, %v5600
        %v5629 = vadd.f32 %v5594, %v5600
        %v5630 = vadd.f32 %v5595, %v5600
        %v5631 = vadd.f32 %v5596, %v5600
        %v5632 = vadd.f32 %v5597, %v5600
        %v5633 = vadd.f32 %v5598, %v5600
        %v5634 = vld [vmem:[%s586] sm:$0x3]
        %v5635 = vld [vmem:[%s10] sm:$0x1]
        %v5636 = vld [vmem:[%s11] sm:$0x1]
        %v5637 = vld [vmem:[#allocation5] sm:$0xff]
        %v5638 = vld [vmem:[#allocation5 + $0x8] sm:$0xff]
        %v5639 = vld [vmem:[#allocation5 + $0x10] sm:$0xff]
        %v5640 = vld [vmem:[#allocation5 + $0x18] sm:$0xff]
        %v5641 = vld [vmem:[#allocation5 + $0x20] sm:$0xff]
        %v5642 = vld [vmem:[#allocation5 + $0x28] sm:$0xff]
        %v5643 = vld [vmem:[#allocation5 + $0x30] sm:$0xff]
        %v5644 = vld [vmem:[#allocation5 + $0x38] sm:$0xff]
        %v5645 = vsel %vm3010, %v5602, 0.0
        %v5646 = vsel %vm3010, %v5603, 0.0
        %v5647 = vadd.f32 %v5645, %v5646
        %v5648 = vsel %vm3010, %v5604, 0.0
        %v5649 = vadd.f32 %v5647, %v5648
        %v5650 = vsel %vm3010, %v5605, 0.0
        %v5651 = vadd.f32 %v5649, %v5650
        %v5652 = vsel %vm3010, %v5606, 0.0
        %v5653 = vadd.f32 %v5651, %v5652
        %v5654 = vsel %vm3010, %v5607, 0.0
        %v5655 = vadd.f32 %v5653, %v5654
        %v5656 = vsel %vm3010, %v5608, 0.0
        %v5657 = vadd.f32 %v5655, %v5656
        %v5658 = vsel %vm3010, %v5609, 0.0
        %v5659 = vadd.f32 %v5657, %v5658
        %v5660 = vsel %vm3010, %v5610, 0.0
        %v5661 = vadd.f32 %v5659, %v5660
        %v5662 = vsel %vm3010, %v5611, 0.0
        %v5663 = vadd.f32 %v5661, %v5662
        %v5664 = vsel %vm3010, %v5612, 0.0
        %v5665 = vadd.f32 %v5663, %v5664
        %v5666 = vsel %vm3010, %v5613, 0.0
        %v5667 = vadd.f32 %v5665, %v5666
        %v5668 = vsel %vm3010, %v5614, 0.0
        %v5669 = vadd.f32 %v5667, %v5668
        %v5670 = vsel %vm3010, %v5615, 0.0
        %v5671 = vadd.f32 %v5669, %v5670
        %v5672 = vsel %vm3010, %v5616, 0.0
        %v5673 = vadd.f32 %v5671, %v5672
        %v5674 = vsel %vm3010, %v5617, 0.0
        %v5675 = vadd.f32 %v5673, %v5674
        %v5676 = vsel %vm3010, %v5618, 0.0
        %v5677 = vadd.f32 %v5675, %v5676
        %v5678 = vsel %vm3010, %v5619, 0.0
        %v5679 = vadd.f32 %v5677, %v5678
        %v5680 = vsel %vm3010, %v5620, 0.0
        %v5681 = vadd.f32 %v5679, %v5680
        %v5682 = vsel %vm3010, %v5621, 0.0
        %v5683 = vadd.f32 %v5681, %v5682
        %v5684 = vsel %vm3010, %v5622, 0.0
        %v5685 = vadd.f32 %v5683, %v5684
        %v5686 = vsel %vm3010, %v5623, 0.0
        %v5687 = vadd.f32 %v5685, %v5686
        %v5688 = vsel %vm3010, %v5624, 0.0
        %v5689 = vadd.f32 %v5687, %v5688
        %v5690 = vsel %vm3010, %v5625, 0.0
        %v5691 = vadd.f32 %v5689, %v5690
        %v5692 = vsel %vm3010, %v5626, 0.0
        %v5693 = vadd.f32 %v5691, %v5692
        %v5694 = vsel %vm3010, %v5627, 0.0
        %v5695 = vadd.f32 %v5693, %v5694
        %v5696 = vsel %vm3010, %v5628, 0.0
        %v5697 = vadd.f32 %v5695, %v5696
        %v5698 = vsel %vm3010, %v5629, 0.0
        %v5699 = vadd.f32 %v5697, %v5698
        %v5700 = vsel %vm3010, %v5630, 0.0
        %v5701 = vadd.f32 %v5699, %v5700
        %v5702 = vsel %vm3010, %v5631, 0.0
        %v5703 = vadd.f32 %v5701, %v5702
        %v5704 = vsel %vm3010, %v5632, 0.0
        %v5705 = vadd.f32 %v5703, %v5704
        %v5706 = vsel %vm3010, %v5633, 0.0
        %v5707 = vadd.f32 %v5705, %v5706
        %v5708 = vrot.slane %v5707, 4
        %v5709 = vadd.f32 %v5707, %v5708
        %v5710 = vrot.slane %v5709, 2
        %v5711 = vadd.f32 %v5709, %v5710
        %v5712 = vrot.slane %v5711, 1
        %v5713 = vadd.f32 %v5711, %v5712
        %v5715 = vsel %vm3010, %v5713, 0
        %5717 = vmatpush.msra.mxu0 0.0
        %5718 = vmatpush.msra.mxu0 0.0
        %5719 = vmatpush.msra.mxu0 0.0
        %5720 = vmatpush.msra.mxu0 0.0
        %5721 = vmatpush.msra.mxu0 0.0
        %5722 = vmatpush.msra.mxu0 0.0
        %5723 = vmatpush.msra.mxu0 0.0
        %5724 = vmatpush.msra.mxu0 0.0
        %5725 = vmatpush.msra.mxu0 %v5644
        %5726 = vmatpush.msra.mxu0 %v5643
        %5727 = vmatpush.msra.mxu0 %v5642
        %5728 = vmatpush.msra.mxu0 %v5641
        %5729 = vmatpush.msra.mxu0 %v5640
        %5730 = vmatpush.msra.mxu0 %v5639
        %5731 = vmatpush.msra.mxu0 %v5638
        %5732 = vmatpush.msra.mxu0 %v5637
        %5733 = vmatmul.f32.gmra.mxu0 %v5715
        %v5734 = vpop.f32.mrf.mxu0
        %v5735 = vadd.f32 0.0, %v5734
        %5736 = vdwg.mxu0
        %v5737 = vperm.slane %v5735, 0
        %v5738 = vsub.f32 %v5602, %v5737
        %v5739 = vsub.f32 %v5603, %v5737
        %v5740 = vsub.f32 %v5604, %v5737
        %v5741 = vsub.f32 %v5605, %v5737
        %v5742 = vsub.f32 %v5606, %v5737
        %v5743 = vsub.f32 %v5607, %v5737
        %v5744 = vsub.f32 %v5608, %v5737
        %v5745 = vsub.f32 %v5609, %v5737
        %v5746 = vsub.f32 %v5610, %v5737
        %v5747 = vsub.f32 %v5611, %v5737
        %v5748 = vsub.f32 %v5612, %v5737
        %v5749 = vsub.f32 %v5613, %v5737
        %v5750 = vsub.f32 %v5614, %v5737
        %v5751 = vsub.f32 %v5615, %v5737
        %v5752 = vsub.f32 %v5616, %v5737
        %v5753 = vsub.f32 %v5617, %v5737
        %v5754 = vsub.f32 %v5618, %v5737
        %v5755 = vsub.f32 %v5619, %v5737
        %v5756 = vsub.f32 %v5620, %v5737
        %v5757 = vsub.f32 %v5621, %v5737
        %v5758 = vsub.f32 %v5622, %v5737
        %v5759 = vsub.f32 %v5623, %v5737
        %v5760 = vsub.f32 %v5624, %v5737
        %v5761 = vsub.f32 %v5625, %v5737
        %v5762 = vsub.f32 %v5626, %v5737
        %v5763 = vsub.f32 %v5627, %v5737
        %v5764 = vsub.f32 %v5628, %v5737
        %v5765 = vsub.f32 %v5629, %v5737
        %v5766 = vsub.f32 %v5630, %v5737
        %v5767 = vsub.f32 %v5631, %v5737
        %v5768 = vsub.f32 %v5632, %v5737
        %v5769 = vsub.f32 %v5633, %v5737
        %v5770 = vmul.f32 %v5738, %v5738
        %v5771 = vmul.f32 %v5739, %v5739
        %v5772 = vmul.f32 %v5740, %v5740
        %v5773 = vmul.f32 %v5741, %v5741
        %v5774 = vmul.f32 %v5742, %v5742
        %v5775 = vmul.f32 %v5743, %v5743
        %v5776 = vmul.f32 %v5744, %v5744
        %v5777 = vmul.f32 %v5745, %v5745
        %v5778 = vmul.f32 %v5746, %v5746
        %v5779 = vmul.f32 %v5747, %v5747
        %v5780 = vmul.f32 %v5748, %v5748
        %v5781 = vmul.f32 %v5749, %v5749
        %v5782 = vmul.f32 %v5750, %v5750
        %v5783 = vmul.f32 %v5751, %v5751
        %v5784 = vmul.f32 %v5752, %v5752
        %v5785 = vmul.f32 %v5753, %v5753
        %v5786 = vmul.f32 %v5754, %v5754
        %v5787 = vmul.f32 %v5755, %v5755
        %v5788 = vmul.f32 %v5756, %v5756
        %v5789 = vmul.f32 %v5757, %v5757
        %v5790 = vmul.f32 %v5758, %v5758
        %v5791 = vmul.f32 %v5759, %v5759
        %v5792 = vmul.f32 %v5760, %v5760
        %v5793 = vmul.f32 %v5761, %v5761
        %v5794 = vmul.f32 %v5762, %v5762
        %v5795 = vmul.f32 %v5763, %v5763
        %v5796 = vmul.f32 %v5764, %v5764
        %v5797 = vmul.f32 %v5765, %v5765
        %v5798 = vmul.f32 %v5766, %v5766
        %v5799 = vmul.f32 %v5767, %v5767
        %v5800 = vmul.f32 %v5768, %v5768
        %v5801 = vmul.f32 %v5769, %v5769
        %v5802 = vsel %vm3010, %v5770, 0.0
        %v5803 = vsel %vm3010, %v5771, 0.0
        %v5804 = vadd.f32 %v5802, %v5803
        %v5805 = vsel %vm3010, %v5772, 0.0
        %v5806 = vadd.f32 %v5804, %v5805
        %v5807 = vsel %vm3010, %v5773, 0.0
        %v5808 = vadd.f32 %v5806, %v5807
        %v5809 = vsel %vm3010, %v5774, 0.0
        %v5810 = vadd.f32 %v5808, %v5809
        %v5811 = vsel %vm3010, %v5775, 0.0
        %v5812 = vadd.f32 %v5810, %v5811
        %v5813 = vsel %vm3010, %v5776, 0.0
        %v5814 = vadd.f32 %v5812, %v5813
        %v5815 = vsel %vm3010, %v5777, 0.0
        %v5816 = vadd.f32 %v5814, %v5815
        %v5817 = vsel %vm3010, %v5778, 0.0
        %v5818 = vadd.f32 %v5816, %v5817
        %v5819 = vsel %vm3010, %v5779, 0.0
        %v5820 = vadd.f32 %v5818, %v5819
        %v5821 = vsel %vm3010, %v5780, 0.0
        %v5822 = vadd.f32 %v5820, %v5821
        %v5823 = vsel %vm3010, %v5781, 0.0
        %v5824 = vadd.f32 %v5822, %v5823
        %v5825 = vsel %vm3010, %v5782, 0.0
        %v5826 = vadd.f32 %v5824, %v5825
        %v5827 = vsel %vm3010, %v5783, 0.0
        %v5828 = vadd.f32 %v5826, %v5827
        %v5829 = vsel %vm3010, %v5784, 0.0
        %v5830 = vadd.f32 %v5828, %v5829
        %v5831 = vsel %vm3010, %v5785, 0.0
        %v5832 = vadd.f32 %v5830, %v5831
        %v5833 = vsel %vm3010, %v5786, 0.0
        %v5834 = vadd.f32 %v5832, %v5833
        %v5835 = vsel %vm3010, %v5787, 0.0
        %v5836 = vadd.f32 %v5834, %v5835
        %v5837 = vsel %vm3010, %v5788, 0.0
        %v5838 = vadd.f32 %v5836, %v5837
        %v5839 = vsel %vm3010, %v5789, 0.0
        %v5840 = vadd.f32 %v5838, %v5839
        %v5841 = vsel %vm3010, %v5790, 0.0
        %v5842 = vadd.f32 %v5840, %v5841
        %v5843 = vsel %vm3010, %v5791, 0.0
        %v5844 = vadd.f32 %v5842, %v5843
        %v5845 = vsel %vm3010, %v5792, 0.0
        %v5846 = vadd.f32 %v5844, %v5845
        %v5847 = vsel %vm3010, %v5793, 0.0
        %v5848 = vadd.f32 %v5846, %v5847
        %v5849 = vsel %vm3010, %v5794, 0.0
        %v5850 = vadd.f32 %v5848, %v5849
        %v5851 = vsel %vm3010, %v5795, 0.0
        %v5852 = vadd.f32 %v5850, %v5851
        %v5853 = vsel %vm3010, %v5796, 0.0
        %v5854 = vadd.f32 %v5852, %v5853
        %v5855 = vsel %vm3010, %v5797, 0.0
        %v5856 = vadd.f32 %v5854, %v5855
        %v5857 = vsel %vm3010, %v5798, 0.0
        %v5858 = vadd.f32 %v5856, %v5857
        %v5859 = vsel %vm3010, %v5799, 0.0
        %v5860 = vadd.f32 %v5858, %v5859
        %v5861 = vsel %vm3010, %v5800, 0.0
        %v5862 = vadd.f32 %v5860, %v5861
        %v5863 = vsel %vm3010, %v5801, 0.0
        %v5864 = vadd.f32 %v5862, %v5863
        %v5865 = vrot.slane %v5864, 4
        %v5866 = vadd.f32 %v5864, %v5865
        %v5867 = vrot.slane %v5866, 2
        %v5868 = vadd.f32 %v5866, %v5867
        %v5869 = vrot.slane %v5868, 1
        %v5870 = vadd.f32 %v5868, %v5869
        %v5872 = vsel %vm3010, %v5870, 0
        %5874 = vmatpush.msra.mxu0 0.0
        %5875 = vmatpush.msra.mxu0 0.0
        %5876 = vmatpush.msra.mxu0 0.0
        %5877 = vmatpush.msra.mxu0 0.0
        %5878 = vmatpush.msra.mxu0 0.0
        %5879 = vmatpush.msra.mxu0 0.0
        %5880 = vmatpush.msra.mxu0 0.0
        %5881 = vmatpush.msra.mxu0 0.0
        %5882 = vmatpush.msra.mxu0 %v5644
        %5883 = vmatpush.msra.mxu0 %v5643
        %5884 = vmatpush.msra.mxu0 %v5642
        %5885 = vmatpush.msra.mxu0 %v5641
        %5886 = vmatpush.msra.mxu0 %v5640
        %5887 = vmatpush.msra.mxu0 %v5639
        %5888 = vmatpush.msra.mxu0 %v5638
        %5889 = vmatpush.msra.mxu0 %v5637
        %5890 = vmatmul.f32.gmra.mxu0 %v5872
        %v5891 = vpop.f32.mrf.mxu0
        %v5892 = vadd.f32 1e-05, %v5891
        %5893 = vdwg.mxu0
        %v5894 = vrsqrt.pop %v5892
        %v5895 = vmul.f32 %v5894, %v5892
        %v5896 = vmul.f32 %v5895, %v5894
        %v5897 = vmul.f32 0.5, %v5896
        %v5898 = vsub.f32 1.5, %v5897
        %v5899 = vmul.f32 %v5894, %v5898
        %vm5900 = vweird.f32 %v5892
        %vm5901 = vweird.f32 %v5894
        %vm5902 = vmor %vm5900, %vm5901
        %v5903 = vsel %vm5902, %v5894, %v5899
        %v5904 = vperm.slane %v5903, 0
        %v5905 = vmul.f32 %v5738, %v5904
        %v5906 = vmul.f32 %v5739, %v5904
        %v5907 = vmul.f32 %v5740, %v5904
        %v5908 = vmul.f32 %v5741, %v5904
        %v5909 = vmul.f32 %v5742, %v5904
        %v5910 = vmul.f32 %v5743, %v5904
        %v5911 = vmul.f32 %v5744, %v5904
        %v5912 = vmul.f32 %v5745, %v5904
        %v5913 = vmul.f32 %v5746, %v5904
        %v5914 = vmul.f32 %v5747, %v5904
        %v5915 = vmul.f32 %v5748, %v5904
        %v5916 = vmul.f32 %v5749, %v5904
        %v5917 = vmul.f32 %v5750, %v5904
        %v5918 = vmul.f32 %v5751, %v5904
        %v5919 = vmul.f32 %v5752, %v5904
        %v5920 = vmul.f32 %v5753, %v5904
        %v5921 = vmul.f32 %v5754, %v5904
        %v5922 = vmul.f32 %v5755, %v5904
        %v5923 = vmul.f32 %v5756, %v5904
        %v5924 = vmul.f32 %v5757, %v5904
        %v5925 = vmul.f32 %v5758, %v5904
        %v5926 = vmul.f32 %v5759, %v5904
        %v5927 = vmul.f32 %v5760, %v5904
        %v5928 = vmul.f32 %v5761, %v5904
        %v5929 = vmul.f32 %v5762, %v5904
        %v5930 = vmul.f32 %v5763, %v5904
        %v5931 = vmul.f32 %v5764, %v5904
        %v5932 = vmul.f32 %v5765, %v5904
        %v5933 = vmul.f32 %v5766, %v5904
        %v5934 = vmul.f32 %v5767, %v5904
        %v5935 = vmul.f32 %v5768, %v5904
        %v5936 = vmul.f32 %v5769, %v5904
        %v5938 = vperm.slane %v5635, 0
        %v5940 = vmul.f32 %v5905, %v5938
        %v5941 = vmul.f32 %v5906, %v5938
        %v5942 = vmul.f32 %v5907, %v5938
        %v5943 = vmul.f32 %v5908, %v5938
        %v5944 = vmul.f32 %v5909, %v5938
        %v5945 = vmul.f32 %v5910, %v5938
        %v5946 = vmul.f32 %v5911, %v5938
        %v5947 = vmul.f32 %v5912, %v5938
        %v5948 = vmul.f32 %v5913, %v5938
        %v5949 = vmul.f32 %v5914, %v5938
        %v5950 = vmul.f32 %v5915, %v5938
        %v5951 = vmul.f32 %v5916, %v5938
        %v5952 = vmul.f32 %v5917, %v5938
        %v5953 = vmul.f32 %v5918, %v5938
        %v5954 = vmul.f32 %v5919, %v5938
        %v5955 = vmul.f32 %v5920, %v5938
        %v5956 = vmul.f32 %v5921, %v5938
        %v5957 = vmul.f32 %v5922, %v5938
        %v5958 = vmul.f32 %v5923, %v5938
        %v5959 = vmul.f32 %v5924, %v5938
        %v5960 = vmul.f32 %v5925, %v5938
        %v5961 = vmul.f32 %v5926, %v5938
        %v5962 = vmul.f32 %v5927, %v5938
        %v5963 = vmul.f32 %v5928, %v5938
        %v5964 = vmul.f32 %v5929, %v5938
        %v5965 = vmul.f32 %v5930, %v5938
        %v5966 = vmul.f32 %v5931, %v5938
        %v5967 = vmul.f32 %v5932, %v5938
        %v5968 = vmul.f32 %v5933, %v5938
        %v5969 = vmul.f32 %v5934, %v5938
        %v5970 = vmul.f32 %v5935, %v5938
        %v5971 = vmul.f32 %v5936, %v5938
        %v5973 = vperm.slane %v5636, 0
        %v5975 = vadd.f32 %v5940, %v5973
        %v5976 = vadd.f32 %v5941, %v5973
        %v5977 = vadd.f32 %v5942, %v5973
        %v5978 = vadd.f32 %v5943, %v5973
        %v5979 = vadd.f32 %v5944, %v5973
        %v5980 = vadd.f32 %v5945, %v5973
        %v5981 = vadd.f32 %v5946, %v5973
        %v5982 = vadd.f32 %v5947, %v5973
        %v5983 = vadd.f32 %v5948, %v5973
        %v5984 = vadd.f32 %v5949, %v5973
        %v5985 = vadd.f32 %v5950, %v5973
        %v5986 = vadd.f32 %v5951, %v5973
        %v5987 = vadd.f32 %v5952, %v5973
        %v5988 = vadd.f32 %v5953, %v5973
        %v5989 = vadd.f32 %v5954, %v5973
        %v5990 = vadd.f32 %v5955, %v5973
        %v5991 = vadd.f32 %v5956, %v5973
        %v5992 = vadd.f32 %v5957, %v5973
        %v5993 = vadd.f32 %v5958, %v5973
        %v5994 = vadd.f32 %v5959, %v5973
        %v5995 = vadd.f32 %v5960, %v5973
        %v5996 = vadd.f32 %v5961, %v5973
        %v5997 = vadd.f32 %v5962, %v5973
        %v5998 = vadd.f32 %v5963, %v5973
        %v5999 = vadd.f32 %v5964, %v5973
        %v6000 = vadd.f32 %v5965, %v5973
        %v6001 = vadd.f32 %v5966, %v5973
        %v6002 = vadd.f32 %v5967, %v5973
        %v6003 = vadd.f32 %v5968, %v5973
        %v6004 = vadd.f32 %v5969, %v5973
        %v6005 = vadd.f32 %v5970, %v5973
        %v6006 = vadd.f32 %v5971, %v5973
        %v6007 = vadd.f32 %v5634, 1.0
        %v6008 = vperm.slane %v6007, 0
        %v6009 = vmul.f32 %v5975, %v6008
        %v6010 = vmul.f32 %v5976, %v6008
        %v6011 = vmul.f32 %v5977, %v6008
        %v6012 = vmul.f32 %v5978, %v6008
        %v6013 = vmul.f32 %v5979, %v6008
        %v6014 = vmul.f32 %v5980, %v6008
        %v6015 = vmul.f32 %v5981, %v6008
        %v6016 = vmul.f32 %v5982, %v6008
        %v6017 = vmul.f32 %v5983, %v6008
        %v6018 = vmul.f32 %v5984, %v6008
        %v6019 = vmul.f32 %v5985, %v6008
        %v6020 = vmul.f32 %v5986, %v6008
        %v6021 = vmul.f32 %v5987, %v6008
        %v6022 = vmul.f32 %v5988, %v6008
        %v6023 = vmul.f32 %v5989, %v6008
        %v6024 = vmul.f32 %v5990, %v6008
        %v6025 = vmul.f32 %v5991, %v6008
        %v6026 = vmul.f32 %v5992, %v6008
        %v6027 = vmul.f32 %v5993, %v6008
        %v6028 = vmul.f32 %v5994, %v6008
        %v6029 = vmul.f32 %v5995, %v6008
        %v6030 = vmul.f32 %v5996, %v6008
        %v6031 = vmul.f32 %v5997, %v6008
        %v6032 = vmul.f32 %v5998, %v6008
        %v6033 = vmul.f32 %v5999, %v6008
        %v6034 = vmul.f32 %v6000, %v6008
        %v6035 = vmul.f32 %v6001, %v6008
        %v6036 = vmul.f32 %v6002, %v6008
        %v6037 = vmul.f32 %v6003, %v6008
        %v6038 = vmul.f32 %v6004, %v6008
        %v6039 = vmul.f32 %v6005, %v6008
        %v6040 = vmul.f32 %v6006, %v6008
        %v6041 = vperm.slane %v5634, 1
        %v6042 = vadd.f32 %v6009, %v6041
        %v6043 = vadd.f32 %v6010, %v6041
        %v6044 = vadd.f32 %v6011, %v6041
        %v6045 = vadd.f32 %v6012, %v6041
        %v6046 = vadd.f32 %v6013, %v6041
        %v6047 = vadd.f32 %v6014, %v6041
        %v6048 = vadd.f32 %v6015, %v6041
        %v6049 = vadd.f32 %v6016, %v6041
        %v6050 = vadd.f32 %v6017, %v6041
        %v6051 = vadd.f32 %v6018, %v6041
        %v6052 = vadd.f32 %v6019, %v6041
        %v6053 = vadd.f32 %v6020, %v6041
        %v6054 = vadd.f32 %v6021, %v6041
        %v6055 = vadd.f32 %v6022, %v6041
        %v6056 = vadd.f32 %v6023, %v6041
        %v6057 = vadd.f32 %v6024, %v6041
        %v6058 = vadd.f32 %v6025, %v6041
        %v6059 = vadd.f32 %v6026, %v6041
        %v6060 = vadd.f32 %v6027, %v6041
        %v6061 = vadd.f32 %v6028, %v6041
        %v6062 = vadd.f32 %v6029, %v6041
        %v6063 = vadd.f32 %v6030, %v6041
        %v6064 = vadd.f32 %v6031, %v6041
        %v6065 = vadd.f32 %v6032, %v6041
        %v6066 = vadd.f32 %v6033, %v6041
        %v6067 = vadd.f32 %v6034, %v6041
        %v6068 = vadd.f32 %v6035, %v6041
        %v6069 = vadd.f32 %v6036, %v6041
        %v6070 = vadd.f32 %v6037, %v6041
        %v6071 = vadd.f32 %v6038, %v6041
        %v6072 = vadd.f32 %v6039, %v6041
        %v6073 = vadd.f32 %v6040, %v6041
        %v6074 = vxor.u32 %v6042, 2147483648
        %v6075 = vxor.u32 %v6043, 2147483648
        %v6076 = vxor.u32 %v6044, 2147483648
        %v6077 = vxor.u32 %v6045, 2147483648
        %v6078 = vxor.u32 %v6046, 2147483648
        %v6079 = vxor.u32 %v6047, 2147483648
        %v6080 = vxor.u32 %v6048, 2147483648
        %v6081 = vxor.u32 %v6049, 2147483648
        %v6082 = vxor.u32 %v6050, 2147483648
        %v6083 = vxor.u32 %v6051, 2147483648
        %v6084 = vxor.u32 %v6052, 2147483648
        %v6085 = vxor.u32 %v6053, 2147483648
        %v6086 = vxor.u32 %v6054, 2147483648
        %v6087 = vxor.u32 %v6055, 2147483648
        %v6088 = vxor.u32 %v6056, 2147483648
        %v6089 = vxor.u32 %v6057, 2147483648
        %v6090 = vxor.u32 %v6058, 2147483648
        %v6091 = vxor.u32 %v6059, 2147483648
        %v6092 = vxor.u32 %v6060, 2147483648
        %v6093 = vxor.u32 %v6061, 2147483648
        %v6094 = vxor.u32 %v6062, 2147483648
        %v6095 = vxor.u32 %v6063, 2147483648
        %v6096 = vxor.u32 %v6064, 2147483648
        %v6097 = vxor.u32 %v6065, 2147483648
        %v6098 = vxor.u32 %v6066, 2147483648
        %v6099 = vxor.u32 %v6067, 2147483648
        %v6100 = vxor.u32 %v6068, 2147483648
        %v6101 = vxor.u32 %v6069, 2147483648
        %v6102 = vxor.u32 %v6070, 2147483648
        %v6103 = vxor.u32 %v6071, 2147483648
        %v6104 = vxor.u32 %v6072, 2147483648
        %v6105 = vxor.u32 %v6073, 2147483648
        %v6106 = vmul.f32 %v6074, 1.442695
        %v6107 = vpow.pop %v6106
        %v6108 = vmul.f32 %v6075, 1.442695
        %v6109 = vpow.pop %v6108
        %v6110 = vmul.f32 %v6076, 1.442695
        %v6111 = vpow.pop %v6110
        %v6112 = vmul.f32 %v6077, 1.442695
        %v6113 = vpow.pop %v6112
        %v6114 = vmul.f32 %v6078, 1.442695
        %v6115 = vpow.pop %v6114
        %v6116 = vmul.f32 %v6079, 1.442695
        %v6117 = vpow.pop %v6116
        %v6118 = vmul.f32 %v6080, 1.442695
        %v6119 = vpow.pop %v6118
        %v6120 = vmul.f32 %v6081, 1.442695
        %v6121 = vpow.pop %v6120
        %v6122 = vmul.f32 %v6082, 1.442695
        %v6123 = vpow.pop %v6122
        %v6124 = vmul.f32 %v6083, 1.442695
        %v6125 = vpow.pop %v6124
        %v6126 = vmul.f32 %v6084, 1.442695
        %v6127 = vpow.pop %v6126
        %v6128 = vmul.f32 %v6085, 1.442695
        %v6129 = vpow.pop %v6128
        %v6130 = vmul.f32 %v6086, 1.442695
        %v6131 = vpow.pop %v6130
        %v6132 = vmul.f32 %v6087, 1.442695
        %v6133 = vpow.pop %v6132
        %v6134 = vmul.f32 %v6088, 1.442695
        %v6135 = vpow.pop %v6134
        %v6136 = vmul.f32 %v6089, 1.442695
        %v6137 = vpow.pop %v6136
        %v6138 = vmul.f32 %v6090, 1.442695
        %v6139 = vpow.pop %v6138
        %v6140 = vmul.f32 %v6091, 1.442695
        %v6141 = vpow.pop %v6140
        %v6142 = vmul.f32 %v6092, 1.442695
        %v6143 = vpow.pop %v6142
        %v6144 = vmul.f32 %v6093, 1.442695
        %v6145 = vpow.pop %v6144
        %v6146 = vmul.f32 %v6094, 1.442695
        %v6147 = vpow.pop %v6146
        %v6148 = vmul.f32 %v6095, 1.442695
        %v6149 = vpow.pop %v6148
        %v6150 = vmul.f32 %v6096, 1.442695
        %v6151 = vpow.pop %v6150
        %v6152 = vmul.f32 %v6097, 1.442695
        %v6153 = vpow.pop %v6152
        %v6154 = vmul.f32 %v6098, 1.442695
        %v6155 = vpow.pop %v6154
        %v6156 = vmul.f32 %v6099, 1.442695
        %v6157 = vpow.pop %v6156
        %v6158 = vmul.f32 %v6100, 1.442695
        %v6159 = vpow.pop %v6158
        %v6160 = vmul.f32 %v6101, 1.442695
        %v6161 = vpow.pop %v6160
        %v6162 = vmul.f32 %v6102, 1.442695
        %v6163 = vpow.pop %v6162
        %v6164 = vmul.f32 %v6103, 1.442695
        %v6165 = vpow.pop %v6164
        %v6166 = vmul.f32 %v6104, 1.442695
        %v6167 = vpow.pop %v6166
        %v6168 = vmul.f32 %v6105, 1.442695
        %v6169 = vpow.pop %v6168
        %v6170 = vadd.f32 %v6107, 1.0
        %v6171 = vadd.f32 %v6109, 1.0
        %v6172 = vadd.f32 %v6111, 1.0
        %v6173 = vadd.f32 %v6113, 1.0
        %v6174 = vadd.f32 %v6115, 1.0
        %v6175 = vadd.f32 %v6117, 1.0
        %v6176 = vadd.f32 %v6119, 1.0
        %v6177 = vadd.f32 %v6121, 1.0
        %v6178 = vadd.f32 %v6123, 1.0
        %v6179 = vadd.f32 %v6125, 1.0
        %v6180 = vadd.f32 %v6127, 1.0
        %v6181 = vadd.f32 %v6129, 1.0
        %v6182 = vadd.f32 %v6131, 1.0
        %v6183 = vadd.f32 %v6133, 1.0
        %v6184 = vadd.f32 %v6135, 1.0
        %v6185 = vadd.f32 %v6137, 1.0
        %v6186 = vadd.f32 %v6139, 1.0
        %v6187 = vadd.f32 %v6141, 1.0
        %v6188 = vadd.f32 %v6143, 1.0
        %v6189 = vadd.f32 %v6145, 1.0
        %v6190 = vadd.f32 %v6147, 1.0
        %v6191 = vadd.f32 %v6149, 1.0
        %v6192 = vadd.f32 %v6151, 1.0
        %v6193 = vadd.f32 %v6153, 1.0
        %v6194 = vadd.f32 %v6155, 1.0
        %v6195 = vadd.f32 %v6157, 1.0
        %v6196 = vadd.f32 %v6159, 1.0
        %v6197 = vadd.f32 %v6161, 1.0
        %v6198 = vadd.f32 %v6163, 1.0
        %v6199 = vadd.f32 %v6165, 1.0
        %v6200 = vadd.f32 %v6167, 1.0
        %v6201 = vadd.f32 %v6169, 1.0
        %v6202 = vrcp.pop %v6170
        %v6203 = vmul.f32 %v6170, %v6202
        %v6204 = vsub.f32 1.0, %v6203
        %v6205 = vmul.f32 %v6202, %v6204
        %v6206 = vadd.f32 %v6202, %v6205
        %vm6207 = vweird.f32 %v6170
        %vm6208 = vweird.f32 %v6202
        %vm6209 = vmor %vm6207, %vm6208
        %v6210 = vsel %vm6209, %v6202, %v6206
        %v6211 = vand.u32 2147483647, %v6170
        %vm6212 = vcmp.eq.f32.partialorder %v6211, 8.507059e+37
        %v6213 = vand.u32 %v6170, 2147483648
        %v6214 = vor.u32 1.1754944e-38, %v6213
        %v6215 = vsel %vm6212, %v6214, %v6210
        %v6216 = vmul.f32 1.0, %v6215
        %v6217 = vrcp.pop %v6171
        %v6218 = vmul.f32 %v6171, %v6217
        %v6219 = vsub.f32 1.0, %v6218
        %v6220 = vmul.f32 %v6217, %v6219
        %v6221 = vadd.f32 %v6217, %v6220
        %vm6222 = vweird.f32 %v6171
        %vm6223 = vweird.f32 %v6217
        %vm6224 = vmor %vm6222, %vm6223
        %v6225 = vsel %vm6224, %v6217, %v6221
        %v6226 = vand.u32 2147483647, %v6171
        %vm6227 = vcmp.eq.f32.partialorder %v6226, 8.507059e+37
        %v6228 = vand.u32 %v6171, 2147483648
        %v6229 = vor.u32 1.1754944e-38, %v6228
        %v6230 = vsel %vm6227, %v6229, %v6225
        %v6231 = vmul.f32 1.0, %v6230
        %v6232 = vrcp.pop %v6172
        %v6233 = vmul.f32 %v6172, %v6232
        %v6234 = vsub.f32 1.0, %v6233
        %v6235 = vmul.f32 %v6232, %v6234
        %v6236 = vadd.f32 %v6232, %v6235
        %vm6237 = vweird.f32 %v6172
        %vm6238 = vweird.f32 %v6232
        %vm6239 = vmor %vm6237, %vm6238
        %v6240 = vsel %vm6239, %v6232, %v6236
        %v6241 = vand.u32 2147483647, %v6172
        %vm6242 = vcmp.eq.f32.partialorder %v6241, 8.507059e+37
        %v6243 = vand.u32 %v6172, 2147483648
        %v6244 = vor.u32 1.1754944e-38, %v6243
        %v6245 = vsel %vm6242, %v6244, %v6240
        %v6246 = vmul.f32 1.0, %v6245
        %v6247 = vrcp.pop %v6173
        %v6248 = vmul.f32 %v6173, %v6247
        %v6249 = vsub.f32 1.0, %v6248
        %v6250 = vmul.f32 %v6247, %v6249
        %v6251 = vadd.f32 %v6247, %v6250
        %vm6252 = vweird.f32 %v6173
        %vm6253 = vweird.f32 %v6247
        %vm6254 = vmor %vm6252, %vm6253
        %v6255 = vsel %vm6254, %v6247, %v6251
        %v6256 = vand.u32 2147483647, %v6173
        %vm6257 = vcmp.eq.f32.partialorder %v6256, 8.507059e+37
        %v6258 = vand.u32 %v6173, 2147483648
        %v6259 = vor.u32 1.1754944e-38, %v6258
        %v6260 = vsel %vm6257, %v6259, %v6255
        %v6261 = vmul.f32 1.0, %v6260
        %v6262 = vrcp.pop %v6174
        %v6263 = vmul.f32 %v6174, %v6262
        %v6264 = vsub.f32 1.0, %v6263
        %v6265 = vmul.f32 %v6262, %v6264
        %v6266 = vadd.f32 %v6262, %v6265
        %vm6267 = vweird.f32 %v6174
        %vm6268 = vweird.f32 %v6262
        %vm6269 = vmor %vm6267, %vm6268
        %v6270 = vsel %vm6269, %v6262, %v6266
        %v6271 = vand.u32 2147483647, %v6174
        %vm6272 = vcmp.eq.f32.partialorder %v6271, 8.507059e+37
        %v6273 = vand.u32 %v6174, 2147483648
        %v6274 = vor.u32 1.1754944e-38, %v6273
        %v6275 = vsel %vm6272, %v6274, %v6270
        %v6276 = vmul.f32 1.0, %v6275
        %v6277 = vrcp.pop %v6175
        %v6278 = vmul.f32 %v6175, %v6277
        %v6279 = vsub.f32 1.0, %v6278
        %v6280 = vmul.f32 %v6277, %v6279
        %v6281 = vadd.f32 %v6277, %v6280
        %vm6282 = vweird.f32 %v6175
        %vm6283 = vweird.f32 %v6277
        %vm6284 = vmor %vm6282, %vm6283
        %v6285 = vsel %vm6284, %v6277, %v6281
        %v6286 = vand.u32 2147483647, %v6175
        %vm6287 = vcmp.eq.f32.partialorder %v6286, 8.507059e+37
        %v6288 = vand.u32 %v6175, 2147483648
        %v6289 = vor.u32 1.1754944e-38, %v6288
        %v6290 = vsel %vm6287, %v6289, %v6285
        %v6291 = vmul.f32 1.0, %v6290
        %v6292 = vrcp.pop %v6176
        %v6293 = vmul.f32 %v6176, %v6292
        %v6294 = vsub.f32 1.0, %v6293
        %v6295 = vmul.f32 %v6292, %v6294
        %v6296 = vadd.f32 %v6292, %v6295
        %vm6297 = vweird.f32 %v6176
        %vm6298 = vweird.f32 %v6292
        %vm6299 = vmor %vm6297, %vm6298
        %v6300 = vsel %vm6299, %v6292, %v6296
        %v6301 = vand.u32 2147483647, %v6176
        %vm6302 = vcmp.eq.f32.partialorder %v6301, 8.507059e+37
        %v6303 = vand.u32 %v6176, 2147483648
        %v6304 = vor.u32 1.1754944e-38, %v6303
        %v6305 = vsel %vm6302, %v6304, %v6300
        %v6306 = vmul.f32 1.0, %v6305
        %v6307 = vrcp.pop %v6177
        %v6308 = vmul.f32 %v6177, %v6307
        %v6309 = vsub.f32 1.0, %v6308
        %v6310 = vmul.f32 %v6307, %v6309
        %v6311 = vadd.f32 %v6307, %v6310
        %vm6312 = vweird.f32 %v6177
        %vm6313 = vweird.f32 %v6307
        %vm6314 = vmor %vm6312, %vm6313
        %v6315 = vsel %vm6314, %v6307, %v6311
        %v6316 = vand.u32 2147483647, %v6177
        %vm6317 = vcmp.eq.f32.partialorder %v6316, 8.507059e+37
        %v6318 = vand.u32 %v6177, 2147483648
        %v6319 = vor.u32 1.1754944e-38, %v6318
        %v6320 = vsel %vm6317, %v6319, %v6315
        %v6321 = vmul.f32 1.0, %v6320
        %v6322 = vrcp.pop %v6178
        %v6323 = vmul.f32 %v6178, %v6322
        %v6324 = vsub.f32 1.0, %v6323
        %v6325 = vmul.f32 %v6322, %v6324
        %v6326 = vadd.f32 %v6322, %v6325
        %vm6327 = vweird.f32 %v6178
        %vm6328 = vweird.f32 %v6322
        %vm6329 = vmor %vm6327, %vm6328
        %v6330 = vsel %vm6329, %v6322, %v6326
        %v6331 = vand.u32 2147483647, %v6178
        %vm6332 = vcmp.eq.f32.partialorder %v6331, 8.507059e+37
        %v6333 = vand.u32 %v6178, 2147483648
        %v6334 = vor.u32 1.1754944e-38, %v6333
        %v6335 = vsel %vm6332, %v6334, %v6330
        %v6336 = vmul.f32 1.0, %v6335
        %v6337 = vrcp.pop %v6179
        %v6338 = vmul.f32 %v6179, %v6337
        %v6339 = vsub.f32 1.0, %v6338
        %v6340 = vmul.f32 %v6337, %v6339
        %v6341 = vadd.f32 %v6337, %v6340
        %vm6342 = vweird.f32 %v6179
        %vm6343 = vweird.f32 %v6337
        %vm6344 = vmor %vm6342, %vm6343
        %v6345 = vsel %vm6344, %v6337, %v6341
        %v6346 = vand.u32 2147483647, %v6179
        %vm6347 = vcmp.eq.f32.partialorder %v6346, 8.507059e+37
        %v6348 = vand.u32 %v6179, 2147483648
        %v6349 = vor.u32 1.1754944e-38, %v6348
        %v6350 = vsel %vm6347, %v6349, %v6345
        %v6351 = vmul.f32 1.0, %v6350
        %v6352 = vrcp.pop %v6180
        %v6353 = vmul.f32 %v6180, %v6352
        %v6354 = vsub.f32 1.0, %v6353
        %v6355 = vmul.f32 %v6352, %v6354
        %v6356 = vadd.f32 %v6352, %v6355
        %vm6357 = vweird.f32 %v6180
        %vm6358 = vweird.f32 %v6352
        %vm6359 = vmor %vm6357, %vm6358
        %v6360 = vsel %vm6359, %v6352, %v6356
        %v6361 = vand.u32 2147483647, %v6180
        %vm6362 = vcmp.eq.f32.partialorder %v6361, 8.507059e+37
        %v6363 = vand.u32 %v6180, 2147483648
        %v6364 = vor.u32 1.1754944e-38, %v6363
        %v6365 = vsel %vm6362, %v6364, %v6360
        %v6366 = vmul.f32 1.0, %v6365
        %v6367 = vrcp.pop %v6181
        %v6368 = vmul.f32 %v6181, %v6367
        %v6369 = vsub.f32 1.0, %v6368
        %v6370 = vmul.f32 %v6367, %v6369
        %v6371 = vadd.f32 %v6367, %v6370
        %vm6372 = vweird.f32 %v6181
        %vm6373 = vweird.f32 %v6367
        %vm6374 = vmor %vm6372, %vm6373
        %v6375 = vsel %vm6374, %v6367, %v6371
        %v6376 = vand.u32 2147483647, %v6181
        %vm6377 = vcmp.eq.f32.partialorder %v6376, 8.507059e+37
        %v6378 = vand.u32 %v6181, 2147483648
        %v6379 = vor.u32 1.1754944e-38, %v6378
        %v6380 = vsel %vm6377, %v6379, %v6375
        %v6381 = vmul.f32 1.0, %v6380
        %v6382 = vrcp.pop %v6182
        %v6383 = vmul.f32 %v6182, %v6382
        %v6384 = vsub.f32 1.0, %v6383
        %v6385 = vmul.f32 %v6382, %v6384
        %v6386 = vadd.f32 %v6382, %v6385
        %vm6387 = vweird.f32 %v6182
        %vm6388 = vweird.f32 %v6382
        %vm6389 = vmor %vm6387, %vm6388
        %v6390 = vsel %vm6389, %v6382, %v6386
        %v6391 = vand.u32 2147483647, %v6182
        %vm6392 = vcmp.eq.f32.partialorder %v6391, 8.507059e+37
        %v6393 = vand.u32 %v6182, 2147483648
        %v6394 = vor.u32 1.1754944e-38, %v6393
        %v6395 = vsel %vm6392, %v6394, %v6390
        %v6396 = vmul.f32 1.0, %v6395
        %v6397 = vrcp.pop %v6183
        %v6398 = vmul.f32 %v6183, %v6397
        %v6399 = vsub.f32 1.0, %v6398
        %v6400 = vmul.f32 %v6397, %v6399
        %v6401 = vadd.f32 %v6397, %v6400
        %vm6402 = vweird.f32 %v6183
        %vm6403 = vweird.f32 %v6397
        %vm6404 = vmor %vm6402, %vm6403
        %v6405 = vsel %vm6404, %v6397, %v6401
        %v6406 = vand.u32 2147483647, %v6183
        %vm6407 = vcmp.eq.f32.partialorder %v6406, 8.507059e+37
        %v6408 = vand.u32 %v6183, 2147483648
        %v6409 = vor.u32 1.1754944e-38, %v6408
        %v6410 = vsel %vm6407, %v6409, %v6405
        %v6411 = vmul.f32 1.0, %v6410
        %v6412 = vrcp.pop %v6184
        %v6413 = vmul.f32 %v6184, %v6412
        %v6414 = vsub.f32 1.0, %v6413
        %v6415 = vmul.f32 %v6412, %v6414
        %v6416 = vadd.f32 %v6412, %v6415
        %vm6417 = vweird.f32 %v6184
        %vm6418 = vweird.f32 %v6412
        %vm6419 = vmor %vm6417, %vm6418
        %v6420 = vsel %vm6419, %v6412, %v6416
        %v6421 = vand.u32 2147483647, %v6184
        %vm6422 = vcmp.eq.f32.partialorder %v6421, 8.507059e+37
        %v6423 = vand.u32 %v6184, 2147483648
        %v6424 = vor.u32 1.1754944e-38, %v6423
        %v6425 = vsel %vm6422, %v6424, %v6420
        %v6426 = vmul.f32 1.0, %v6425
        %v6427 = vrcp.pop %v6185
        %v6428 = vmul.f32 %v6185, %v6427
        %v6429 = vsub.f32 1.0, %v6428
        %v6430 = vmul.f32 %v6427, %v6429
        %v6431 = vadd.f32 %v6427, %v6430
        %vm6432 = vweird.f32 %v6185
        %vm6433 = vweird.f32 %v6427
        %vm6434 = vmor %vm6432, %vm6433
        %v6435 = vsel %vm6434, %v6427, %v6431
        %v6436 = vand.u32 2147483647, %v6185
        %vm6437 = vcmp.eq.f32.partialorder %v6436, 8.507059e+37
        %v6438 = vand.u32 %v6185, 2147483648
        %v6439 = vor.u32 1.1754944e-38, %v6438
        %v6440 = vsel %vm6437, %v6439, %v6435
        %v6441 = vmul.f32 1.0, %v6440
        %v6442 = vrcp.pop %v6186
        %v6443 = vmul.f32 %v6186, %v6442
        %v6444 = vsub.f32 1.0, %v6443
        %v6445 = vmul.f32 %v6442, %v6444
        %v6446 = vadd.f32 %v6442, %v6445
        %vm6447 = vweird.f32 %v6186
        %vm6448 = vweird.f32 %v6442
        %vm6449 = vmor %vm6447, %vm6448
        %v6450 = vsel %vm6449, %v6442, %v6446
        %v6451 = vand.u32 2147483647, %v6186
        %vm6452 = vcmp.eq.f32.partialorder %v6451, 8.507059e+37
        %v6453 = vand.u32 %v6186, 2147483648
        %v6454 = vor.u32 1.1754944e-38, %v6453
        %v6455 = vsel %vm6452, %v6454, %v6450
        %v6456 = vmul.f32 1.0, %v6455
        %v6457 = vrcp.pop %v6187
        %v6458 = vmul.f32 %v6187, %v6457
        %v6459 = vsub.f32 1.0, %v6458
        %v6460 = vmul.f32 %v6457, %v6459
        %v6461 = vadd.f32 %v6457, %v6460
        %vm6462 = vweird.f32 %v6187
        %vm6463 = vweird.f32 %v6457
        %vm6464 = vmor %vm6462, %vm6463
        %v6465 = vsel %vm6464, %v6457, %v6461
        %v6466 = vand.u32 2147483647, %v6187
        %vm6467 = vcmp.eq.f32.partialorder %v6466, 8.507059e+37
        %v6468 = vand.u32 %v6187, 2147483648
        %v6469 = vor.u32 1.1754944e-38, %v6468
        %v6470 = vsel %vm6467, %v6469, %v6465
        %v6471 = vmul.f32 1.0, %v6470
        %v6472 = vrcp.pop %v6188
        %v6473 = vmul.f32 %v6188, %v6472
        %v6474 = vsub.f32 1.0, %v6473
        %v6475 = vmul.f32 %v6472, %v6474
        %v6476 = vadd.f32 %v6472, %v6475
        %vm6477 = vweird.f32 %v6188
        %vm6478 = vweird.f32 %v6472
        %vm6479 = vmor %vm6477, %vm6478
        %v6480 = vsel %vm6479, %v6472, %v6476
        %v6481 = vand.u32 2147483647, %v6188
        %vm6482 = vcmp.eq.f32.partialorder %v6481, 8.507059e+37
        %v6483 = vand.u32 %v6188, 2147483648
        %v6484 = vor.u32 1.1754944e-38, %v6483
        %v6485 = vsel %vm6482, %v6484, %v6480
        %v6486 = vmul.f32 1.0, %v6485
        %v6487 = vrcp.pop %v6189
        %v6488 = vmul.f32 %v6189, %v6487
        %v6489 = vsub.f32 1.0, %v6488
        %v6490 = vmul.f32 %v6487, %v6489
        %v6491 = vadd.f32 %v6487, %v6490
        %vm6492 = vweird.f32 %v6189
        %vm6493 = vweird.f32 %v6487
        %vm6494 = vmor %vm6492, %vm6493
        %v6495 = vsel %vm6494, %v6487, %v6491
        %v6496 = vand.u32 2147483647, %v6189
        %vm6497 = vcmp.eq.f32.partialorder %v6496, 8.507059e+37
        %v6498 = vand.u32 %v6189, 2147483648
        %v6499 = vor.u32 1.1754944e-38, %v6498
        %v6500 = vsel %vm6497, %v6499, %v6495
        %v6501 = vmul.f32 1.0, %v6500
        %v6502 = vrcp.pop %v6190
        %v6503 = vmul.f32 %v6190, %v6502
        %v6504 = vsub.f32 1.0, %v6503
        %v6505 = vmul.f32 %v6502, %v6504
        %v6506 = vadd.f32 %v6502, %v6505
        %vm6507 = vweird.f32 %v6190
        %vm6508 = vweird.f32 %v6502
        %vm6509 = vmor %vm6507, %vm6508
        %v6510 = vsel %vm6509, %v6502, %v6506
        %v6511 = vand.u32 2147483647, %v6190
        %vm6512 = vcmp.eq.f32.partialorder %v6511, 8.507059e+37
        %v6513 = vand.u32 %v6190, 2147483648
        %v6514 = vor.u32 1.1754944e-38, %v6513
        %v6515 = vsel %vm6512, %v6514, %v6510
        %v6516 = vmul.f32 1.0, %v6515
        %v6517 = vrcp.pop %v6191
        %v6518 = vmul.f32 %v6191, %v6517
        %v6519 = vsub.f32 1.0, %v6518
        %v6520 = vmul.f32 %v6517, %v6519
        %v6521 = vadd.f32 %v6517, %v6520
        %vm6522 = vweird.f32 %v6191
        %vm6523 = vweird.f32 %v6517
        %vm6524 = vmor %vm6522, %vm6523
        %v6525 = vsel %vm6524, %v6517, %v6521
        %v6526 = vand.u32 2147483647, %v6191
        %vm6527 = vcmp.eq.f32.partialorder %v6526, 8.507059e+37
        %v6528 = vand.u32 %v6191, 2147483648
        %v6529 = vor.u32 1.1754944e-38, %v6528
        %v6530 = vsel %vm6527, %v6529, %v6525
        %v6531 = vmul.f32 1.0, %v6530
        %v6532 = vrcp.pop %v6192
        %v6533 = vmul.f32 %v6192, %v6532
        %v6534 = vsub.f32 1.0, %v6533
        %v6535 = vmul.f32 %v6532, %v6534
        %v6536 = vadd.f32 %v6532, %v6535
        %vm6537 = vweird.f32 %v6192
        %vm6538 = vweird.f32 %v6532
        %vm6539 = vmor %vm6537, %vm6538
        %v6540 = vsel %vm6539, %v6532, %v6536
        %v6541 = vand.u32 2147483647, %v6192
        %vm6542 = vcmp.eq.f32.partialorder %v6541, 8.507059e+37
        %v6543 = vand.u32 %v6192, 2147483648
        %v6544 = vor.u32 1.1754944e-38, %v6543
        %v6545 = vsel %vm6542, %v6544, %v6540
        %v6546 = vmul.f32 1.0, %v6545
        %v6547 = vrcp.pop %v6193
        %v6548 = vmul.f32 %v6193, %v6547
        %v6549 = vsub.f32 1.0, %v6548
        %v6550 = vmul.f32 %v6547, %v6549
        %v6551 = vadd.f32 %v6547, %v6550
        %vm6552 = vweird.f32 %v6193
        %vm6553 = vweird.f32 %v6547
        %vm6554 = vmor %vm6552, %vm6553
        %v6555 = vsel %vm6554, %v6547, %v6551
        %v6556 = vand.u32 2147483647, %v6193
        %vm6557 = vcmp.eq.f32.partialorder %v6556, 8.507059e+37
        %v6558 = vand.u32 %v6193, 2147483648
        %v6559 = vor.u32 1.1754944e-38, %v6558
        %v6560 = vsel %vm6557, %v6559, %v6555
        %v6561 = vmul.f32 1.0, %v6560
        %v6562 = vrcp.pop %v6194
        %v6563 = vmul.f32 %v6194, %v6562
        %v6564 = vsub.f32 1.0, %v6563
        %v6565 = vmul.f32 %v6562, %v6564
        %v6566 = vadd.f32 %v6562, %v6565
        %vm6567 = vweird.f32 %v6194
        %vm6568 = vweird.f32 %v6562
        %vm6569 = vmor %vm6567, %vm6568
        %v6570 = vsel %vm6569, %v6562, %v6566
        %v6571 = vand.u32 2147483647, %v6194
        %vm6572 = vcmp.eq.f32.partialorder %v6571, 8.507059e+37
        %v6573 = vand.u32 %v6194, 2147483648
        %v6574 = vor.u32 1.1754944e-38, %v6573
        %v6575 = vsel %vm6572, %v6574, %v6570
        %v6576 = vmul.f32 1.0, %v6575
        %v6577 = vrcp.pop %v6195
        %v6578 = vmul.f32 %v6195, %v6577
        %v6579 = vsub.f32 1.0, %v6578
        %v6580 = vmul.f32 %v6577, %v6579
        %v6581 = vadd.f32 %v6577, %v6580
        %vm6582 = vweird.f32 %v6195
        %vm6583 = vweird.f32 %v6577
        %vm6584 = vmor %vm6582, %vm6583
        %v6585 = vsel %vm6584, %v6577, %v6581
        %v6586 = vand.u32 2147483647, %v6195
        %vm6587 = vcmp.eq.f32.partialorder %v6586, 8.507059e+37
        %v6588 = vand.u32 %v6195, 2147483648
        %v6589 = vor.u32 1.1754944e-38, %v6588
        %v6590 = vsel %vm6587, %v6589, %v6585
        %v6591 = vmul.f32 1.0, %v6590
        %v6592 = vrcp.pop %v6196
        %v6593 = vmul.f32 %v6196, %v6592
        %v6594 = vsub.f32 1.0, %v6593
        %v6595 = vmul.f32 %v6592, %v6594
        %v6596 = vadd.f32 %v6592, %v6595
        %vm6597 = vweird.f32 %v6196
        %vm6598 = vweird.f32 %v6592
        %vm6599 = vmor %vm6597, %vm6598
        %v6600 = vsel %vm6599, %v6592, %v6596
        %v6601 = vand.u32 2147483647, %v6196
        %vm6602 = vcmp.eq.f32.partialorder %v6601, 8.507059e+37
        %v6603 = vand.u32 %v6196, 2147483648
        %v6604 = vor.u32 1.1754944e-38, %v6603
        %v6605 = vsel %vm6602, %v6604, %v6600
        %v6606 = vmul.f32 1.0, %v6605
        %v6607 = vrcp.pop %v6197
        %v6608 = vmul.f32 %v6197, %v6607
        %v6609 = vsub.f32 1.0, %v6608
        %v6610 = vmul.f32 %v6607, %v6609
        %v6611 = vadd.f32 %v6607, %v6610
        %vm6612 = vweird.f32 %v6197
        %vm6613 = vweird.f32 %v6607
        %vm6614 = vmor %vm6612, %vm6613
        %v6615 = vsel %vm6614, %v6607, %v6611
        %v6616 = vand.u32 2147483647, %v6197
        %vm6617 = vcmp.eq.f32.partialorder %v6616, 8.507059e+37
        %v6618 = vand.u32 %v6197, 2147483648
        %v6619 = vor.u32 1.1754944e-38, %v6618
        %v6620 = vsel %vm6617, %v6619, %v6615
        %v6621 = vmul.f32 1.0, %v6620
        %v6622 = vrcp.pop %v6198
        %v6623 = vmul.f32 %v6198, %v6622
        %v6624 = vsub.f32 1.0, %v6623
        %v6625 = vmul.f32 %v6622, %v6624
        %v6626 = vadd.f32 %v6622, %v6625
        %vm6627 = vweird.f32 %v6198
        %vm6628 = vweird.f32 %v6622
        %vm6629 = vmor %vm6627, %vm6628
        %v6630 = vsel %vm6629, %v6622, %v6626
        %v6631 = vand.u32 2147483647, %v6198
        %vm6632 = vcmp.eq.f32.partialorder %v6631, 8.507059e+37
        %v6633 = vand.u32 %v6198, 2147483648
        %v6634 = vor.u32 1.1754944e-38, %v6633
        %v6635 = vsel %vm6632, %v6634, %v6630
        %v6636 = vmul.f32 1.0, %v6635
        %v6637 = vrcp.pop %v6199
        %v6638 = vmul.f32 %v6199, %v6637
        %v6639 = vsub.f32 1.0, %v6638
        %v6640 = vmul.f32 %v6637, %v6639
        %v6641 = vadd.f32 %v6637, %v6640
        %vm6642 = vweird.f32 %v6199
        %vm6643 = vweird.f32 %v6637
        %vm6644 = vmor %vm6642, %vm6643
        %v6645 = vsel %vm6644, %v6637, %v6641
        %v6646 = vand.u32 2147483647, %v6199
        %vm6647 = vcmp.eq.f32.partialorder %v6646, 8.507059e+37
        %v6648 = vand.u32 %v6199, 2147483648
        %v6649 = vor.u32 1.1754944e-38, %v6648
        %v6650 = vsel %vm6647, %v6649, %v6645
        %v6651 = vmul.f32 1.0, %v6650
        %v6652 = vrcp.pop %v6200
        %v6653 = vmul.f32 %v6200, %v6652
        %v6654 = vsub.f32 1.0, %v6653
        %v6655 = vmul.f32 %v6652, %v6654
        %v6656 = vadd.f32 %v6652, %v6655
        %vm6657 = vweird.f32 %v6200
        %vm6658 = vweird.f32 %v6652
        %vm6659 = vmor %vm6657, %vm6658
        %v6660 = vsel %vm6659, %v6652, %v6656
        %v6661 = vand.u32 2147483647, %v6200
        %vm6662 = vcmp.eq.f32.partialorder %v6661, 8.507059e+37
        %v6663 = vand.u32 %v6200, 2147483648
        %v6664 = vor.u32 1.1754944e-38, %v6663
        %v6665 = vsel %vm6662, %v6664, %v6660
        %v6666 = vmul.f32 1.0, %v6665
        %v6667 = vrcp.pop %v6201
        %v6668 = vmul.f32 %v6201, %v6667
        %v6669 = vsub.f32 1.0, %v6668
        %v6670 = vmul.f32 %v6667, %v6669
        %v6671 = vadd.f32 %v6667, %v6670
        %vm6672 = vweird.f32 %v6201
        %vm6673 = vweird.f32 %v6667
        %vm6674 = vmor %vm6672, %vm6673
        %v6675 = vsel %vm6674, %v6667, %v6671
        %v6676 = vand.u32 2147483647, %v6201
        %vm6677 = vcmp.eq.f32.partialorder %v6676, 8.507059e+37
        %v6678 = vand.u32 %v6201, 2147483648
        %v6679 = vor.u32 1.1754944e-38, %v6678
        %v6680 = vsel %vm6677, %v6679, %v6675
        %v6681 = vmul.f32 1.0, %v6680
        %v6682 = vmul.f32 %v6042, %v6216
        %v6683 = vmul.f32 %v6043, %v6231
        %v6684 = vmul.f32 %v6044, %v6246
        %v6685 = vmul.f32 %v6045, %v6261
        %v6686 = vmul.f32 %v6046, %v6276
        %v6687 = vmul.f32 %v6047, %v6291
        %v6688 = vmul.f32 %v6048, %v6306
        %v6689 = vmul.f32 %v6049, %v6321
        %v6690 = vmul.f32 %v6050, %v6336
        %v6691 = vmul.f32 %v6051, %v6351
        %v6692 = vmul.f32 %v6052, %v6366
        %v6693 = vmul.f32 %v6053, %v6381
        %v6694 = vmul.f32 %v6054, %v6396
        %v6695 = vmul.f32 %v6055, %v6411
        %v6696 = vmul.f32 %v6056, %v6426
        %v6697 = vmul.f32 %v6057, %v6441
        %v6698 = vmul.f32 %v6058, %v6456
        %v6699 = vmul.f32 %v6059, %v6471
        %v6700 = vmul.f32 %v6060, %v6486
        %v6701 = vmul.f32 %v6061, %v6501
        %v6702 = vmul.f32 %v6062, %v6516
        %v6703 = vmul.f32 %v6063, %v6531
        %v6704 = vmul.f32 %v6064, %v6546
        %v6705 = vmul.f32 %v6065, %v6561
        %v6706 = vmul.f32 %v6066, %v6576
        %v6707 = vmul.f32 %v6067, %v6591
        %v6708 = vmul.f32 %v6068, %v6606
        %v6709 = vmul.f32 %v6069, %v6621
        %v6710 = vmul.f32 %v6070, %v6636
        %v6711 = vmul.f32 %v6071, %v6651
        %v6712 = vmul.f32 %v6072, %v6666
        %v6713 = vmul.f32 %v6073, %v6681
        %v6714 = vld [vmem:[%s13] sm:$0x1]
        %v6715 = vrot.slane %v6682, 7
        %v6716 = vrot.slane %v6683, 7
        %v6717 = vrot.slane %v6684, 7
        %v6718 = vrot.slane %v6685, 7
        %v6719 = vrot.slane %v6686, 7
        %v6720 = vrot.slane %v6687, 7
        %v6721 = vrot.slane %v6688, 7
        %v6722 = vrot.slane %v6689, 7
        %v6723 = vrot.slane %v6690, 7
        %v6724 = vrot.slane %v6691, 7
        %v6725 = vrot.slane %v6692, 7
        %v6726 = vrot.slane %v6693, 7
        %v6727 = vrot.slane %v6694, 7
        %v6728 = vrot.slane %v6695, 7
        %v6729 = vrot.slane %v6696, 7
        %v6730 = vrot.slane %v6697, 7
        %v6731 = vrot.slane %v6698, 7
        %v6732 = vrot.slane %v6699, 7
        %v6733 = vrot.slane %v6700, 7
        %v6734 = vrot.slane %v6701, 7
        %v6735 = vrot.slane %v6702, 7
        %v6736 = vrot.slane %v6703, 7
        %v6737 = vrot.slane %v6704, 7
        %v6738 = vrot.slane %v6705, 7
        %v6739 = vrot.slane %v6706, 7
        %v6740 = vrot.slane %v6707, 7
        %v6741 = vrot.slane %v6708, 7
        %v6742 = vrot.slane %v6709, 7
        %v6743 = vrot.slane %v6710, 7
        %v6744 = vrot.slane %v6711, 7
        %v6745 = vrot.slane %v6712, 7
        %v6746 = vrot.slane %v6713, 7
        %v6747 = vsel %vm1728, %v6745, %v6746
        %v6748 = vsel %vm1728, %v6744, %v6745
        %v6749 = vsel %vm1728, %v6743, %v6744
        %v6750 = vsel %vm1728, %v6742, %v6743
        %v6751 = vsel %vm1728, %v6741, %v6742
        %v6752 = vsel %vm1728, %v6740, %v6741
        %v6753 = vsel %vm1728, %v6739, %v6740
        %v6754 = vsel %vm1728, %v6738, %v6739
        %v6755 = vsel %vm1728, %v6737, %v6738
        %v6756 = vsel %vm1728, %v6736, %v6737
        %v6757 = vsel %vm1728, %v6735, %v6736
        %v6758 = vsel %vm1728, %v6734, %v6735
        %v6759 = vsel %vm1728, %v6733, %v6734
        %v6760 = vsel %vm1728, %v6732, %v6733
        %v6761 = vsel %vm1728, %v6731, %v6732
        %v6762 = vsel %vm1728, %v6730, %v6731
        %v6763 = vsel %vm1728, %v6729, %v6730
        %v6764 = vsel %vm1728, %v6728, %v6729
        %v6765 = vsel %vm1728, %v6727, %v6728
        %v6766 = vsel %vm1728, %v6726, %v6727
        %v6767 = vsel %vm1728, %v6725, %v6726
        %v6768 = vsel %vm1728, %v6724, %v6725
        %v6769 = vsel %vm1728, %v6723, %v6724
        %v6770 = vsel %vm1728, %v6722, %v6723
        %v6771 = vsel %vm1728, %v6721, %v6722
        %v6772 = vsel %vm1728, %v6720, %v6721
        %v6773 = vsel %vm1728, %v6719, %v6720
        %v6774 = vsel %vm1728, %v6718, %v6719
        %v6775 = vsel %vm1728, %v6717, %v6718
        %v6776 = vsel %vm1728, %v6716, %v6717
        %v6777 = vsel %vm1728, %v6715, %v6716
        %v6778 = vsel %vm1728, %v6746, %v6715
        %v6779 = vsel %vm1985, %v6748, 0.0
        %v6780 = vsel %vm1986, %v6747, 0.0
        %v6781 = vsel %vm1987, %v6778, 0.0
        %v6782 = vsel %vm1988, %v6777, 0.0
        %v6783 = vsel %vm1989, %v6776, 0.0
        %v6784 = vsel %vm1990, %v6775, 0.0
        %v6785 = vsel %vm1991, %v6774, 0.0
        %v6786 = vsel %vm1992, %v6773, 0.0
        %v6787 = vsel %vm1993, %v6772, 0.0
        %v6788 = vsel %vm1994, %v6771, 0.0
        %v6789 = vsel %vm1995, %v6770, 0.0
        %v6790 = vsel %vm1996, %v6769, 0.0
        %v6791 = vsel %vm1997, %v6768, 0.0
        %v6792 = vsel %vm1998, %v6767, 0.0
        %v6793 = vsel %vm1999, %v6766, 0.0
        %v6794 = vsel %vm2000, %v6765, 0.0
        %v6795 = vsel %vm2001, %v6764, 0.0
        %v6796 = vsel %vm2002, %v6763, 0.0
        %v6797 = vsel %vm2003, %v6762, 0.0
        %v6798 = vsel %vm2004, %v6761, 0.0
        %v6799 = vsel %vm2005, %v6760, 0.0
        %v6800 = vsel %vm2006, %v6759, 0.0
        %v6801 = vsel %vm2007, %v6758, 0.0
        %v6802 = vsel %vm2008, %v6757, 0.0
        %v6803 = vsel %vm2009, %v6756, 0.0
        %v6804 = vsel %vm2010, %v6755, 0.0
        %v6805 = vsel %vm2011, %v6754, 0.0
        %v6806 = vsel %vm2012, %v6753, 0.0
        %v6807 = vsel %vm2013, %v6752, 0.0
        %v6808 = vsel %vm2014, %v6751, 0.0
        %v6809 = vsel %vm2015, %v6750, 0.0
        %v6810 = vsel %vm2016, %v6749, 0.0
        %v6811 = vpack.c.bf16 %v6779, %v6779
        %v6812 = vpack.c.bf16 %v6780, %v6780
        %v6813 = vpack.c.bf16 %v6781, %v6781
        %v6814 = vpack.c.bf16 %v6782, %v6782
        %v6815 = vpack.c.bf16 %v6783, %v6783
        %v6816 = vpack.c.bf16 %v6784, %v6784
        %v6817 = vpack.c.bf16 %v6785, %v6785
        %v6818 = vpack.c.bf16 %v6786, %v6786
        %v6819 = vpack.c.bf16 %v6787, %v6787
        %v6820 = vpack.c.bf16 %v6788, %v6788
        %v6821 = vpack.c.bf16 %v6789, %v6789
        %v6822 = vpack.c.bf16 %v6790, %v6790
        %v6823 = vpack.c.bf16 %v6791, %v6791
        %v6824 = vpack.c.bf16 %v6792, %v6792
        %v6825 = vpack.c.bf16 %v6793, %v6793
        %v6826 = vpack.c.bf16 %v6794, %v6794
        %v6827 = vpack.c.bf16 %v6795, %v6795
        %v6828 = vpack.c.bf16 %v6796, %v6796
        %v6829 = vpack.c.bf16 %v6797, %v6797
        %v6830 = vpack.c.bf16 %v6798, %v6798
        %v6831 = vpack.c.bf16 %v6799, %v6799
        %v6832 = vpack.c.bf16 %v6800, %v6800
        %v6833 = vpack.c.bf16 %v6801, %v6801
        %v6834 = vpack.c.bf16 %v6802, %v6802
        %v6835 = vpack.c.bf16 %v6803, %v6803
        %v6836 = vpack.c.bf16 %v6804, %v6804
        %v6837 = vpack.c.bf16 %v6805, %v6805
        %v6838 = vpack.c.bf16 %v6806, %v6806
        %v6839 = vpack.c.bf16 %v6807, %v6807
        %v6840 = vpack.c.bf16 %v6808, %v6808
        %v6841 = vpack.c.bf16 %v6809, %v6809
        %v6842 = vpack.c.bf16 %v6810, %v6810
        %v6843 = vsel %vm2209, %v6712, 0.0
        %v6844 = vsel %vm2210, %v6713, 0.0
        %v6845 = vsel %vm2211, %v6682, 0.0
        %v6846 = vsel %vm2212, %v6683, 0.0
        %v6847 = vsel %vm2213, %v6684, 0.0
        %v6848 = vsel %vm2214, %v6685, 0.0
        %v6849 = vsel %vm2215, %v6686, 0.0
        %v6850 = vsel %vm2216, %v6687, 0.0
        %v6851 = vsel %vm2217, %v6688, 0.0
        %v6852 = vsel %vm2218, %v6689, 0.0
        %v6853 = vsel %vm2219, %v6690, 0.0
        %v6854 = vsel %vm2220, %v6691, 0.0
        %v6855 = vsel %vm2221, %v6692, 0.0
        %v6856 = vsel %vm2222, %v6693, 0.0
        %v6857 = vsel %vm2223, %v6694, 0.0
        %v6858 = vsel %vm2224, %v6695, 0.0
        %v6859 = vsel %vm2225, %v6696, 0.0
        %v6860 = vsel %vm2226, %v6697, 0.0
        %v6861 = vsel %vm2227, %v6698, 0.0
        %v6862 = vsel %vm2228, %v6699, 0.0
        %v6863 = vsel %vm2229, %v6700, 0.0
        %v6864 = vsel %vm2230, %v6701, 0.0
        %v6865 = vsel %vm2231, %v6702, 0.0
        %v6866 = vsel %vm2232, %v6703, 0.0
        %v6867 = vsel %vm2233, %v6704, 0.0
        %v6868 = vsel %vm2234, %v6705, 0.0
        %v6869 = vsel %vm2235, %v6706, 0.0
        %v6870 = vsel %vm2236, %v6707, 0.0
        %v6871 = vsel %vm2237, %v6708, 0.0
        %v6872 = vsel %vm2238, %v6709, 0.0
        %v6873 = vsel %vm2239, %v6710, 0.0
        %v6874 = vsel %vm2240, %v6711, 0.0
        %v6875 = vpack.c.bf16 %v6843, %v6843
        %v6876 = vpack.c.bf16 %v6844, %v6844
        %v6877 = vpack.c.bf16 %v6845, %v6845
        %v6878 = vpack.c.bf16 %v6846, %v6846
        %v6879 = vpack.c.bf16 %v6847, %v6847
        %v6880 = vpack.c.bf16 %v6848, %v6848
        %v6881 = vpack.c.bf16 %v6849, %v6849
        %v6882 = vpack.c.bf16 %v6850, %v6850
        %v6883 = vpack.c.bf16 %v6851, %v6851
        %v6884 = vpack.c.bf16 %v6852, %v6852
        %v6885 = vpack.c.bf16 %v6853, %v6853
        %v6886 = vpack.c.bf16 %v6854, %v6854
        %v6887 = vpack.c.bf16 %v6855, %v6855
        %v6888 = vpack.c.bf16 %v6856, %v6856
        %v6889 = vpack.c.bf16 %v6857, %v6857
        %v6890 = vpack.c.bf16 %v6858, %v6858
        %v6891 = vpack.c.bf16 %v6859, %v6859
        %v6892 = vpack.c.bf16 %v6860, %v6860
        %v6893 = vpack.c.bf16 %v6861, %v6861
        %v6894 = vpack.c.bf16 %v6862, %v6862
        %v6895 = vpack.c.bf16 %v6863, %v6863
        %v6896 = vpack.c.bf16 %v6864, %v6864
        %v6897 = vpack.c.bf16 %v6865, %v6865
        %v6898 = vpack.c.bf16 %v6866, %v6866
        %v6899 = vpack.c.bf16 %v6867, %v6867
        %v6900 = vpack.c.bf16 %v6868, %v6868
        %v6901 = vpack.c.bf16 %v6869, %v6869
        %v6902 = vpack.c.bf16 %v6870, %v6870
        %v6903 = vpack.c.bf16 %v6871, %v6871
        %v6904 = vpack.c.bf16 %v6872, %v6872
        %v6905 = vpack.c.bf16 %v6873, %v6873
        %v6906 = vpack.c.bf16 %v6874, %v6874
        %v6907 = vrot.slane %v6682, 1
        %v6908 = vrot.slane %v6683, 1
        %v6909 = vrot.slane %v6684, 1
        %v6910 = vrot.slane %v6685, 1
        %v6911 = vrot.slane %v6686, 1
        %v6912 = vrot.slane %v6687, 1
        %v6913 = vrot.slane %v6688, 1
        %v6914 = vrot.slane %v6689, 1
        %v6915 = vrot.slane %v6690, 1
        %v6916 = vrot.slane %v6691, 1
        %v6917 = vrot.slane %v6692, 1
        %v6918 = vrot.slane %v6693, 1
        %v6919 = vrot.slane %v6694, 1
        %v6920 = vrot.slane %v6695, 1
        %v6921 = vrot.slane %v6696, 1
        %v6922 = vrot.slane %v6697, 1
        %v6923 = vrot.slane %v6698, 1
        %v6924 = vrot.slane %v6699, 1
        %v6925 = vrot.slane %v6700, 1
        %v6926 = vrot.slane %v6701, 1
        %v6927 = vrot.slane %v6702, 1
        %v6928 = vrot.slane %v6703, 1
        %v6929 = vrot.slane %v6704, 1
        %v6930 = vrot.slane %v6705, 1
        %v6931 = vrot.slane %v6706, 1
        %v6932 = vrot.slane %v6707, 1
        %v6933 = vrot.slane %v6708, 1
        %v6934 = vrot.slane %v6709, 1
        %v6935 = vrot.slane %v6710, 1
        %v6936 = vrot.slane %v6711, 1
        %v6937 = vrot.slane %v6712, 1
        %v6938 = vrot.slane %v6713, 1
        %v6939 = vsel %vm2337, %v6937, %v6938
        %v6940 = vsel %vm2337, %v6936, %v6937
        %v6941 = vsel %vm2337, %v6935, %v6936
        %v6942 = vsel %vm2337, %v6934, %v6935
        %v6943 = vsel %vm2337, %v6933, %v6934
        %v6944 = vsel %vm2337, %v6932, %v6933
        %v6945 = vsel %vm2337, %v6931, %v6932
        %v6946 = vsel %vm2337, %v6930, %v6931
        %v6947 = vsel %vm2337, %v6929, %v6930
        %v6948 = vsel %vm2337, %v6928, %v6929
        %v6949 = vsel %vm2337, %v6927, %v6928
        %v6950 = vsel %vm2337, %v6926, %v6927
        %v6951 = vsel %vm2337, %v6925, %v6926
        %v6952 = vsel %vm2337, %v6924, %v6925
        %v6953 = vsel %vm2337, %v6923, %v6924
        %v6954 = vsel %vm2337, %v6922, %v6923
        %v6955 = vsel %vm2337, %v6921, %v6922
        %v6956 = vsel %vm2337, %v6920, %v6921
        %v6957 = vsel %vm2337, %v6919, %v6920
        %v6958 = vsel %vm2337, %v6918, %v6919
        %v6959 = vsel %vm2337, %v6917, %v6918
        %v6960 = vsel %vm2337, %v6916, %v6917
        %v6961 = vsel %vm2337, %v6915, %v6916
        %v6962 = vsel %vm2337, %v6914, %v6915
        %v6963 = vsel %vm2337, %v6913, %v6914
        %v6964 = vsel %vm2337, %v6912, %v6913
        %v6965 = vsel %vm2337, %v6911, %v6912
        %v6966 = vsel %vm2337, %v6910, %v6911
        %v6967 = vsel %vm2337, %v6909, %v6910
        %v6968 = vsel %vm2337, %v6908, %v6909
        %v6969 = vsel %vm2337, %v6907, %v6908
        %v6970 = vsel %vm2337, %v6938, %v6907
        %v6971 = vsel %vm2562, %v6939, 0.0
        %v6972 = vsel %vm2563, %v6970, 0.0
        %v6973 = vsel %vm2564, %v6969, 0.0
        %v6974 = vsel %vm2565, %v6968, 0.0
        %v6975 = vsel %vm2566, %v6967, 0.0
        %v6976 = vsel %vm2567, %v6966, 0.0
        %v6977 = vsel %vm2568, %v6965, 0.0
        %v6978 = vsel %vm2569, %v6964, 0.0
        %v6979 = vsel %vm2570, %v6963, 0.0
        %v6980 = vsel %vm2571, %v6962, 0.0
        %v6981 = vsel %vm2572, %v6961, 0.0
        %v6982 = vsel %vm2573, %v6960, 0.0
        %v6983 = vsel %vm2574, %v6959, 0.0
        %v6984 = vsel %vm2575, %v6958, 0.0
        %v6985 = vsel %vm2576, %v6957, 0.0
        %v6986 = vsel %vm2577, %v6956, 0.0
        %v6987 = vsel %vm2578, %v6955, 0.0
        %v6988 = vsel %vm2579, %v6954, 0.0
        %v6989 = vsel %vm2580, %v6953, 0.0
        %v6990 = vsel %vm2581, %v6952, 0.0
        %v6991 = vsel %vm2582, %v6951, 0.0
        %v6992 = vsel %vm2583, %v6950, 0.0
        %v6993 = vsel %vm2584, %v6949, 0.0
        %v6994 = vsel %vm2585, %v6948, 0.0
        %v6995 = vsel %vm2586, %v6947, 0.0
        %v6996 = vsel %vm2587, %v6946, 0.0
        %v6997 = vsel %vm2588, %v6945, 0.0
        %v6998 = vsel %vm2589, %v6944, 0.0
        %v6999 = vsel %vm2590, %v6943, 0.0
        %v7000 = vsel %vm2591, %v6942, 0.0
        %v7001 = vsel %vm2592, %v6941, 0.0
        %v7002 = vsel %vm2593, %v6940, 0.0
        %v7003 = vpack.c.bf16 %v6971, %v6971
        %v7004 = vpack.c.bf16 %v6972, %v6972
        %v7005 = vpack.c.bf16 %v6973, %v6973
        %v7006 = vpack.c.bf16 %v6974, %v6974
        %v7007 = vpack.c.bf16 %v6975, %v6975
        %v7008 = vpack.c.bf16 %v6976, %v6976
        %v7009 = vpack.c.bf16 %v6977, %v6977
        %v7010 = vpack.c.bf16 %v6978, %v6978
        %v7011 = vpack.c.bf16 %v6979, %v6979
        %v7012 = vpack.c.bf16 %v6980, %v6980
        %v7013 = vpack.c.bf16 %v6981, %v6981
        %v7014 = vpack.c.bf16 %v6982, %v6982
        %v7015 = vpack.c.bf16 %v6983, %v6983
        %v7016 = vpack.c.bf16 %v6984, %v6984
        %v7017 = vpack.c.bf16 %v6985, %v6985
        %v7018 = vpack.c.bf16 %v6986, %v6986
        %v7019 = vpack.c.bf16 %v6987, %v6987
        %v7020 = vpack.c.bf16 %v6988, %v6988
        %v7021 = vpack.c.bf16 %v6989, %v6989
        %v7022 = vpack.c.bf16 %v6990, %v6990
        %v7023 = vpack.c.bf16 %v6991, %v6991
        %v7024 = vpack.c.bf16 %v6992, %v6992
        %v7025 = vpack.c.bf16 %v6993, %v6993
        %v7026 = vpack.c.bf16 %v6994, %v6994
        %v7027 = vpack.c.bf16 %v6995, %v6995
        %v7028 = vpack.c.bf16 %v6996, %v6996
        %v7029 = vpack.c.bf16 %v6997, %v6997
        %v7030 = vpack.c.bf16 %v6998, %v6998
        %v7031 = vpack.c.bf16 %v6999, %v6999
        %v7032 = vpack.c.bf16 %v7000, %v7000
        %v7033 = vpack.c.bf16 %v7001, %v7001
        %v7034 = vpack.c.bf16 %v7002, %v7002
        %v7067 = vunpack.c.l.b16 %v6811
        %v7068 = vunpack.c.l.b16 %v6812
        %v7069 = vunpack.c.l.b16 %v6813
        %v7070 = vunpack.c.l.b16 %v6814
        %v7071 = vunpack.c.l.b16 %v6815
        %v7072 = vunpack.c.l.b16 %v6816
        %v7073 = vunpack.c.l.b16 %v6817
        %v7074 = vunpack.c.l.b16 %v6818
        %v7075 = vunpack.c.l.b16 %v6819
        %v7076 = vunpack.c.l.b16 %v6820
        %v7077 = vunpack.c.l.b16 %v6821
        %v7078 = vunpack.c.l.b16 %v6822
        %v7079 = vunpack.c.l.b16 %v6823
        %v7080 = vunpack.c.l.b16 %v6824
        %v7081 = vunpack.c.l.b16 %v6825
        %v7082 = vunpack.c.l.b16 %v6826
        %v7083 = vunpack.c.l.b16 %v6827
        %v7084 = vunpack.c.l.b16 %v6828
        %v7085 = vunpack.c.l.b16 %v6829
        %v7086 = vunpack.c.l.b16 %v6830
        %v7087 = vunpack.c.l.b16 %v6831
        %v7088 = vunpack.c.l.b16 %v6832
        %v7089 = vunpack.c.l.b16 %v6833
        %v7090 = vunpack.c.l.b16 %v6834
        %v7091 = vunpack.c.l.b16 %v6835
        %v7092 = vunpack.c.l.b16 %v6836
        %v7093 = vunpack.c.l.b16 %v6837
        %v7094 = vunpack.c.l.b16 %v6838
        %v7095 = vunpack.c.l.b16 %v6839
        %v7096 = vunpack.c.l.b16 %v6840
        %v7097 = vunpack.c.l.b16 %v6841
        %v7098 = vunpack.c.l.b16 %v6842
        %v7099 = vpack.c.b16 %v7068, %v7067
        %v7100 = vpack.c.b16 %v7070, %v7069
        %v7101 = vpack.c.b16 %v7072, %v7071
        %v7102 = vpack.c.b16 %v7074, %v7073
        %v7103 = vpack.c.b16 %v7076, %v7075
        %v7104 = vpack.c.b16 %v7078, %v7077
        %v7105 = vpack.c.b16 %v7080, %v7079
        %v7106 = vpack.c.b16 %v7082, %v7081
        %v7107 = vpack.c.b16 %v7084, %v7083
        %v7108 = vpack.c.b16 %v7086, %v7085
        %v7109 = vpack.c.b16 %v7088, %v7087
        %v7110 = vpack.c.b16 %v7090, %v7089
        %v7111 = vpack.c.b16 %v7092, %v7091
        %v7112 = vpack.c.b16 %v7094, %v7093
        %v7113 = vpack.c.b16 %v7096, %v7095
        %v7114 = vpack.c.b16 %v7098, %v7097
        %v7147 = vunpack.c.l.b16 %v6875
        %v7148 = vunpack.c.l.b16 %v6876
        %v7149 = vunpack.c.l.b16 %v6877
        %v7150 = vunpack.c.l.b16 %v6878
        %v7151 = vunpack.c.l.b16 %v6879
        %v7152 = vunpack.c.l.b16 %v6880
        %v7153 = vunpack.c.l.b16 %v6881
        %v7154 = vunpack.c.l.b16 %v6882
        %v7155 = vunpack.c.l.b16 %v6883
        %v7156 = vunpack.c.l.b16 %v6884
        %v7157 = vunpack.c.l.b16 %v6885
        %v7158 = vunpack.c.l.b16 %v6886
        %v7159 = vunpack.c.l.b16 %v6887
        %v7160 = vunpack.c.l.b16 %v6888
        %v7161 = vunpack.c.l.b16 %v6889
        %v7162 = vunpack.c.l.b16 %v6890
        %v7163 = vunpack.c.l.b16 %v6891
        %v7164 = vunpack.c.l.b16 %v6892
        %v7165 = vunpack.c.l.b16 %v6893
        %v7166 = vunpack.c.l.b16 %v6894
        %v7167 = vunpack.c.l.b16 %v6895
        %v7168 = vunpack.c.l.b16 %v6896
        %v7169 = vunpack.c.l.b16 %v6897
        %v7170 = vunpack.c.l.b16 %v6898
        %v7171 = vunpack.c.l.b16 %v6899
        %v7172 = vunpack.c.l.b16 %v6900
        %v7173 = vunpack.c.l.b16 %v6901
        %v7174 = vunpack.c.l.b16 %v6902
        %v7175 = vunpack.c.l.b16 %v6903
        %v7176 = vunpack.c.l.b16 %v6904
        %v7177 = vunpack.c.l.b16 %v6905
        %v7178 = vunpack.c.l.b16 %v6906
        %v7179 = vpack.c.b16 %v7148, %v7147
        %v7180 = vpack.c.b16 %v7150, %v7149
        %v7181 = vpack.c.b16 %v7152, %v7151
        %v7182 = vpack.c.b16 %v7154, %v7153
        %v7183 = vpack.c.b16 %v7156, %v7155
        %v7184 = vpack.c.b16 %v7158, %v7157
        %v7185 = vpack.c.b16 %v7160, %v7159
        %v7186 = vpack.c.b16 %v7162, %v7161
        %v7187 = vpack.c.b16 %v7164, %v7163
        %v7188 = vpack.c.b16 %v7166, %v7165
        %v7189 = vpack.c.b16 %v7168, %v7167
        %v7190 = vpack.c.b16 %v7170, %v7169
        %v7191 = vpack.c.b16 %v7172, %v7171
        %v7192 = vpack.c.b16 %v7174, %v7173
        %v7193 = vpack.c.b16 %v7176, %v7175
        %v7194 = vpack.c.b16 %v7178, %v7177
        %7195 = vrot.lane.b32.xlu0 %v7179, 64
        %v7196 = vpop.permute.xlu0 %7195
        %7197 = vrot.lane.b32.xlu0 %v7180, 64
        %v7198 = vpop.permute.xlu0 %7197
        %7199 = vrot.lane.b32.xlu0 %v7181, 64
        %v7200 = vpop.permute.xlu0 %7199
        %7201 = vrot.lane.b32.xlu0 %v7182, 64
        %v7202 = vpop.permute.xlu0 %7201
        %7203 = vrot.lane.b32.xlu0 %v7183, 64
        %v7204 = vpop.permute.xlu0 %7203
        %7205 = vrot.lane.b32.xlu0 %v7184, 64
        %v7206 = vpop.permute.xlu0 %7205
        %7207 = vrot.lane.b32.xlu0 %v7185, 64
        %v7208 = vpop.permute.xlu0 %7207
        %7209 = vrot.lane.b32.xlu0 %v7186, 64
        %v7210 = vpop.permute.xlu0 %7209
        %7211 = vrot.lane.b32.xlu0 %v7187, 64
        %v7212 = vpop.permute.xlu0 %7211
        %7213 = vrot.lane.b32.xlu0 %v7188, 64
        %v7214 = vpop.permute.xlu0 %7213
        %7215 = vrot.lane.b32.xlu0 %v7189, 64
        %v7216 = vpop.permute.xlu0 %7215
        %7217 = vrot.lane.b32.xlu0 %v7190, 64
        %v7218 = vpop.permute.xlu0 %7217
        %7219 = vrot.lane.b32.xlu0 %v7191, 64
        %v7220 = vpop.permute.xlu0 %7219
        %7221 = vrot.lane.b32.xlu0 %v7192, 64
        %v7222 = vpop.permute.xlu0 %7221
        %7223 = vrot.lane.b32.xlu0 %v7193, 64
        %v7224 = vpop.permute.xlu0 %7223
        %7225 = vrot.lane.b32.xlu0 %v7194, 64
        %v7226 = vpop.permute.xlu0 %7225
        %v7259 = vunpack.c.l.b16 %v7003
        %v7260 = vunpack.c.l.b16 %v7004
        %v7261 = vunpack.c.l.b16 %v7005
        %v7262 = vunpack.c.l.b16 %v7006
        %v7263 = vunpack.c.l.b16 %v7007
        %v7264 = vunpack.c.l.b16 %v7008
        %v7265 = vunpack.c.l.b16 %v7009
        %v7266 = vunpack.c.l.b16 %v7010
        %v7267 = vunpack.c.l.b16 %v7011
        %v7268 = vunpack.c.l.b16 %v7012
        %v7269 = vunpack.c.l.b16 %v7013
        %v7270 = vunpack.c.l.b16 %v7014
        %v7271 = vunpack.c.l.b16 %v7015
        %v7272 = vunpack.c.l.b16 %v7016
        %v7273 = vunpack.c.l.b16 %v7017
        %v7274 = vunpack.c.l.b16 %v7018
        %v7275 = vunpack.c.l.b16 %v7019
        %v7276 = vunpack.c.l.b16 %v7020
        %v7277 = vunpack.c.l.b16 %v7021
        %v7278 = vunpack.c.l.b16 %v7022
        %v7279 = vunpack.c.l.b16 %v7023
        %v7280 = vunpack.c.l.b16 %v7024
        %v7281 = vunpack.c.l.b16 %v7025
        %v7282 = vunpack.c.l.b16 %v7026
        %v7283 = vunpack.c.l.b16 %v7027
        %v7284 = vunpack.c.l.b16 %v7028
        %v7285 = vunpack.c.l.b16 %v7029
        %v7286 = vunpack.c.l.b16 %v7030
        %v7287 = vunpack.c.l.b16 %v7031
        %v7288 = vunpack.c.l.b16 %v7032
        %v7289 = vunpack.c.l.b16 %v7033
        %v7290 = vunpack.c.l.b16 %v7034
        %v7291 = vpack.c.b16 %v7260, %v7259
        %v7292 = vpack.c.b16 %v7262, %v7261
        %v7293 = vpack.c.b16 %v7264, %v7263
        %v7294 = vpack.c.b16 %v7266, %v7265
        %v7295 = vpack.c.b16 %v7268, %v7267
        %v7296 = vpack.c.b16 %v7270, %v7269
        %v7297 = vpack.c.b16 %v7272, %v7271
        %v7298 = vpack.c.b16 %v7274, %v7273
        %v7299 = vpack.c.b16 %v7276, %v7275
        %v7300 = vpack.c.b16 %v7278, %v7277
        %v7301 = vpack.c.b16 %v7280, %v7279
        %v7302 = vpack.c.b16 %v7282, %v7281
        %v7303 = vpack.c.b16 %v7284, %v7283
        %v7304 = vpack.c.b16 %v7286, %v7285
        %v7305 = vpack.c.b16 %v7288, %v7287
        %v7306 = vpack.c.b16 %v7290, %v7289
        %v7309 = vsel %vm3010, %v7099, %v7196
        %v7313 = vsel %vm3010, %v7100, %v7198
        %v7317 = vsel %vm3010, %v7101, %v7200
        %v7321 = vsel %vm3010, %v7102, %v7202
        %v7325 = vsel %vm3010, %v7103, %v7204
        %v7329 = vsel %vm3010, %v7104, %v7206
        %v7333 = vsel %vm3010, %v7105, %v7208
        %v7337 = vsel %vm3010, %v7106, %v7210
        %v7341 = vsel %vm3010, %v7107, %v7212
        %v7345 = vsel %vm3010, %v7108, %v7214
        %v7349 = vsel %vm3010, %v7109, %v7216
        %v7353 = vsel %vm3010, %v7110, %v7218
        %v7357 = vsel %vm3010, %v7111, %v7220
        %v7361 = vsel %vm3010, %v7112, %v7222
        %v7365 = vsel %vm3010, %v7113, %v7224
        %v7369 = vsel %vm3010, %v7114, %v7226
        %v7371 = vld [vmem:[%s12] sm:$0xf]
        %v7372 = vld [vmem:[%s12 + $0x4] sm:$0xf]
        %v7373 = vld [vmem:[%s12 + $0x8] sm:$0xf]
        %v7374 = vld [vmem:[%s12 + $0xc] sm:$0xf]
        %v7375 = vld [vmem:[%s12 + $0x10] sm:$0xf]
        %v7376 = vld [vmem:[%s12 + $0x14] sm:$0xf]
        %v7377 = vld [vmem:[%s12 + $0x18] sm:$0xf]
        %v7378 = vld [vmem:[%s12 + $0x1c] sm:$0xf]
        %v7379 = vld [vmem:[%s12 + $0x20] sm:$0xf]
        %v7380 = vld [vmem:[%s12 + $0x24] sm:$0xf]
        %v7381 = vld [vmem:[%s12 + $0x28] sm:$0xf]
        %v7382 = vld [vmem:[%s12 + $0x2c] sm:$0xf]
        %v7383 = vld [vmem:[%s12 + $0x30] sm:$0xf]
        %v7384 = vld [vmem:[%s12 + $0x34] sm:$0xf]
        %v7385 = vld [vmem:[%s12 + $0x38] sm:$0xf]
        %v7386 = vld [vmem:[%s12 + $0x3c] sm:$0xf]
        %v7387 = vld [vmem:[%s12 + $0x40] sm:$0xf]
        %v7388 = vld [vmem:[%s12 + $0x44] sm:$0xf]
        %v7389 = vld [vmem:[%s12 + $0x48] sm:$0xf]
        %v7390 = vld [vmem:[%s12 + $0x4c] sm:$0xf]
        %v7391 = vld [vmem:[%s12 + $0x50] sm:$0xf]
        %v7392 = vld [vmem:[%s12 + $0x54] sm:$0xf]
        %v7393 = vld [vmem:[%s12 + $0x58] sm:$0xf]
        %v7394 = vld [vmem:[%s12 + $0x5c] sm:$0xf]
        %v7395 = vsel %vm3183, %v6778, 0.0
        %v7396 = vsel %vm3184, %v6777, 0.0
        %v7397 = vsel %vm3185, %v6776, 0.0
        %v7398 = vsel %vm3186, %v6775, 0.0
        %v7399 = vsel %vm3187, %v6774, 0.0
        %v7400 = vsel %vm3188, %v6773, 0.0
        %v7401 = vsel %vm3189, %v6772, 0.0
        %v7402 = vsel %vm3190, %v6771, 0.0
        %v7403 = vsel %vm3191, %v6770, 0.0
        %v7404 = vsel %vm3192, %v6769, 0.0
        %v7405 = vsel %vm3193, %v6768, 0.0
        %v7406 = vsel %vm3194, %v6767, 0.0
        %v7407 = vsel %vm3195, %v6766, 0.0
        %v7408 = vsel %vm3196, %v6765, 0.0
        %v7409 = vsel %vm3197, %v6764, 0.0
        %v7410 = vsel %vm3198, %v6763, 0.0
        %v7411 = vsel %vm3199, %v6762, 0.0
        %v7412 = vsel %vm3200, %v6761, 0.0
        %v7413 = vsel %vm3201, %v6760, 0.0
        %v7414 = vsel %vm3202, %v6759, 0.0
        %v7415 = vsel %vm3203, %v6758, 0.0
        %v7416 = vsel %vm3204, %v6757, 0.0
        %v7417 = vsel %vm3205, %v6756, 0.0
        %v7418 = vsel %vm3206, %v6755, 0.0
        %v7419 = vsel %vm3207, %v6754, 0.0
        %v7420 = vsel %vm3208, %v6753, 0.0
        %v7421 = vsel %vm3209, %v6752, 0.0
        %v7422 = vsel %vm3210, %v6751, 0.0
        %v7423 = vsel %vm3211, %v6750, 0.0
        %v7424 = vsel %vm3212, %v6749, 0.0
        %v7425 = vsel %vm3213, %v6748, 0.0
        %v7426 = vsel %vm3214, %v6747, 0.0
        %v7427 = vpack.c.bf16 %v7395, %v7395
        %v7428 = vpack.c.bf16 %v7396, %v7396
        %v7429 = vpack.c.bf16 %v7397, %v7397
        %v7430 = vpack.c.bf16 %v7398, %v7398
        %v7431 = vpack.c.bf16 %v7399, %v7399
        %v7432 = vpack.c.bf16 %v7400, %v7400
        %v7433 = vpack.c.bf16 %v7401, %v7401
        %v7434 = vpack.c.bf16 %v7402, %v7402
        %v7435 = vpack.c.bf16 %v7403, %v7403
        %v7436 = vpack.c.bf16 %v7404, %v7404
        %v7437 = vpack.c.bf16 %v7405, %v7405
        %v7438 = vpack.c.bf16 %v7406, %v7406
        %v7439 = vpack.c.bf16 %v7407, %v7407
        %v7440 = vpack.c.bf16 %v7408, %v7408
        %v7441 = vpack.c.bf16 %v7409, %v7409
        %v7442 = vpack.c.bf16 %v7410, %v7410
        %v7443 = vpack.c.bf16 %v7411, %v7411
        %v7444 = vpack.c.bf16 %v7412, %v7412
        %v7445 = vpack.c.bf16 %v7413, %v7413
        %v7446 = vpack.c.bf16 %v7414, %v7414
        %v7447 = vpack.c.bf16 %v7415, %v7415
        %v7448 = vpack.c.bf16 %v7416, %v7416
        %v7449 = vpack.c.bf16 %v7417, %v7417
        %v7450 = vpack.c.bf16 %v7418, %v7418
        %v7451 = vpack.c.bf16 %v7419, %v7419
        %v7452 = vpack.c.bf16 %v7420, %v7420
        %v7453 = vpack.c.bf16 %v7421, %v7421
        %v7454 = vpack.c.bf16 %v7422, %v7422
        %v7455 = vpack.c.bf16 %v7423, %v7423
        %v7456 = vpack.c.bf16 %v7424, %v7424
        %v7457 = vpack.c.bf16 %v7425, %v7425
        %v7458 = vpack.c.bf16 %v7426, %v7426
        %v7459 = vpack.c.bf16 %v6682, %v6682
        %v7460 = vpack.c.bf16 %v6683, %v6683
        %v7461 = vpack.c.bf16 %v6684, %v6684
        %v7462 = vpack.c.bf16 %v6685, %v6685
        %v7463 = vpack.c.bf16 %v6686, %v6686
        %v7464 = vpack.c.bf16 %v6687, %v6687
        %v7465 = vpack.c.bf16 %v6688, %v6688
        %v7466 = vpack.c.bf16 %v6689, %v6689
        %v7467 = vpack.c.bf16 %v6690, %v6690
        %v7468 = vpack.c.bf16 %v6691, %v6691
        %v7469 = vpack.c.bf16 %v6692, %v6692
        %v7470 = vpack.c.bf16 %v6693, %v6693
        %v7471 = vpack.c.bf16 %v6694, %v6694
        %v7472 = vpack.c.bf16 %v6695, %v6695
        %v7473 = vpack.c.bf16 %v6696, %v6696
        %v7474 = vpack.c.bf16 %v6697, %v6697
        %v7475 = vpack.c.bf16 %v6698, %v6698
        %v7476 = vpack.c.bf16 %v6699, %v6699
        %v7477 = vpack.c.bf16 %v6700, %v6700
        %v7478 = vpack.c.bf16 %v6701, %v6701
        %v7479 = vpack.c.bf16 %v6702, %v6702
        %v7480 = vpack.c.bf16 %v6703, %v6703
        %v7481 = vpack.c.bf16 %v6704, %v6704
        %v7482 = vpack.c.bf16 %v6705, %v6705
        %v7483 = vpack.c.bf16 %v6706, %v6706
        %v7484 = vpack.c.bf16 %v6707, %v6707
        %v7485 = vpack.c.bf16 %v6708, %v6708
        %v7486 = vpack.c.bf16 %v6709, %v6709
        %v7487 = vpack.c.bf16 %v6710, %v6710
        %v7488 = vpack.c.bf16 %v6711, %v6711
        %v7489 = vpack.c.bf16 %v6712, %v6712
        %v7490 = vpack.c.bf16 %v6713, %v6713
        %v7491 = vsel %vm3439, %v6969, 0.0
        %v7492 = vsel %vm3440, %v6968, 0.0
        %v7493 = vsel %vm3441, %v6967, 0.0
        %v7494 = vsel %vm3442, %v6966, 0.0
        %v7495 = vsel %vm3443, %v6965, 0.0
        %v7496 = vsel %vm3444, %v6964, 0.0
        %v7497 = vsel %vm3445, %v6963, 0.0
        %v7498 = vsel %vm3446, %v6962, 0.0
        %v7499 = vsel %vm3447, %v6961, 0.0
        %v7500 = vsel %vm3448, %v6960, 0.0
        %v7501 = vsel %vm3449, %v6959, 0.0
        %v7502 = vsel %vm3450, %v6958, 0.0
        %v7503 = vsel %vm3451, %v6957, 0.0
        %v7504 = vsel %vm3452, %v6956, 0.0
        %v7505 = vsel %vm3453, %v6955, 0.0
        %v7506 = vsel %vm3454, %v6954, 0.0
        %v7507 = vsel %vm3455, %v6953, 0.0
        %v7508 = vsel %vm3456, %v6952, 0.0
        %v7509 = vsel %vm3457, %v6951, 0.0
        %v7510 = vsel %vm3458, %v6950, 0.0
        %v7511 = vsel %vm3459, %v6949, 0.0
        %v7512 = vsel %vm3460, %v6948, 0.0
        %v7513 = vsel %vm3461, %v6947, 0.0
        %v7514 = vsel %vm3462, %v6946, 0.0
        %v7515 = vsel %vm3463, %v6945, 0.0
        %v7516 = vsel %vm3464, %v6944, 0.0
        %v7517 = vsel %vm3465, %v6943, 0.0
        %v7518 = vsel %vm3466, %v6942, 0.0
        %v7519 = vsel %vm3467, %v6941, 0.0
        %v7520 = vsel %vm3468, %v6940, 0.0
        %v7521 = vsel %vm3469, %v6939, 0.0
        %v7522 = vsel %vm3470, %v6970, 0.0
        %v7523 = vpack.c.bf16 %v7491, %v7491
        %v7524 = vpack.c.bf16 %v7492, %v7492
        %v7525 = vpack.c.bf16 %v7493, %v7493
        %v7526 = vpack.c.bf16 %v7494, %v7494
        %v7527 = vpack.c.bf16 %v7495, %v7495
        %v7528 = vpack.c.bf16 %v7496, %v7496
        %v7529 = vpack.c.bf16 %v7497, %v7497
        %v7530 = vpack.c.bf16 %v7498, %v7498
        %v7531 = vpack.c.bf16 %v7499, %v7499
        %v7532 = vpack.c.bf16 %v7500, %v7500
        %v7533 = vpack.c.bf16 %v7501, %v7501
        %v7534 = vpack.c.bf16 %v7502, %v7502
        %v7535 = vpack.c.bf16 %v7503, %v7503
        %v7536 = vpack.c.bf16 %v7504, %v7504
        %v7537 = vpack.c.bf16 %v7505, %v7505
        %v7538 = vpack.c.bf16 %v7506, %v7506
        %v7539 = vpack.c.bf16 %v7507, %v7507
        %v7540 = vpack.c.bf16 %v7508, %v7508
        %v7541 = vpack.c.bf16 %v7509, %v7509
        %v7542 = vpack.c.bf16 %v7510, %v7510
        %v7543 = vpack.c.bf16 %v7511, %v7511
        %v7544 = vpack.c.bf16 %v7512, %v7512
        %v7545 = vpack.c.bf16 %v7513, %v7513
        %v7546 = vpack.c.bf16 %v7514, %v7514
        %v7547 = vpack.c.bf16 %v7515, %v7515
        %v7548 = vpack.c.bf16 %v7516, %v7516
        %v7549 = vpack.c.bf16 %v7517, %v7517
        %v7550 = vpack.c.bf16 %v7518, %v7518
        %v7551 = vpack.c.bf16 %v7519, %v7519
        %v7552 = vpack.c.bf16 %v7520, %v7520
        %v7553 = vpack.c.bf16 %v7521, %v7521
        %v7554 = vpack.c.bf16 %v7522, %v7522
        %v7587 = vunpack.c.l.b16 %v7427
        %v7588 = vunpack.c.l.b16 %v7428
        %v7589 = vunpack.c.l.b16 %v7429
        %v7590 = vunpack.c.l.b16 %v7430
        %v7591 = vunpack.c.l.b16 %v7431
        %v7592 = vunpack.c.l.b16 %v7432
        %v7593 = vunpack.c.l.b16 %v7433
        %v7594 = vunpack.c.l.b16 %v7434
        %v7595 = vunpack.c.l.b16 %v7435
        %v7596 = vunpack.c.l.b16 %v7436
        %v7597 = vunpack.c.l.b16 %v7437
        %v7598 = vunpack.c.l.b16 %v7438
        %v7599 = vunpack.c.l.b16 %v7439
        %v7600 = vunpack.c.l.b16 %v7440
        %v7601 = vunpack.c.l.b16 %v7441
        %v7602 = vunpack.c.l.b16 %v7442
        %v7603 = vunpack.c.l.b16 %v7443
        %v7604 = vunpack.c.l.b16 %v7444
        %v7605 = vunpack.c.l.b16 %v7445
        %v7606 = vunpack.c.l.b16 %v7446
        %v7607 = vunpack.c.l.b16 %v7447
        %v7608 = vunpack.c.l.b16 %v7448
        %v7609 = vunpack.c.l.b16 %v7449
        %v7610 = vunpack.c.l.b16 %v7450
        %v7611 = vunpack.c.l.b16 %v7451
        %v7612 = vunpack.c.l.b16 %v7452
        %v7613 = vunpack.c.l.b16 %v7453
        %v7614 = vunpack.c.l.b16 %v7454
        %v7615 = vunpack.c.l.b16 %v7455
        %v7616 = vunpack.c.l.b16 %v7456
        %v7617 = vunpack.c.l.b16 %v7457
        %v7618 = vunpack.c.l.b16 %v7458
        %v7619 = vpack.c.b16 %v7588, %v7587
        %v7620 = vpack.c.b16 %v7590, %v7589
        %v7621 = vpack.c.b16 %v7592, %v7591
        %v7622 = vpack.c.b16 %v7594, %v7593
        %v7623 = vpack.c.b16 %v7596, %v7595
        %v7624 = vpack.c.b16 %v7598, %v7597
        %v7625 = vpack.c.b16 %v7600, %v7599
        %v7626 = vpack.c.b16 %v7602, %v7601
        %v7627 = vpack.c.b16 %v7604, %v7603
        %v7628 = vpack.c.b16 %v7606, %v7605
        %v7629 = vpack.c.b16 %v7608, %v7607
        %v7630 = vpack.c.b16 %v7610, %v7609
        %v7631 = vpack.c.b16 %v7612, %v7611
        %v7632 = vpack.c.b16 %v7614, %v7613
        %v7633 = vpack.c.b16 %v7616, %v7615
        %v7634 = vpack.c.b16 %v7618, %v7617
        %v7667 = vunpack.c.l.b16 %v7459
        %v7668 = vunpack.c.l.b16 %v7460
        %v7669 = vunpack.c.l.b16 %v7461
        %v7670 = vunpack.c.l.b16 %v7462
        %v7671 = vunpack.c.l.b16 %v7463
        %v7672 = vunpack.c.l.b16 %v7464
        %v7673 = vunpack.c.l.b16 %v7465
        %v7674 = vunpack.c.l.b16 %v7466
        %v7675 = vunpack.c.l.b16 %v7467
        %v7676 = vunpack.c.l.b16 %v7468
        %v7677 = vunpack.c.l.b16 %v7469
        %v7678 = vunpack.c.l.b16 %v7470
        %v7679 = vunpack.c.l.b16 %v7471
        %v7680 = vunpack.c.l.b16 %v7472
        %v7681 = vunpack.c.l.b16 %v7473
        %v7682 = vunpack.c.l.b16 %v7474
        %v7683 = vunpack.c.l.b16 %v7475
        %v7684 = vunpack.c.l.b16 %v7476
        %v7685 = vunpack.c.l.b16 %v7477
        %v7686 = vunpack.c.l.b16 %v7478
        %v7687 = vunpack.c.l.b16 %v7479
        %v7688 = vunpack.c.l.b16 %v7480
        %v7689 = vunpack.c.l.b16 %v7481
        %v7690 = vunpack.c.l.b16 %v7482
        %v7691 = vunpack.c.l.b16 %v7483
        %v7692 = vunpack.c.l.b16 %v7484
        %v7693 = vunpack.c.l.b16 %v7485
        %v7694 = vunpack.c.l.b16 %v7486
        %v7695 = vunpack.c.l.b16 %v7487
        %v7696 = vunpack.c.l.b16 %v7488
        %v7697 = vunpack.c.l.b16 %v7489
        %v7698 = vunpack.c.l.b16 %v7490
        %v7699 = vpack.c.b16 %v7668, %v7667
        %v7700 = vpack.c.b16 %v7670, %v7669
        %v7701 = vpack.c.b16 %v7672, %v7671
        %v7702 = vpack.c.b16 %v7674, %v7673
        %v7703 = vpack.c.b16 %v7676, %v7675
        %v7704 = vpack.c.b16 %v7678, %v7677
        %v7705 = vpack.c.b16 %v7680, %v7679
        %v7706 = vpack.c.b16 %v7682, %v7681
        %v7707 = vpack.c.b16 %v7684, %v7683
        %v7708 = vpack.c.b16 %v7686, %v7685
        %v7709 = vpack.c.b16 %v7688, %v7687
        %v7710 = vpack.c.b16 %v7690, %v7689
        %v7711 = vpack.c.b16 %v7692, %v7691
        %v7712 = vpack.c.b16 %v7694, %v7693
        %v7713 = vpack.c.b16 %v7696, %v7695
        %v7714 = vpack.c.b16 %v7698, %v7697
        %7715 = vrot.lane.b32.xlu0 %v7699, 64
        %v7716 = vpop.permute.xlu0 %7715
        %7717 = vrot.lane.b32.xlu0 %v7700, 64
        %v7718 = vpop.permute.xlu0 %7717
        %7719 = vrot.lane.b32.xlu0 %v7701, 64
        %v7720 = vpop.permute.xlu0 %7719
        %7721 = vrot.lane.b32.xlu0 %v7702, 64
        %v7722 = vpop.permute.xlu0 %7721
        %7723 = vrot.lane.b32.xlu0 %v7703, 64
        %v7724 = vpop.permute.xlu0 %7723
        %7725 = vrot.lane.b32.xlu0 %v7704, 64
        %v7726 = vpop.permute.xlu0 %7725
        %7727 = vrot.lane.b32.xlu0 %v7705, 64
        %v7728 = vpop.permute.xlu0 %7727
        %7729 = vrot.lane.b32.xlu0 %v7706, 64
        %v7730 = vpop.permute.xlu0 %7729
        %7731 = vrot.lane.b32.xlu0 %v7707, 64
        %v7732 = vpop.permute.xlu0 %7731
        %7733 = vrot.lane.b32.xlu0 %v7708, 64
        %v7734 = vpop.permute.xlu0 %7733
        %7735 = vrot.lane.b32.xlu0 %v7709, 64
        %v7736 = vpop.permute.xlu0 %7735
        %7737 = vrot.lane.b32.xlu0 %v7710, 64
        %v7738 = vpop.permute.xlu0 %7737
        %7739 = vrot.lane.b32.xlu0 %v7711, 64
        %v7740 = vpop.permute.xlu0 %7739
        %7741 = vrot.lane.b32.xlu0 %v7712, 64
        %v7742 = vpop.permute.xlu0 %7741
        %7743 = vrot.lane.b32.xlu0 %v7713, 64
        %v7744 = vpop.permute.xlu0 %7743
        %7745 = vrot.lane.b32.xlu0 %v7714, 64
        %v7746 = vpop.permute.xlu0 %7745
        %v7779 = vunpack.c.l.b16 %v7523
        %v7780 = vunpack.c.l.b16 %v7524
        %v7781 = vunpack.c.l.b16 %v7525
        %v7782 = vunpack.c.l.b16 %v7526
        %v7783 = vunpack.c.l.b16 %v7527
        %v7784 = vunpack.c.l.b16 %v7528
        %v7785 = vunpack.c.l.b16 %v7529
        %v7786 = vunpack.c.l.b16 %v7530
        %v7787 = vunpack.c.l.b16 %v7531
        %v7788 = vunpack.c.l.b16 %v7532
        %v7789 = vunpack.c.l.b16 %v7533
        %v7790 = vunpack.c.l.b16 %v7534
        %v7791 = vunpack.c.l.b16 %v7535
        %v7792 = vunpack.c.l.b16 %v7536
        %v7793 = vunpack.c.l.b16 %v7537
        %v7794 = vunpack.c.l.b16 %v7538
        %v7795 = vunpack.c.l.b16 %v7539
        %v7796 = vunpack.c.l.b16 %v7540
        %v7797 = vunpack.c.l.b16 %v7541
        %v7798 = vunpack.c.l.b16 %v7542
        %v7799 = vunpack.c.l.b16 %v7543
        %v7800 = vunpack.c.l.b16 %v7544
        %v7801 = vunpack.c.l.b16 %v7545
        %v7802 = vunpack.c.l.b16 %v7546
        %v7803 = vunpack.c.l.b16 %v7547
        %v7804 = vunpack.c.l.b16 %v7548
        %v7805 = vunpack.c.l.b16 %v7549
        %v7806 = vunpack.c.l.b16 %v7550
        %v7807 = vunpack.c.l.b16 %v7551
        %v7808 = vunpack.c.l.b16 %v7552
        %v7809 = vunpack.c.l.b16 %v7553
        %v7810 = vunpack.c.l.b16 %v7554
        %v7811 = vpack.c.b16 %v7780, %v7779
        %v7812 = vpack.c.b16 %v7782, %v7781
        %v7813 = vpack.c.b16 %v7784, %v7783
        %v7814 = vpack.c.b16 %v7786, %v7785
        %v7815 = vpack.c.b16 %v7788, %v7787
        %v7816 = vpack.c.b16 %v7790, %v7789
        %v7817 = vpack.c.b16 %v7792, %v7791
        %v7818 = vpack.c.b16 %v7794, %v7793
        %v7819 = vpack.c.b16 %v7796, %v7795
        %v7820 = vpack.c.b16 %v7798, %v7797
        %v7821 = vpack.c.b16 %v7800, %v7799
        %v7822 = vpack.c.b16 %v7802, %v7801
        %v7823 = vpack.c.b16 %v7804, %v7803
        %v7824 = vpack.c.b16 %v7806, %v7805
        %v7825 = vpack.c.b16 %v7808, %v7807
        %v7826 = vpack.c.b16 %v7810, %v7809
        %v7829 = vsel %vm3010, %v7619, %v7716
        %v7833 = vsel %vm3010, %v7620, %v7718
        %v7837 = vsel %vm3010, %v7621, %v7720
        %v7841 = vsel %vm3010, %v7622, %v7722
        %v7845 = vsel %vm3010, %v7623, %v7724
        %v7849 = vsel %vm3010, %v7624, %v7726
        %v7853 = vsel %vm3010, %v7625, %v7728
        %v7857 = vsel %vm3010, %v7626, %v7730
        %v7861 = vsel %vm3010, %v7627, %v7732
        %v7865 = vsel %vm3010, %v7628, %v7734
        %v7869 = vsel %vm3010, %v7629, %v7736
        %v7873 = vsel %vm3010, %v7630, %v7738
        %v7877 = vsel %vm3010, %v7631, %v7740
        %v7881 = vsel %vm3010, %v7632, %v7742
        %v7885 = vsel %vm3010, %v7633, %v7744
        %v7889 = vsel %vm3010, %v7634, %v7746
        %v7891 = vld [vmem:[%s12 + $0x60] sm:$0xf]
        %v7892 = vld [vmem:[%s12 + $0x64] sm:$0xf]
        %v7893 = vld [vmem:[%s12 + $0x68] sm:$0xf]
        %v7894 = vld [vmem:[%s12 + $0x6c] sm:$0xf]
        %v7895 = vld [vmem:[%s12 + $0x70] sm:$0xf]
        %v7896 = vld [vmem:[%s12 + $0x74] sm:$0xf]
        %v7897 = vld [vmem:[%s12 + $0x78] sm:$0xf]
        %v7898 = vld [vmem:[%s12 + $0x7c] sm:$0xf]
        %v7899 = vld [vmem:[%s12 + $0x80] sm:$0xf]
        %v7900 = vld [vmem:[%s12 + $0x84] sm:$0xf]
        %v7901 = vld [vmem:[%s12 + $0x88] sm:$0xf]
        %v7902 = vld [vmem:[%s12 + $0x8c] sm:$0xf]
        %v7903 = vld [vmem:[%s12 + $0x90] sm:$0xf]
        %v7904 = vld [vmem:[%s12 + $0x94] sm:$0xf]
        %v7905 = vld [vmem:[%s12 + $0x98] sm:$0xf]
        %v7906 = vld [vmem:[%s12 + $0x9c] sm:$0xf]
        %v7907 = vld [vmem:[%s12 + $0xa0] sm:$0xf]
        %v7908 = vld [vmem:[%s12 + $0xa4] sm:$0xf]
        %v7909 = vld [vmem:[%s12 + $0xa8] sm:$0xf]
        %v7910 = vld [vmem:[%s12 + $0xac] sm:$0xf]
        %v7911 = vld [vmem:[%s12 + $0xb0] sm:$0xf]
        %v7912 = vld [vmem:[%s12 + $0xb4] sm:$0xf]
        %v7913 = vld [vmem:[%s12 + $0xb8] sm:$0xf]
        %v7914 = vld [vmem:[%s12 + $0xbc] sm:$0xf]
        %v7939 = vunpack.c.l.b16 %v7891
        %v7940 = vunpack.c.l.b16 %v7892
        %v7941 = vunpack.c.l.b16 %v7893
        %v7942 = vunpack.c.l.b16 %v7894
        %v7943 = vunpack.c.l.b16 %v7895
        %v7944 = vunpack.c.l.b16 %v7896
        %v7945 = vunpack.c.l.b16 %v7897
        %v7946 = vunpack.c.l.b16 %v7898
        %v7947 = vunpack.c.l.b16 %v7899
        %v7948 = vunpack.c.l.b16 %v7900
        %v7949 = vunpack.c.l.b16 %v7901
        %v7950 = vunpack.c.l.b16 %v7902
        %v7951 = vunpack.c.l.b16 %v7903
        %v7952 = vunpack.c.l.b16 %v7904
        %v7953 = vunpack.c.l.b16 %v7905
        %v7954 = vunpack.c.l.b16 %v7906
        %v7955 = vunpack.c.l.b16 %v7907
        %v7956 = vunpack.c.l.b16 %v7908
        %v7957 = vunpack.c.l.b16 %v7909
        %v7958 = vunpack.c.l.b16 %v7910
        %v7959 = vunpack.c.l.b16 %v7911
        %v7960 = vunpack.c.l.b16 %v7912
        %v7961 = vunpack.c.l.b16 %v7913
        %v7962 = vunpack.c.l.b16 %v7914
        %v7963 = vpack.c.b16 %v7940, %v7939
        %v7964 = vpack.c.b16 %v7942, %v7941
        %v7965 = vpack.c.b16 %v7944, %v7943
        %v7966 = vpack.c.b16 %v7946, %v7945
        %v7967 = vpack.c.b16 %v7948, %v7947
        %v7968 = vpack.c.b16 %v7950, %v7949
        %v7969 = vpack.c.b16 %v7952, %v7951
        %v7970 = vpack.c.b16 %v7954, %v7953
        %v7971 = vpack.c.b16 %v7956, %v7955
        %v7972 = vpack.c.b16 %v7958, %v7957
        %v7973 = vpack.c.b16 %v7960, %v7959
        %v7974 = vpack.c.b16 %v7962, %v7961
        %v7988 = vsel %vm3010, %v7811, 0
        %v7991 = vsel %vm3010, %v7812, 0
        %v7994 = vsel %vm3010, %v7813, 0
        %v7997 = vsel %vm3010, %v7814, 0
        %v8000 = vsel %vm3010, %v7815, 0
        %v8003 = vsel %vm3010, %v7816, 0
        %v8006 = vsel %vm3010, %v7817, 0
        %v8009 = vsel %vm3010, %v7818, 0
        %v8012 = vsel %vm3010, %v7819, 0
        %v8015 = vsel %vm3010, %v7820, 0
        %v8018 = vsel %vm3010, %v7821, 0
        %v8021 = vsel %vm3010, %v7822, 0
        %v8024 = vsel %vm3010, %v7823, 0
        %v8027 = vsel %vm3010, %v7824, 0
        %v8030 = vsel %vm3010, %v7825, 0
        %v8033 = vsel %vm3010, %v7826, 0
        %8035 = vmatpush.bf16.msra.mxu0 %v7970
        %8036 = vmatpush.bf16.msra.mxu0 %v7969
        %8037 = vmatpush.bf16.msra.mxu0 %v7968
        %8038 = vmatpush.bf16.msra.mxu0 %v7967
        %8039 = vmatpush.bf16.msra.mxu0 %v7966
        %8040 = vmatpush.bf16.msra.mxu0 %v7965
        %8041 = vmatpush.bf16.msra.mxu0 %v7964
        %8042 = vmatpush.bf16.msra.mxu0 %v7963
        %8043 = vmatmul.bf16.gmra.mxu0 %v7829
        %v8044 = vpop.f32.mrf.mxu0
        %v8045 = vadd.f32 0.0, %v8044
        %v8046 = vpop.f32.mrf.mxu0
        %v8047 = vadd.f32 0.0, %v8046
        %8048 = vmatmul.bf16.gmra.mxu0 %v7833
        %v8049 = vpop.f32.mrf.mxu0
        %v8050 = vadd.f32 0.0, %v8049
        %v8051 = vpop.f32.mrf.mxu0
        %v8052 = vadd.f32 0.0, %v8051
        %8053 = vmatmul.bf16.gmra.mxu0 %v7837
        %v8054 = vpop.f32.mrf.mxu0
        %v8055 = vadd.f32 0.0, %v8054
        %v8056 = vpop.f32.mrf.mxu0
        %v8057 = vadd.f32 0.0, %v8056
        %8058 = vmatmul.bf16.gmra.mxu0 %v7841
        %v8059 = vpop.f32.mrf.mxu0
        %v8060 = vadd.f32 0.0, %v8059
        %v8061 = vpop.f32.mrf.mxu0
        %v8062 = vadd.f32 0.0, %v8061
        %8063 = vmatmul.bf16.gmra.mxu0 %v7845
        %v8064 = vpop.f32.mrf.mxu0
        %v8065 = vadd.f32 0.0, %v8064
        %v8066 = vpop.f32.mrf.mxu0
        %v8067 = vadd.f32 0.0, %v8066
        %8068 = vmatmul.bf16.gmra.mxu0 %v7849
        %v8069 = vpop.f32.mrf.mxu0
        %v8070 = vadd.f32 0.0, %v8069
        %v8071 = vpop.f32.mrf.mxu0
        %v8072 = vadd.f32 0.0, %v8071
        %8073 = vmatmul.bf16.gmra.mxu0 %v7853
        %v8074 = vpop.f32.mrf.mxu0
        %v8075 = vadd.f32 0.0, %v8074
        %v8076 = vpop.f32.mrf.mxu0
        %v8077 = vadd.f32 0.0, %v8076
        %8078 = vmatmul.bf16.gmra.mxu0 %v7857
        %v8079 = vpop.f32.mrf.mxu0
        %v8080 = vadd.f32 0.0, %v8079
        %v8081 = vpop.f32.mrf.mxu0
        %v8082 = vadd.f32 0.0, %v8081
        %8083 = vmatmul.bf16.gmra.mxu0 %v7861
        %v8084 = vpop.f32.mrf.mxu0
        %v8085 = vadd.f32 0.0, %v8084
        %v8086 = vpop.f32.mrf.mxu0
        %v8087 = vadd.f32 0.0, %v8086
        %8088 = vmatmul.bf16.gmra.mxu0 %v7865
        %v8089 = vpop.f32.mrf.mxu0
        %v8090 = vadd.f32 0.0, %v8089
        %v8091 = vpop.f32.mrf.mxu0
        %v8092 = vadd.f32 0.0, %v8091
        %8093 = vmatmul.bf16.gmra.mxu0 %v7869
        %v8094 = vpop.f32.mrf.mxu0
        %v8095 = vadd.f32 0.0, %v8094
        %v8096 = vpop.f32.mrf.mxu0
        %v8097 = vadd.f32 0.0, %v8096
        %8098 = vmatmul.bf16.gmra.mxu0 %v7873
        %v8099 = vpop.f32.mrf.mxu0
        %v8100 = vadd.f32 0.0, %v8099
        %v8101 = vpop.f32.mrf.mxu0
        %v8102 = vadd.f32 0.0, %v8101
        %8103 = vmatmul.bf16.gmra.mxu0 %v7877
        %v8104 = vpop.f32.mrf.mxu0
        %v8105 = vadd.f32 0.0, %v8104
        %v8106 = vpop.f32.mrf.mxu0
        %v8107 = vadd.f32 0.0, %v8106
        %8108 = vmatmul.bf16.gmra.mxu0 %v7881
        %v8109 = vpop.f32.mrf.mxu0
        %v8110 = vadd.f32 0.0, %v8109
        %v8111 = vpop.f32.mrf.mxu0
        %v8112 = vadd.f32 0.0, %v8111
        %8113 = vmatmul.bf16.gmra.mxu0 %v7885
        %v8114 = vpop.f32.mrf.mxu0
        %v8115 = vadd.f32 0.0, %v8114
        %v8116 = vpop.f32.mrf.mxu0
        %v8117 = vadd.f32 0.0, %v8116
        %8118 = vmatmul.bf16.gmra.mxu0 %v7889
        %v8119 = vpop.f32.mrf.mxu0
        %v8120 = vadd.f32 0.0, %v8119
        %v8121 = vpop.f32.mrf.mxu0
        %v8122 = vadd.f32 0.0, %v8121
        %8123 = vdwg.mxu0
        %8124 = vmatpush.bf16.msra.mxu0 0
        %8125 = vmatpush.bf16.msra.mxu0 0
        %8126 = vmatpush.bf16.msra.mxu0 0
        %8127 = vmatpush.bf16.msra.mxu0 0
        %8128 = vmatpush.bf16.msra.mxu0 %v7974
        %8129 = vmatpush.bf16.msra.mxu0 %v7973
        %8130 = vmatpush.bf16.msra.mxu0 %v7972
        %8131 = vmatpush.bf16.msra.mxu0 %v7971
        %8132 = vmatmul.bf16.gmra.mxu0 %v7988
        %v8133 = vpop.f32.mrf.mxu0
        %v8134 = vadd.f32 %v8045, %v8133
        %v8135 = vpop.f32.mrf.mxu0
        %v8136 = vadd.f32 %v8047, %v8135
        %8137 = vmatmul.bf16.gmra.mxu0 %v7991
        %v8138 = vpop.f32.mrf.mxu0
        %v8139 = vadd.f32 %v8050, %v8138
        %v8140 = vpop.f32.mrf.mxu0
        %v8141 = vadd.f32 %v8052, %v8140
        %8142 = vmatmul.bf16.gmra.mxu0 %v7994
        %v8143 = vpop.f32.mrf.mxu0
        %v8144 = vadd.f32 %v8055, %v8143
        %v8145 = vpop.f32.mrf.mxu0
        %v8146 = vadd.f32 %v8057, %v8145
        %8147 = vmatmul.bf16.gmra.mxu0 %v7997
        %v8148 = vpop.f32.mrf.mxu0
        %v8149 = vadd.f32 %v8060, %v8148
        %v8150 = vpop.f32.mrf.mxu0
        %v8151 = vadd.f32 %v8062, %v8150
        %8152 = vmatmul.bf16.gmra.mxu0 %v8000
        %v8153 = vpop.f32.mrf.mxu0
        %v8154 = vadd.f32 %v8065, %v8153
        %v8155 = vpop.f32.mrf.mxu0
        %v8156 = vadd.f32 %v8067, %v8155
        %8157 = vmatmul.bf16.gmra.mxu0 %v8003
        %v8158 = vpop.f32.mrf.mxu0
        %v8159 = vadd.f32 %v8070, %v8158
        %v8160 = vpop.f32.mrf.mxu0
        %v8161 = vadd.f32 %v8072, %v8160
        %8162 = vmatmul.bf16.gmra.mxu0 %v8006
        %v8163 = vpop.f32.mrf.mxu0
        %v8164 = vadd.f32 %v8075, %v8163
        %v8165 = vpop.f32.mrf.mxu0
        %v8166 = vadd.f32 %v8077, %v8165
        %8167 = vmatmul.bf16.gmra.mxu0 %v8009
        %v8168 = vpop.f32.mrf.mxu0
        %v8169 = vadd.f32 %v8080, %v8168
        %v8170 = vpop.f32.mrf.mxu0
        %v8171 = vadd.f32 %v8082, %v8170
        %8172 = vmatmul.bf16.gmra.mxu0 %v8012
        %v8173 = vpop.f32.mrf.mxu0
        %v8174 = vadd.f32 %v8085, %v8173
        %v8175 = vpop.f32.mrf.mxu0
        %v8176 = vadd.f32 %v8087, %v8175
        %8177 = vmatmul.bf16.gmra.mxu0 %v8015
        %v8178 = vpop.f32.mrf.mxu0
        %v8179 = vadd.f32 %v8090, %v8178
        %v8180 = vpop.f32.mrf.mxu0
        %v8181 = vadd.f32 %v8092, %v8180
        %8182 = vmatmul.bf16.gmra.mxu0 %v8018
        %v8183 = vpop.f32.mrf.mxu0
        %v8184 = vadd.f32 %v8095, %v8183
        %v8185 = vpop.f32.mrf.mxu0
        %v8186 = vadd.f32 %v8097, %v8185
        %8187 = vmatmul.bf16.gmra.mxu0 %v8021
        %v8188 = vpop.f32.mrf.mxu0
        %v8189 = vadd.f32 %v8100, %v8188
        %v8190 = vpop.f32.mrf.mxu0
        %v8191 = vadd.f32 %v8102, %v8190
        %8192 = vmatmul.bf16.gmra.mxu0 %v8024
        %v8193 = vpop.f32.mrf.mxu0
        %v8194 = vadd.f32 %v8105, %v8193
        %v8195 = vpop.f32.mrf.mxu0
        %v8196 = vadd.f32 %v8107, %v8195
        %8197 = vmatmul.bf16.gmra.mxu0 %v8027
        %v8198 = vpop.f32.mrf.mxu0
        %v8199 = vadd.f32 %v8110, %v8198
        %v8200 = vpop.f32.mrf.mxu0
        %v8201 = vadd.f32 %v8112, %v8200
        %8202 = vmatmul.bf16.gmra.mxu0 %v8030
        %v8203 = vpop.f32.mrf.mxu0
        %v8204 = vadd.f32 %v8115, %v8203
        %v8205 = vpop.f32.mrf.mxu0
        %v8206 = vadd.f32 %v8117, %v8205
        %8207 = vmatmul.bf16.gmra.mxu0 %v8033
        %v8208 = vpop.f32.mrf.mxu0
        %v8209 = vadd.f32 %v8120, %v8208
        %v8210 = vpop.f32.mrf.mxu0
        %v8211 = vadd.f32 %v8122, %v8210
        %8212 = vdwg.mxu0
        %v8237 = vunpack.c.l.b16 %v7371
        %v8238 = vunpack.c.l.b16 %v7372
        %v8239 = vunpack.c.l.b16 %v7373
        %v8240 = vunpack.c.l.b16 %v7374
        %v8241 = vunpack.c.l.b16 %v7375
        %v8242 = vunpack.c.l.b16 %v7376
        %v8243 = vunpack.c.l.b16 %v7377
        %v8244 = vunpack.c.l.b16 %v7378
        %v8245 = vunpack.c.l.b16 %v7379
        %v8246 = vunpack.c.l.b16 %v7380
        %v8247 = vunpack.c.l.b16 %v7381
        %v8248 = vunpack.c.l.b16 %v7382
        %v8249 = vunpack.c.l.b16 %v7383
        %v8250 = vunpack.c.l.b16 %v7384
        %v8251 = vunpack.c.l.b16 %v7385
        %v8252 = vunpack.c.l.b16 %v7386
        %v8253 = vunpack.c.l.b16 %v7387
        %v8254 = vunpack.c.l.b16 %v7388
        %v8255 = vunpack.c.l.b16 %v7389
        %v8256 = vunpack.c.l.b16 %v7390
        %v8257 = vunpack.c.l.b16 %v7391
        %v8258 = vunpack.c.l.b16 %v7392
        %v8259 = vunpack.c.l.b16 %v7393
        %v8260 = vunpack.c.l.b16 %v7394
        %v8261 = vpack.c.b16 %v8238, %v8237
        %v8262 = vpack.c.b16 %v8240, %v8239
        %v8263 = vpack.c.b16 %v8242, %v8241
        %v8264 = vpack.c.b16 %v8244, %v8243
        %v8265 = vpack.c.b16 %v8246, %v8245
        %v8266 = vpack.c.b16 %v8248, %v8247
        %v8267 = vpack.c.b16 %v8250, %v8249
        %v8268 = vpack.c.b16 %v8252, %v8251
        %v8269 = vpack.c.b16 %v8254, %v8253
        %v8270 = vpack.c.b16 %v8256, %v8255
        %v8271 = vpack.c.b16 %v8258, %v8257
        %v8272 = vpack.c.b16 %v8260, %v8259
        %v8286 = vsel %vm3010, %v7291, 0
        %v8289 = vsel %vm3010, %v7292, 0
        %v8292 = vsel %vm3010, %v7293, 0
        %v8295 = vsel %vm3010, %v7294, 0
        %v8298 = vsel %vm3010, %v7295, 0
        %v8301 = vsel %vm3010, %v7296, 0
        %v8304 = vsel %vm3010, %v7297, 0
        %v8307 = vsel %vm3010, %v7298, 0
        %v8310 = vsel %vm3010, %v7299, 0
        %v8313 = vsel %vm3010, %v7300, 0
        %v8316 = vsel %vm3010, %v7301, 0
        %v8319 = vsel %vm3010, %v7302, 0
        %v8322 = vsel %vm3010, %v7303, 0
        %v8325 = vsel %vm3010, %v7304, 0
        %v8328 = vsel %vm3010, %v7305, 0
        %v8331 = vsel %vm3010, %v7306, 0
        %8333 = vmatpush.bf16.msra.mxu0 %v8268
        %8334 = vmatpush.bf16.msra.mxu0 %v8267
        %8335 = vmatpush.bf16.msra.mxu0 %v8266
        %8336 = vmatpush.bf16.msra.mxu0 %v8265
        %8337 = vmatpush.bf16.msra.mxu0 %v8264
        %8338 = vmatpush.bf16.msra.mxu0 %v8263
        %8339 = vmatpush.bf16.msra.mxu0 %v8262
        %8340 = vmatpush.bf16.msra.mxu0 %v8261
        %8341 = vmatmul.bf16.gmra.mxu0 %v7309
        %v8342 = vpop.f32.mrf.mxu0
        %v8343 = vadd.f32 %v8134, %v8342
        %v8344 = vpop.f32.mrf.mxu0
        %v8345 = vadd.f32 %v8136, %v8344
        %8346 = vmatmul.bf16.gmra.mxu0 %v7313
        %v8347 = vpop.f32.mrf.mxu0
        %v8348 = vadd.f32 %v8139, %v8347
        %v8349 = vpop.f32.mrf.mxu0
        %v8350 = vadd.f32 %v8141, %v8349
        %8351 = vmatmul.bf16.gmra.mxu0 %v7317
        %v8352 = vpop.f32.mrf.mxu0
        %v8353 = vadd.f32 %v8144, %v8352
        %v8354 = vpop.f32.mrf.mxu0
        %v8355 = vadd.f32 %v8146, %v8354
        %8356 = vmatmul.bf16.gmra.mxu0 %v7321
        %v8357 = vpop.f32.mrf.mxu0
        %v8358 = vadd.f32 %v8149, %v8357
        %v8359 = vpop.f32.mrf.mxu0
        %v8360 = vadd.f32 %v8151, %v8359
        %8361 = vmatmul.bf16.gmra.mxu0 %v7325
        %v8362 = vpop.f32.mrf.mxu0
        %v8363 = vadd.f32 %v8154, %v8362
        %v8364 = vpop.f32.mrf.mxu0
        %v8365 = vadd.f32 %v8156, %v8364
        %8366 = vmatmul.bf16.gmra.mxu0 %v7329
        %v8367 = vpop.f32.mrf.mxu0
        %v8368 = vadd.f32 %v8159, %v8367
        %v8369 = vpop.f32.mrf.mxu0
        %v8370 = vadd.f32 %v8161, %v8369
        %8371 = vmatmul.bf16.gmra.mxu0 %v7333
        %v8372 = vpop.f32.mrf.mxu0
        %v8373 = vadd.f32 %v8164, %v8372
        %v8374 = vpop.f32.mrf.mxu0
        %v8375 = vadd.f32 %v8166, %v8374
        %8376 = vmatmul.bf16.gmra.mxu0 %v7337
        %v8377 = vpop.f32.mrf.mxu0
        %v8378 = vadd.f32 %v8169, %v8377
        %v8379 = vpop.f32.mrf.mxu0
        %v8380 = vadd.f32 %v8171, %v8379
        %8381 = vmatmul.bf16.gmra.mxu0 %v7341
        %v8382 = vpop.f32.mrf.mxu0
        %v8383 = vadd.f32 %v8174, %v8382
        %v8384 = vpop.f32.mrf.mxu0
        %v8385 = vadd.f32 %v8176, %v8384
        %8386 = vmatmul.bf16.gmra.mxu0 %v7345
        %v8387 = vpop.f32.mrf.mxu0
        %v8388 = vadd.f32 %v8179, %v8387
        %v8389 = vpop.f32.mrf.mxu0
        %v8390 = vadd.f32 %v8181, %v8389
        %8391 = vmatmul.bf16.gmra.mxu0 %v7349
        %v8392 = vpop.f32.mrf.mxu0
        %v8393 = vadd.f32 %v8184, %v8392
        %v8394 = vpop.f32.mrf.mxu0
        %v8395 = vadd.f32 %v8186, %v8394
        %8396 = vmatmul.bf16.gmra.mxu0 %v7353
        %v8397 = vpop.f32.mrf.mxu0
        %v8398 = vadd.f32 %v8189, %v8397
        %v8399 = vpop.f32.mrf.mxu0
        %v8400 = vadd.f32 %v8191, %v8399
        %8401 = vmatmul.bf16.gmra.mxu0 %v7357
        %v8402 = vpop.f32.mrf.mxu0
        %v8403 = vadd.f32 %v8194, %v8402
        %v8404 = vpop.f32.mrf.mxu0
        %v8405 = vadd.f32 %v8196, %v8404
        %8406 = vmatmul.bf16.gmra.mxu0 %v7361
        %v8407 = vpop.f32.mrf.mxu0
        %v8408 = vadd.f32 %v8199, %v8407
        %v8409 = vpop.f32.mrf.mxu0
        %v8410 = vadd.f32 %v8201, %v8409
        %8411 = vmatmul.bf16.gmra.mxu0 %v7365
        %v8412 = vpop.f32.mrf.mxu0
        %v8413 = vadd.f32 %v8204, %v8412
        %v8414 = vpop.f32.mrf.mxu0
        %v8415 = vadd.f32 %v8206, %v8414
        %8416 = vmatmul.bf16.gmra.mxu0 %v7369
        %v8417 = vpop.f32.mrf.mxu0
        %v8418 = vadd.f32 %v8209, %v8417
        %v8419 = vpop.f32.mrf.mxu0
        %v8420 = vadd.f32 %v8211, %v8419
        %8421 = vdwg.mxu0
        %8422 = vmatpush.bf16.msra.mxu0 0
        %8423 = vmatpush.bf16.msra.mxu0 0
        %8424 = vmatpush.bf16.msra.mxu0 0
        %8425 = vmatpush.bf16.msra.mxu0 0
        %8426 = vmatpush.bf16.msra.mxu0 %v8272
        %8427 = vmatpush.bf16.msra.mxu0 %v8271
        %8428 = vmatpush.bf16.msra.mxu0 %v8270
        %8429 = vmatpush.bf16.msra.mxu0 %v8269
        %8430 = vmatmul.bf16.gmra.mxu0 %v8286
        %v8431 = vpop.f32.mrf.mxu0
        %v8432 = vadd.f32 %v8343, %v8431
        %v8433 = vpop.f32.mrf.mxu0
        %v8434 = vadd.f32 %v8345, %v8433
        %8435 = vmatmul.bf16.gmra.mxu0 %v8289
        %v8436 = vpop.f32.mrf.mxu0
        %v8437 = vadd.f32 %v8348, %v8436
        %v8438 = vpop.f32.mrf.mxu0
        %v8439 = vadd.f32 %v8350, %v8438
        %8440 = vmatmul.bf16.gmra.mxu0 %v8292
        %v8441 = vpop.f32.mrf.mxu0
        %v8442 = vadd.f32 %v8353, %v8441
        %v8443 = vpop.f32.mrf.mxu0
        %v8444 = vadd.f32 %v8355, %v8443
        %8445 = vmatmul.bf16.gmra.mxu0 %v8295
        %v8446 = vpop.f32.mrf.mxu0
        %v8447 = vadd.f32 %v8358, %v8446
        %v8448 = vpop.f32.mrf.mxu0
        %v8449 = vadd.f32 %v8360, %v8448
        %8450 = vmatmul.bf16.gmra.mxu0 %v8298
        %v8451 = vpop.f32.mrf.mxu0
        %v8452 = vadd.f32 %v8363, %v8451
        %v8453 = vpop.f32.mrf.mxu0
        %v8454 = vadd.f32 %v8365, %v8453
        %8455 = vmatmul.bf16.gmra.mxu0 %v8301
        %v8456 = vpop.f32.mrf.mxu0
        %v8457 = vadd.f32 %v8368, %v8456
        %v8458 = vpop.f32.mrf.mxu0
        %v8459 = vadd.f32 %v8370, %v8458
        %8460 = vmatmul.bf16.gmra.mxu0 %v8304
        %v8461 = vpop.f32.mrf.mxu0
        %v8462 = vadd.f32 %v8373, %v8461
        %v8463 = vpop.f32.mrf.mxu0
        %v8464 = vadd.f32 %v8375, %v8463
        %8465 = vmatmul.bf16.gmra.mxu0 %v8307
        %v8466 = vpop.f32.mrf.mxu0
        %v8467 = vadd.f32 %v8378, %v8466
        %v8468 = vpop.f32.mrf.mxu0
        %v8469 = vadd.f32 %v8380, %v8468
        %8470 = vmatmul.bf16.gmra.mxu0 %v8310
        %v8471 = vpop.f32.mrf.mxu0
        %v8472 = vadd.f32 %v8383, %v8471
        %v8473 = vpop.f32.mrf.mxu0
        %v8474 = vadd.f32 %v8385, %v8473
        %8475 = vmatmul.bf16.gmra.mxu0 %v8313
        %v8476 = vpop.f32.mrf.mxu0
        %v8477 = vadd.f32 %v8388, %v8476
        %v8478 = vpop.f32.mrf.mxu0
        %v8479 = vadd.f32 %v8390, %v8478
        %8480 = vmatmul.bf16.gmra.mxu0 %v8316
        %v8481 = vpop.f32.mrf.mxu0
        %v8482 = vadd.f32 %v8393, %v8481
        %v8483 = vpop.f32.mrf.mxu0
        %v8484 = vadd.f32 %v8395, %v8483
        %8485 = vmatmul.bf16.gmra.mxu0 %v8319
        %v8486 = vpop.f32.mrf.mxu0
        %v8487 = vadd.f32 %v8398, %v8486
        %v8488 = vpop.f32.mrf.mxu0
        %v8489 = vadd.f32 %v8400, %v8488
        %8490 = vmatmul.bf16.gmra.mxu0 %v8322
        %v8491 = vpop.f32.mrf.mxu0
        %v8492 = vadd.f32 %v8403, %v8491
        %v8493 = vpop.f32.mrf.mxu0
        %v8494 = vadd.f32 %v8405, %v8493
        %8495 = vmatmul.bf16.gmra.mxu0 %v8325
        %v8496 = vpop.f32.mrf.mxu0
        %v8497 = vadd.f32 %v8408, %v8496
        %v8498 = vpop.f32.mrf.mxu0
        %v8499 = vadd.f32 %v8410, %v8498
        %8500 = vmatmul.bf16.gmra.mxu0 %v8328
        %v8501 = vpop.f32.mrf.mxu0
        %v8502 = vadd.f32 %v8413, %v8501
        %v8503 = vpop.f32.mrf.mxu0
        %v8504 = vadd.f32 %v8415, %v8503
        %8505 = vmatmul.bf16.gmra.mxu0 %v8331
        %v8506 = vpop.f32.mrf.mxu0
        %v8507 = vadd.f32 %v8418, %v8506
        %v8508 = vpop.f32.mrf.mxu0
        %v8509 = vadd.f32 %v8420, %v8508
        %8510 = vdwg.mxu0
        %v8511 = vsel %vm4438, %v6776, 0.0
        %v8512 = vsel %vm4439, %v6775, 0.0
        %v8513 = vsel %vm4440, %v6774, 0.0
        %v8514 = vsel %vm4441, %v6773, 0.0
        %v8515 = vsel %vm4442, %v6772, 0.0
        %v8516 = vsel %vm4443, %v6771, 0.0
        %v8517 = vsel %vm4444, %v6770, 0.0
        %v8518 = vsel %vm4445, %v6769, 0.0
        %v8519 = vsel %vm4446, %v6768, 0.0
        %v8520 = vsel %vm4447, %v6767, 0.0
        %v8521 = vsel %vm4448, %v6766, 0.0
        %v8522 = vsel %vm4449, %v6765, 0.0
        %v8523 = vsel %vm4450, %v6764, 0.0
        %v8524 = vsel %vm4451, %v6763, 0.0
        %v8525 = vsel %vm4452, %v6762, 0.0
        %v8526 = vsel %vm4453, %v6761, 0.0
        %v8527 = vsel %vm4454, %v6760, 0.0
        %v8528 = vsel %vm4455, %v6759, 0.0
        %v8529 = vsel %vm4456, %v6758, 0.0
        %v8530 = vsel %vm4457, %v6757, 0.0
        %v8531 = vsel %vm4458, %v6756, 0.0
        %v8532 = vsel %vm4459, %v6755, 0.0
        %v8533 = vsel %vm4460, %v6754, 0.0
        %v8534 = vsel %vm4461, %v6753, 0.0
        %v8535 = vsel %vm4462, %v6752, 0.0
        %v8536 = vsel %vm4463, %v6751, 0.0
        %v8537 = vsel %vm4464, %v6750, 0.0
        %v8538 = vsel %vm4465, %v6749, 0.0
        %v8539 = vsel %vm4466, %v6748, 0.0
        %v8540 = vsel %vm4467, %v6747, 0.0
        %v8541 = vsel %vm4468, %v6778, 0.0
        %v8542 = vsel %vm4469, %v6777, 0.0
        %v8543 = vpack.c.bf16 %v8511, %v8511
        %v8544 = vpack.c.bf16 %v8512, %v8512
        %v8545 = vpack.c.bf16 %v8513, %v8513
        %v8546 = vpack.c.bf16 %v8514, %v8514
        %v8547 = vpack.c.bf16 %v8515, %v8515
        %v8548 = vpack.c.bf16 %v8516, %v8516
        %v8549 = vpack.c.bf16 %v8517, %v8517
        %v8550 = vpack.c.bf16 %v8518, %v8518
        %v8551 = vpack.c.bf16 %v8519, %v8519
        %v8552 = vpack.c.bf16 %v8520, %v8520
        %v8553 = vpack.c.bf16 %v8521, %v8521
        %v8554 = vpack.c.bf16 %v8522, %v8522
        %v8555 = vpack.c.bf16 %v8523, %v8523
        %v8556 = vpack.c.bf16 %v8524, %v8524
        %v8557 = vpack.c.bf16 %v8525, %v8525
        %v8558 = vpack.c.bf16 %v8526, %v8526
        %v8559 = vpack.c.bf16 %v8527, %v8527
        %v8560 = vpack.c.bf16 %v8528, %v8528
        %v8561 = vpack.c.bf16 %v8529, %v8529
        %v8562 = vpack.c.bf16 %v8530, %v8530
        %v8563 = vpack.c.bf16 %v8531, %v8531
        %v8564 = vpack.c.bf16 %v8532, %v8532
        %v8565 = vpack.c.bf16 %v8533, %v8533
        %v8566 = vpack.c.bf16 %v8534, %v8534
        %v8567 = vpack.c.bf16 %v8535, %v8535
        %v8568 = vpack.c.bf16 %v8536, %v8536
        %v8569 = vpack.c.bf16 %v8537, %v8537
        %v8570 = vpack.c.bf16 %v8538, %v8538
        %v8571 = vpack.c.bf16 %v8539, %v8539
        %v8572 = vpack.c.bf16 %v8540, %v8540
        %v8573 = vpack.c.bf16 %v8541, %v8541
        %v8574 = vpack.c.bf16 %v8542, %v8542
        %v8575 = vsel %vm4662, %v6684, 0.0
        %v8576 = vsel %vm4663, %v6685, 0.0
        %v8577 = vsel %vm4664, %v6686, 0.0
        %v8578 = vsel %vm4665, %v6687, 0.0
        %v8579 = vsel %vm4666, %v6688, 0.0
        %v8580 = vsel %vm4667, %v6689, 0.0
        %v8581 = vsel %vm4668, %v6690, 0.0
        %v8582 = vsel %vm4669, %v6691, 0.0
        %v8583 = vsel %vm4670, %v6692, 0.0
        %v8584 = vsel %vm4671, %v6693, 0.0
        %v8585 = vsel %vm4672, %v6694, 0.0
        %v8586 = vsel %vm4673, %v6695, 0.0
        %v8587 = vsel %vm4674, %v6696, 0.0
        %v8588 = vsel %vm4675, %v6697, 0.0
        %v8589 = vsel %vm4676, %v6698, 0.0
        %v8590 = vsel %vm4677, %v6699, 0.0
        %v8591 = vsel %vm4678, %v6700, 0.0
        %v8592 = vsel %vm4679, %v6701, 0.0
        %v8593 = vsel %vm4680, %v6702, 0.0
        %v8594 = vsel %vm4681, %v6703, 0.0
        %v8595 = vsel %vm4682, %v6704, 0.0
        %v8596 = vsel %vm4683, %v6705, 0.0
        %v8597 = vsel %vm4684, %v6706, 0.0
        %v8598 = vsel %vm4685, %v6707, 0.0
        %v8599 = vsel %vm4686, %v6708, 0.0
        %v8600 = vsel %vm4687, %v6709, 0.0
        %v8601 = vsel %vm4688, %v6710, 0.0
        %v8602 = vsel %vm4689, %v6711, 0.0
        %v8603 = vsel %vm4690, %v6712, 0.0
        %v8604 = vsel %vm4691, %v6713, 0.0
        %v8605 = vsel %vm4692, %v6682, 0.0
        %v8606 = vsel %vm4693, %v6683, 0.0
        %v8607 = vpack.c.bf16 %v8575, %v8575
        %v8608 = vpack.c.bf16 %v8576, %v8576
        %v8609 = vpack.c.bf16 %v8577, %v8577
        %v8610 = vpack.c.bf16 %v8578, %v8578
        %v8611 = vpack.c.bf16 %v8579, %v8579
        %v8612 = vpack.c.bf16 %v8580, %v8580
        %v8613 = vpack.c.bf16 %v8581, %v8581
        %v8614 = vpack.c.bf16 %v8582, %v8582
        %v8615 = vpack.c.bf16 %v8583, %v8583
        %v8616 = vpack.c.bf16 %v8584, %v8584
        %v8617 = vpack.c.bf16 %v8585, %v8585
        %v8618 = vpack.c.bf16 %v8586, %v8586
        %v8619 = vpack.c.bf16 %v8587, %v8587
        %v8620 = vpack.c.bf16 %v8588, %v8588
        %v8621 = vpack.c.bf16 %v8589, %v8589
        %v8622 = vpack.c.bf16 %v8590, %v8590
        %v8623 = vpack.c.bf16 %v8591, %v8591
        %v8624 = vpack.c.bf16 %v8592, %v8592
        %v8625 = vpack.c.bf16 %v8593, %v8593
        %v8626 = vpack.c.bf16 %v8594, %v8594
        %v8627 = vpack.c.bf16 %v8595, %v8595
        %v8628 = vpack.c.bf16 %v8596, %v8596
        %v8629 = vpack.c.bf16 %v8597, %v8597
        %v8630 = vpack.c.bf16 %v8598, %v8598
        %v8631 = vpack.c.bf16 %v8599, %v8599
        %v8632 = vpack.c.bf16 %v8600, %v8600
        %v8633 = vpack.c.bf16 %v8601, %v8601
        %v8634 = vpack.c.bf16 %v8602, %v8602
        %v8635 = vpack.c.bf16 %v8603, %v8603
        %v8636 = vpack.c.bf16 %v8604, %v8604
        %v8637 = vpack.c.bf16 %v8605, %v8605
        %v8638 = vpack.c.bf16 %v8606, %v8606
        %v8639 = vsel %vm4918, %v6967, 0.0
        %v8640 = vsel %vm4919, %v6966, 0.0
        %v8641 = vsel %vm4920, %v6965, 0.0
        %v8642 = vsel %vm4921, %v6964, 0.0
        %v8643 = vsel %vm4922, %v6963, 0.0
        %v8644 = vsel %vm4923, %v6962, 0.0
        %v8645 = vsel %vm4924, %v6961, 0.0
        %v8646 = vsel %vm4925, %v6960, 0.0
        %v8647 = vsel %vm4926, %v6959, 0.0
        %v8648 = vsel %vm4927, %v6958, 0.0
        %v8649 = vsel %vm4928, %v6957, 0.0
        %v8650 = vsel %vm4929, %v6956, 0.0
        %v8651 = vsel %vm4930, %v6955, 0.0
        %v8652 = vsel %vm4931, %v6954, 0.0
        %v8653 = vsel %vm4932, %v6953, 0.0
        %v8654 = vsel %vm4933, %v6952, 0.0
        %v8655 = vsel %vm4934, %v6951, 0.0
        %v8656 = vsel %vm4935, %v6950, 0.0
        %v8657 = vsel %vm4936, %v6949, 0.0
        %v8658 = vsel %vm4937, %v6948, 0.0
        %v8659 = vsel %vm4938, %v6947, 0.0
        %v8660 = vsel %vm4939, %v6946, 0.0
        %v8661 = vsel %vm4940, %v6945, 0.0
        %v8662 = vsel %vm4941, %v6944, 0.0
        %v8663 = vsel %vm4942, %v6943, 0.0
        %v8664 = vsel %vm4943, %v6942, 0.0
        %v8665 = vsel %vm4944, %v6941, 0.0
        %v8666 = vsel %vm4945, %v6940, 0.0
        %v8667 = vsel %vm4946, %v6939, 0.0
        %v8668 = vsel %vm4947, %v6970, 0.0
        %v8669 = vsel %vm4948, %v6969, 0.0
        %v8670 = vsel %vm4949, %v6968, 0.0
        %v8671 = vpack.c.bf16 %v8639, %v8639
        %v8672 = vpack.c.bf16 %v8640, %v8640
        %v8673 = vpack.c.bf16 %v8641, %v8641
        %v8674 = vpack.c.bf16 %v8642, %v8642
        %v8675 = vpack.c.bf16 %v8643, %v8643
        %v8676 = vpack.c.bf16 %v8644, %v8644
        %v8677 = vpack.c.bf16 %v8645, %v8645
        %v8678 = vpack.c.bf16 %v8646, %v8646
        %v8679 = vpack.c.bf16 %v8647, %v8647
        %v8680 = vpack.c.bf16 %v8648, %v8648
        %v8681 = vpack.c.bf16 %v8649, %v8649
        %v8682 = vpack.c.bf16 %v8650, %v8650
        %v8683 = vpack.c.bf16 %v8651, %v8651
        %v8684 = vpack.c.bf16 %v8652, %v8652
        %v8685 = vpack.c.bf16 %v8653, %v8653
        %v8686 = vpack.c.bf16 %v8654, %v8654
        %v8687 = vpack.c.bf16 %v8655, %v8655
        %v8688 = vpack.c.bf16 %v8656, %v8656
        %v8689 = vpack.c.bf16 %v8657, %v8657
        %v8690 = vpack.c.bf16 %v8658, %v8658
        %v8691 = vpack.c.bf16 %v8659, %v8659
        %v8692 = vpack.c.bf16 %v8660, %v8660
        %v8693 = vpack.c.bf16 %v8661, %v8661
        %v8694 = vpack.c.bf16 %v8662, %v8662
        %v8695 = vpack.c.bf16 %v8663, %v8663
        %v8696 = vpack.c.bf16 %v8664, %v8664
        %v8697 = vpack.c.bf16 %v8665, %v8665
        %v8698 = vpack.c.bf16 %v8666, %v8666
        %v8699 = vpack.c.bf16 %v8667, %v8667
        %v8700 = vpack.c.bf16 %v8668, %v8668
        %v8701 = vpack.c.bf16 %v8669, %v8669
        %v8702 = vpack.c.bf16 %v8670, %v8670
        %v8735 = vunpack.c.l.b16 %v8543
        %v8736 = vunpack.c.l.b16 %v8544
        %v8737 = vunpack.c.l.b16 %v8545
        %v8738 = vunpack.c.l.b16 %v8546
        %v8739 = vunpack.c.l.b16 %v8547
        %v8740 = vunpack.c.l.b16 %v8548
        %v8741 = vunpack.c.l.b16 %v8549
        %v8742 = vunpack.c.l.b16 %v8550
        %v8743 = vunpack.c.l.b16 %v8551
        %v8744 = vunpack.c.l.b16 %v8552
        %v8745 = vunpack.c.l.b16 %v8553
        %v8746 = vunpack.c.l.b16 %v8554
        %v8747 = vunpack.c.l.b16 %v8555
        %v8748 = vunpack.c.l.b16 %v8556
        %v8749 = vunpack.c.l.b16 %v8557
        %v8750 = vunpack.c.l.b16 %v8558
        %v8751 = vunpack.c.l.b16 %v8559
        %v8752 = vunpack.c.l.b16 %v8560
        %v8753 = vunpack.c.l.b16 %v8561
        %v8754 = vunpack.c.l.b16 %v8562
        %v8755 = vunpack.c.l.b16 %v8563
        %v8756 = vunpack.c.l.b16 %v8564
        %v8757 = vunpack.c.l.b16 %v8565
        %v8758 = vunpack.c.l.b16 %v8566
        %v8759 = vunpack.c.l.b16 %v8567
        %v8760 = vunpack.c.l.b16 %v8568
        %v8761 = vunpack.c.l.b16 %v8569
        %v8762 = vunpack.c.l.b16 %v8570
        %v8763 = vunpack.c.l.b16 %v8571
        %v8764 = vunpack.c.l.b16 %v8572
        %v8765 = vunpack.c.l.b16 %v8573
        %v8766 = vunpack.c.l.b16 %v8574
        %v8767 = vpack.c.b16 %v8736, %v8735
        %v8768 = vpack.c.b16 %v8738, %v8737
        %v8769 = vpack.c.b16 %v8740, %v8739
        %v8770 = vpack.c.b16 %v8742, %v8741
        %v8771 = vpack.c.b16 %v8744, %v8743
        %v8772 = vpack.c.b16 %v8746, %v8745
        %v8773 = vpack.c.b16 %v8748, %v8747
        %v8774 = vpack.c.b16 %v8750, %v8749
        %v8775 = vpack.c.b16 %v8752, %v8751
        %v8776 = vpack.c.b16 %v8754, %v8753
        %v8777 = vpack.c.b16 %v8756, %v8755
        %v8778 = vpack.c.b16 %v8758, %v8757
        %v8779 = vpack.c.b16 %v8760, %v8759
        %v8780 = vpack.c.b16 %v8762, %v8761
        %v8781 = vpack.c.b16 %v8764, %v8763
        %v8782 = vpack.c.b16 %v8766, %v8765
        %v8815 = vunpack.c.l.b16 %v8607
        %v8816 = vunpack.c.l.b16 %v8608
        %v8817 = vunpack.c.l.b16 %v8609
        %v8818 = vunpack.c.l.b16 %v8610
        %v8819 = vunpack.c.l.b16 %v8611
        %v8820 = vunpack.c.l.b16 %v8612
        %v8821 = vunpack.c.l.b16 %v8613
        %v8822 = vunpack.c.l.b16 %v8614
        %v8823 = vunpack.c.l.b16 %v8615
        %v8824 = vunpack.c.l.b16 %v8616
        %v8825 = vunpack.c.l.b16 %v8617
        %v8826 = vunpack.c.l.b16 %v8618
        %v8827 = vunpack.c.l.b16 %v8619
        %v8828 = vunpack.c.l.b16 %v8620
        %v8829 = vunpack.c.l.b16 %v8621
        %v8830 = vunpack.c.l.b16 %v8622
        %v8831 = vunpack.c.l.b16 %v8623
        %v8832 = vunpack.c.l.b16 %v8624
        %v8833 = vunpack.c.l.b16 %v8625
        %v8834 = vunpack.c.l.b16 %v8626
        %v8835 = vunpack.c.l.b16 %v8627
        %v8836 = vunpack.c.l.b16 %v8628
        %v8837 = vunpack.c.l.b16 %v8629
        %v8838 = vunpack.c.l.b16 %v8630
        %v8839 = vunpack.c.l.b16 %v8631
        %v8840 = vunpack.c.l.b16 %v8632
        %v8841 = vunpack.c.l.b16 %v8633
        %v8842 = vunpack.c.l.b16 %v8634
        %v8843 = vunpack.c.l.b16 %v8635
        %v8844 = vunpack.c.l.b16 %v8636
        %v8845 = vunpack.c.l.b16 %v8637
        %v8846 = vunpack.c.l.b16 %v8638
        %v8847 = vpack.c.b16 %v8816, %v8815
        %v8848 = vpack.c.b16 %v8818, %v8817
        %v8849 = vpack.c.b16 %v8820, %v8819
        %v8850 = vpack.c.b16 %v8822, %v8821
        %v8851 = vpack.c.b16 %v8824, %v8823
        %v8852 = vpack.c.b16 %v8826, %v8825
        %v8853 = vpack.c.b16 %v8828, %v8827
        %v8854 = vpack.c.b16 %v8830, %v8829
        %v8855 = vpack.c.b16 %v8832, %v8831
        %v8856 = vpack.c.b16 %v8834, %v8833
        %v8857 = vpack.c.b16 %v8836, %v8835
        %v8858 = vpack.c.b16 %v8838, %v8837
        %v8859 = vpack.c.b16 %v8840, %v8839
        %v8860 = vpack.c.b16 %v8842, %v8841
        %v8861 = vpack.c.b16 %v8844, %v8843
        %v8862 = vpack.c.b16 %v8846, %v8845
        %8863 = vrot.lane.b32.xlu0 %v8847, 64
        %v8864 = vpop.permute.xlu0 %8863
        %8865 = vrot.lane.b32.xlu0 %v8848, 64
        %v8866 = vpop.permute.xlu0 %8865
        %8867 = vrot.lane.b32.xlu0 %v8849, 64
        %v8868 = vpop.permute.xlu0 %8867
        %8869 = vrot.lane.b32.xlu0 %v8850, 64
        %v8870 = vpop.permute.xlu0 %8869
        %8871 = vrot.lane.b32.xlu0 %v8851, 64
        %v8872 = vpop.permute.xlu0 %8871
        %8873 = vrot.lane.b32.xlu0 %v8852, 64
        %v8874 = vpop.permute.xlu0 %8873
        %8875 = vrot.lane.b32.xlu0 %v8853, 64
        %v8876 = vpop.permute.xlu0 %8875
        %8877 = vrot.lane.b32.xlu0 %v8854, 64
        %v8878 = vpop.permute.xlu0 %8877
        %8879 = vrot.lane.b32.xlu0 %v8855, 64
        %v8880 = vpop.permute.xlu0 %8879
        %8881 = vrot.lane.b32.xlu0 %v8856, 64
        %v8882 = vpop.permute.xlu0 %8881
        %8883 = vrot.lane.b32.xlu0 %v8857, 64
        %v8884 = vpop.permute.xlu0 %8883
        %8885 = vrot.lane.b32.xlu0 %v8858, 64
        %v8886 = vpop.permute.xlu0 %8885
        %8887 = vrot.lane.b32.xlu0 %v8859, 64
        %v8888 = vpop.permute.xlu0 %8887
        %8889 = vrot.lane.b32.xlu0 %v8860, 64
        %v8890 = vpop.permute.xlu0 %8889
        %8891 = vrot.lane.b32.xlu0 %v8861, 64
        %v8892 = vpop.permute.xlu0 %8891
        %8893 = vrot.lane.b32.xlu0 %v8862, 64
        %v8894 = vpop.permute.xlu0 %8893
        %v8927 = vunpack.c.l.b16 %v8671
        %v8928 = vunpack.c.l.b16 %v8672
        %v8929 = vunpack.c.l.b16 %v8673
        %v8930 = vunpack.c.l.b16 %v8674
        %v8931 = vunpack.c.l.b16 %v8675
        %v8932 = vunpack.c.l.b16 %v8676
        %v8933 = vunpack.c.l.b16 %v8677
        %v8934 = vunpack.c.l.b16 %v8678
        %v8935 = vunpack.c.l.b16 %v8679
        %v8936 = vunpack.c.l.b16 %v8680
        %v8937 = vunpack.c.l.b16 %v8681
        %v8938 = vunpack.c.l.b16 %v8682
        %v8939 = vunpack.c.l.b16 %v8683
        %v8940 = vunpack.c.l.b16 %v8684
        %v8941 = vunpack.c.l.b16 %v8685
        %v8942 = vunpack.c.l.b16 %v8686
        %v8943 = vunpack.c.l.b16 %v8687
        %v8944 = vunpack.c.l.b16 %v8688
        %v8945 = vunpack.c.l.b16 %v8689
        %v8946 = vunpack.c.l.b16 %v8690
        %v8947 = vunpack.c.l.b16 %v8691
        %v8948 = vunpack.c.l.b16 %v8692
        %v8949 = vunpack.c.l.b16 %v8693
        %v8950 = vunpack.c.l.b16 %v8694
        %v8951 = vunpack.c.l.b16 %v8695
        %v8952 = vunpack.c.l.b16 %v8696
        %v8953 = vunpack.c.l.b16 %v8697
        %v8954 = vunpack.c.l.b16 %v8698
        %v8955 = vunpack.c.l.b16 %v8699
        %v8956 = vunpack.c.l.b16 %v8700
        %v8957 = vunpack.c.l.b16 %v8701
        %v8958 = vunpack.c.l.b16 %v8702
        %v8959 = vpack.c.b16 %v8928, %v8927
        %v8960 = vpack.c.b16 %v8930, %v8929
        %v8961 = vpack.c.b16 %v8932, %v8931
        %v8962 = vpack.c.b16 %v8934, %v8933
        %v8963 = vpack.c.b16 %v8936, %v8935
        %v8964 = vpack.c.b16 %v8938, %v8937
        %v8965 = vpack.c.b16 %v8940, %v8939
        %v8966 = vpack.c.b16 %v8942, %v8941
        %v8967 = vpack.c.b16 %v8944, %v8943
        %v8968 = vpack.c.b16 %v8946, %v8945
        %v8969 = vpack.c.b16 %v8948, %v8947
        %v8970 = vpack.c.b16 %v8950, %v8949
        %v8971 = vpack.c.b16 %v8952, %v8951
        %v8972 = vpack.c.b16 %v8954, %v8953
        %v8973 = vpack.c.b16 %v8956, %v8955
        %v8974 = vpack.c.b16 %v8958, %v8957
        %v8977 = vsel %vm3010, %v8767, %v8864
        %v8981 = vsel %vm3010, %v8768, %v8866
        %v8985 = vsel %vm3010, %v8769, %v8868
        %v8989 = vsel %vm3010, %v8770, %v8870
        %v8993 = vsel %vm3010, %v8771, %v8872
        %v8997 = vsel %vm3010, %v8772, %v8874
        %v9001 = vsel %vm3010, %v8773, %v8876
        %v9005 = vsel %vm3010, %v8774, %v8878
        %v9009 = vsel %vm3010, %v8775, %v8880
        %v9013 = vsel %vm3010, %v8776, %v8882
        %v9017 = vsel %vm3010, %v8777, %v8884
        %v9021 = vsel %vm3010, %v8778, %v8886
        %v9025 = vsel %vm3010, %v8779, %v8888
        %v9029 = vsel %vm3010, %v8780, %v8890
        %v9033 = vsel %vm3010, %v8781, %v8892
        %v9037 = vsel %vm3010, %v8782, %v8894
        %v9039 = vld [vmem:[%s12 + $0xc0] sm:$0xf]
        %v9040 = vld [vmem:[%s12 + $0xc4] sm:$0xf]
        %v9041 = vld [vmem:[%s12 + $0xc8] sm:$0xf]
        %v9042 = vld [vmem:[%s12 + $0xcc] sm:$0xf]
        %v9043 = vld [vmem:[%s12 + $0xd0] sm:$0xf]
        %v9044 = vld [vmem:[%s12 + $0xd4] sm:$0xf]
        %v9045 = vld [vmem:[%s12 + $0xd8] sm:$0xf]
        %v9046 = vld [vmem:[%s12 + $0xdc] sm:$0xf]
        %v9047 = vld [vmem:[%s12 + $0xe0] sm:$0xf]
        %v9048 = vld [vmem:[%s12 + $0xe4] sm:$0xf]
        %v9049 = vld [vmem:[%s12 + $0xe8] sm:$0xf]
        %v9050 = vld [vmem:[%s12 + $0xec] sm:$0xf]
        %v9051 = vld [vmem:[%s12 + $0xf0] sm:$0xf]
        %v9052 = vld [vmem:[%s12 + $0xf4] sm:$0xf]
        %v9053 = vld [vmem:[%s12 + $0xf8] sm:$0xf]
        %v9054 = vld [vmem:[%s12 + $0xfc] sm:$0xf]
        %v9055 = vld [vmem:[%s12 + $0x100] sm:$0xf]
        %v9056 = vld [vmem:[%s12 + $0x104] sm:$0xf]
        %v9057 = vld [vmem:[%s12 + $0x108] sm:$0xf]
        %v9058 = vld [vmem:[%s12 + $0x10c] sm:$0xf]
        %v9059 = vld [vmem:[%s12 + $0x110] sm:$0xf]
        %v9060 = vld [vmem:[%s12 + $0x114] sm:$0xf]
        %v9061 = vld [vmem:[%s12 + $0x118] sm:$0xf]
        %v9062 = vld [vmem:[%s12 + $0x11c] sm:$0xf]
        %v9087 = vunpack.c.l.b16 %v9039
        %v9088 = vunpack.c.l.b16 %v9040
        %v9089 = vunpack.c.l.b16 %v9041
        %v9090 = vunpack.c.l.b16 %v9042
        %v9091 = vunpack.c.l.b16 %v9043
        %v9092 = vunpack.c.l.b16 %v9044
        %v9093 = vunpack.c.l.b16 %v9045
        %v9094 = vunpack.c.l.b16 %v9046
        %v9095 = vunpack.c.l.b16 %v9047
        %v9096 = vunpack.c.l.b16 %v9048
        %v9097 = vunpack.c.l.b16 %v9049
        %v9098 = vunpack.c.l.b16 %v9050
        %v9099 = vunpack.c.l.b16 %v9051
        %v9100 = vunpack.c.l.b16 %v9052
        %v9101 = vunpack.c.l.b16 %v9053
        %v9102 = vunpack.c.l.b16 %v9054
        %v9103 = vunpack.c.l.b16 %v9055
        %v9104 = vunpack.c.l.b16 %v9056
        %v9105 = vunpack.c.l.b16 %v9057
        %v9106 = vunpack.c.l.b16 %v9058
        %v9107 = vunpack.c.l.b16 %v9059
        %v9108 = vunpack.c.l.b16 %v9060
        %v9109 = vunpack.c.l.b16 %v9061
        %v9110 = vunpack.c.l.b16 %v9062
        %v9111 = vpack.c.b16 %v9088, %v9087
        %v9112 = vpack.c.b16 %v9090, %v9089
        %v9113 = vpack.c.b16 %v9092, %v9091
        %v9114 = vpack.c.b16 %v9094, %v9093
        %v9115 = vpack.c.b16 %v9096, %v9095
        %v9116 = vpack.c.b16 %v9098, %v9097
        %v9117 = vpack.c.b16 %v9100, %v9099
        %v9118 = vpack.c.b16 %v9102, %v9101
        %v9119 = vpack.c.b16 %v9104, %v9103
        %v9120 = vpack.c.b16 %v9106, %v9105
        %v9121 = vpack.c.b16 %v9108, %v9107
        %v9122 = vpack.c.b16 %v9110, %v9109
        %v9136 = vsel %vm3010, %v8959, 0
        %v9139 = vsel %vm3010, %v8960, 0
        %v9142 = vsel %vm3010, %v8961, 0
        %v9145 = vsel %vm3010, %v8962, 0
        %v9148 = vsel %vm3010, %v8963, 0
        %v9151 = vsel %vm3010, %v8964, 0
        %v9154 = vsel %vm3010, %v8965, 0
        %v9157 = vsel %vm3010, %v8966, 0
        %v9160 = vsel %vm3010, %v8967, 0
        %v9163 = vsel %vm3010, %v8968, 0
        %v9166 = vsel %vm3010, %v8969, 0
        %v9169 = vsel %vm3010, %v8970, 0
        %v9172 = vsel %vm3010, %v8971, 0
        %v9175 = vsel %vm3010, %v8972, 0
        %v9178 = vsel %vm3010, %v8973, 0
        %v9181 = vsel %vm3010, %v8974, 0
        %9183 = vmatpush.bf16.msra.mxu0 %v9118
        %9184 = vmatpush.bf16.msra.mxu0 %v9117
        %9185 = vmatpush.bf16.msra.mxu0 %v9116
        %9186 = vmatpush.bf16.msra.mxu0 %v9115
        %9187 = vmatpush.bf16.msra.mxu0 %v9114
        %9188 = vmatpush.bf16.msra.mxu0 %v9113
        %9189 = vmatpush.bf16.msra.mxu0 %v9112
        %9190 = vmatpush.bf16.msra.mxu0 %v9111
        %9191 = vmatmul.bf16.gmra.mxu0 %v8977
        %v9192 = vpop.f32.mrf.mxu0
        %v9193 = vadd.f32 0.0, %v9192
        %v9194 = vpop.f32.mrf.mxu0
        %v9195 = vadd.f32 0.0, %v9194
        %9196 = vmatmul.bf16.gmra.mxu0 %v8981
        %v9197 = vpop.f32.mrf.mxu0
        %v9198 = vadd.f32 0.0, %v9197
        %v9199 = vpop.f32.mrf.mxu0
        %v9200 = vadd.f32 0.0, %v9199
        %9201 = vmatmul.bf16.gmra.mxu0 %v8985
        %v9202 = vpop.f32.mrf.mxu0
        %v9203 = vadd.f32 0.0, %v9202
        %v9204 = vpop.f32.mrf.mxu0
        %v9205 = vadd.f32 0.0, %v9204
        %9206 = vmatmul.bf16.gmra.mxu0 %v8989
        %v9207 = vpop.f32.mrf.mxu0
        %v9208 = vadd.f32 0.0, %v9207
        %v9209 = vpop.f32.mrf.mxu0
        %v9210 = vadd.f32 0.0, %v9209
        %9211 = vmatmul.bf16.gmra.mxu0 %v8993
        %v9212 = vpop.f32.mrf.mxu0
        %v9213 = vadd.f32 0.0, %v9212
        %v9214 = vpop.f32.mrf.mxu0
        %v9215 = vadd.f32 0.0, %v9214
        %9216 = vmatmul.bf16.gmra.mxu0 %v8997
        %v9217 = vpop.f32.mrf.mxu0
        %v9218 = vadd.f32 0.0, %v9217
        %v9219 = vpop.f32.mrf.mxu0
        %v9220 = vadd.f32 0.0, %v9219
        %9221 = vmatmul.bf16.gmra.mxu0 %v9001
        %v9222 = vpop.f32.mrf.mxu0
        %v9223 = vadd.f32 0.0, %v9222
        %v9224 = vpop.f32.mrf.mxu0
        %v9225 = vadd.f32 0.0, %v9224
        %9226 = vmatmul.bf16.gmra.mxu0 %v9005
        %v9227 = vpop.f32.mrf.mxu0
        %v9228 = vadd.f32 0.0, %v9227
        %v9229 = vpop.f32.mrf.mxu0
        %v9230 = vadd.f32 0.0, %v9229
        %9231 = vmatmul.bf16.gmra.mxu0 %v9009
        %v9232 = vpop.f32.mrf.mxu0
        %v9233 = vadd.f32 0.0, %v9232
        %v9234 = vpop.f32.mrf.mxu0
        %v9235 = vadd.f32 0.0, %v9234
        %9236 = vmatmul.bf16.gmra.mxu0 %v9013
        %v9237 = vpop.f32.mrf.mxu0
        %v9238 = vadd.f32 0.0, %v9237
        %v9239 = vpop.f32.mrf.mxu0
        %v9240 = vadd.f32 0.0, %v9239
        %9241 = vmatmul.bf16.gmra.mxu0 %v9017
        %v9242 = vpop.f32.mrf.mxu0
        %v9243 = vadd.f32 0.0, %v9242
        %v9244 = vpop.f32.mrf.mxu0
        %v9245 = vadd.f32 0.0, %v9244
        %9246 = vmatmul.bf16.gmra.mxu0 %v9021
        %v9247 = vpop.f32.mrf.mxu0
        %v9248 = vadd.f32 0.0, %v9247
        %v9249 = vpop.f32.mrf.mxu0
        %v9250 = vadd.f32 0.0, %v9249
        %9251 = vmatmul.bf16.gmra.mxu0 %v9025
        %v9252 = vpop.f32.mrf.mxu0
        %v9253 = vadd.f32 0.0, %v9252
        %v9254 = vpop.f32.mrf.mxu0
        %v9255 = vadd.f32 0.0, %v9254
        %9256 = vmatmul.bf16.gmra.mxu0 %v9029
        %v9257 = vpop.f32.mrf.mxu0
        %v9258 = vadd.f32 0.0, %v9257
        %v9259 = vpop.f32.mrf.mxu0
        %v9260 = vadd.f32 0.0, %v9259
        %9261 = vmatmul.bf16.gmra.mxu0 %v9033
        %v9262 = vpop.f32.mrf.mxu0
        %v9263 = vadd.f32 0.0, %v9262
        %v9264 = vpop.f32.mrf.mxu0
        %v9265 = vadd.f32 0.0, %v9264
        %9266 = vmatmul.bf16.gmra.mxu0 %v9037
        %v9267 = vpop.f32.mrf.mxu0
        %v9268 = vadd.f32 0.0, %v9267
        %v9269 = vpop.f32.mrf.mxu0
        %v9270 = vadd.f32 0.0, %v9269
        %9271 = vdwg.mxu0
        %9272 = vmatpush.bf16.msra.mxu0 0
        %9273 = vmatpush.bf16.msra.mxu0 0
        %9274 = vmatpush.bf16.msra.mxu0 0
        %9275 = vmatpush.bf16.msra.mxu0 0
        %9276 = vmatpush.bf16.msra.mxu0 %v9122
        %9277 = vmatpush.bf16.msra.mxu0 %v9121
        %9278 = vmatpush.bf16.msra.mxu0 %v9120
        %9279 = vmatpush.bf16.msra.mxu0 %v9119
        %9280 = vmatmul.bf16.gmra.mxu0 %v9136
        %v9281 = vpop.f32.mrf.mxu0
        %v9282 = vadd.f32 %v9193, %v9281
        %v9283 = vpop.f32.mrf.mxu0
        %v9284 = vadd.f32 %v9195, %v9283
        %9285 = vmatmul.bf16.gmra.mxu0 %v9139
        %v9286 = vpop.f32.mrf.mxu0
        %v9287 = vadd.f32 %v9198, %v9286
        %v9288 = vpop.f32.mrf.mxu0
        %v9289 = vadd.f32 %v9200, %v9288
        %9290 = vmatmul.bf16.gmra.mxu0 %v9142
        %v9291 = vpop.f32.mrf.mxu0
        %v9292 = vadd.f32 %v9203, %v9291
        %v9293 = vpop.f32.mrf.mxu0
        %v9294 = vadd.f32 %v9205, %v9293
        %9295 = vmatmul.bf16.gmra.mxu0 %v9145
        %v9296 = vpop.f32.mrf.mxu0
        %v9297 = vadd.f32 %v9208, %v9296
        %v9298 = vpop.f32.mrf.mxu0
        %v9299 = vadd.f32 %v9210, %v9298
        %9300 = vmatmul.bf16.gmra.mxu0 %v9148
        %v9301 = vpop.f32.mrf.mxu0
        %v9302 = vadd.f32 %v9213, %v9301
        %v9303 = vpop.f32.mrf.mxu0
        %v9304 = vadd.f32 %v9215, %v9303
        %9305 = vmatmul.bf16.gmra.mxu0 %v9151
        %v9306 = vpop.f32.mrf.mxu0
        %v9307 = vadd.f32 %v9218, %v9306
        %v9308 = vpop.f32.mrf.mxu0
        %v9309 = vadd.f32 %v9220, %v9308
        %9310 = vmatmul.bf16.gmra.mxu0 %v9154
        %v9311 = vpop.f32.mrf.mxu0
        %v9312 = vadd.f32 %v9223, %v9311
        %v9313 = vpop.f32.mrf.mxu0
        %v9314 = vadd.f32 %v9225, %v9313
        %9315 = vmatmul.bf16.gmra.mxu0 %v9157
        %v9316 = vpop.f32.mrf.mxu0
        %v9317 = vadd.f32 %v9228, %v9316
        %v9318 = vpop.f32.mrf.mxu0
        %v9319 = vadd.f32 %v9230, %v9318
        %9320 = vmatmul.bf16.gmra.mxu0 %v9160
        %v9321 = vpop.f32.mrf.mxu0
        %v9322 = vadd.f32 %v9233, %v9321
        %v9323 = vpop.f32.mrf.mxu0
        %v9324 = vadd.f32 %v9235, %v9323
        %9325 = vmatmul.bf16.gmra.mxu0 %v9163
        %v9326 = vpop.f32.mrf.mxu0
        %v9327 = vadd.f32 %v9238, %v9326
        %v9328 = vpop.f32.mrf.mxu0
        %v9329 = vadd.f32 %v9240, %v9328
        %9330 = vmatmul.bf16.gmra.mxu0 %v9166
        %v9331 = vpop.f32.mrf.mxu0
        %v9332 = vadd.f32 %v9243, %v9331
        %v9333 = vpop.f32.mrf.mxu0
        %v9334 = vadd.f32 %v9245, %v9333
        %9335 = vmatmul.bf16.gmra.mxu0 %v9169
        %v9336 = vpop.f32.mrf.mxu0
        %v9337 = vadd.f32 %v9248, %v9336
        %v9338 = vpop.f32.mrf.mxu0
        %v9339 = vadd.f32 %v9250, %v9338
        %9340 = vmatmul.bf16.gmra.mxu0 %v9172
        %v9341 = vpop.f32.mrf.mxu0
        %v9342 = vadd.f32 %v9253, %v9341
        %v9343 = vpop.f32.mrf.mxu0
        %v9344 = vadd.f32 %v9255, %v9343
        %9345 = vmatmul.bf16.gmra.mxu0 %v9175
        %v9346 = vpop.f32.mrf.mxu0
        %v9347 = vadd.f32 %v9258, %v9346
        %v9348 = vpop.f32.mrf.mxu0
        %v9349 = vadd.f32 %v9260, %v9348
        %9350 = vmatmul.bf16.gmra.mxu0 %v9178
        %v9351 = vpop.f32.mrf.mxu0
        %v9352 = vadd.f32 %v9263, %v9351
        %v9353 = vpop.f32.mrf.mxu0
        %v9354 = vadd.f32 %v9265, %v9353
        %9355 = vmatmul.bf16.gmra.mxu0 %v9181
        %v9356 = vpop.f32.mrf.mxu0
        %v9357 = vadd.f32 %v9268, %v9356
        %v9358 = vpop.f32.mrf.mxu0
        %v9359 = vadd.f32 %v9270, %v9358
        %9360 = vdwg.mxu0
        %v9361 = vadd.f32 %v8432, %v9282
        %v9362 = vadd.f32 %v8434, %v9284
        %v9363 = vadd.f32 %v8437, %v9287
        %v9364 = vadd.f32 %v8439, %v9289
        %v9365 = vadd.f32 %v8442, %v9292
        %v9366 = vadd.f32 %v8444, %v9294
        %v9367 = vadd.f32 %v8447, %v9297
        %v9368 = vadd.f32 %v8449, %v9299
        %v9369 = vadd.f32 %v8452, %v9302
        %v9370 = vadd.f32 %v8454, %v9304
        %v9371 = vadd.f32 %v8457, %v9307
        %v9372 = vadd.f32 %v8459, %v9309
        %v9373 = vadd.f32 %v8462, %v9312
        %v9374 = vadd.f32 %v8464, %v9314
        %v9375 = vadd.f32 %v8467, %v9317
        %v9376 = vadd.f32 %v8469, %v9319
        %v9377 = vadd.f32 %v8472, %v9322
        %v9378 = vadd.f32 %v8474, %v9324
        %v9379 = vadd.f32 %v8477, %v9327
        %v9380 = vadd.f32 %v8479, %v9329
        %v9381 = vadd.f32 %v8482, %v9332
        %v9382 = vadd.f32 %v8484, %v9334
        %v9383 = vadd.f32 %v8487, %v9337
        %v9384 = vadd.f32 %v8489, %v9339
        %v9385 = vadd.f32 %v8492, %v9342
        %v9386 = vadd.f32 %v8494, %v9344
        %v9387 = vadd.f32 %v8497, %v9347
        %v9388 = vadd.f32 %v8499, %v9349
        %v9389 = vadd.f32 %v8502, %v9352
        %v9390 = vadd.f32 %v8504, %v9354
        %v9391 = vadd.f32 %v8507, %v9357
        %v9392 = vadd.f32 %v8509, %v9359
        %v9394 = vperm.slane %v6714, 0
        %v9396 = vadd.f32 %v9361, %v9394
        %v9397 = vadd.f32 %v9362, %v9394
        %v9398 = vadd.f32 %v9363, %v9394
        %v9399 = vadd.f32 %v9364, %v9394
        %v9400 = vadd.f32 %v9365, %v9394
        %v9401 = vadd.f32 %v9366, %v9394
        %v9402 = vadd.f32 %v9367, %v9394
        %v9403 = vadd.f32 %v9368, %v9394
        %v9404 = vadd.f32 %v9369, %v9394
        %v9405 = vadd.f32 %v9370, %v9394
        %v9406 = vadd.f32 %v9371, %v9394
        %v9407 = vadd.f32 %v9372, %v9394
        %v9408 = vadd.f32 %v9373, %v9394
        %v9409 = vadd.f32 %v9374, %v9394
        %v9410 = vadd.f32 %v9375, %v9394
        %v9411 = vadd.f32 %v9376, %v9394
        %v9412 = vadd.f32 %v9377, %v9394
        %v9413 = vadd.f32 %v9378, %v9394
        %v9414 = vadd.f32 %v9379, %v9394
        %v9415 = vadd.f32 %v9380, %v9394
        %v9416 = vadd.f32 %v9381, %v9394
        %v9417 = vadd.f32 %v9382, %v9394
        %v9418 = vadd.f32 %v9383, %v9394
        %v9419 = vadd.f32 %v9384, %v9394
        %v9420 = vadd.f32 %v9385, %v9394
        %v9421 = vadd.f32 %v9386, %v9394
        %v9422 = vadd.f32 %v9387, %v9394
        %v9423 = vadd.f32 %v9388, %v9394
        %v9424 = vadd.f32 %v9389, %v9394
        %v9425 = vadd.f32 %v9390, %v9394
        %v9426 = vadd.f32 %v9391, %v9394
        %v9427 = vadd.f32 %v9392, %v9394
        %v9428 = vpack.c.bf16 %v653, %v652
        %v9429 = vpack.c.bf16 %v655, %v654
        %v9430 = vpack.c.bf16 %v657, %v656
        %v9431 = vpack.c.bf16 %v659, %v658
        %v9432 = vpack.c.bf16 %v661, %v660
        %v9433 = vpack.c.bf16 %v663, %v662
        %v9434 = vpack.c.bf16 %v665, %v664
        %v9435 = vpack.c.bf16 %v667, %v666
        %v9436 = vpack.c.bf16 %v669, %v668
        %v9437 = vpack.c.bf16 %v671, %v670
        %v9438 = vpack.c.bf16 %v673, %v672
        %v9439 = vpack.c.bf16 %v675, %v674
        %v9440 = vpack.c.bf16 %v677, %v676
        %v9441 = vpack.c.bf16 %v679, %v678
        %v9442 = vpack.c.bf16 %v681, %v680
        %v9443 = vpack.c.bf16 %v683, %v682
        %v9444 = vld [vmem:[#allocation7] sm:$0xf]
        %v9445 = vld [vmem:[#allocation7 + $0x4] sm:$0xf]
        %v9446 = vld [vmem:[#allocation7 + $0x8] sm:$0xf]
        %v9447 = vld [vmem:[#allocation7 + $0xc] sm:$0xf]
        %v9448 = vld [vmem:[%s15] sm:$0x1]
        %v9450 = vperm.slane %v9448, 0
        %v9456 = vunpack.c.l.b16 %v9444
        %v9457 = vunpack.c.l.b16 %v9445
        %v9458 = vunpack.c.l.b16 %v9446
        %v9459 = vunpack.c.l.b16 %v9447
        %v9460 = vpack.c.b16 %v9457, %v9456
        %v9461 = vpack.c.b16 %v9459, %v9458
        %v9465 = vsel %vm690, %v9428, 0
        %v9468 = vsel %vm690, %v9429, 0
        %v9471 = vsel %vm690, %v9430, 0
        %v9474 = vsel %vm690, %v9431, 0
        %v9477 = vsel %vm690, %v9432, 0
        %v9480 = vsel %vm690, %v9433, 0
        %v9483 = vsel %vm690, %v9434, 0
        %v9486 = vsel %vm690, %v9435, 0
        %v9489 = vsel %vm690, %v9436, 0
        %v9492 = vsel %vm690, %v9437, 0
        %v9495 = vsel %vm690, %v9438, 0
        %v9498 = vsel %vm690, %v9439, 0
        %v9501 = vsel %vm690, %v9440, 0
        %v9504 = vsel %vm690, %v9441, 0
        %v9507 = vsel %vm690, %v9442, 0
        %v9510 = vsel %vm690, %v9443, 0
        %9512 = vmatpush.bf16.msra.mxu0 0
        %9513 = vmatpush.bf16.msra.mxu0 0
        %9514 = vmatpush.bf16.msra.mxu0 0
        %9515 = vmatpush.bf16.msra.mxu0 0
        %9516 = vmatpush.bf16.msra.mxu0 0
        %9517 = vmatpush.bf16.msra.mxu0 0
        %9518 = vmatpush.bf16.msra.mxu0 %v9461
        %9519 = vmatpush.bf16.msra.mxu0 %v9460
        %9520 = vmatmul.bf16.gmra.mxu0 %v9465
        %v9521 = vpop.f32.mrf.mxu0
        %v9522 = vadd.f32 %v9450, %v9521
        %v9523 = vpop.f32.mrf.mxu0
        %v9524 = vadd.f32 %v9450, %v9523
        %9525 = vmatmul.bf16.gmra.mxu0 %v9468
        %v9526 = vpop.f32.mrf.mxu0
        %v9527 = vadd.f32 %v9450, %v9526
        %v9528 = vpop.f32.mrf.mxu0
        %v9529 = vadd.f32 %v9450, %v9528
        %9530 = vmatmul.bf16.gmra.mxu0 %v9471
        %v9531 = vpop.f32.mrf.mxu0
        %v9532 = vadd.f32 %v9450, %v9531
        %v9533 = vpop.f32.mrf.mxu0
        %v9534 = vadd.f32 %v9450, %v9533
        %9535 = vmatmul.bf16.gmra.mxu0 %v9474
        %v9536 = vpop.f32.mrf.mxu0
        %v9537 = vadd.f32 %v9450, %v9536
        %v9538 = vpop.f32.mrf.mxu0
        %v9539 = vadd.f32 %v9450, %v9538
        %9540 = vmatmul.bf16.gmra.mxu0 %v9477
        %v9541 = vpop.f32.mrf.mxu0
        %v9542 = vadd.f32 %v9450, %v9541
        %v9543 = vpop.f32.mrf.mxu0
        %v9544 = vadd.f32 %v9450, %v9543
        %9545 = vmatmul.bf16.gmra.mxu0 %v9480
        %v9546 = vpop.f32.mrf.mxu0
        %v9547 = vadd.f32 %v9450, %v9546
        %v9548 = vpop.f32.mrf.mxu0
        %v9549 = vadd.f32 %v9450, %v9548
        %9550 = vmatmul.bf16.gmra.mxu0 %v9483
        %v9551 = vpop.f32.mrf.mxu0
        %v9552 = vadd.f32 %v9450, %v9551
        %v9553 = vpop.f32.mrf.mxu0
        %v9554 = vadd.f32 %v9450, %v9553
        %9555 = vmatmul.bf16.gmra.mxu0 %v9486
        %v9556 = vpop.f32.mrf.mxu0
        %v9557 = vadd.f32 %v9450, %v9556
        %v9558 = vpop.f32.mrf.mxu0
        %v9559 = vadd.f32 %v9450, %v9558
        %9560 = vmatmul.bf16.gmra.mxu0 %v9489
        %v9561 = vpop.f32.mrf.mxu0
        %v9562 = vadd.f32 %v9450, %v9561
        %v9563 = vpop.f32.mrf.mxu0
        %v9564 = vadd.f32 %v9450, %v9563
        %9565 = vmatmul.bf16.gmra.mxu0 %v9492
        %v9566 = vpop.f32.mrf.mxu0
        %v9567 = vadd.f32 %v9450, %v9566
        %v9568 = vpop.f32.mrf.mxu0
        %v9569 = vadd.f32 %v9450, %v9568
        %9570 = vmatmul.bf16.gmra.mxu0 %v9495
        %v9571 = vpop.f32.mrf.mxu0
        %v9572 = vadd.f32 %v9450, %v9571
        %v9573 = vpop.f32.mrf.mxu0
        %v9574 = vadd.f32 %v9450, %v9573
        %9575 = vmatmul.bf16.gmra.mxu0 %v9498
        %v9576 = vpop.f32.mrf.mxu0
        %v9577 = vadd.f32 %v9450, %v9576
        %v9578 = vpop.f32.mrf.mxu0
        %v9579 = vadd.f32 %v9450, %v9578
        %9580 = vmatmul.bf16.gmra.mxu0 %v9501
        %v9581 = vpop.f32.mrf.mxu0
        %v9582 = vadd.f32 %v9450, %v9581
        %v9583 = vpop.f32.mrf.mxu0
        %v9584 = vadd.f32 %v9450, %v9583
        %9585 = vmatmul.bf16.gmra.mxu0 %v9504
        %v9586 = vpop.f32.mrf.mxu0
        %v9587 = vadd.f32 %v9450, %v9586
        %v9588 = vpop.f32.mrf.mxu0
        %v9589 = vadd.f32 %v9450, %v9588
        %9590 = vmatmul.bf16.gmra.mxu0 %v9507
        %v9591 = vpop.f32.mrf.mxu0
        %v9592 = vadd.f32 %v9450, %v9591
        %v9593 = vpop.f32.mrf.mxu0
        %v9594 = vadd.f32 %v9450, %v9593
        %9595 = vmatmul.bf16.gmra.mxu0 %v9510
        %v9596 = vpop.f32.mrf.mxu0
        %v9597 = vadd.f32 %v9450, %v9596
        %v9598 = vpop.f32.mrf.mxu0
        %v9599 = vadd.f32 %v9450, %v9598
        %9600 = vdwg.mxu0
        %v9601 = vadd.f32 %v9396, %v9522
        %v9602 = vadd.f32 %v9397, %v9524
        %v9603 = vadd.f32 %v9398, %v9527
        %v9604 = vadd.f32 %v9399, %v9529
        %v9605 = vadd.f32 %v9400, %v9532
        %v9606 = vadd.f32 %v9401, %v9534
        %v9607 = vadd.f32 %v9402, %v9537
        %v9608 = vadd.f32 %v9403, %v9539
        %v9609 = vadd.f32 %v9404, %v9542
        %v9610 = vadd.f32 %v9405, %v9544
        %v9611 = vadd.f32 %v9406, %v9547
        %v9612 = vadd.f32 %v9407, %v9549
        %v9613 = vadd.f32 %v9408, %v9552
        %v9614 = vadd.f32 %v9409, %v9554
        %v9615 = vadd.f32 %v9410, %v9557
        %v9616 = vadd.f32 %v9411, %v9559
        %v9617 = vadd.f32 %v9412, %v9562
        %v9618 = vadd.f32 %v9413, %v9564
        %v9619 = vadd.f32 %v9414, %v9567
        %v9620 = vadd.f32 %v9415, %v9569
        %v9621 = vadd.f32 %v9416, %v9572
        %v9622 = vadd.f32 %v9417, %v9574
        %v9623 = vadd.f32 %v9418, %v9577
        %v9624 = vadd.f32 %v9419, %v9579
        %v9625 = vadd.f32 %v9420, %v9582
        %v9626 = vadd.f32 %v9421, %v9584
        %v9627 = vadd.f32 %v9422, %v9587
        %v9628 = vadd.f32 %v9423, %v9589
        %v9629 = vadd.f32 %v9424, %v9592
        %v9630 = vadd.f32 %v9425, %v9594
        %v9631 = vadd.f32 %v9426, %v9597
        %v9632 = vadd.f32 %v9427, %v9599
        %9633 = vst [vmem:[%s577] sm:$0xff] %v9601
        %9634 = vst [vmem:[%s577 + $0x8] sm:$0xff] %v9602
        %9635 = vst [vmem:[%s577 + $0x10] sm:$0xff] %v9603
        %9636 = vst [vmem:[%s577 + $0x18] sm:$0xff] %v9604
        %9637 = vst [vmem:[%s577 + $0x20] sm:$0xff] %v9605
        %9638 = vst [vmem:[%s577 + $0x28] sm:$0xff] %v9606
        %9639 = vst [vmem:[%s577 + $0x30] sm:$0xff] %v9607
        %9640 = vst [vmem:[%s577 + $0x38] sm:$0xff] %v9608
        %9641 = vst [vmem:[%s577 + $0x40] sm:$0xff] %v9609
        %9642 = vst [vmem:[%s577 + $0x48] sm:$0xff] %v9610
        %9643 = vst [vmem:[%s577 + $0x50] sm:$0xff] %v9611
        %9644 = vst [vmem:[%s577 + $0x58] sm:$0xff] %v9612
        %9645 = vst [vmem:[%s577 + $0x60] sm:$0xff] %v9613
        %9646 = vst [vmem:[%s577 + $0x68] sm:$0xff] %v9614
        %9647 = vst [vmem:[%s577 + $0x70] sm:$0xff] %v9615
        %9648 = vst [vmem:[%s577 + $0x78] sm:$0xff] %v9616
        %9649 = vst [vmem:[%s577 + $0x80] sm:$0xff] %v9617
        %9650 = vst [vmem:[%s577 + $0x88] sm:$0xff] %v9618
        %9651 = vst [vmem:[%s577 + $0x90] sm:$0xff] %v9619
        %9652 = vst [vmem:[%s577 + $0x98] sm:$0xff] %v9620
        %9653 = vst [vmem:[%s577 + $0xa0] sm:$0xff] %v9621
        %9654 = vst [vmem:[%s577 + $0xa8] sm:$0xff] %v9622
        %9655 = vst [vmem:[%s577 + $0xb0] sm:$0xff] %v9623
        %9656 = vst [vmem:[%s577 + $0xb8] sm:$0xff] %v9624
        %9657 = vst [vmem:[%s577 + $0xc0] sm:$0xff] %v9625
        %9658 = vst [vmem:[%s577 + $0xc8] sm:$0xff] %v9626
        %9659 = vst [vmem:[%s577 + $0xd0] sm:$0xff] %v9627
        %9660 = vst [vmem:[%s577 + $0xd8] sm:$0xff] %v9628
        %9661 = vst [vmem:[%s577 + $0xe0] sm:$0xff] %v9629
        %9662 = vst [vmem:[%s577 + $0xe8] sm:$0xff] %v9630
        %9663 = vst [vmem:[%s577 + $0xf0] sm:$0xff] %v9631
        %9664 = vst [vmem:[%s577 + $0xf8] sm:$0xff] %v9632
        %s9665 = sand.u32 %s386, 1
        %s9666 = scalar_lea.sflag [#allocation4], %s9665
        %s9667 = sand.u32 %s386, 1
        %s9668 = smul.addr %s9667, 256
        %s9669 = scalar_lea.vmem [#allocation8], %s9668
        // Predicated region
        $region97: #{resnet_forward.1} parent=83 // pred_check
          %p9670 = pneg %p396
        $region98: #{resnet_forward.1} parent=83 // pred_check_branch
          %9672 = sbr.rel (%p9670) target = $region100
        $region99: #{resnet_forward.1} parent=83 // pred_region
          %9674 = vsyncadd %s9666, 0
          %s9675 = smul.addr %s32, 32
          %s9676 = smul.addr %s9675, 8
          %s9677 = scalar_lea.hbm %s16, %s9676
          %s9678 = sshll.u32 %s9669, 4
          %s9679 = int_to_ptr.vmem [resolvable:$true] %s9678
          %s9680 = sshll.u32 %s9677, 4
          %s9681 = int_to_ptr.hbm [resolvable:$true] %s9680
          %9686 = dma.vmem_to_hbm [thread:$0]  %s9679, 4096, %s9681, %s9666, 128, 128, 8
        $region100: #{resnet_forward.1} parent=83 // pred_fallthru
          _
      $region84: #{resnet_forward.1} parent=5 // pred_fallthru
        _
      %p9687 = scmp.le.s32.totalorder 2, %s27
      // Predicated region
      $region101: #{resnet_forward.1} parent=5 // pred_check
        %p9688 = pneg %p9687
      $region102: #{resnet_forward.1} parent=5 // pred_check_branch
        %9690 = sbr.rel (%p9688) target = $region104
      $region103: #{resnet_forward.1} parent=5 // pred_region
        %s9691 = ssub.s32 %s27, 2
        // Predicated region
        $region105: #{resnet_forward.1} parent=103 // pred_check
          %p9692 = pneg %p402
        $region106: #{resnet_forward.1} parent=103 // pred_check_branch
          %9694 = sbr.rel (%p9692) target = $region108
        $region107: #{resnet_forward.1} parent=103 // pred_region
          %s9695 = sand.u32 %s387, 1
          %s9696 = scalar_lea.sflag [#allocation4], %s9695
          %s9697 = sand.u32 %s387, 1
          %s9698 = smul.addr %s9697, 256
          %s9699 = scalar_lea.vmem [#allocation8], %s9698
          %9701 = dma.done %s9696, 4096
        $region108: #{resnet_forward.1} parent=103 // pred_fallthru
          _
      $region104: #{resnet_forward.1} parent=5 // pred_fallthru
        _
    $region6: #{resnet_forward.1} parent=1 // loop_footer
      %s31 = sadd.s32 1, %s27
    $region7: #{resnet_forward.1} parent=1 // loop_footer_branch
      %26 = sbr.rel target = $region3
    $region8: #{resnet_forward.1} parent=1 // loop_exit
      _
    %9702 = vsyncpa [#allocation3], 1
    %s9703 = scalar_lea.sflag [#allocation3], 1
    %9704 = vsyncpa %s9703, 1
    %9705 = vsyncpa [#allocation6], 1
    %9706 = vsyncpa [#allocation4], 1
    %s9707 = scalar_lea.sflag [#allocation4], 1
    %9708 = vsyncpa %s9707, 1

</llo_original>
